<compile_context>
chip_gen: v7x
topology: tpu7x:2x2x1
jax: 0.10.0
libtpu: 0.0.40
codegen_flags: <defaults>
</compile_context>

<pallas_src>
import math
from itertools import combinations_with_replacement

import numpy as np
import jax
import jax.numpy as jnp
from jax.experimental import pallas as pl
from jax.experimental.pallas import tpu as pltpu


# ----------------------------------------------------------------------------
# Exponent generation (host-side parameter glue, mirrors generate_exponents)
# ----------------------------------------------------------------------------
def generate_exponents(d, degree):
    num_poly = math.comb(degree + d, d)
    exponents = np.zeros((num_poly, d), dtype=np.int32)
    i = 0
    for total_degree in range(degree + 1):
        for exps in combinations_with_replacement(range(d), total_degree):
            for var in exps:
                exponents[i, var] += 1
            i += 1
    return exponents[1:]  # drop the constant (all-zero) multi-index


def _round_up(v, m):
    return ((v + m - 1) // m) * m


# ----------------------------------------------------------------------------
# Fused kernel: Chebyshev moments (recurrence + MXU selection) + transposed MLP
# Grid = (batch tiles ["parallel"], point tiles ["arbitrary"]).
# ----------------------------------------------------------------------------
def _make_kernel(d, J, mm_dtype):
    def kernel(x_ref, wsum_ref, sel_ref,
               w1_ref, b1_ref, w2_ref, b2_ref,
               w3_ref, b3_ref, w4_ref, b4_ref,
               o_ref, acc_ref):
        bt = x_ref.shape[0]
        j_id = pl.program_id(1)
        nj = pl.num_programs(1)

        def mm(a, b):
            return jnp.dot(a.astype(mm_dtype), b.astype(mm_dtype),
                           preferred_element_type=jnp.float32)

        @pl.when(j_id == 0)
        def _init():
            acc_ref[...] = jnp.zeros_like(acc_ref)

        # ---- Chebyshev recurrence on the VPU (no arccos / cos), N lane-dense ----
        x = x_ref[...]                                    # (bt, d, tn)
        cheb = [jnp.ones_like(x), x]                      # T_0, T_1
        for _ in range(J - 2):
            cheb.append(2.0 * x * cheb[-1] - cheb[-2])    # T_j = 2x T_{j-1} - T_{j-2}
        # TODO(synk): at degree=15 keep T_j in one stacked VMEM scratch instead of a
        #             J-long unrolled list to bound vreg/VMEM live ranges.

        # Per-coordinate stacked values C_k: (bt, J, tn) - j on sublanes, n on lanes.
        c = [jnp.concatenate([cheb[jj][:, k:k + 1, :] for jj in range(J)], axis=1)
             .astype(mm_dtype) for k in range(d)]
        sel_mats = [sel_ref[k] for k in range(d)]         # (M_pad, J), hoisted loads
        wcol = wsum_ref[...]                              # (tn, 1): 1/N or 0 (pad)

        # MXU selection + product + point mean, per batch row (selT_k stays
        # stationary in the MXU across the unrolled batch loop).
        for b in range(bt):
            pb = None
            for k in range(d):
                s = mm(sel_mats[k], c[k][b])              # (M_pad, tn)
                pb = s if pb is None else pb * s
            acc_ref[:, b:b + 1] += mm(pb, wcol)           # (M_pad, 1) mean via MXU

        # ---- fused MLP head (transposed; BN folded; Dropout = identity) ----
        @pl.when(j_id == nj - 1)
        def _finalize():
            mom = acc_ref[...]                                            # (M_pad, bt)
            h = jnp.maximum(mm(w1_ref[...], mom) + b1_ref[...], 0.0)
            h = jnp.maximum(mm(w2_ref[...], h) + b2_ref[...], 0.0)
            h = jnp.maximum(mm(w3_ref[...], h) + b3_ref[...], 0.0)
            logits_t = mm(w4_ref[...], h) + b4_ref[...]                   # (C_pad, bt)
            o_ref[...] = jnp.transpose(logits_t).astype(o_ref.dtype)      # (bt, C_pad)

    return kernel


# ----------------------------------------------------------------------------
# Parameter init (PyTorch-Linear-style uniform) with eval-mode BN folded in
# ----------------------------------------------------------------------------
def init_params(key, dim_in, layer_dims, dim_out, eps=1e-5):
    dims = [dim_in] + list(layer_dims) + [dim_out]
    params = {}
    for i in range(len(dims) - 1):
        key, kw, kb = jax.random.split(key, 3)
        bound = 1.0 / math.sqrt(dims[i])
        w = jax.random.uniform(kw, (dims[i], dims[i + 1]), jnp.float32, -bound, bound)
        b = jax.random.uniform(kb, (1, dims[i + 1]), jnp.float32, -bound, bound)
        if i < len(dims) - 2:
            # BatchNorm1d eval fold: gamma=1, beta=0, running_mean=0, running_var=1
            gamma = jnp.ones((1, dims[i + 1]), jnp.float32)
            beta = jnp.zeros((1, dims[i + 1]), jnp.float32)
            mean = jnp.zeros((1, dims[i + 1]), jnp.float32)
            var = jnp.ones((1, dims[i + 1]), jnp.float32)
            scale = gamma / jnp.sqrt(var + eps)
            w = w * scale
            b = (b - mean) * scale + beta
        params[f"w{i + 1}"] = w
        params[f"b{i + 1}"] = b
    return params


# ----------------------------------------------------------------------------
# Forward wrapper (single pallas_call) and a pure-JAX reference
# ----------------------------------------------------------------------------
def momentnet_forward(x_bdn, exponents, params, *, block_b=64, max_tn=512,
                      mm_dtype=jnp.float32):
    """x_bdn: (B, d, N) float32 points in [-1, 1]; exponents: (M, d) ints (static).

    mm_dtype: set to jnp.bfloat16 on v5e (bf16-native MXU); f32 default keeps the
    numeric check against the f32 reference tight.
    """
    B, d, N = x_bdn.shape
    exponents = np.asarray(exponents)
    M = exponents.shape[0]
    degree = int(exponents.max())
    J = degree + 1
    M_pad = _round_up(M, 128)

    # Static per-coordinate selection matrices: selT[k, m, j] = [exponents[m, k] == j]
    sel_np = np.zeros((d, M_pad, J), np.float32)
    for m in range(M):
        for k in range(d):
            sel_np[k, m, int(exponents[m, k])] = 1.0
    sel = jnp.asarray(sel_np, dtype=mm_dtype)

    # Transpose + zero-pad MLP weights (lane-dense 128 features); biases as columns.
    feat = [M_pad] + [_round_up(params[f"w{i}"].shape[1], 128) for i in (1, 2, 3, 4)]
    wts = []
    for i in range(1, 5):
        w = np.asarray(params[f"w{i}"])
        b = np.asarray(params[f"b{i}"])
        wp = np.zeros((feat[i - 1], feat[i]), np.float32)
        wp[:w.shape[0], :w.shape[1]] = w
        bp = np.zeros((feat[i], 1), np.float32)
        bp[:b.shape[1], 0] = b[0]
        wts.append(jnp.asarray(wp.T, dtype=mm_dtype))      # (out_pad, in_pad)
        wts.append(jnp.asarray(bp, dtype=jnp.float32))     # (out_pad, 1)
    C = params["w4"].shape[1]
    C_pad = feat[4]

    # Batch tiling ("parallel") and point tiling ("arbitrary", accumulator in VMEM).
    block_b = max(8, (min(block_b, _round_up(B, 8)) // 8) * 8)
    B_pad = _round_up(B, block_b)
    if N <= max_tn:
        tn, N_pad = N, N
    else:
        tn = max_tn                       # multiple of 128 (required when tiling N)
        N_pad = _round_up(N, tn)
    # TODO(synk): at production sizes (degree=15, block_b>=64, N>=2048) tune
    #             vmem_limit_bytes / cap block_b for v7x's 64 MiB VMEM.

    x = x_bdn
    if B_pad != B or N_pad != N:
        x = jnp.pad(x, ((0, B_pad - B), (0, 0), (0, N_pad - N)))
    # Mean weights: 1/N for real points, 0 for N-padding (also masks padded points).
    wsum = jnp.zeros((N_pad, 1), jnp.float32).at[:N, 0].set(1.0 / float(N))

    def full_spec(a):
        return pl.BlockSpec(a.shape, lambda i, j, _nd=a.ndim: (0,) * _nd)

    kernel = _make_kernel(d, J, mm_dtype)
    out = pl.pallas_call(
        kernel,
        out_shape=jax.ShapeDtypeStruct((B_pad, C_pad), jnp.float32),
        grid=(B_pad // block_b, N_pad // tn),
        in_specs=[pl.BlockSpec((block_b, d, tn), lambda i, j: (i, 0, j)),
                  pl.BlockSpec((tn, 1), lambda i, j: (j, 0)),
                  full_spec(sel)] + [full_spec(a) for a in wts],
        out_specs=pl.BlockSpec((block_b, C_pad), lambda i, j: (i, 0)),
        scratch_shapes=[pltpu.VMEM((M_pad, block_b), jnp.float32)],
        compiler_params=pltpu.CompilerParams(
            dimension_semantics=("parallel", "arbitrary")),
    )(x, wsum, sel, *wts)
    return out[:B, :C]


def reference_forward(x_bdn, exponents_f32, params):
    x = jnp.transpose(x_bdn, (0, 2, 1))                                  # (B, N, d)
    ch = jnp.cos(exponents_f32[None, None, :, :] * jnp.arccos(x)[:, :, None, :])
    mom = jnp.prod(ch, axis=-1).sum(axis=1) / x.shape[1]                 # (B, M)
    h = mom
    for i in (1, 2, 3):
        h = jnp.maximum(h @ params[f"w{i}"] + params[f"b{i}"], 0.0)
    return h @ params["w4"] + params["b4"]


if __name__ == "__main__":
    # Small shapes consistent with the module: (B, dim_in, N) point cloud.
    B, d, N = 2, 3, 64
    degree = 4
    layer_dims = [64, 32, 32]
    dim_out = 40

    exps = generate_exponents(d, degree)          # (M, d) static int exponents
    M = exps.shape[0]

    key = jax.random.PRNGKey(0)
    key, kx = jax.random.split(key)
    # Points in [-1, 1] (Chebyshev domain).
    x = jax.random.uniform(kx, (B, d, N), jnp.float32, -0.999, 0.999)

    params = init_params(key, M, layer_dims, dim_out)

    out = jax.block_until_ready(momentnet_forward(x, exps, params))
    ref = reference_forward(x, jnp.asarray(exps, jnp.float32), params)

    assert out.shape == (B, dim_out)
    np.testing.assert_allclose(np.asarray(out), np.asarray(ref),
                               rtol=1e-2, atol=1e-2)
    print("KERNEL_OK")
</pallas_src>

<mosaic_0001>
module attributes {stable_mosaic.version = 11 : i64} {
  func.func @kernel(%arg0: i32, %arg1: i32, %arg2: memref<8x3x64xf32, #tpu.memory_space<vmem>>, %arg3: memref<64x1xf32, #tpu.memory_space<vmem>>, %arg4: memref<3x128x5xf32, #tpu.memory_space<vmem>>, %arg5: memref<128x128xf32, #tpu.memory_space<vmem>>, %arg6: memref<128x1xf32, #tpu.memory_space<vmem>>, %arg7: memref<128x128xf32, #tpu.memory_space<vmem>>, %arg8: memref<128x1xf32, #tpu.memory_space<vmem>>, %arg9: memref<128x128xf32, #tpu.memory_space<vmem>>, %arg10: memref<128x1xf32, #tpu.memory_space<vmem>>, %arg11: memref<128x128xf32, #tpu.memory_space<vmem>>, %arg12: memref<128x1xf32, #tpu.memory_space<vmem>>, %arg13: memref<8x128xf32, #tpu.memory_space<vmem>>, %arg14: memref<128x8xf32, #tpu.memory_space<vmem>>) attributes {dimension_semantics = [#tpu.dimension_semantics<parallel>, #tpu.dimension_semantics<arbitrary>], iteration_bounds = array<i64: 1, 1>, scalar_prefetch = 0 : i64, scratch_operands = 1 : i64, tpu.core_type = #tpu.core_type<tc>, window_params = [{transform_indices = @transform_0, window_bounds = array<i64: 8, 3, 64>}, {transform_indices = @transform_1, window_bounds = array<i64: 64, 1>}, {pipeline_mode = #tpu.pipeline_mode<synchronous>, transform_indices = @transform_2, window_bounds = array<i64: 3, 128, 5>}, {pipeline_mode = #tpu.pipeline_mode<synchronous>, transform_indices = @transform_3, window_bounds = array<i64: 128, 128>}, {pipeline_mode = #tpu.pipeline_mode<synchronous>, transform_indices = @transform_4, window_bounds = array<i64: 128, 1>}, {pipeline_mode = #tpu.pipeline_mode<synchronous>, transform_indices = @transform_5, window_bounds = array<i64: 128, 128>}, {pipeline_mode = #tpu.pipeline_mode<synchronous>, transform_indices = @transform_6, window_bounds = array<i64: 128, 1>}, {pipeline_mode = #tpu.pipeline_mode<synchronous>, transform_indices = @transform_7, window_bounds = array<i64: 128, 128>}, {pipeline_mode = #tpu.pipeline_mode<synchronous>, transform_indices = @transform_8, window_bounds = array<i64: 128, 1>}, {pipeline_mode = #tpu.pipeline_mode<synchronous>, transform_indices = @transform_9, window_bounds = array<i64: 128, 128>}, {pipeline_mode = #tpu.pipeline_mode<synchronous>, transform_indices = @transform_10, window_bounds = array<i64: 128, 1>}, {transform_indices = @transform_11, window_bounds = array<i64: 8, 128>}]} {
    %c0_i32 = arith.constant 0 : i32
    %0 = arith.cmpi eq, %arg1, %c0_i32 : i32
    %1 = arith.extui %0 : i1 to i32
    %c0_i32_0 = arith.constant 0 : i32
    %2 = arith.cmpi ne, %1, %c0_i32_0 : i32
    scf.if %2 {
      %cst_76 = arith.constant 0.000000e+00 : f32
      %165 = vector.broadcast %cst_76 : f32 to vector<128x8xf32>
      %c0_77 = arith.constant 0 : index
      %c0_78 = arith.constant 0 : index
      %166 = vector.load %arg14[%c0_77, %c0_78] : memref<128x8xf32, #tpu.memory_space<vmem>>, vector<128x8xf32>
      tpu.vector_store %arg14[%c0_77, %c0_78], %165 {strides = array<i32>} : memref<128x8xf32, #tpu.memory_space<vmem>>, vector<128x8xf32>,
    } else {
    }
    %c0 = arith.constant 0 : index
    %c0_1 = arith.constant 0 : index
    %c0_2 = arith.constant 0 : index
    %3 = vector.load %arg2[%c0, %c0_1, %c0_2] : memref<8x3x64xf32, #tpu.memory_space<vmem>>, vector<8x3x64xf32>
    %cst = arith.constant 1.000000e+00 : f32
    %4 = vector.broadcast %cst : f32 to vector<8x3x64xf32>
    %cst_3 = arith.constant 2.000000e+00 : f32
    %5 = vector.broadcast %cst_3 : f32 to vector<8x3x64xf32>
    %6 = arith.mulf %5, %3 : vector<8x3x64xf32>
    %7 = arith.mulf %6, %3 : vector<8x3x64xf32>
    %8 = arith.subf %7, %4 : vector<8x3x64xf32>
    %cst_4 = arith.constant 2.000000e+00 : f32
    %9 = vector.broadcast %cst_4 : f32 to vector<8x3x64xf32>
    %10 = arith.mulf %9, %3 : vector<8x3x64xf32>
    %11 = arith.mulf %10, %8 : vector<8x3x64xf32>
    %12 = arith.subf %11, %3 : vector<8x3x64xf32>
    %cst_5 = arith.constant 2.000000e+00 : f32
    %13 = vector.broadcast %cst_5 : f32 to vector<8x3x64xf32>
    %14 = arith.mulf %13, %3 : vector<8x3x64xf32>
    %15 = arith.mulf %14, %12 : vector<8x3x64xf32>
    %16 = arith.subf %15, %8 : vector<8x3x64xf32>
    %17 = vector.extract_strided_slice %4 {offsets = [0, 0, 0], sizes = [8, 1, 64], strides = [1, 1, 1]} : vector<8x3x64xf32> to vector<8x1x64xf32>
    %18 = vector.extract_strided_slice %3 {offsets = [0, 0, 0], sizes = [8, 1, 64], strides = [1, 1, 1]} : vector<8x3x64xf32> to vector<8x1x64xf32>
    %19 = vector.extract_strided_slice %8 {offsets = [0, 0, 0], sizes = [8, 1, 64], strides = [1, 1, 1]} : vector<8x3x64xf32> to vector<8x1x64xf32>
    %20 = vector.extract_strided_slice %12 {offsets = [0, 0, 0], sizes = [8, 1, 64], strides = [1, 1, 1]} : vector<8x3x64xf32> to vector<8x1x64xf32>
    %21 = vector.extract_strided_slice %16 {offsets = [0, 0, 0], sizes = [8, 1, 64], strides = [1, 1, 1]} : vector<8x3x64xf32> to vector<8x1x64xf32>
    %22 = tpu.concatenate %17, %18, %19, %20, %21 in 1 : vector<8x1x64xf32>, vector<8x1x64xf32>, vector<8x1x64xf32>, vector<8x1x64xf32>, vector<8x1x64xf32> -> vector<8x5x64xf32>
    %23 = vector.extract_strided_slice %4 {offsets = [0, 1, 0], sizes = [8, 1, 64], strides = [1, 1, 1]} : vector<8x3x64xf32> to vector<8x1x64xf32>
    %24 = vector.extract_strided_slice %3 {offsets = [0, 1, 0], sizes = [8, 1, 64], strides = [1, 1, 1]} : vector<8x3x64xf32> to vector<8x1x64xf32>
    %25 = vector.extract_strided_slice %8 {offsets = [0, 1, 0], sizes = [8, 1, 64], strides = [1, 1, 1]} : vector<8x3x64xf32> to vector<8x1x64xf32>
    %26 = vector.extract_strided_slice %12 {offsets = [0, 1, 0], sizes = [8, 1, 64], strides = [1, 1, 1]} : vector<8x3x64xf32> to vector<8x1x64xf32>
    %27 = vector.extract_strided_slice %16 {offsets = [0, 1, 0], sizes = [8, 1, 64], strides = [1, 1, 1]} : vector<8x3x64xf32> to vector<8x1x64xf32>
    %28 = tpu.concatenate %23, %24, %25, %26, %27 in 1 : vector<8x1x64xf32>, vector<8x1x64xf32>, vector<8x1x64xf32>, vector<8x1x64xf32>, vector<8x1x64xf32> -> vector<8x5x64xf32>
    %29 = vector.extract_strided_slice %4 {offsets = [0, 2, 0], sizes = [8, 1, 64], strides = [1, 1, 1]} : vector<8x3x64xf32> to vector<8x1x64xf32>
    %30 = vector.extract_strided_slice %3 {offsets = [0, 2, 0], sizes = [8, 1, 64], strides = [1, 1, 1]} : vector<8x3x64xf32> to vector<8x1x64xf32>
    %31 = vector.extract_strided_slice %8 {offsets = [0, 2, 0], sizes = [8, 1, 64], strides = [1, 1, 1]} : vector<8x3x64xf32> to vector<8x1x64xf32>
    %32 = vector.extract_strided_slice %12 {offsets = [0, 2, 0], sizes = [8, 1, 64], strides = [1, 1, 1]} : vector<8x3x64xf32> to vector<8x1x64xf32>
    %33 = vector.extract_strided_slice %16 {offsets = [0, 2, 0], sizes = [8, 1, 64], strides = [1, 1, 1]} : vector<8x3x64xf32> to vector<8x1x64xf32>
    %34 = tpu.concatenate %29, %30, %31, %32, %33 in 1 : vector<8x1x64xf32>, vector<8x1x64xf32>, vector<8x1x64xf32>, vector<8x1x64xf32>, vector<8x1x64xf32> -> vector<8x5x64xf32>
    %c0_6 = arith.constant 0 : index
    %c0_7 = arith.constant 0 : index
    %c0_8 = arith.constant 0 : index
    %35 = vector.load %arg4[%c0_6, %c0_7, %c0_8] : memref<3x128x5xf32, #tpu.memory_space<vmem>>, vector<1x128x5xf32>
    %36 = vector.shape_cast %35 : vector<1x128x5xf32> to vector<128x5xf32>
    %c1 = arith.constant 1 : index
    %c0_9 = arith.constant 0 : index
    %c0_10 = arith.constant 0 : index
    %37 = vector.load %arg4[%c1, %c0_9, %c0_10] : memref<3x128x5xf32, #tpu.memory_space<vmem>>, vector<1x128x5xf32>
    %38 = vector.shape_cast %37 : vector<1x128x5xf32> to vector<128x5xf32>
    %c2 = arith.constant 2 : index
    %c0_11 = arith.constant 0 : index
    %c0_12 = arith.constant 0 : index
    %39 = vector.load %arg4[%c2, %c0_11, %c0_12] : memref<3x128x5xf32, #tpu.memory_space<vmem>>, vector<1x128x5xf32>
    %40 = vector.shape_cast %39 : vector<1x128x5xf32> to vector<128x5xf32>
    %c0_13 = arith.constant 0 : index
    %c0_14 = arith.constant 0 : index
    %41 = vector.load %arg3[%c0_13, %c0_14] : memref<64x1xf32, #tpu.memory_space<vmem>>, vector<64x1xf32>
    %42 = vector.extract_strided_slice %22 {offsets = [0, 0, 0], sizes = [1, 5, 64], strides = [1, 1, 1]} : vector<8x5x64xf32> to vector<1x5x64xf32>
    %43 = vector.shape_cast %42 : vector<1x5x64xf32> to vector<5x64xf32>
    %cst_15 = arith.constant dense<0.000000e+00> : vector<128x64xf32>
    %44 = tpu.matmul %36, %43, %cst_15 {dimension_numbers = #tpu.dot_dimension_numbers<[1], [0], [0], [1], [0, 0, 1, 1], [], []>} : vector<128x5xf32>, vector<5x64xf32>, vector<128x64xf32> -> vector<128x64xf32>
    %45 = vector.extract_strided_slice %28 {offsets = [0, 0, 0], sizes = [1, 5, 64], strides = [1, 1, 1]} : vector<8x5x64xf32> to vector<1x5x64xf32>
    %46 = vector.shape_cast %45 : vector<1x5x64xf32> to vector<5x64xf32>
    %cst_16 = arith.constant dense<0.000000e+00> : vector<128x64xf32>
    %47 = tpu.matmul %38, %46, %cst_16 {dimension_numbers = #tpu.dot_dimension_numbers<[1], [0], [0], [1], [0, 0, 1, 1], [], []>} : vector<128x5xf32>, vector<5x64xf32>, vector<128x64xf32> -> vector<128x64xf32>
    %48 = arith.mulf %44, %47 : vector<128x64xf32>
    %49 = vector.extract_strided_slice %34 {offsets = [0, 0, 0], sizes = [1, 5, 64], strides = [1, 1, 1]} : vector<8x5x64xf32> to vector<1x5x64xf32>
    %50 = vector.shape_cast %49 : vector<1x5x64xf32> to vector<5x64xf32>
    %cst_17 = arith.constant dense<0.000000e+00> : vector<128x64xf32>
    %51 = tpu.matmul %40, %50, %cst_17 {dimension_numbers = #tpu.dot_dimension_numbers<[1], [0], [0], [1], [0, 0, 1, 1], [], []>} : vector<128x5xf32>, vector<5x64xf32>, vector<128x64xf32> -> vector<128x64xf32>
    %52 = arith.mulf %48, %51 : vector<128x64xf32>
    %c0_18 = arith.constant 0 : index
    %c0_19 = arith.constant 0 : index
    %53 = vector.load %arg14[%c0_18, %c0_19] : memref<128x8xf32, #tpu.memory_space<vmem>>, vector<128x1xf32>
    %cst_20 = arith.constant dense<0.000000e+00> : vector<128x1xf32>
    %54 = tpu.matmul %52, %41, %cst_20 {dimension_numbers = #tpu.dot_dimension_numbers<[1], [0], [0], [1], [0, 0, 1, 1], [], []>} : vector<128x64xf32>, vector<64x1xf32>, vector<128x1xf32> -> vector<128x1xf32>
    %55 = arith.addf %53, %54 : vector<128x1xf32>
    %c0_21 = arith.constant 0 : index
    %c0_22 = arith.constant 0 : index
    %56 = vector.load %arg14[%c0_21, %c0_22] : memref<128x8xf32, #tpu.memory_space<vmem>>, vector<128x1xf32>
    tpu.vector_store %arg14[%c0_21, %c0_22], %55 {strides = array<i32>} : memref<128x8xf32, #tpu.memory_space<vmem>>, vector<128x1xf32>,
    %57 = vector.extract_strided_slice %22 {offsets = [1, 0, 0], sizes = [1, 5, 64], strides = [1, 1, 1]} : vector<8x5x64xf32> to vector<1x5x64xf32>
    %58 = vector.shape_cast %57 : vector<1x5x64xf32> to vector<5x64xf32>
    %cst_23 = arith.constant dense<0.000000e+00> : vector<128x64xf32>
    %59 = tpu.matmul %36, %58, %cst_23 {dimension_numbers = #tpu.dot_dimension_numbers<[1], [0], [0], [1], [0, 0, 1, 1], [], []>} : vector<128x5xf32>, vector<5x64xf32>, vector<128x64xf32> -> vector<128x64xf32>
    %60 = vector.extract_strided_slice %28 {offsets = [1, 0, 0], sizes = [1, 5, 64], strides = [1, 1, 1]} : vector<8x5x64xf32> to vector<1x5x64xf32>
    %61 = vector.shape_cast %60 : vector<1x5x64xf32> to vector<5x64xf32>
    %cst_24 = arith.constant dense<0.000000e+00> : vector<128x64xf32>
    %62 = tpu.matmul %38, %61, %cst_24 {dimension_numbers = #tpu.dot_dimension_numbers<[1], [0], [0], [1], [0, 0, 1, 1], [], []>} : vector<128x5xf32>, vector<5x64xf32>, vector<128x64xf32> -> vector<128x64xf32>
    %63 = arith.mulf %59, %62 : vector<128x64xf32>
    %64 = vector.extract_strided_slice %34 {offsets = [1, 0, 0], sizes = [1, 5, 64], strides = [1, 1, 1]} : vector<8x5x64xf32> to vector<1x5x64xf32>
    %65 = vector.shape_cast %64 : vector<1x5x64xf32> to vector<5x64xf32>
    %cst_25 = arith.constant dense<0.000000e+00> : vector<128x64xf32>
    %66 = tpu.matmul %40, %65, %cst_25 {dimension_numbers = #tpu.dot_dimension_numbers<[1], [0], [0], [1], [0, 0, 1, 1], [], []>} : vector<128x5xf32>, vector<5x64xf32>, vector<128x64xf32> -> vector<128x64xf32>
    %67 = arith.mulf %63, %66 : vector<128x64xf32>
    %c0_26 = arith.constant 0 : index
    %c1_27 = arith.constant 1 : index
    %68 = vector.load %arg14[%c0_26, %c1_27] : memref<128x8xf32, #tpu.memory_space<vmem>>, vector<128x1xf32>
    %cst_28 = arith.constant dense<0.000000e+00> : vector<128x1xf32>
    %69 = tpu.matmul %67, %41, %cst_28 {dimension_numbers = #tpu.dot_dimension_numbers<[1], [0], [0], [1], [0, 0, 1, 1], [], []>} : vector<128x64xf32>, vector<64x1xf32>, vector<128x1xf32> -> vector<128x1xf32>
    %70 = arith.addf %68, %69 : vector<128x1xf32>
    %c0_29 = arith.constant 0 : index
    %c1_30 = arith.constant 1 : index
    %71 = vector.load %arg14[%c0_29, %c1_30] : memref<128x8xf32, #tpu.memory_space<vmem>>, vector<128x1xf32>
    tpu.vector_store %arg14[%c0_29, %c1_30], %70 {strides = array<i32>} : memref<128x8xf32, #tpu.memory_space<vmem>>, vector<128x1xf32>,
    %72 = vector.extract_strided_slice %22 {offsets = [2, 0, 0], sizes = [1, 5, 64], strides = [1, 1, 1]} : vector<8x5x64xf32> to vector<1x5x64xf32>
    %73 = vector.shape_cast %72 : vector<1x5x64xf32> to vector<5x64xf32>
    %cst_31 = arith.constant dense<0.000000e+00> : vector<128x64xf32>
    %74 = tpu.matmul %36, %73, %cst_31 {dimension_numbers = #tpu.dot_dimension_numbers<[1], [0], [0], [1], [0, 0, 1, 1], [], []>} : vector<128x5xf32>, vector<5x64xf32>, vector<128x64xf32> -> vector<128x64xf32>
    %75 = vector.extract_strided_slice %28 {offsets = [2, 0, 0], sizes = [1, 5, 64], strides = [1, 1, 1]} : vector<8x5x64xf32> to vector<1x5x64xf32>
    %76 = vector.shape_cast %75 : vector<1x5x64xf32> to vector<5x64xf32>
    %cst_32 = arith.constant dense<0.000000e+00> : vector<128x64xf32>
    %77 = tpu.matmul %38, %76, %cst_32 {dimension_numbers = #tpu.dot_dimension_numbers<[1], [0], [0], [1], [0, 0, 1, 1], [], []>} : vector<128x5xf32>, vector<5x64xf32>, vector<128x64xf32> -> vector<128x64xf32>
    %78 = arith.mulf %74, %77 : vector<128x64xf32>
    %79 = vector.extract_strided_slice %34 {offsets = [2, 0, 0], sizes = [1, 5, 64], strides = [1, 1, 1]} : vector<8x5x64xf32> to vector<1x5x64xf32>
    %80 = vector.shape_cast %79 : vector<1x5x64xf32> to vector<5x64xf32>
    %cst_33 = arith.constant dense<0.000000e+00> : vector<128x64xf32>
    %81 = tpu.matmul %40, %80, %cst_33 {dimension_numbers = #tpu.dot_dimension_numbers<[1], [0], [0], [1], [0, 0, 1, 1], [], []>} : vector<128x5xf32>, vector<5x64xf32>, vector<128x64xf32> -> vector<128x64xf32>
    %82 = arith.mulf %78, %81 : vector<128x64xf32>
    %c0_34 = arith.constant 0 : index
    %c2_35 = arith.constant 2 : index
    %83 = vector.load %arg14[%c0_34, %c2_35] : memref<128x8xf32, #tpu.memory_space<vmem>>, vector<128x1xf32>
    %cst_36 = arith.constant dense<0.000000e+00> : vector<128x1xf32>
    %84 = tpu.matmul %82, %41, %cst_36 {dimension_numbers = #tpu.dot_dimension_numbers<[1], [0], [0], [1], [0, 0, 1, 1], [], []>} : vector<128x64xf32>, vector<64x1xf32>, vector<128x1xf32> -> vector<128x1xf32>
    %85 = arith.addf %83, %84 : vector<128x1xf32>
    %c0_37 = arith.constant 0 : index
    %c2_38 = arith.constant 2 : index
    %86 = vector.load %arg14[%c0_37, %c2_38] : memref<128x8xf32, #tpu.memory_space<vmem>>, vector<128x1xf32>
    tpu.vector_store %arg14[%c0_37, %c2_38], %85 {strides = array<i32>} : memref<128x8xf32, #tpu.memory_space<vmem>>, vector<128x1xf32>,
    %87 = vector.extract_strided_slice %22 {offsets = [3, 0, 0], sizes = [1, 5, 64], strides = [1, 1, 1]} : vector<8x5x64xf32> to vector<1x5x64xf32>
    %88 = vector.shape_cast %87 : vector<1x5x64xf32> to vector<5x64xf32>
    %cst_39 = arith.constant dense<0.000000e+00> : vector<128x64xf32>
    %89 = tpu.matmul %36, %88, %cst_39 {dimension_numbers = #tpu.dot_dimension_numbers<[1], [0], [0], [1], [0, 0, 1, 1], [], []>} : vector<128x5xf32>, vector<5x64xf32>, vector<128x64xf32> -> vector<128x64xf32>
    %90 = vector.extract_strided_slice %28 {offsets = [3, 0, 0], sizes = [1, 5, 64], strides = [1, 1, 1]} : vector<8x5x64xf32> to vector<1x5x64xf32>
    %91 = vector.shape_cast %90 : vector<1x5x64xf32> to vector<5x64xf32>
    %cst_40 = arith.constant dense<0.000000e+00> : vector<128x64xf32>
    %92 = tpu.matmul %38, %91, %cst_40 {dimension_numbers = #tpu.dot_dimension_numbers<[1], [0], [0], [1], [0, 0, 1, 1], [], []>} : vector<128x5xf32>, vector<5x64xf32>, vector<128x64xf32> -> vector<128x64xf32>
    %93 = arith.mulf %89, %92 : vector<128x64xf32>
    %94 = vector.extract_strided_slice %34 {offsets = [3, 0, 0], sizes = [1, 5, 64], strides = [1, 1, 1]} : vector<8x5x64xf32> to vector<1x5x64xf32>
    %95 = vector.shape_cast %94 : vector<1x5x64xf32> to vector<5x64xf32>
    %cst_41 = arith.constant dense<0.000000e+00> : vector<128x64xf32>
    %96 = tpu.matmul %40, %95, %cst_41 {dimension_numbers = #tpu.dot_dimension_numbers<[1], [0], [0], [1], [0, 0, 1, 1], [], []>} : vector<128x5xf32>, vector<5x64xf32>, vector<128x64xf32> -> vector<128x64xf32>
    %97 = arith.mulf %93, %96 : vector<128x64xf32>
    %c0_42 = arith.constant 0 : index
    %c3 = arith.constant 3 : index
    %98 = vector.load %arg14[%c0_42, %c3] : memref<128x8xf32, #tpu.memory_space<vmem>>, vector<128x1xf32>
    %cst_43 = arith.constant dense<0.000000e+00> : vector<128x1xf32>
    %99 = tpu.matmul %97, %41, %cst_43 {dimension_numbers = #tpu.dot_dimension_numbers<[1], [0], [0], [1], [0, 0, 1, 1], [], []>} : vector<128x64xf32>, vector<64x1xf32>, vector<128x1xf32> -> vector<128x1xf32>
    %100 = arith.addf %98, %99 : vector<128x1xf32>
    %c0_44 = arith.constant 0 : index
    %c3_45 = arith.constant 3 : index
    %101 = vector.load %arg14[%c0_44, %c3_45] : memref<128x8xf32, #tpu.memory_space<vmem>>, vector<128x1xf32>
    tpu.vector_store %arg14[%c0_44, %c3_45], %100 {strides = array<i32>} : memref<128x8xf32, #tpu.memory_space<vmem>>, vector<128x1xf32>,
    %102 = vector.extract_strided_slice %22 {offsets = [4, 0, 0], sizes = [1, 5, 64], strides = [1, 1, 1]} : vector<8x5x64xf32> to vector<1x5x64xf32>
    %103 = vector.shape_cast %102 : vector<1x5x64xf32> to vector<5x64xf32>
    %cst_46 = arith.constant dense<0.000000e+00> : vector<128x64xf32>
    %104 = tpu.matmul %36, %103, %cst_46 {dimension_numbers = #tpu.dot_dimension_numbers<[1], [0], [0], [1], [0, 0, 1, 1], [], []>} : vector<128x5xf32>, vector<5x64xf32>, vector<128x64xf32> -> vector<128x64xf32>
    %105 = vector.extract_strided_slice %28 {offsets = [4, 0, 0], sizes = [1, 5, 64], strides = [1, 1, 1]} : vector<8x5x64xf32> to vector<1x5x64xf32>
    %106 = vector.shape_cast %105 : vector<1x5x64xf32> to vector<5x64xf32>
    %cst_47 = arith.constant dense<0.000000e+00> : vector<128x64xf32>
    %107 = tpu.matmul %38, %106, %cst_47 {dimension_numbers = #tpu.dot_dimension_numbers<[1], [0], [0], [1], [0, 0, 1, 1], [], []>} : vector<128x5xf32>, vector<5x64xf32>, vector<128x64xf32> -> vector<128x64xf32>
    %108 = arith.mulf %104, %107 : vector<128x64xf32>
    %109 = vector.extract_strided_slice %34 {offsets = [4, 0, 0], sizes = [1, 5, 64], strides = [1, 1, 1]} : vector<8x5x64xf32> to vector<1x5x64xf32>
    %110 = vector.shape_cast %109 : vector<1x5x64xf32> to vector<5x64xf32>
    %cst_48 = arith.constant dense<0.000000e+00> : vector<128x64xf32>
    %111 = tpu.matmul %40, %110, %cst_48 {dimension_numbers = #tpu.dot_dimension_numbers<[1], [0], [0], [1], [0, 0, 1, 1], [], []>} : vector<128x5xf32>, vector<5x64xf32>, vector<128x64xf32> -> vector<128x64xf32>
    %112 = arith.mulf %108, %111 : vector<128x64xf32>
    %c0_49 = arith.constant 0 : index
    %c4 = arith.constant 4 : index
    %113 = vector.load %arg14[%c0_49, %c4] : memref<128x8xf32, #tpu.memory_space<vmem>>, vector<128x1xf32>
    %cst_50 = arith.constant dense<0.000000e+00> : vector<128x1xf32>
    %114 = tpu.matmul %112, %41, %cst_50 {dimension_numbers = #tpu.dot_dimension_numbers<[1], [0], [0], [1], [0, 0, 1, 1], [], []>} : vector<128x64xf32>, vector<64x1xf32>, vector<128x1xf32> -> vector<128x1xf32>
    %115 = arith.addf %113, %114 : vector<128x1xf32>
    %c0_51 = arith.constant 0 : index
    %c4_52 = arith.constant 4 : index
    %116 = vector.load %arg14[%c0_51, %c4_52] : memref<128x8xf32, #tpu.memory_space<vmem>>, vector<128x1xf32>
    tpu.vector_store %arg14[%c0_51, %c4_52], %115 {strides = array<i32>} : memref<128x8xf32, #tpu.memory_space<vmem>>, vector<128x1xf32>,
    %117 = vector.extract_strided_slice %22 {offsets = [5, 0, 0], sizes = [1, 5, 64], strides = [1, 1, 1]} : vector<8x5x64xf32> to vector<1x5x64xf32>
    %118 = vector.shape_cast %117 : vector<1x5x64xf32> to vector<5x64xf32>
    %cst_53 = arith.constant dense<0.000000e+00> : vector<128x64xf32>
    %119 = tpu.matmul %36, %118, %cst_53 {dimension_numbers = #tpu.dot_dimension_numbers<[1], [0], [0], [1], [0, 0, 1, 1], [], []>} : vector<128x5xf32>, vector<5x64xf32>, vector<128x64xf32> -> vector<128x64xf32>
    %120 = vector.extract_strided_slice %28 {offsets = [5, 0, 0], sizes = [1, 5, 64], strides = [1, 1, 1]} : vector<8x5x64xf32> to vector<1x5x64xf32>
    %121 = vector.shape_cast %120 : vector<1x5x64xf32> to vector<5x64xf32>
    %cst_54 = arith.constant dense<0.000000e+00> : vector<128x64xf32>
    %122 = tpu.matmul %38, %121, %cst_54 {dimension_numbers = #tpu.dot_dimension_numbers<[1], [0], [0], [1], [0, 0, 1, 1], [], []>} : vector<128x5xf32>, vector<5x64xf32>, vector<128x64xf32> -> vector<128x64xf32>
    %123 = arith.mulf %119, %122 : vector<128x64xf32>
    %124 = vector.extract_strided_slice %34 {offsets = [5, 0, 0], sizes = [1, 5, 64], strides = [1, 1, 1]} : vector<8x5x64xf32> to vector<1x5x64xf32>
    %125 = vector.shape_cast %124 : vector<1x5x64xf32> to vector<5x64xf32>
    %cst_55 = arith.constant dense<0.000000e+00> : vector<128x64xf32>
    %126 = tpu.matmul %40, %125, %cst_55 {dimension_numbers = #tpu.dot_dimension_numbers<[1], [0], [0], [1], [0, 0, 1, 1], [], []>} : vector<128x5xf32>, vector<5x64xf32>, vector<128x64xf32> -> vector<128x64xf32>
    %127 = arith.mulf %123, %126 : vector<128x64xf32>
    %c0_56 = arith.constant 0 : index
    %c5 = arith.constant 5 : index
    %128 = vector.load %arg14[%c0_56, %c5] : memref<128x8xf32, #tpu.memory_space<vmem>>, vector<128x1xf32>
    %cst_57 = arith.constant dense<0.000000e+00> : vector<128x1xf32>
    %129 = tpu.matmul %127, %41, %cst_57 {dimension_numbers = #tpu.dot_dimension_numbers<[1], [0], [0], [1], [0, 0, 1, 1], [], []>} : vector<128x64xf32>, vector<64x1xf32>, vector<128x1xf32> -> vector<128x1xf32>
    %130 = arith.addf %128, %129 : vector<128x1xf32>
    %c0_58 = arith.constant 0 : index
    %c5_59 = arith.constant 5 : index
    %131 = vector.load %arg14[%c0_58, %c5_59] : memref<128x8xf32, #tpu.memory_space<vmem>>, vector<128x1xf32>
    tpu.vector_store %arg14[%c0_58, %c5_59], %130 {strides = array<i32>} : memref<128x8xf32, #tpu.memory_space<vmem>>, vector<128x1xf32>,
    %132 = vector.extract_strided_slice %22 {offsets = [6, 0, 0], sizes = [1, 5, 64], strides = [1, 1, 1]} : vector<8x5x64xf32> to vector<1x5x64xf32>
    %133 = vector.shape_cast %132 : vector<1x5x64xf32> to vector<5x64xf32>
    %cst_60 = arith.constant dense<0.000000e+00> : vector<128x64xf32>
    %134 = tpu.matmul %36, %133, %cst_60 {dimension_numbers = #tpu.dot_dimension_numbers<[1], [0], [0], [1], [0, 0, 1, 1], [], []>} : vector<128x5xf32>, vector<5x64xf32>, vector<128x64xf32> -> vector<128x64xf32>
    %135 = vector.extract_strided_slice %28 {offsets = [6, 0, 0], sizes = [1, 5, 64], strides = [1, 1, 1]} : vector<8x5x64xf32> to vector<1x5x64xf32>
    %136 = vector.shape_cast %135 : vector<1x5x64xf32> to vector<5x64xf32>
    %cst_61 = arith.constant dense<0.000000e+00> : vector<128x64xf32>
    %137 = tpu.matmul %38, %136, %cst_61 {dimension_numbers = #tpu.dot_dimension_numbers<[1], [0], [0], [1], [0, 0, 1, 1], [], []>} : vector<128x5xf32>, vector<5x64xf32>, vector<128x64xf32> -> vector<128x64xf32>
    %138 = arith.mulf %134, %137 : vector<128x64xf32>
    %139 = vector.extract_strided_slice %34 {offsets = [6, 0, 0], sizes = [1, 5, 64], strides = [1, 1, 1]} : vector<8x5x64xf32> to vector<1x5x64xf32>
    %140 = vector.shape_cast %139 : vector<1x5x64xf32> to vector<5x64xf32>
    %cst_62 = arith.constant dense<0.000000e+00> : vector<128x64xf32>
    %141 = tpu.matmul %40, %140, %cst_62 {dimension_numbers = #tpu.dot_dimension_numbers<[1], [0], [0], [1], [0, 0, 1, 1], [], []>} : vector<128x5xf32>, vector<5x64xf32>, vector<128x64xf32> -> vector<128x64xf32>
    %142 = arith.mulf %138, %141 : vector<128x64xf32>
    %c0_63 = arith.constant 0 : index
    %c6 = arith.constant 6 : index
    %143 = vector.load %arg14[%c0_63, %c6] : memref<128x8xf32, #tpu.memory_space<vmem>>, vector<128x1xf32>
    %cst_64 = arith.constant dense<0.000000e+00> : vector<128x1xf32>
    %144 = tpu.matmul %142, %41, %cst_64 {dimension_numbers = #tpu.dot_dimension_numbers<[1], [0], [0], [1], [0, 0, 1, 1], [], []>} : vector<128x64xf32>, vector<64x1xf32>, vector<128x1xf32> -> vector<128x1xf32>
    %145 = arith.addf %143, %144 : vector<128x1xf32>
    %c0_65 = arith.constant 0 : index
    %c6_66 = arith.constant 6 : index
    %146 = vector.load %arg14[%c0_65, %c6_66] : memref<128x8xf32, #tpu.memory_space<vmem>>, vector<128x1xf32>
    tpu.vector_store %arg14[%c0_65, %c6_66], %145 {strides = array<i32>} : memref<128x8xf32, #tpu.memory_space<vmem>>, vector<128x1xf32>,
    %147 = vector.extract_strided_slice %22 {offsets = [7, 0, 0], sizes = [1, 5, 64], strides = [1, 1, 1]} : vector<8x5x64xf32> to vector<1x5x64xf32>
    %148 = vector.shape_cast %147 : vector<1x5x64xf32> to vector<5x64xf32>
    %cst_67 = arith.constant dense<0.000000e+00> : vector<128x64xf32>
    %149 = tpu.matmul %36, %148, %cst_67 {dimension_numbers = #tpu.dot_dimension_numbers<[1], [0], [0], [1], [0, 0, 1, 1], [], []>} : vector<128x5xf32>, vector<5x64xf32>, vector<128x64xf32> -> vector<128x64xf32>
    %150 = vector.extract_strided_slice %28 {offsets = [7, 0, 0], sizes = [1, 5, 64], strides = [1, 1, 1]} : vector<8x5x64xf32> to vector<1x5x64xf32>
    %151 = vector.shape_cast %150 : vector<1x5x64xf32> to vector<5x64xf32>
    %cst_68 = arith.constant dense<0.000000e+00> : vector<128x64xf32>
    %152 = tpu.matmul %38, %151, %cst_68 {dimension_numbers = #tpu.dot_dimension_numbers<[1], [0], [0], [1], [0, 0, 1, 1], [], []>} : vector<128x5xf32>, vector<5x64xf32>, vector<128x64xf32> -> vector<128x64xf32>
    %153 = arith.mulf %149, %152 : vector<128x64xf32>
    %154 = vector.extract_strided_slice %34 {offsets = [7, 0, 0], sizes = [1, 5, 64], strides = [1, 1, 1]} : vector<8x5x64xf32> to vector<1x5x64xf32>
    %155 = vector.shape_cast %154 : vector<1x5x64xf32> to vector<5x64xf32>
    %cst_69 = arith.constant dense<0.000000e+00> : vector<128x64xf32>
    %156 = tpu.matmul %40, %155, %cst_69 {dimension_numbers = #tpu.dot_dimension_numbers<[1], [0], [0], [1], [0, 0, 1, 1], [], []>} : vector<128x5xf32>, vector<5x64xf32>, vector<128x64xf32> -> vector<128x64xf32>
    %157 = arith.mulf %153, %156 : vector<128x64xf32>
    %c0_70 = arith.constant 0 : index
    %c7 = arith.constant 7 : index
    %158 = vector.load %arg14[%c0_70, %c7] : memref<128x8xf32, #tpu.memory_space<vmem>>, vector<128x1xf32>
    %cst_71 = arith.constant dense<0.000000e+00> : vector<128x1xf32>
    %159 = tpu.matmul %157, %41, %cst_71 {dimension_numbers = #tpu.dot_dimension_numbers<[1], [0], [0], [1], [0, 0, 1, 1], [], []>} : vector<128x64xf32>, vector<64x1xf32>, vector<128x1xf32> -> vector<128x1xf32>
    %160 = arith.addf %158, %159 : vector<128x1xf32>
    %c0_72 = arith.constant 0 : index
    %c7_73 = arith.constant 7 : index
    %161 = vector.load %arg14[%c0_72, %c7_73] : memref<128x8xf32, #tpu.memory_space<vmem>>, vector<128x1xf32>
    tpu.vector_store %arg14[%c0_72, %c7_73], %160 {strides = array<i32>} : memref<128x8xf32, #tpu.memory_space<vmem>>, vector<128x1xf32>,
    %c0_i32_74 = arith.constant 0 : i32
    %162 = arith.cmpi eq, %arg1, %c0_i32_74 : i32
    %163 = arith.extui %162 : i1 to i32
    %c0_i32_75 = arith.constant 0 : i32
    %164 = arith.cmpi ne, %163, %c0_i32_75 : i32
    scf.if %164 {
      %c0_76 = arith.constant 0 : index
      %c0_77 = arith.constant 0 : index
      %165 = vector.load %arg14[%c0_76, %c0_77] : memref<128x8xf32, #tpu.memory_space<vmem>>, vector<128x8xf32>
      %c0_78 = arith.constant 0 : index
      %c0_79 = arith.constant 0 : index
      %166 = vector.load %arg5[%c0_78, %c0_79] : memref<128x128xf32, #tpu.memory_space<vmem>>, vector<128x128xf32>
      %cst_80 = arith.constant dense<0.000000e+00> : vector<128x8xf32>
      %167 = tpu.matmul %166, %165, %cst_80 {dimension_numbers = #tpu.dot_dimension_numbers<[1], [0], [0], [1], [0, 0, 1, 1], [], []>} : vector<128x128xf32>, vector<128x8xf32>, vector<128x8xf32> -> vector<128x8xf32>
      %c0_81 = arith.constant 0 : index
      %c0_82 = arith.constant 0 : index
      %168 = vector.load %arg6[%c0_81, %c0_82] : memref<128x1xf32, #tpu.memory_space<vmem>>, vector<128x1xf32>
      %169 = vector.broadcast %168 : vector<128x1xf32> to vector<128x8xf32>
      %170 = arith.addf %167, %169 : vector<128x8xf32>
      %cst_83 = arith.constant 0.000000e+00 : f32
      %171 = vector.broadcast %cst_83 : f32 to vector<128x8xf32>
      %172 = arith.maximumf %170, %171 : vector<128x8xf32>
      %c0_84 = arith.constant 0 : index
      %c0_85 = arith.constant 0 : index
      %173 = vector.load %arg7[%c0_84, %c0_85] : memref<128x128xf32, #tpu.memory_space<vmem>>, vector<128x128xf32>
      %cst_86 = arith.constant dense<0.000000e+00> : vector<128x8xf32>
      %174 = tpu.matmul %173, %172, %cst_86 {dimension_numbers = #tpu.dot_dimension_numbers<[1], [0], [0], [1], [0, 0, 1, 1], [], []>} : vector<128x128xf32>, vector<128x8xf32>, vector<128x8xf32> -> vector<128x8xf32>
      %c0_87 = arith.constant 0 : index
      %c0_88 = arith.constant 0 : index
      %175 = vector.load %arg8[%c0_87, %c0_88] : memref<128x1xf32, #tpu.memory_space<vmem>>, vector<128x1xf32>
      %176 = vector.broadcast %175 : vector<128x1xf32> to vector<128x8xf32>
      %177 = arith.addf %174, %176 : vector<128x8xf32>
      %cst_89 = arith.constant 0.000000e+00 : f32
      %178 = vector.broadcast %cst_89 : f32 to vector<128x8xf32>
      %179 = arith.maximumf %177, %178 : vector<128x8xf32>
      %c0_90 = arith.constant 0 : index
      %c0_91 = arith.constant 0 : index
      %180 = vector.load %arg9[%c0_90, %c0_91] : memref<128x128xf32, #tpu.memory_space<vmem>>, vector<128x128xf32>
      %cst_92 = arith.constant dense<0.000000e+00> : vector<128x8xf32>
      %181 = tpu.matmul %180, %179, %cst_92 {dimension_numbers = #tpu.dot_dimension_numbers<[1], [0], [0], [1], [0, 0, 1, 1], [], []>} : vector<128x128xf32>, vector<128x8xf32>, vector<128x8xf32> -> vector<128x8xf32>
      %c0_93 = arith.constant 0 : index
      %c0_94 = arith.constant 0 : index
      %182 = vector.load %arg10[%c0_93, %c0_94] : memref<128x1xf32, #tpu.memory_space<vmem>>, vector<128x1xf32>
      %183 = vector.broadcast %182 : vector<128x1xf32> to vector<128x8xf32>
      %184 = arith.addf %181, %183 : vector<128x8xf32>
      %cst_95 = arith.constant 0.000000e+00 : f32
      %185 = vector.broadcast %cst_95 : f32 to vector<128x8xf32>
      %186 = arith.maximumf %184, %185 : vector<128x8xf32>
      %c0_96 = arith.constant 0 : index
      %c0_97 = arith.constant 0 : index
      %187 = vector.load %arg11[%c0_96, %c0_97] : memref<128x128xf32, #tpu.memory_space<vmem>>, vector<128x128xf32>
      %cst_98 = arith.constant dense<0.000000e+00> : vector<128x8xf32>
      %188 = tpu.matmul %187, %186, %cst_98 {dimension_numbers = #tpu.dot_dimension_numbers<[1], [0], [0], [1], [0, 0, 1, 1], [], []>} : vector<128x128xf32>, vector<128x8xf32>, vector<128x8xf32> -> vector<128x8xf32>
      %c0_99 = arith.constant 0 : index
      %c0_100 = arith.constant 0 : index
      %189 = vector.load %arg12[%c0_99, %c0_100] : memref<128x1xf32, #tpu.memory_space<vmem>>, vector<128x1xf32>
      %190 = vector.broadcast %189 : vector<128x1xf32> to vector<128x8xf32>
      %191 = arith.addf %188, %190 : vector<128x8xf32>
      %192 = tpu.transpose %191, [1, 0] : vector<128x8xf32> -> vector<8x128xf32>
      %c0_101 = arith.constant 0 : index
      %c0_102 = arith.constant 0 : index
      %193 = vector.load %arg13[%c0_101, %c0_102] : memref<8x128xf32, #tpu.memory_space<vmem>>, vector<8x128xf32>
      tpu.vector_store %arg13[%c0_101, %c0_102], %192 {strides = array<i32>} : memref<8x128xf32, #tpu.memory_space<vmem>>, vector<8x128xf32>,
    } else {
    }
    return
  }
  func.func @transform_0(%arg0: i32, %arg1: i32) -> (i32, i32, i32) {
    %c0_i32 = arith.constant 0 : i32
    %c0_i32_0 = arith.constant 0 : i32
    return %arg0, %c0_i32, %arg1 : i32, i32, i32
  }
  func.func @transform_1(%arg0: i32, %arg1: i32) -> (i32, i32) {
    %c0_i32 = arith.constant 0 : i32
    %c0_i32_0 = arith.constant 0 : i32
    return %arg1, %c0_i32 : i32, i32
  }
  func.func @transform_2(%arg0: i32, %arg1: i32) -> (i32, i32, i32) {
    %c0_i32 = arith.constant 0 : i32
    %c0_i32_0 = arith.constant 0 : i32
    %c0_i32_1 = arith.constant 0 : i32
    %c0_i32_2 = arith.constant 0 : i32
    return %c0_i32, %c0_i32_0, %c0_i32_1 : i32, i32, i32
  }
  func.func @transform_3(%arg0: i32, %arg1: i32) -> (i32, i32) {
    %c0_i32 = arith.constant 0 : i32
    %c0_i32_0 = arith.constant 0 : i32
    %c0_i32_1 = arith.constant 0 : i32
    return %c0_i32, %c0_i32_0 : i32, i32
  }
  func.func @transform_4(%arg0: i32, %arg1: i32) -> (i32, i32) {
    %c0_i32 = arith.constant 0 : i32
    %c0_i32_0 = arith.constant 0 : i32
    %c0_i32_1 = arith.constant 0 : i32
    return %c0_i32, %c0_i32_0 : i32, i32
  }
  func.func @transform_5(%arg0: i32, %arg1: i32) -> (i32, i32) {
    %c0_i32 = arith.constant 0 : i32
    %c0_i32_0 = arith.constant 0 : i32
    %c0_i32_1 = arith.constant 0 : i32
    return %c0_i32, %c0_i32_0 : i32, i32
  }
  func.func @transform_6(%arg0: i32, %arg1: i32) -> (i32, i32) {
    %c0_i32 = arith.constant 0 : i32
    %c0_i32_0 = arith.constant 0 : i32
    %c0_i32_1 = arith.constant 0 : i32
    return %c0_i32, %c0_i32_0 : i32, i32
  }
  func.func @transform_7(%arg0: i32, %arg1: i32) -> (i32, i32) {
    %c0_i32 = arith.constant 0 : i32
    %c0_i32_0 = arith.constant 0 : i32
    %c0_i32_1 = arith.constant 0 : i32
    return %c0_i32, %c0_i32_0 : i32, i32
  }
  func.func @transform_8(%arg0: i32, %arg1: i32) -> (i32, i32) {
    %c0_i32 = arith.constant 0 : i32
    %c0_i32_0 = arith.constant 0 : i32
    %c0_i32_1 = arith.constant 0 : i32
    return %c0_i32, %c0_i32_0 : i32, i32
  }
  func.func @transform_9(%arg0: i32, %arg1: i32) -> (i32, i32) {
    %c0_i32 = arith.constant 0 : i32
    %c0_i32_0 = arith.constant 0 : i32
    %c0_i32_1 = arith.constant 0 : i32
    return %c0_i32, %c0_i32_0 : i32, i32
  }
  func.func @transform_10(%arg0: i32, %arg1: i32) -> (i32, i32) {
    %c0_i32 = arith.constant 0 : i32
    %c0_i32_0 = arith.constant 0 : i32
    %c0_i32_1 = arith.constant 0 : i32
    return %c0_i32, %c0_i32_0 : i32, i32
  }
  func.func @transform_11(%arg0: i32, %arg1: i32) -> (i32, i32) {
    %c0_i32 = arith.constant 0 : i32
    %c0_i32_0 = arith.constant 0 : i32
    return %arg0, %c0_i32 : i32, i32
  }
}

</mosaic_0001>

<llo_original>
// kernel: tpu_custom_call.1
$region0: #{tpu_custom_call.1}
  #allocation0 [shape = 'u32[]', space=smem, size = 0x4, offset = 0x4, fixed_abs, tag = 'smem constant byte address 0x4 - core index']
  #allocation1 [shape = 'u32[144,128]{1,0:T(1,128)}', space=vmem, size = 0x12000, scoped, tag = 'internal scratch']
  #allocation2 [shape = 'f32[128,8]{1,0:T(8,128)}', space=vmem, size = 0x10000, scoped, tag = 'scratch operand']
  %s0 = inlined_call_operand.vmem [shape: f32[8,3,64], index: 0, kind: input, shape index: {}]
  %s1 = inlined_call_operand.vmem [shape: f32[64,1], index: 1, kind: input, shape index: {}]
  %s2 = inlined_call_operand.vmem [shape: f32[3,128,5], index: 2, kind: input, shape index: {}]
  %s3 = inlined_call_operand.vmem [shape: f32[128,128], index: 3, kind: input, shape index: {}]
  %s4 = inlined_call_operand.vmem [shape: f32[128,1], index: 4, kind: input, shape index: {}]
  %s5 = inlined_call_operand.vmem [shape: f32[128,128], index: 5, kind: input, shape index: {}]
  %s6 = inlined_call_operand.vmem [shape: f32[128,1], index: 6, kind: input, shape index: {}]
  %s7 = inlined_call_operand.vmem [shape: f32[128,128], index: 7, kind: input, shape index: {}]
  %s8 = inlined_call_operand.vmem [shape: f32[128,1], index: 8, kind: input, shape index: {}]
  %s9 = inlined_call_operand.vmem [shape: f32[128,128], index: 9, kind: input, shape index: {}]
  %s10 = inlined_call_operand.vmem [shape: f32[128,1], index: 10, kind: input, shape index: {}]
  %s11 = inlined_call_operand.hbm [shape: f32[8,128], index: 11, kind: output, shape index: {}]
  %s12 = sld [smem:[#allocation0]]
  $region62: #{tpu_custom_call.1} parent=0
    _
  %s14 = ssub.s32 1, %s12
  %s15 = scalar_select 0, %s14, %s12
  $region1: #{tpu_custom_call.1} parent=0
    #allocation3 [shape = 'u8[4096]{0}', space=vmem, size = 0x1000, scoped, tag = 'output window, operand 0, single buffered']
    #allocation4 [shape = 's32[1]{0}', space=sflag, size = 0x4, scoped, tag = 'scoped memory for tpu_custom_call.1']
    %16 = vsyncpa [#allocation4], 0
    // Predicated region
    $region2: #{tpu_custom_call.1} parent=1 // pred_check
      _
    $region3: #{tpu_custom_call.1} parent=1 // pred_check_branch
      %18 = sbr.rel (0) target = $region5
    $region4: #{tpu_custom_call.1} parent=1 // pred_region
      _
    $region5: #{tpu_custom_call.1} parent=1 // pred_fallthru
      _
    // Predicated region
    $region6: #{tpu_custom_call.1} parent=1 // pred_check
      _
    $region7: #{tpu_custom_call.1} parent=1 // pred_check_branch
      %20 = sbr.rel (0) target = $region9
    $region8: #{tpu_custom_call.1} parent=1 // pred_region
      _
    $region9: #{tpu_custom_call.1} parent=1 // pred_fallthru
      _
    // Predicated region
    $region10: #{tpu_custom_call.1} parent=1 // pred_check
      _
    $region11: #{tpu_custom_call.1} parent=1 // pred_check_branch
      %22 = sbr.rel (0) target = $region13
    $region12: #{tpu_custom_call.1} parent=1 // pred_region
      _
    $region13: #{tpu_custom_call.1} parent=1 // pred_fallthru
      _
    // Predicated region
    $region14: #{tpu_custom_call.1} parent=1 // pred_check
      _
    $region15: #{tpu_custom_call.1} parent=1 // pred_check_branch
      %24 = sbr.rel (0) target = $region17
    $region16: #{tpu_custom_call.1} parent=1 // pred_region
      _
    $region17: #{tpu_custom_call.1} parent=1 // pred_fallthru
      _
    // Predicated region
    $region18: #{tpu_custom_call.1} parent=1 // pred_check
      _
    $region19: #{tpu_custom_call.1} parent=1 // pred_check_branch
      %26 = sbr.rel (0) target = $region21
    $region20: #{tpu_custom_call.1} parent=1 // pred_region
      _
    $region21: #{tpu_custom_call.1} parent=1 // pred_fallthru
      _
    // Predicated region
    $region22: #{tpu_custom_call.1} parent=1 // pred_check
      _
    $region23: #{tpu_custom_call.1} parent=1 // pred_check_branch
      %28 = sbr.rel (0) target = $region25
    $region24: #{tpu_custom_call.1} parent=1 // pred_region
      _
    $region25: #{tpu_custom_call.1} parent=1 // pred_fallthru
      _
    // Predicated region
    $region26: #{tpu_custom_call.1} parent=1 // pred_check
      _
    $region27: #{tpu_custom_call.1} parent=1 // pred_check_branch
      %30 = sbr.rel (0) target = $region29
    $region28: #{tpu_custom_call.1} parent=1 // pred_region
      _
    $region29: #{tpu_custom_call.1} parent=1 // pred_fallthru
      _
    // Predicated region
    $region30: #{tpu_custom_call.1} parent=1 // pred_check
      _
    $region31: #{tpu_custom_call.1} parent=1 // pred_check_branch
      %32 = sbr.rel (0) target = $region33
    $region32: #{tpu_custom_call.1} parent=1 // pred_region
      _
    $region33: #{tpu_custom_call.1} parent=1 // pred_fallthru
      _
    // Predicated region
    $region34: #{tpu_custom_call.1} parent=1 // pred_check
      _
    $region35: #{tpu_custom_call.1} parent=1 // pred_check_branch
      %34 = sbr.rel (0) target = $region37
    $region36: #{tpu_custom_call.1} parent=1 // pred_region
      _
    $region37: #{tpu_custom_call.1} parent=1 // pred_fallthru
      _
    // Predicated region
    $region38: #{tpu_custom_call.1} parent=1 // pred_check
      _
    $region39: #{tpu_custom_call.1} parent=1 // pred_check_branch
      %36 = sbr.rel (0) target = $region41
    $region40: #{tpu_custom_call.1} parent=1 // pred_region
      _
    $region41: #{tpu_custom_call.1} parent=1 // pred_fallthru
      _
    // Predicated region
    $region42: #{tpu_custom_call.1} parent=1 // pred_check
      _
    $region43: #{tpu_custom_call.1} parent=1 // pred_check_branch
      %38 = sbr.rel (0) target = $region45
    $region44: #{tpu_custom_call.1} parent=1 // pred_region
      _
    $region45: #{tpu_custom_call.1} parent=1 // pred_fallthru
      _
    %p39 = scmp.eq.s32.totalorder 0, 0
    // Predicated region
    $region46: #{tpu_custom_call.1} parent=1 // pred_check
      %p40 = pneg %p39
    $region47: #{tpu_custom_call.1} parent=1 // pred_check_branch
      %42 = sbr.rel (%p40) target = $region49
    $region48: #{tpu_custom_call.1} parent=1 // pred_region
      %vm43 = vcmask 64512
      %44 = vst.msk [vmem:[#allocation2] sm:$0xff] %vm43, 0.0
      %45 = vst.msk [vmem:[#allocation2 + $0x8] sm:$0xff] %vm43, 0.0
      %46 = vst.msk [vmem:[#allocation2 + $0x10] sm:$0xff] %vm43, 0.0
      %47 = vst.msk [vmem:[#allocation2 + $0x18] sm:$0xff] %vm43, 0.0
      %48 = vst.msk [vmem:[#allocation2 + $0x20] sm:$0xff] %vm43, 0.0
      %49 = vst.msk [vmem:[#allocation2 + $0x28] sm:$0xff] %vm43, 0.0
      %50 = vst.msk [vmem:[#allocation2 + $0x30] sm:$0xff] %vm43, 0.0
      %51 = vst.msk [vmem:[#allocation2 + $0x38] sm:$0xff] %vm43, 0.0
      %52 = vst.msk [vmem:[#allocation2 + $0x40] sm:$0xff] %vm43, 0.0
      %53 = vst.msk [vmem:[#allocation2 + $0x48] sm:$0xff] %vm43, 0.0
      %54 = vst.msk [vmem:[#allocation2 + $0x50] sm:$0xff] %vm43, 0.0
      %55 = vst.msk [vmem:[#allocation2 + $0x58] sm:$0xff] %vm43, 0.0
      %56 = vst.msk [vmem:[#allocation2 + $0x60] sm:$0xff] %vm43, 0.0
      %57 = vst.msk [vmem:[#allocation2 + $0x68] sm:$0xff] %vm43, 0.0
      %58 = vst.msk [vmem:[#allocation2 + $0x70] sm:$0xff] %vm43, 0.0
      %59 = vst.msk [vmem:[#allocation2 + $0x78] sm:$0xff] %vm43, 0.0
    $region49: #{tpu_custom_call.1} parent=1 // pred_fallthru
      _
    %v60 = vld [vmem:[%s0] sm:$0x7]
    %v61 = vld [vmem:[%s0 + $0x4] sm:$0x7]
    %v62 = vld [vmem:[%s0 + $0x8] sm:$0x7]
    %v63 = vld [vmem:[%s0 + $0xc] sm:$0x7]
    %v64 = vld [vmem:[%s0 + $0x10] sm:$0x7]
    %v65 = vld [vmem:[%s0 + $0x14] sm:$0x7]
    %v66 = vld [vmem:[%s0 + $0x18] sm:$0x7]
    %v67 = vld [vmem:[%s0 + $0x1c] sm:$0x7]
    %v68 = vmul.f32 %v60, 2.0
    %v69 = vmul.f32 %v61, 2.0
    %v70 = vmul.f32 %v62, 2.0
    %v71 = vmul.f32 %v63, 2.0
    %v72 = vmul.f32 %v64, 2.0
    %v73 = vmul.f32 %v65, 2.0
    %v74 = vmul.f32 %v66, 2.0
    %v75 = vmul.f32 %v67, 2.0
    %v76 = vmul.f32 %v68, %v60
    %v77 = vmul.f32 %v69, %v61
    %v78 = vmul.f32 %v70, %v62
    %v79 = vmul.f32 %v71, %v63
    %v80 = vmul.f32 %v72, %v64
    %v81 = vmul.f32 %v73, %v65
    %v82 = vmul.f32 %v74, %v66
    %v83 = vmul.f32 %v75, %v67
    %v84 = vsub.f32 %v76, 1.0
    %v85 = vsub.f32 %v77, 1.0
    %v86 = vsub.f32 %v78, 1.0
    %v87 = vsub.f32 %v79, 1.0
    %v88 = vsub.f32 %v80, 1.0
    %v89 = vsub.f32 %v81, 1.0
    %v90 = vsub.f32 %v82, 1.0
    %v91 = vsub.f32 %v83, 1.0
    %v92 = vmul.f32 %v68, %v84
    %v93 = vmul.f32 %v69, %v85
    %v94 = vmul.f32 %v70, %v86
    %v95 = vmul.f32 %v71, %v87
    %v96 = vmul.f32 %v72, %v88
    %v97 = vmul.f32 %v73, %v89
    %v98 = vmul.f32 %v74, %v90
    %v99 = vmul.f32 %v75, %v91
    %v100 = vsub.f32 %v92, %v60
    %v101 = vsub.f32 %v93, %v61
    %v102 = vsub.f32 %v94, %v62
    %v103 = vsub.f32 %v95, %v63
    %v104 = vsub.f32 %v96, %v64
    %v105 = vsub.f32 %v97, %v65
    %v106 = vsub.f32 %v98, %v66
    %v107 = vsub.f32 %v99, %v67
    %v108 = vmul.f32 %v68, %v100
    %v109 = vmul.f32 %v69, %v101
    %v110 = vmul.f32 %v70, %v102
    %v111 = vmul.f32 %v71, %v103
    %v112 = vmul.f32 %v72, %v104
    %v113 = vmul.f32 %v73, %v105
    %v114 = vmul.f32 %v74, %v106
    %v115 = vmul.f32 %v75, %v107
    %v116 = vsub.f32 %v108, %v84
    %v117 = vsub.f32 %v109, %v85
    %v118 = vsub.f32 %v110, %v86
    %v119 = vsub.f32 %v111, %v87
    %v120 = vsub.f32 %v112, %v88
    %v121 = vsub.f32 %v113, %v89
    %v122 = vsub.f32 %v114, %v90
    %v123 = vsub.f32 %v115, %v91
    %v132 = vrot.slane %v60, 7
    %v133 = vrot.slane %v61, 7
    %v134 = vrot.slane %v62, 7
    %v135 = vrot.slane %v63, 7
    %v136 = vrot.slane %v64, 7
    %v137 = vrot.slane %v65, 7
    %v138 = vrot.slane %v66, 7
    %v139 = vrot.slane %v67, 7
    %v156 = vrot.slane %v84, 6
    %v157 = vrot.slane %v85, 6
    %v158 = vrot.slane %v86, 6
    %v159 = vrot.slane %v87, 6
    %v160 = vrot.slane %v88, 6
    %v161 = vrot.slane %v89, 6
    %v162 = vrot.slane %v90, 6
    %v163 = vrot.slane %v91, 6
    %v180 = vrot.slane %v100, 5
    %v181 = vrot.slane %v101, 5
    %v182 = vrot.slane %v102, 5
    %v183 = vrot.slane %v103, 5
    %v184 = vrot.slane %v104, 5
    %v185 = vrot.slane %v105, 5
    %v186 = vrot.slane %v106, 5
    %v187 = vrot.slane %v107, 5
    %v204 = vrot.slane %v116, 4
    %v205 = vrot.slane %v117, 4
    %v206 = vrot.slane %v118, 4
    %v207 = vrot.slane %v119, 4
    %v208 = vrot.slane %v120, 4
    %v209 = vrot.slane %v121, 4
    %v210 = vrot.slane %v122, 4
    %v211 = vrot.slane %v123, 4
    %vm220 = vcmask 1040384
    %v221 = vsel %vm220, 1.0, %v132
    %v222 = vsel %vm220, 1.0, %v133
    %v223 = vsel %vm220, 1.0, %v134
    %v224 = vsel %vm220, 1.0, %v135
    %v225 = vsel %vm220, 1.0, %v136
    %v226 = vsel %vm220, 1.0, %v137
    %v227 = vsel %vm220, 1.0, %v138
    %v228 = vsel %vm220, 1.0, %v139
    %vm229 = vcmask 1041408
    %v230 = vsel %vm229, %v221, %v156
    %v231 = vsel %vm229, %v222, %v157
    %v232 = vsel %vm229, %v223, %v158
    %v233 = vsel %vm229, %v224, %v159
    %v234 = vsel %vm229, %v225, %v160
    %v235 = vsel %vm229, %v226, %v161
    %v236 = vsel %vm229, %v227, %v162
    %v237 = vsel %vm229, %v228, %v163
    %vm238 = vcmask 1042432
    %v239 = vsel %vm238, %v230, %v180
    %v240 = vsel %vm238, %v231, %v181
    %v241 = vsel %vm238, %v232, %v182
    %v242 = vsel %vm238, %v233, %v183
    %v243 = vsel %vm238, %v234, %v184
    %v244 = vsel %vm238, %v235, %v185
    %v245 = vsel %vm238, %v236, %v186
    %v246 = vsel %vm238, %v237, %v187
    %vm247 = vcmask 1043456
    %v248 = vsel %vm247, %v239, %v204
    %v249 = vsel %vm247, %v240, %v205
    %v250 = vsel %vm247, %v241, %v206
    %v251 = vsel %vm247, %v242, %v207
    %v252 = vsel %vm247, %v243, %v208
    %v253 = vsel %vm247, %v244, %v209
    %v254 = vsel %vm247, %v245, %v210
    %v255 = vsel %vm247, %v246, %v211
    %v256 = vrot.slane %v84, 7
    %v257 = vrot.slane %v85, 7
    %v258 = vrot.slane %v86, 7
    %v259 = vrot.slane %v87, 7
    %v260 = vrot.slane %v88, 7
    %v261 = vrot.slane %v89, 7
    %v262 = vrot.slane %v90, 7
    %v263 = vrot.slane %v91, 7
    %v272 = vrot.slane %v100, 6
    %v273 = vrot.slane %v101, 6
    %v274 = vrot.slane %v102, 6
    %v275 = vrot.slane %v103, 6
    %v276 = vrot.slane %v104, 6
    %v277 = vrot.slane %v105, 6
    %v278 = vrot.slane %v106, 6
    %v279 = vrot.slane %v107, 6
    %v288 = vrot.slane %v116, 5
    %v289 = vrot.slane %v117, 5
    %v290 = vrot.slane %v118, 5
    %v291 = vrot.slane %v119, 5
    %v292 = vrot.slane %v120, 5
    %v293 = vrot.slane %v121, 5
    %v294 = vrot.slane %v122, 5
    %v295 = vrot.slane %v123, 5
    %v304 = vsel %vm220, 1.0, %v60
    %v305 = vsel %vm220, 1.0, %v61
    %v306 = vsel %vm220, 1.0, %v62
    %v307 = vsel %vm220, 1.0, %v63
    %v308 = vsel %vm220, 1.0, %v64
    %v309 = vsel %vm220, 1.0, %v65
    %v310 = vsel %vm220, 1.0, %v66
    %v311 = vsel %vm220, 1.0, %v67
    %v312 = vsel %vm229, %v304, %v256
    %v313 = vsel %vm229, %v305, %v257
    %v314 = vsel %vm229, %v306, %v258
    %v315 = vsel %vm229, %v307, %v259
    %v316 = vsel %vm229, %v308, %v260
    %v317 = vsel %vm229, %v309, %v261
    %v318 = vsel %vm229, %v310, %v262
    %v319 = vsel %vm229, %v311, %v263
    %v320 = vsel %vm238, %v312, %v272
    %v321 = vsel %vm238, %v313, %v273
    %v322 = vsel %vm238, %v314, %v274
    %v323 = vsel %vm238, %v315, %v275
    %v324 = vsel %vm238, %v316, %v276
    %v325 = vsel %vm238, %v317, %v277
    %v326 = vsel %vm238, %v318, %v278
    %v327 = vsel %vm238, %v319, %v279
    %v328 = vsel %vm247, %v320, %v288
    %v329 = vsel %vm247, %v321, %v289
    %v330 = vsel %vm247, %v322, %v290
    %v331 = vsel %vm247, %v323, %v291
    %v332 = vsel %vm247, %v324, %v292
    %v333 = vsel %vm247, %v325, %v293
    %v334 = vsel %vm247, %v326, %v294
    %v335 = vsel %vm247, %v327, %v295
    %v336 = vrot.slane %v60, 1
    %v337 = vrot.slane %v61, 1
    %v338 = vrot.slane %v62, 1
    %v339 = vrot.slane %v63, 1
    %v340 = vrot.slane %v64, 1
    %v341 = vrot.slane %v65, 1
    %v342 = vrot.slane %v66, 1
    %v343 = vrot.slane %v67, 1
    %v352 = vrot.slane %v100, 7
    %v353 = vrot.slane %v101, 7
    %v354 = vrot.slane %v102, 7
    %v355 = vrot.slane %v103, 7
    %v356 = vrot.slane %v104, 7
    %v357 = vrot.slane %v105, 7
    %v358 = vrot.slane %v106, 7
    %v359 = vrot.slane %v107, 7
    %v368 = vrot.slane %v116, 6
    %v369 = vrot.slane %v117, 6
    %v370 = vrot.slane %v118, 6
    %v371 = vrot.slane %v119, 6
    %v372 = vrot.slane %v120, 6
    %v373 = vrot.slane %v121, 6
    %v374 = vrot.slane %v122, 6
    %v375 = vrot.slane %v123, 6
    %v384 = vsel %vm220, 1.0, %v336
    %v385 = vsel %vm220, 1.0, %v337
    %v386 = vsel %vm220, 1.0, %v338
    %v387 = vsel %vm220, 1.0, %v339
    %v388 = vsel %vm220, 1.0, %v340
    %v389 = vsel %vm220, 1.0, %v341
    %v390 = vsel %vm220, 1.0, %v342
    %v391 = vsel %vm220, 1.0, %v343
    %v392 = vsel %vm229, %v384, %v84
    %v393 = vsel %vm229, %v385, %v85
    %v394 = vsel %vm229, %v386, %v86
    %v395 = vsel %vm229, %v387, %v87
    %v396 = vsel %vm229, %v388, %v88
    %v397 = vsel %vm229, %v389, %v89
    %v398 = vsel %vm229, %v390, %v90
    %v399 = vsel %vm229, %v391, %v91
    %v400 = vsel %vm238, %v392, %v352
    %v401 = vsel %vm238, %v393, %v353
    %v402 = vsel %vm238, %v394, %v354
    %v403 = vsel %vm238, %v395, %v355
    %v404 = vsel %vm238, %v396, %v356
    %v405 = vsel %vm238, %v397, %v357
    %v406 = vsel %vm238, %v398, %v358
    %v407 = vsel %vm238, %v399, %v359
    %v408 = vsel %vm247, %v400, %v368
    %v409 = vsel %vm247, %v401, %v369
    %v410 = vsel %vm247, %v402, %v370
    %v411 = vsel %vm247, %v403, %v371
    %v412 = vsel %vm247, %v404, %v372
    %v413 = vsel %vm247, %v405, %v373
    %v414 = vsel %vm247, %v406, %v374
    %v415 = vsel %vm247, %v407, %v375
    %v416 = vld [vmem:[%s2] sm:$0xff]
    %v417 = vld [vmem:[%s2 + $0x8] sm:$0xff]
    %v418 = vld [vmem:[%s2 + $0x10] sm:$0xff]
    %v419 = vld [vmem:[%s2 + $0x18] sm:$0xff]
    %v420 = vld [vmem:[%s2 + $0x20] sm:$0xff]
    %v421 = vld [vmem:[%s2 + $0x28] sm:$0xff]
    %v422 = vld [vmem:[%s2 + $0x30] sm:$0xff]
    %v423 = vld [vmem:[%s2 + $0x38] sm:$0xff]
    %v424 = vld [vmem:[%s2 + $0x40] sm:$0xff]
    %v425 = vld [vmem:[%s2 + $0x48] sm:$0xff]
    %v426 = vld [vmem:[%s2 + $0x50] sm:$0xff]
    %v427 = vld [vmem:[%s2 + $0x58] sm:$0xff]
    %v428 = vld [vmem:[%s2 + $0x60] sm:$0xff]
    %v429 = vld [vmem:[%s2 + $0x68] sm:$0xff]
    %v430 = vld [vmem:[%s2 + $0x70] sm:$0xff]
    %v431 = vld [vmem:[%s2 + $0x78] sm:$0xff]
    %s432 = scalar_lea.vmem %s2, 128
    %v433 = vld [vmem:[%s432] sm:$0xff]
    %v434 = vld [vmem:[%s432 + $0x8] sm:$0xff]
    %v435 = vld [vmem:[%s432 + $0x10] sm:$0xff]
    %v436 = vld [vmem:[%s432 + $0x18] sm:$0xff]
    %v437 = vld [vmem:[%s432 + $0x20] sm:$0xff]
    %v438 = vld [vmem:[%s432 + $0x28] sm:$0xff]
    %v439 = vld [vmem:[%s432 + $0x30] sm:$0xff]
    %v440 = vld [vmem:[%s432 + $0x38] sm:$0xff]
    %v441 = vld [vmem:[%s432 + $0x40] sm:$0xff]
    %v442 = vld [vmem:[%s432 + $0x48] sm:$0xff]
    %v443 = vld [vmem:[%s432 + $0x50] sm:$0xff]
    %v444 = vld [vmem:[%s432 + $0x58] sm:$0xff]
    %v445 = vld [vmem:[%s432 + $0x60] sm:$0xff]
    %v446 = vld [vmem:[%s432 + $0x68] sm:$0xff]
    %v447 = vld [vmem:[%s432 + $0x70] sm:$0xff]
    %v448 = vld [vmem:[%s432 + $0x78] sm:$0xff]
    %s449 = scalar_lea.vmem %s2, 256
    %v450 = vld [vmem:[%s449] sm:$0xff]
    %v451 = vld [vmem:[%s449 + $0x8] sm:$0xff]
    %v452 = vld [vmem:[%s449 + $0x10] sm:$0xff]
    %v453 = vld [vmem:[%s449 + $0x18] sm:$0xff]
    %v454 = vld [vmem:[%s449 + $0x20] sm:$0xff]
    %v455 = vld [vmem:[%s449 + $0x28] sm:$0xff]
    %v456 = vld [vmem:[%s449 + $0x30] sm:$0xff]
    %v457 = vld [vmem:[%s449 + $0x38] sm:$0xff]
    %v458 = vld [vmem:[%s449 + $0x40] sm:$0xff]
    %v459 = vld [vmem:[%s449 + $0x48] sm:$0xff]
    %v460 = vld [vmem:[%s449 + $0x50] sm:$0xff]
    %v461 = vld [vmem:[%s449 + $0x58] sm:$0xff]
    %v462 = vld [vmem:[%s449 + $0x60] sm:$0xff]
    %v463 = vld [vmem:[%s449 + $0x68] sm:$0xff]
    %v464 = vld [vmem:[%s449 + $0x70] sm:$0xff]
    %v465 = vld [vmem:[%s449 + $0x78] sm:$0xff]
    %v466 = vld [vmem:[%s1] sm:$0xff]
    %v467 = vld [vmem:[%s1 + $0x8] sm:$0xff]
    %v468 = vld [vmem:[%s1 + $0x10] sm:$0xff]
    %v469 = vld [vmem:[%s1 + $0x18] sm:$0xff]
    %v470 = vld [vmem:[%s1 + $0x20] sm:$0xff]
    %v471 = vld [vmem:[%s1 + $0x28] sm:$0xff]
    %v472 = vld [vmem:[%s1 + $0x30] sm:$0xff]
    %v473 = vld [vmem:[%s1 + $0x38] sm:$0xff]
    %vm474 = vcmask 39936
    %v476 = vsel %vm474, %v416, 0
    %v479 = vsel %vm474, %v417, 0
    %v482 = vsel %vm474, %v418, 0
    %v485 = vsel %vm474, %v419, 0
    %v488 = vsel %vm474, %v420, 0
    %v491 = vsel %vm474, %v421, 0
    %v494 = vsel %vm474, %v422, 0
    %v497 = vsel %vm474, %v423, 0
    %v500 = vsel %vm474, %v424, 0
    %v503 = vsel %vm474, %v425, 0
    %v506 = vsel %vm474, %v426, 0
    %v509 = vsel %vm474, %v427, 0
    %v512 = vsel %vm474, %v428, 0
    %v515 = vsel %vm474, %v429, 0
    %v518 = vsel %vm474, %v430, 0
    %v521 = vsel %vm474, %v431, 0
    %vm523 = vcmask 1044480
    %v525 = vsel %vm523, %v248, 0
    %527 = vmatprep.subr.mxu0 0.0
    %528 = vmatpush1.msra.mxu0 %v525
    %529 = vmatprep.subr.mxu0 0.0
    %530 = vmatpush1.msra.mxu0 0.0
    %531 = vmatprep.subr.mxu0 0.0
    %532 = vmatpush1.msra.mxu0 0.0
    %533 = vmatprep.subr.mxu0 0.0
    %534 = vmatpush1.msra.mxu0 0.0
    %535 = vmatprep.subr.mxu0 0.0
    %536 = vmatpush1.msra.mxu0 0.0
    %537 = vmatprep.subr.mxu0 0.0
    %538 = vmatpush1.msra.mxu0 0.0
    %539 = vmatprep.subr.mxu0 0.0
    %540 = vmatpush1.msra.mxu0 0.0
    %541 = vmatprep.subr.mxu0 0.0
    %542 = vmatpush1.msra.mxu0 0.0
    %543 = vmatprep.subr.mxu0 0.0
    %544 = vmatpush1.msra.mxu0 0.0
    %545 = vmatprep.subr.mxu0 0.0
    %546 = vmatpush1.msra.mxu0 0.0
    %547 = vmatprep.subr.mxu0 0.0
    %548 = vmatpush1.msra.mxu0 0.0
    %549 = vmatprep.subr.mxu0 0.0
    %550 = vmatpush1.msra.mxu0 0.0
    %551 = vmatprep.subr.mxu0 0.0
    %552 = vmatpush1.msra.mxu0 0.0
    %553 = vmatprep.subr.mxu0 0.0
    %554 = vmatpush1.msra.mxu0 0.0
    %555 = vmatprep.subr.mxu0 0.0
    %556 = vmatpush1.msra.mxu0 0.0
    %557 = vmatprep.subr.mxu0 0.0
    %558 = vmatpush1.msra.mxu0 0.0
    %559 = vmatprep.subr.mxu0 0.0
    %560 = vmatpush1.msra.mxu0 0.0
    %561 = vmatprep.subr.mxu0 0.0
    %562 = vmatpush1.msra.mxu0 0.0
    %563 = vmatprep.subr.mxu0 0.0
    %564 = vmatpush1.msra.mxu0 0.0
    %565 = vmatprep.subr.mxu0 0.0
    %566 = vmatpush1.msra.mxu0 0.0
    %567 = vmatprep.subr.mxu0 0.0
    %568 = vmatpush1.msra.mxu0 0.0
    %569 = vmatprep.subr.mxu0 0.0
    %570 = vmatpush1.msra.mxu0 0.0
    %571 = vmatprep.subr.mxu0 0.0
    %572 = vmatpush1.msra.mxu0 0.0
    %573 = vmatprep.subr.mxu0 0.0
    %574 = vmatpush1.msra.mxu0 0.0
    %575 = vmatprep.subr.mxu0 0.0
    %576 = vmatpush1.msra.mxu0 0.0
    %577 = vmatprep.subr.mxu0 0.0
    %578 = vmatpush1.msra.mxu0 0.0
    %579 = vmatprep.subr.mxu0 0.0
    %580 = vmatpush1.msra.mxu0 0.0
    %581 = vmatprep.subr.mxu0 0.0
    %582 = vmatpush1.msra.mxu0 0.0
    %583 = vmatprep.subr.mxu0 0.0
    %584 = vmatpush1.msra.mxu0 0.0
    %585 = vmatprep.subr.mxu0 0.0
    %586 = vmatpush1.msra.mxu0 0.0
    %587 = vmatprep.subr.mxu0 0.0
    %588 = vmatpush1.msra.mxu0 0.0
    %589 = vmatprep.subr.mxu0 0.0
    %590 = vmatpush1.msra.mxu0 0.0
    %591 = vmatprep.mubr.f32.mxu0 0.0
    %592 = vmatmul.mubr.f32.gmra.mrb[0].mxu0 %v476
    %v593 = vpop.f32.mrb[0].mxu0
    %v594 = vadd.f32 0.0, %v593
    %v595 = vpop.f32.mrb[0].mxu0
    %596 = vmatprep.mubr.f32.mxu0 0.0
    %597 = vmatmul.mubr.f32.gmra.mrb[0].mxu0 %v479
    %v598 = vpop.f32.mrb[0].mxu0
    %v599 = vadd.f32 0.0, %v598
    %v600 = vpop.f32.mrb[0].mxu0
    %601 = vmatprep.mubr.f32.mxu0 0.0
    %602 = vmatmul.mubr.f32.gmra.mrb[0].mxu0 %v482
    %v603 = vpop.f32.mrb[0].mxu0
    %v604 = vadd.f32 0.0, %v603
    %v605 = vpop.f32.mrb[0].mxu0
    %606 = vmatprep.mubr.f32.mxu0 0.0
    %607 = vmatmul.mubr.f32.gmra.mrb[0].mxu0 %v485
    %v608 = vpop.f32.mrb[0].mxu0
    %v609 = vadd.f32 0.0, %v608
    %v610 = vpop.f32.mrb[0].mxu0
    %611 = vmatprep.mubr.f32.mxu0 0.0
    %612 = vmatmul.mubr.f32.gmra.mrb[0].mxu0 %v488
    %v613 = vpop.f32.mrb[0].mxu0
    %v614 = vadd.f32 0.0, %v613
    %v615 = vpop.f32.mrb[0].mxu0
    %616 = vmatprep.mubr.f32.mxu0 0.0
    %617 = vmatmul.mubr.f32.gmra.mrb[0].mxu0 %v491
    %v618 = vpop.f32.mrb[0].mxu0
    %v619 = vadd.f32 0.0, %v618
    %v620 = vpop.f32.mrb[0].mxu0
    %621 = vmatprep.mubr.f32.mxu0 0.0
    %622 = vmatmul.mubr.f32.gmra.mrb[0].mxu0 %v494
    %v623 = vpop.f32.mrb[0].mxu0
    %v624 = vadd.f32 0.0, %v623
    %v625 = vpop.f32.mrb[0].mxu0
    %626 = vmatprep.mubr.f32.mxu0 0.0
    %627 = vmatmul.mubr.f32.gmra.mrb[0].mxu0 %v497
    %v628 = vpop.f32.mrb[0].mxu0
    %v629 = vadd.f32 0.0, %v628
    %v630 = vpop.f32.mrb[0].mxu0
    %631 = vmatprep.mubr.f32.mxu0 0.0
    %632 = vmatmul.mubr.f32.gmra.mrb[0].mxu0 %v500
    %v633 = vpop.f32.mrb[0].mxu0
    %v634 = vadd.f32 0.0, %v633
    %v635 = vpop.f32.mrb[0].mxu0
    %636 = vmatprep.mubr.f32.mxu0 0.0
    %637 = vmatmul.mubr.f32.gmra.mrb[0].mxu0 %v503
    %v638 = vpop.f32.mrb[0].mxu0
    %v639 = vadd.f32 0.0, %v638
    %v640 = vpop.f32.mrb[0].mxu0
    %641 = vmatprep.mubr.f32.mxu0 0.0
    %642 = vmatmul.mubr.f32.gmra.mrb[0].mxu0 %v506
    %v643 = vpop.f32.mrb[0].mxu0
    %v644 = vadd.f32 0.0, %v643
    %v645 = vpop.f32.mrb[0].mxu0
    %646 = vmatprep.mubr.f32.mxu0 0.0
    %647 = vmatmul.mubr.f32.gmra.mrb[0].mxu0 %v509
    %v648 = vpop.f32.mrb[0].mxu0
    %v649 = vadd.f32 0.0, %v648
    %v650 = vpop.f32.mrb[0].mxu0
    %651 = vmatprep.mubr.f32.mxu0 0.0
    %652 = vmatmul.mubr.f32.gmra.mrb[0].mxu0 %v512
    %v653 = vpop.f32.mrb[0].mxu0
    %v654 = vadd.f32 0.0, %v653
    %v655 = vpop.f32.mrb[0].mxu0
    %656 = vmatprep.mubr.f32.mxu0 0.0
    %657 = vmatmul.mubr.f32.gmra.mrb[0].mxu0 %v515
    %v658 = vpop.f32.mrb[0].mxu0
    %v659 = vadd.f32 0.0, %v658
    %v660 = vpop.f32.mrb[0].mxu0
    %661 = vmatprep.mubr.f32.mxu0 0.0
    %662 = vmatmul.mubr.f32.gmra.mrb[0].mxu0 %v518
    %v663 = vpop.f32.mrb[0].mxu0
    %v664 = vadd.f32 0.0, %v663
    %v665 = vpop.f32.mrb[0].mxu0
    %666 = vmatprep.mubr.f32.mxu0 0.0
    %667 = vmatmul.mubr.f32.gmra.mrb[0].mxu0 %v521
    %v668 = vpop.f32.mrb[0].mxu0
    %v669 = vadd.f32 0.0, %v668
    %v670 = vpop.f32.mrb[0].mxu0
    %671 = vdwg.mxu0
    %v673 = vsel %vm474, %v433, 0
    %v676 = vsel %vm474, %v434, 0
    %v679 = vsel %vm474, %v435, 0
    %v682 = vsel %vm474, %v436, 0
    %v685 = vsel %vm474, %v437, 0
    %v688 = vsel %vm474, %v438, 0
    %v691 = vsel %vm474, %v439, 0
    %v694 = vsel %vm474, %v440, 0
    %v697 = vsel %vm474, %v441, 0
    %v700 = vsel %vm474, %v442, 0
    %v703 = vsel %vm474, %v443, 0
    %v706 = vsel %vm474, %v444, 0
    %v709 = vsel %vm474, %v445, 0
    %v712 = vsel %vm474, %v446, 0
    %v715 = vsel %vm474, %v447, 0
    %v718 = vsel %vm474, %v448, 0
    %v721 = vsel %vm523, %v328, 0
    %723 = vmatprep.subr.mxu0 0.0
    %724 = vmatpush1.msra.mxu0 %v721
    %725 = vmatprep.subr.mxu0 0.0
    %726 = vmatpush1.msra.mxu0 0.0
    %727 = vmatprep.subr.mxu0 0.0
    %728 = vmatpush1.msra.mxu0 0.0
    %729 = vmatprep.subr.mxu0 0.0
    %730 = vmatpush1.msra.mxu0 0.0
    %731 = vmatprep.subr.mxu0 0.0
    %732 = vmatpush1.msra.mxu0 0.0
    %733 = vmatprep.subr.mxu0 0.0
    %734 = vmatpush1.msra.mxu0 0.0
    %735 = vmatprep.subr.mxu0 0.0
    %736 = vmatpush1.msra.mxu0 0.0
    %737 = vmatprep.subr.mxu0 0.0
    %738 = vmatpush1.msra.mxu0 0.0
    %739 = vmatprep.subr.mxu0 0.0
    %740 = vmatpush1.msra.mxu0 0.0
    %741 = vmatprep.subr.mxu0 0.0
    %742 = vmatpush1.msra.mxu0 0.0
    %743 = vmatprep.subr.mxu0 0.0
    %744 = vmatpush1.msra.mxu0 0.0
    %745 = vmatprep.subr.mxu0 0.0
    %746 = vmatpush1.msra.mxu0 0.0
    %747 = vmatprep.subr.mxu0 0.0
    %748 = vmatpush1.msra.mxu0 0.0
    %749 = vmatprep.subr.mxu0 0.0
    %750 = vmatpush1.msra.mxu0 0.0
    %751 = vmatprep.subr.mxu0 0.0
    %752 = vmatpush1.msra.mxu0 0.0
    %753 = vmatprep.subr.mxu0 0.0
    %754 = vmatpush1.msra.mxu0 0.0
    %755 = vmatprep.subr.mxu0 0.0
    %756 = vmatpush1.msra.mxu0 0.0
    %757 = vmatprep.subr.mxu0 0.0
    %758 = vmatpush1.msra.mxu0 0.0
    %759 = vmatprep.subr.mxu0 0.0
    %760 = vmatpush1.msra.mxu0 0.0
    %761 = vmatprep.subr.mxu0 0.0
    %762 = vmatpush1.msra.mxu0 0.0
    %763 = vmatprep.subr.mxu0 0.0
    %764 = vmatpush1.msra.mxu0 0.0
    %765 = vmatprep.subr.mxu0 0.0
    %766 = vmatpush1.msra.mxu0 0.0
    %767 = vmatprep.subr.mxu0 0.0
    %768 = vmatpush1.msra.mxu0 0.0
    %769 = vmatprep.subr.mxu0 0.0
    %770 = vmatpush1.msra.mxu0 0.0
    %771 = vmatprep.subr.mxu0 0.0
    %772 = vmatpush1.msra.mxu0 0.0
    %773 = vmatprep.subr.mxu0 0.0
    %774 = vmatpush1.msra.mxu0 0.0
    %775 = vmatprep.subr.mxu0 0.0
    %776 = vmatpush1.msra.mxu0 0.0
    %777 = vmatprep.subr.mxu0 0.0
    %778 = vmatpush1.msra.mxu0 0.0
    %779 = vmatprep.subr.mxu0 0.0
    %780 = vmatpush1.msra.mxu0 0.0
    %781 = vmatprep.subr.mxu0 0.0
    %782 = vmatpush1.msra.mxu0 0.0
    %783 = vmatprep.subr.mxu0 0.0
    %784 = vmatpush1.msra.mxu0 0.0
    %785 = vmatprep.subr.mxu0 0.0
    %786 = vmatpush1.msra.mxu0 0.0
    %787 = vmatprep.mubr.f32.mxu0 0.0
    %788 = vmatmul.mubr.f32.gmra.mrb[0].mxu0 %v673
    %v789 = vpop.f32.mrb[0].mxu0
    %v790 = vadd.f32 0.0, %v789
    %v791 = vpop.f32.mrb[0].mxu0
    %792 = vmatprep.mubr.f32.mxu0 0.0
    %793 = vmatmul.mubr.f32.gmra.mrb[0].mxu0 %v676
    %v794 = vpop.f32.mrb[0].mxu0
    %v795 = vadd.f32 0.0, %v794
    %v796 = vpop.f32.mrb[0].mxu0
    %797 = vmatprep.mubr.f32.mxu0 0.0
    %798 = vmatmul.mubr.f32.gmra.mrb[0].mxu0 %v679
    %v799 = vpop.f32.mrb[0].mxu0
    %v800 = vadd.f32 0.0, %v799
    %v801 = vpop.f32.mrb[0].mxu0
    %802 = vmatprep.mubr.f32.mxu0 0.0
    %803 = vmatmul.mubr.f32.gmra.mrb[0].mxu0 %v682
    %v804 = vpop.f32.mrb[0].mxu0
    %v805 = vadd.f32 0.0, %v804
    %v806 = vpop.f32.mrb[0].mxu0
    %807 = vmatprep.mubr.f32.mxu0 0.0
    %808 = vmatmul.mubr.f32.gmra.mrb[0].mxu0 %v685
    %v809 = vpop.f32.mrb[0].mxu0
    %v810 = vadd.f32 0.0, %v809
    %v811 = vpop.f32.mrb[0].mxu0
    %812 = vmatprep.mubr.f32.mxu0 0.0
    %813 = vmatmul.mubr.f32.gmra.mrb[0].mxu0 %v688
    %v814 = vpop.f32.mrb[0].mxu0
    %v815 = vadd.f32 0.0, %v814
    %v816 = vpop.f32.mrb[0].mxu0
    %817 = vmatprep.mubr.f32.mxu0 0.0
    %818 = vmatmul.mubr.f32.gmra.mrb[0].mxu0 %v691
    %v819 = vpop.f32.mrb[0].mxu0
    %v820 = vadd.f32 0.0, %v819
    %v821 = vpop.f32.mrb[0].mxu0
    %822 = vmatprep.mubr.f32.mxu0 0.0
    %823 = vmatmul.mubr.f32.gmra.mrb[0].mxu0 %v694
    %v824 = vpop.f32.mrb[0].mxu0
    %v825 = vadd.f32 0.0, %v824
    %v826 = vpop.f32.mrb[0].mxu0
    %827 = vmatprep.mubr.f32.mxu0 0.0
    %828 = vmatmul.mubr.f32.gmra.mrb[0].mxu0 %v697
    %v829 = vpop.f32.mrb[0].mxu0
    %v830 = vadd.f32 0.0, %v829
    %v831 = vpop.f32.mrb[0].mxu0
    %832 = vmatprep.mubr.f32.mxu0 0.0
    %833 = vmatmul.mubr.f32.gmra.mrb[0].mxu0 %v700
    %v834 = vpop.f32.mrb[0].mxu0
    %v835 = vadd.f32 0.0, %v834
    %v836 = vpop.f32.mrb[0].mxu0
    %837 = vmatprep.mubr.f32.mxu0 0.0
    %838 = vmatmul.mubr.f32.gmra.mrb[0].mxu0 %v703
    %v839 = vpop.f32.mrb[0].mxu0
    %v840 = vadd.f32 0.0, %v839
    %v841 = vpop.f32.mrb[0].mxu0
    %842 = vmatprep.mubr.f32.mxu0 0.0
    %843 = vmatmul.mubr.f32.gmra.mrb[0].mxu0 %v706
    %v844 = vpop.f32.mrb[0].mxu0
    %v845 = vadd.f32 0.0, %v844
    %v846 = vpop.f32.mrb[0].mxu0
    %847 = vmatprep.mubr.f32.mxu0 0.0
    %848 = vmatmul.mubr.f32.gmra.mrb[0].mxu0 %v709
    %v849 = vpop.f32.mrb[0].mxu0
    %v850 = vadd.f32 0.0, %v849
    %v851 = vpop.f32.mrb[0].mxu0
    %852 = vmatprep.mubr.f32.mxu0 0.0
    %853 = vmatmul.mubr.f32.gmra.mrb[0].mxu0 %v712
    %v854 = vpop.f32.mrb[0].mxu0
    %v855 = vadd.f32 0.0, %v854
    %v856 = vpop.f32.mrb[0].mxu0
    %857 = vmatprep.mubr.f32.mxu0 0.0
    %858 = vmatmul.mubr.f32.gmra.mrb[0].mxu0 %v715
    %v859 = vpop.f32.mrb[0].mxu0
    %v860 = vadd.f32 0.0, %v859
    %v861 = vpop.f32.mrb[0].mxu0
    %862 = vmatprep.mubr.f32.mxu0 0.0
    %863 = vmatmul.mubr.f32.gmra.mrb[0].mxu0 %v718
    %v864 = vpop.f32.mrb[0].mxu0
    %v865 = vadd.f32 0.0, %v864
    %v866 = vpop.f32.mrb[0].mxu0
    %867 = vdwg.mxu0
    %v868 = vmul.f32 %v594, %v790
    %v869 = vmul.f32 %v599, %v795
    %v870 = vmul.f32 %v604, %v800
    %v871 = vmul.f32 %v609, %v805
    %v872 = vmul.f32 %v614, %v810
    %v873 = vmul.f32 %v619, %v815
    %v874 = vmul.f32 %v624, %v820
    %v875 = vmul.f32 %v629, %v825
    %v876 = vmul.f32 %v634, %v830
    %v877 = vmul.f32 %v639, %v835
    %v878 = vmul.f32 %v644, %v840
    %v879 = vmul.f32 %v649, %v845
    %v880 = vmul.f32 %v654, %v850
    %v881 = vmul.f32 %v659, %v855
    %v882 = vmul.f32 %v664, %v860
    %v883 = vmul.f32 %v669, %v865
    %v885 = vsel %vm474, %v450, 0
    %v888 = vsel %vm474, %v451, 0
    %v891 = vsel %vm474, %v452, 0
    %v894 = vsel %vm474, %v453, 0
    %v897 = vsel %vm474, %v454, 0
    %v900 = vsel %vm474, %v455, 0
    %v903 = vsel %vm474, %v456, 0
    %v906 = vsel %vm474, %v457, 0
    %v909 = vsel %vm474, %v458, 0
    %v912 = vsel %vm474, %v459, 0
    %v915 = vsel %vm474, %v460, 0
    %v918 = vsel %vm474, %v461, 0
    %v921 = vsel %vm474, %v462, 0
    %v924 = vsel %vm474, %v463, 0
    %v927 = vsel %vm474, %v464, 0
    %v930 = vsel %vm474, %v465, 0
    %v933 = vsel %vm523, %v408, 0
    %935 = vmatprep.subr.mxu0 0.0
    %936 = vmatpush1.msra.mxu0 %v933
    %937 = vmatprep.subr.mxu0 0.0
    %938 = vmatpush1.msra.mxu0 0.0
    %939 = vmatprep.subr.mxu0 0.0
    %940 = vmatpush1.msra.mxu0 0.0
    %941 = vmatprep.subr.mxu0 0.0
    %942 = vmatpush1.msra.mxu0 0.0
    %943 = vmatprep.subr.mxu0 0.0
    %944 = vmatpush1.msra.mxu0 0.0
    %945 = vmatprep.subr.mxu0 0.0
    %946 = vmatpush1.msra.mxu0 0.0
    %947 = vmatprep.subr.mxu0 0.0
    %948 = vmatpush1.msra.mxu0 0.0
    %949 = vmatprep.subr.mxu0 0.0
    %950 = vmatpush1.msra.mxu0 0.0
    %951 = vmatprep.subr.mxu0 0.0
    %952 = vmatpush1.msra.mxu0 0.0
    %953 = vmatprep.subr.mxu0 0.0
    %954 = vmatpush1.msra.mxu0 0.0
    %955 = vmatprep.subr.mxu0 0.0
    %956 = vmatpush1.msra.mxu0 0.0
    %957 = vmatprep.subr.mxu0 0.0
    %958 = vmatpush1.msra.mxu0 0.0
    %959 = vmatprep.subr.mxu0 0.0
    %960 = vmatpush1.msra.mxu0 0.0
    %961 = vmatprep.subr.mxu0 0.0
    %962 = vmatpush1.msra.mxu0 0.0
    %963 = vmatprep.subr.mxu0 0.0
    %964 = vmatpush1.msra.mxu0 0.0
    %965 = vmatprep.subr.mxu0 0.0
    %966 = vmatpush1.msra.mxu0 0.0
    %967 = vmatprep.subr.mxu0 0.0
    %968 = vmatpush1.msra.mxu0 0.0
    %969 = vmatprep.subr.mxu0 0.0
    %970 = vmatpush1.msra.mxu0 0.0
    %971 = vmatprep.subr.mxu0 0.0
    %972 = vmatpush1.msra.mxu0 0.0
    %973 = vmatprep.subr.mxu0 0.0
    %974 = vmatpush1.msra.mxu0 0.0
    %975 = vmatprep.subr.mxu0 0.0
    %976 = vmatpush1.msra.mxu0 0.0
    %977 = vmatprep.subr.mxu0 0.0
    %978 = vmatpush1.msra.mxu0 0.0
    %979 = vmatprep.subr.mxu0 0.0
    %980 = vmatpush1.msra.mxu0 0.0
    %981 = vmatprep.subr.mxu0 0.0
    %982 = vmatpush1.msra.mxu0 0.0
    %983 = vmatprep.subr.mxu0 0.0
    %984 = vmatpush1.msra.mxu0 0.0
    %985 = vmatprep.subr.mxu0 0.0
    %986 = vmatpush1.msra.mxu0 0.0
    %987 = vmatprep.subr.mxu0 0.0
    %988 = vmatpush1.msra.mxu0 0.0
    %989 = vmatprep.subr.mxu0 0.0
    %990 = vmatpush1.msra.mxu0 0.0
    %991 = vmatprep.subr.mxu0 0.0
    %992 = vmatpush1.msra.mxu0 0.0
    %993 = vmatprep.subr.mxu0 0.0
    %994 = vmatpush1.msra.mxu0 0.0
    %995 = vmatprep.subr.mxu0 0.0
    %996 = vmatpush1.msra.mxu0 0.0
    %997 = vmatprep.subr.mxu0 0.0
    %998 = vmatpush1.msra.mxu0 0.0
    %999 = vmatprep.mubr.f32.mxu0 0.0
    %1000 = vmatmul.mubr.f32.gmra.mrb[0].mxu0 %v885
    %v1001 = vpop.f32.mrb[0].mxu0
    %v1002 = vadd.f32 0.0, %v1001
    %v1003 = vpop.f32.mrb[0].mxu0
    %1004 = vmatprep.mubr.f32.mxu0 0.0
    %1005 = vmatmul.mubr.f32.gmra.mrb[0].mxu0 %v888
    %v1006 = vpop.f32.mrb[0].mxu0
    %v1007 = vadd.f32 0.0, %v1006
    %v1008 = vpop.f32.mrb[0].mxu0
    %1009 = vmatprep.mubr.f32.mxu0 0.0
    %1010 = vmatmul.mubr.f32.gmra.mrb[0].mxu0 %v891
    %v1011 = vpop.f32.mrb[0].mxu0
    %v1012 = vadd.f32 0.0, %v1011
    %v1013 = vpop.f32.mrb[0].mxu0
    %1014 = vmatprep.mubr.f32.mxu0 0.0
    %1015 = vmatmul.mubr.f32.gmra.mrb[0].mxu0 %v894
    %v1016 = vpop.f32.mrb[0].mxu0
    %v1017 = vadd.f32 0.0, %v1016
    %v1018 = vpop.f32.mrb[0].mxu0
    %1019 = vmatprep.mubr.f32.mxu0 0.0
    %1020 = vmatmul.mubr.f32.gmra.mrb[0].mxu0 %v897
    %v1021 = vpop.f32.mrb[0].mxu0
    %v1022 = vadd.f32 0.0, %v1021
    %v1023 = vpop.f32.mrb[0].mxu0
    %1024 = vmatprep.mubr.f32.mxu0 0.0
    %1025 = vmatmul.mubr.f32.gmra.mrb[0].mxu0 %v900
    %v1026 = vpop.f32.mrb[0].mxu0
    %v1027 = vadd.f32 0.0, %v1026
    %v1028 = vpop.f32.mrb[0].mxu0
    %1029 = vmatprep.mubr.f32.mxu0 0.0
    %1030 = vmatmul.mubr.f32.gmra.mrb[0].mxu0 %v903
    %v1031 = vpop.f32.mrb[0].mxu0
    %v1032 = vadd.f32 0.0, %v1031
    %v1033 = vpop.f32.mrb[0].mxu0
    %1034 = vmatprep.mubr.f32.mxu0 0.0
    %1035 = vmatmul.mubr.f32.gmra.mrb[0].mxu0 %v906
    %v1036 = vpop.f32.mrb[0].mxu0
    %v1037 = vadd.f32 0.0, %v1036
    %v1038 = vpop.f32.mrb[0].mxu0
    %1039 = vmatprep.mubr.f32.mxu0 0.0
    %1040 = vmatmul.mubr.f32.gmra.mrb[0].mxu0 %v909
    %v1041 = vpop.f32.mrb[0].mxu0
    %v1042 = vadd.f32 0.0, %v1041
    %v1043 = vpop.f32.mrb[0].mxu0
    %1044 = vmatprep.mubr.f32.mxu0 0.0
    %1045 = vmatmul.mubr.f32.gmra.mrb[0].mxu0 %v912
    %v1046 = vpop.f32.mrb[0].mxu0
    %v1047 = vadd.f32 0.0, %v1046
    %v1048 = vpop.f32.mrb[0].mxu0
    %1049 = vmatprep.mubr.f32.mxu0 0.0
    %1050 = vmatmul.mubr.f32.gmra.mrb[0].mxu0 %v915
    %v1051 = vpop.f32.mrb[0].mxu0
    %v1052 = vadd.f32 0.0, %v1051
    %v1053 = vpop.f32.mrb[0].mxu0
    %1054 = vmatprep.mubr.f32.mxu0 0.0
    %1055 = vmatmul.mubr.f32.gmra.mrb[0].mxu0 %v918
    %v1056 = vpop.f32.mrb[0].mxu0
    %v1057 = vadd.f32 0.0, %v1056
    %v1058 = vpop.f32.mrb[0].mxu0
    %1059 = vmatprep.mubr.f32.mxu0 0.0
    %1060 = vmatmul.mubr.f32.gmra.mrb[0].mxu0 %v921
    %v1061 = vpop.f32.mrb[0].mxu0
    %v1062 = vadd.f32 0.0, %v1061
    %v1063 = vpop.f32.mrb[0].mxu0
    %1064 = vmatprep.mubr.f32.mxu0 0.0
    %1065 = vmatmul.mubr.f32.gmra.mrb[0].mxu0 %v924
    %v1066 = vpop.f32.mrb[0].mxu0
    %v1067 = vadd.f32 0.0, %v1066
    %v1068 = vpop.f32.mrb[0].mxu0
    %1069 = vmatprep.mubr.f32.mxu0 0.0
    %1070 = vmatmul.mubr.f32.gmra.mrb[0].mxu0 %v927
    %v1071 = vpop.f32.mrb[0].mxu0
    %v1072 = vadd.f32 0.0, %v1071
    %v1073 = vpop.f32.mrb[0].mxu0
    %1074 = vmatprep.mubr.f32.mxu0 0.0
    %1075 = vmatmul.mubr.f32.gmra.mrb[0].mxu0 %v930
    %v1076 = vpop.f32.mrb[0].mxu0
    %v1077 = vadd.f32 0.0, %v1076
    %v1078 = vpop.f32.mrb[0].mxu0
    %1079 = vdwg.mxu0
    %v1080 = vmul.f32 %v868, %v1002
    %v1081 = vmul.f32 %v869, %v1007
    %v1082 = vmul.f32 %v870, %v1012
    %v1083 = vmul.f32 %v871, %v1017
    %v1084 = vmul.f32 %v872, %v1022
    %v1085 = vmul.f32 %v873, %v1027
    %v1086 = vmul.f32 %v874, %v1032
    %v1087 = vmul.f32 %v875, %v1037
    %v1088 = vmul.f32 %v876, %v1042
    %v1089 = vmul.f32 %v877, %v1047
    %v1090 = vmul.f32 %v878, %v1052
    %v1091 = vmul.f32 %v879, %v1057
    %v1092 = vmul.f32 %v880, %v1062
    %v1093 = vmul.f32 %v881, %v1067
    %v1094 = vmul.f32 %v882, %v1072
    %v1095 = vmul.f32 %v883, %v1077
    %v1096 = vld [vmem:[#allocation2] sm:$0xff]
    %v1097 = vld [vmem:[#allocation2 + $0x8] sm:$0xff]
    %v1098 = vld [vmem:[#allocation2 + $0x10] sm:$0xff]
    %v1099 = vld [vmem:[#allocation2 + $0x18] sm:$0xff]
    %v1100 = vld [vmem:[#allocation2 + $0x20] sm:$0xff]
    %v1101 = vld [vmem:[#allocation2 + $0x28] sm:$0xff]
    %v1102 = vld [vmem:[#allocation2 + $0x30] sm:$0xff]
    %v1103 = vld [vmem:[#allocation2 + $0x38] sm:$0xff]
    %v1104 = vld [vmem:[#allocation2 + $0x40] sm:$0xff]
    %v1105 = vld [vmem:[#allocation2 + $0x48] sm:$0xff]
    %v1106 = vld [vmem:[#allocation2 + $0x50] sm:$0xff]
    %v1107 = vld [vmem:[#allocation2 + $0x58] sm:$0xff]
    %v1108 = vld [vmem:[#allocation2 + $0x60] sm:$0xff]
    %v1109 = vld [vmem:[#allocation2 + $0x68] sm:$0xff]
    %v1110 = vld [vmem:[#allocation2 + $0x70] sm:$0xff]
    %v1111 = vld [vmem:[#allocation2 + $0x78] sm:$0xff]
    %vm1112 = vcmask 523264
    %v1114 = vsel %vm1112, %v1080, 0
    %v1117 = vsel %vm1112, %v1081, 0
    %v1120 = vsel %vm1112, %v1082, 0
    %v1123 = vsel %vm1112, %v1083, 0
    %v1126 = vsel %vm1112, %v1084, 0
    %v1129 = vsel %vm1112, %v1085, 0
    %v1132 = vsel %vm1112, %v1086, 0
    %v1135 = vsel %vm1112, %v1087, 0
    %v1138 = vsel %vm1112, %v1088, 0
    %v1141 = vsel %vm1112, %v1089, 0
    %v1144 = vsel %vm1112, %v1090, 0
    %v1147 = vsel %vm1112, %v1091, 0
    %v1150 = vsel %vm1112, %v1092, 0
    %v1153 = vsel %vm1112, %v1093, 0
    %v1156 = vsel %vm1112, %v1094, 0
    %v1159 = vsel %vm1112, %v1095, 0
    %1161 = vmatprep.subr.mxu0 0.0
    %1162 = vmatpush1.msra.mxu0 %v466
    %1163 = vmatprep.subr.mxu0 0.0
    %1164 = vmatpush1.msra.mxu0 %v467
    %1165 = vmatprep.subr.mxu0 0.0
    %1166 = vmatpush1.msra.mxu0 %v468
    %1167 = vmatprep.subr.mxu0 0.0
    %1168 = vmatpush1.msra.mxu0 %v469
    %1169 = vmatprep.subr.mxu0 0.0
    %1170 = vmatpush1.msra.mxu0 %v470
    %1171 = vmatprep.subr.mxu0 0.0
    %1172 = vmatpush1.msra.mxu0 %v471
    %1173 = vmatprep.subr.mxu0 0.0
    %1174 = vmatpush1.msra.mxu0 %v472
    %1175 = vmatprep.subr.mxu0 0.0
    %1176 = vmatpush1.msra.mxu0 %v473
    %1177 = vmatprep.subr.mxu0 0.0
    %1178 = vmatpush1.msra.mxu0 0.0
    %1179 = vmatprep.subr.mxu0 0.0
    %1180 = vmatpush1.msra.mxu0 0.0
    %1181 = vmatprep.subr.mxu0 0.0
    %1182 = vmatpush1.msra.mxu0 0.0
    %1183 = vmatprep.subr.mxu0 0.0
    %1184 = vmatpush1.msra.mxu0 0.0
    %1185 = vmatprep.subr.mxu0 0.0
    %1186 = vmatpush1.msra.mxu0 0.0
    %1187 = vmatprep.subr.mxu0 0.0
    %1188 = vmatpush1.msra.mxu0 0.0
    %1189 = vmatprep.subr.mxu0 0.0
    %1190 = vmatpush1.msra.mxu0 0.0
    %1191 = vmatprep.subr.mxu0 0.0
    %1192 = vmatpush1.msra.mxu0 0.0
    %1193 = vmatprep.subr.mxu0 0.0
    %1194 = vmatpush1.msra.mxu0 0.0
    %1195 = vmatprep.subr.mxu0 0.0
    %1196 = vmatpush1.msra.mxu0 0.0
    %1197 = vmatprep.subr.mxu0 0.0
    %1198 = vmatpush1.msra.mxu0 0.0
    %1199 = vmatprep.subr.mxu0 0.0
    %1200 = vmatpush1.msra.mxu0 0.0
    %1201 = vmatprep.subr.mxu0 0.0
    %1202 = vmatpush1.msra.mxu0 0.0
    %1203 = vmatprep.subr.mxu0 0.0
    %1204 = vmatpush1.msra.mxu0 0.0
    %1205 = vmatprep.subr.mxu0 0.0
    %1206 = vmatpush1.msra.mxu0 0.0
    %1207 = vmatprep.subr.mxu0 0.0
    %1208 = vmatpush1.msra.mxu0 0.0
    %1209 = vmatprep.subr.mxu0 0.0
    %1210 = vmatpush1.msra.mxu0 0.0
    %1211 = vmatprep.subr.mxu0 0.0
    %1212 = vmatpush1.msra.mxu0 0.0
    %1213 = vmatprep.subr.mxu0 0.0
    %1214 = vmatpush1.msra.mxu0 0.0
    %1215 = vmatprep.subr.mxu0 0.0
    %1216 = vmatpush1.msra.mxu0 0.0
    %1217 = vmatprep.subr.mxu0 0.0
    %1218 = vmatpush1.msra.mxu0 0.0
    %1219 = vmatprep.subr.mxu0 0.0
    %1220 = vmatpush1.msra.mxu0 0.0
    %1221 = vmatprep.subr.mxu0 0.0
    %1222 = vmatpush1.msra.mxu0 0.0
    %1223 = vmatprep.subr.mxu0 0.0
    %1224 = vmatpush1.msra.mxu0 0.0
    %1225 = vmatprep.mubr.f32.mxu0 0.0
    %1226 = vmatmul.mubr.f32.gmra.mrb[0].mxu0 %v1114
    %v1227 = vpop.f32.mrb[0].mxu0
    %v1228 = vadd.f32 0.0, %v1227
    %v1229 = vpop.f32.mrb[0].mxu0
    %1230 = vmatprep.mubr.f32.mxu0 0.0
    %1231 = vmatmul.mubr.f32.gmra.mrb[0].mxu0 %v1117
    %v1232 = vpop.f32.mrb[0].mxu0
    %v1233 = vadd.f32 0.0, %v1232
    %v1234 = vpop.f32.mrb[0].mxu0
    %1235 = vmatprep.mubr.f32.mxu0 0.0
    %1236 = vmatmul.mubr.f32.gmra.mrb[0].mxu0 %v1120
    %v1237 = vpop.f32.mrb[0].mxu0
    %v1238 = vadd.f32 0.0, %v1237
    %v1239 = vpop.f32.mrb[0].mxu0
    %1240 = vmatprep.mubr.f32.mxu0 0.0
    %1241 = vmatmul.mubr.f32.gmra.mrb[0].mxu0 %v1123
    %v1242 = vpop.f32.mrb[0].mxu0
    %v1243 = vadd.f32 0.0, %v1242
    %v1244 = vpop.f32.mrb[0].mxu0
    %1245 = vmatprep.mubr.f32.mxu0 0.0
    %1246 = vmatmul.mubr.f32.gmra.mrb[0].mxu0 %v1126
    %v1247 = vpop.f32.mrb[0].mxu0
    %v1248 = vadd.f32 0.0, %v1247
    %v1249 = vpop.f32.mrb[0].mxu0
    %1250 = vmatprep.mubr.f32.mxu0 0.0
    %1251 = vmatmul.mubr.f32.gmra.mrb[0].mxu0 %v1129
    %v1252 = vpop.f32.mrb[0].mxu0
    %v1253 = vadd.f32 0.0, %v1252
    %v1254 = vpop.f32.mrb[0].mxu0
    %1255 = vmatprep.mubr.f32.mxu0 0.0
    %1256 = vmatmul.mubr.f32.gmra.mrb[0].mxu0 %v1132
    %v1257 = vpop.f32.mrb[0].mxu0
    %v1258 = vadd.f32 0.0, %v1257
    %v1259 = vpop.f32.mrb[0].mxu0
    %1260 = vmatprep.mubr.f32.mxu0 0.0
    %1261 = vmatmul.mubr.f32.gmra.mrb[0].mxu0 %v1135
    %v1262 = vpop.f32.mrb[0].mxu0
    %v1263 = vadd.f32 0.0, %v1262
    %v1264 = vpop.f32.mrb[0].mxu0
    %1265 = vmatprep.mubr.f32.mxu0 0.0
    %1266 = vmatmul.mubr.f32.gmra.mrb[0].mxu0 %v1138
    %v1267 = vpop.f32.mrb[0].mxu0
    %v1268 = vadd.f32 0.0, %v1267
    %v1269 = vpop.f32.mrb[0].mxu0
    %1270 = vmatprep.mubr.f32.mxu0 0.0
    %1271 = vmatmul.mubr.f32.gmra.mrb[0].mxu0 %v1141
    %v1272 = vpop.f32.mrb[0].mxu0
    %v1273 = vadd.f32 0.0, %v1272
    %v1274 = vpop.f32.mrb[0].mxu0
    %1275 = vmatprep.mubr.f32.mxu0 0.0
    %1276 = vmatmul.mubr.f32.gmra.mrb[0].mxu0 %v1144
    %v1277 = vpop.f32.mrb[0].mxu0
    %v1278 = vadd.f32 0.0, %v1277
    %v1279 = vpop.f32.mrb[0].mxu0
    %1280 = vmatprep.mubr.f32.mxu0 0.0
    %1281 = vmatmul.mubr.f32.gmra.mrb[0].mxu0 %v1147
    %v1282 = vpop.f32.mrb[0].mxu0
    %v1283 = vadd.f32 0.0, %v1282
    %v1284 = vpop.f32.mrb[0].mxu0
    %1285 = vmatprep.mubr.f32.mxu0 0.0
    %1286 = vmatmul.mubr.f32.gmra.mrb[0].mxu0 %v1150
    %v1287 = vpop.f32.mrb[0].mxu0
    %v1288 = vadd.f32 0.0, %v1287
    %v1289 = vpop.f32.mrb[0].mxu0
    %1290 = vmatprep.mubr.f32.mxu0 0.0
    %1291 = vmatmul.mubr.f32.gmra.mrb[0].mxu0 %v1153
    %v1292 = vpop.f32.mrb[0].mxu0
    %v1293 = vadd.f32 0.0, %v1292
    %v1294 = vpop.f32.mrb[0].mxu0
    %1295 = vmatprep.mubr.f32.mxu0 0.0
    %1296 = vmatmul.mubr.f32.gmra.mrb[0].mxu0 %v1156
    %v1297 = vpop.f32.mrb[0].mxu0
    %v1298 = vadd.f32 0.0, %v1297
    %v1299 = vpop.f32.mrb[0].mxu0
    %1300 = vmatprep.mubr.f32.mxu0 0.0
    %1301 = vmatmul.mubr.f32.gmra.mrb[0].mxu0 %v1159
    %v1302 = vpop.f32.mrb[0].mxu0
    %v1303 = vadd.f32 0.0, %v1302
    %v1304 = vpop.f32.mrb[0].mxu0
    %1305 = vdwg.mxu0
    %v1306 = vadd.f32 %v1096, %v1228
    %v1307 = vadd.f32 %v1097, %v1233
    %v1308 = vadd.f32 %v1098, %v1238
    %v1309 = vadd.f32 %v1099, %v1243
    %v1310 = vadd.f32 %v1100, %v1248
    %v1311 = vadd.f32 %v1101, %v1253
    %v1312 = vadd.f32 %v1102, %v1258
    %v1313 = vadd.f32 %v1103, %v1263
    %v1314 = vadd.f32 %v1104, %v1268
    %v1315 = vadd.f32 %v1105, %v1273
    %v1316 = vadd.f32 %v1106, %v1278
    %v1317 = vadd.f32 %v1107, %v1283
    %v1318 = vadd.f32 %v1108, %v1288
    %v1319 = vadd.f32 %v1109, %v1293
    %v1320 = vadd.f32 %v1110, %v1298
    %v1321 = vadd.f32 %v1111, %v1303
    %vm1322 = vcmask 7168
    %1323 = vst.msk [vmem:[#allocation2] sm:$0xff] %vm1322, %v1306
    %1324 = vst.msk [vmem:[#allocation2 + $0x8] sm:$0xff] %vm1322, %v1307
    %1325 = vst.msk [vmem:[#allocation2 + $0x10] sm:$0xff] %vm1322, %v1308
    %1326 = vst.msk [vmem:[#allocation2 + $0x18] sm:$0xff] %vm1322, %v1309
    %1327 = vst.msk [vmem:[#allocation2 + $0x20] sm:$0xff] %vm1322, %v1310
    %1328 = vst.msk [vmem:[#allocation2 + $0x28] sm:$0xff] %vm1322, %v1311
    %1329 = vst.msk [vmem:[#allocation2 + $0x30] sm:$0xff] %vm1322, %v1312
    %1330 = vst.msk [vmem:[#allocation2 + $0x38] sm:$0xff] %vm1322, %v1313
    %1331 = vst.msk [vmem:[#allocation2 + $0x40] sm:$0xff] %vm1322, %v1314
    %1332 = vst.msk [vmem:[#allocation2 + $0x48] sm:$0xff] %vm1322, %v1315
    %1333 = vst.msk [vmem:[#allocation2 + $0x50] sm:$0xff] %vm1322, %v1316
    %1334 = vst.msk [vmem:[#allocation2 + $0x58] sm:$0xff] %vm1322, %v1317
    %1335 = vst.msk [vmem:[#allocation2 + $0x60] sm:$0xff] %vm1322, %v1318
    %1336 = vst.msk [vmem:[#allocation2 + $0x68] sm:$0xff] %vm1322, %v1319
    %1337 = vst.msk [vmem:[#allocation2 + $0x70] sm:$0xff] %vm1322, %v1320
    %1338 = vst.msk [vmem:[#allocation2 + $0x78] sm:$0xff] %vm1322, %v1321
    %v1340 = vsel %vm523, %v249, 0
    %1342 = vmatprep.subr.mxu0 0.0
    %1343 = vmatpush1.msra.mxu0 %v1340
    %1344 = vmatprep.subr.mxu0 0.0
    %1345 = vmatpush1.msra.mxu0 0.0
    %1346 = vmatprep.subr.mxu0 0.0
    %1347 = vmatpush1.msra.mxu0 0.0
    %1348 = vmatprep.subr.mxu0 0.0
    %1349 = vmatpush1.msra.mxu0 0.0
    %1350 = vmatprep.subr.mxu0 0.0
    %1351 = vmatpush1.msra.mxu0 0.0
    %1352 = vmatprep.subr.mxu0 0.0
    %1353 = vmatpush1.msra.mxu0 0.0
    %1354 = vmatprep.subr.mxu0 0.0
    %1355 = vmatpush1.msra.mxu0 0.0
    %1356 = vmatprep.subr.mxu0 0.0
    %1357 = vmatpush1.msra.mxu0 0.0
    %1358 = vmatprep.subr.mxu0 0.0
    %1359 = vmatpush1.msra.mxu0 0.0
    %1360 = vmatprep.subr.mxu0 0.0
    %1361 = vmatpush1.msra.mxu0 0.0
    %1362 = vmatprep.subr.mxu0 0.0
    %1363 = vmatpush1.msra.mxu0 0.0
    %1364 = vmatprep.subr.mxu0 0.0
    %1365 = vmatpush1.msra.mxu0 0.0
    %1366 = vmatprep.subr.mxu0 0.0
    %1367 = vmatpush1.msra.mxu0 0.0
    %1368 = vmatprep.subr.mxu0 0.0
    %1369 = vmatpush1.msra.mxu0 0.0
    %1370 = vmatprep.subr.mxu0 0.0
    %1371 = vmatpush1.msra.mxu0 0.0
    %1372 = vmatprep.subr.mxu0 0.0
    %1373 = vmatpush1.msra.mxu0 0.0
    %1374 = vmatprep.subr.mxu0 0.0
    %1375 = vmatpush1.msra.mxu0 0.0
    %1376 = vmatprep.subr.mxu0 0.0
    %1377 = vmatpush1.msra.mxu0 0.0
    %1378 = vmatprep.subr.mxu0 0.0
    %1379 = vmatpush1.msra.mxu0 0.0
    %1380 = vmatprep.subr.mxu0 0.0
    %1381 = vmatpush1.msra.mxu0 0.0
    %1382 = vmatprep.subr.mxu0 0.0
    %1383 = vmatpush1.msra.mxu0 0.0
    %1384 = vmatprep.subr.mxu0 0.0
    %1385 = vmatpush1.msra.mxu0 0.0
    %1386 = vmatprep.subr.mxu0 0.0
    %1387 = vmatpush1.msra.mxu0 0.0
    %1388 = vmatprep.subr.mxu0 0.0
    %1389 = vmatpush1.msra.mxu0 0.0
    %1390 = vmatprep.subr.mxu0 0.0
    %1391 = vmatpush1.msra.mxu0 0.0
    %1392 = vmatprep.subr.mxu0 0.0
    %1393 = vmatpush1.msra.mxu0 0.0
    %1394 = vmatprep.subr.mxu0 0.0
    %1395 = vmatpush1.msra.mxu0 0.0
    %1396 = vmatprep.subr.mxu0 0.0
    %1397 = vmatpush1.msra.mxu0 0.0
    %1398 = vmatprep.subr.mxu0 0.0
    %1399 = vmatpush1.msra.mxu0 0.0
    %1400 = vmatprep.subr.mxu0 0.0
    %1401 = vmatpush1.msra.mxu0 0.0
    %1402 = vmatprep.subr.mxu0 0.0
    %1403 = vmatpush1.msra.mxu0 0.0
    %1404 = vmatprep.subr.mxu0 0.0
    %1405 = vmatpush1.msra.mxu0 0.0
    %1406 = vmatprep.mubr.f32.mxu0 0.0
    %1407 = vmatmul.mubr.f32.gmra.mrb[0].mxu0 %v476
    %v1408 = vpop.f32.mrb[0].mxu0
    %v1409 = vadd.f32 0.0, %v1408
    %v1410 = vpop.f32.mrb[0].mxu0
    %1411 = vmatprep.mubr.f32.mxu0 0.0
    %1412 = vmatmul.mubr.f32.gmra.mrb[0].mxu0 %v479
    %v1413 = vpop.f32.mrb[0].mxu0
    %v1414 = vadd.f32 0.0, %v1413
    %v1415 = vpop.f32.mrb[0].mxu0
    %1416 = vmatprep.mubr.f32.mxu0 0.0
    %1417 = vmatmul.mubr.f32.gmra.mrb[0].mxu0 %v482
    %v1418 = vpop.f32.mrb[0].mxu0
    %v1419 = vadd.f32 0.0, %v1418
    %v1420 = vpop.f32.mrb[0].mxu0
    %1421 = vmatprep.mubr.f32.mxu0 0.0
    %1422 = vmatmul.mubr.f32.gmra.mrb[0].mxu0 %v485
    %v1423 = vpop.f32.mrb[0].mxu0
    %v1424 = vadd.f32 0.0, %v1423
    %v1425 = vpop.f32.mrb[0].mxu0
    %1426 = vmatprep.mubr.f32.mxu0 0.0
    %1427 = vmatmul.mubr.f32.gmra.mrb[0].mxu0 %v488
    %v1428 = vpop.f32.mrb[0].mxu0
    %v1429 = vadd.f32 0.0, %v1428
    %v1430 = vpop.f32.mrb[0].mxu0
    %1431 = vmatprep.mubr.f32.mxu0 0.0
    %1432 = vmatmul.mubr.f32.gmra.mrb[0].mxu0 %v491
    %v1433 = vpop.f32.mrb[0].mxu0
    %v1434 = vadd.f32 0.0, %v1433
    %v1435 = vpop.f32.mrb[0].mxu0
    %1436 = vmatprep.mubr.f32.mxu0 0.0
    %1437 = vmatmul.mubr.f32.gmra.mrb[0].mxu0 %v494
    %v1438 = vpop.f32.mrb[0].mxu0
    %v1439 = vadd.f32 0.0, %v1438
    %v1440 = vpop.f32.mrb[0].mxu0
    %1441 = vmatprep.mubr.f32.mxu0 0.0
    %1442 = vmatmul.mubr.f32.gmra.mrb[0].mxu0 %v497
    %v1443 = vpop.f32.mrb[0].mxu0
    %v1444 = vadd.f32 0.0, %v1443
    %v1445 = vpop.f32.mrb[0].mxu0
    %1446 = vmatprep.mubr.f32.mxu0 0.0
    %1447 = vmatmul.mubr.f32.gmra.mrb[0].mxu0 %v500
    %v1448 = vpop.f32.mrb[0].mxu0
    %v1449 = vadd.f32 0.0, %v1448
    %v1450 = vpop.f32.mrb[0].mxu0
    %1451 = vmatprep.mubr.f32.mxu0 0.0
    %1452 = vmatmul.mubr.f32.gmra.mrb[0].mxu0 %v503
    %v1453 = vpop.f32.mrb[0].mxu0
    %v1454 = vadd.f32 0.0, %v1453
    %v1455 = vpop.f32.mrb[0].mxu0
    %1456 = vmatprep.mubr.f32.mxu0 0.0
    %1457 = vmatmul.mubr.f32.gmra.mrb[0].mxu0 %v506
    %v1458 = vpop.f32.mrb[0].mxu0
    %v1459 = vadd.f32 0.0, %v1458
    %v1460 = vpop.f32.mrb[0].mxu0
    %1461 = vmatprep.mubr.f32.mxu0 0.0
    %1462 = vmatmul.mubr.f32.gmra.mrb[0].mxu0 %v509
    %v1463 = vpop.f32.mrb[0].mxu0
    %v1464 = vadd.f32 0.0, %v1463
    %v1465 = vpop.f32.mrb[0].mxu0
    %1466 = vmatprep.mubr.f32.mxu0 0.0
    %1467 = vmatmul.mubr.f32.gmra.mrb[0].mxu0 %v512
    %v1468 = vpop.f32.mrb[0].mxu0
    %v1469 = vadd.f32 0.0, %v1468
    %v1470 = vpop.f32.mrb[0].mxu0
    %1471 = vmatprep.mubr.f32.mxu0 0.0
    %1472 = vmatmul.mubr.f32.gmra.mrb[0].mxu0 %v515
    %v1473 = vpop.f32.mrb[0].mxu0
    %v1474 = vadd.f32 0.0, %v1473
    %v1475 = vpop.f32.mrb[0].mxu0
    %1476 = vmatprep.mubr.f32.mxu0 0.0
    %1477 = vmatmul.mubr.f32.gmra.mrb[0].mxu0 %v518
    %v1478 = vpop.f32.mrb[0].mxu0
    %v1479 = vadd.f32 0.0, %v1478
    %v1480 = vpop.f32.mrb[0].mxu0
    %1481 = vmatprep.mubr.f32.mxu0 0.0
    %1482 = vmatmul.mubr.f32.gmra.mrb[0].mxu0 %v521
    %v1483 = vpop.f32.mrb[0].mxu0
    %v1484 = vadd.f32 0.0, %v1483
    %v1485 = vpop.f32.mrb[0].mxu0
    %1486 = vdwg.mxu0
    %v1488 = vsel %vm523, %v329, 0
    %1490 = vmatprep.subr.mxu0 0.0
    %1491 = vmatpush1.msra.mxu0 %v1488
    %1492 = vmatprep.subr.mxu0 0.0
    %1493 = vmatpush1.msra.mxu0 0.0
    %1494 = vmatprep.subr.mxu0 0.0
    %1495 = vmatpush1.msra.mxu0 0.0
    %1496 = vmatprep.subr.mxu0 0.0
    %1497 = vmatpush1.msra.mxu0 0.0
    %1498 = vmatprep.subr.mxu0 0.0
    %1499 = vmatpush1.msra.mxu0 0.0
    %1500 = vmatprep.subr.mxu0 0.0
    %1501 = vmatpush1.msra.mxu0 0.0
    %1502 = vmatprep.subr.mxu0 0.0
    %1503 = vmatpush1.msra.mxu0 0.0
    %1504 = vmatprep.subr.mxu0 0.0
    %1505 = vmatpush1.msra.mxu0 0.0
    %1506 = vmatprep.subr.mxu0 0.0
    %1507 = vmatpush1.msra.mxu0 0.0
    %1508 = vmatprep.subr.mxu0 0.0
    %1509 = vmatpush1.msra.mxu0 0.0
    %1510 = vmatprep.subr.mxu0 0.0
    %1511 = vmatpush1.msra.mxu0 0.0
    %1512 = vmatprep.subr.mxu0 0.0
    %1513 = vmatpush1.msra.mxu0 0.0
    %1514 = vmatprep.subr.mxu0 0.0
    %1515 = vmatpush1.msra.mxu0 0.0
    %1516 = vmatprep.subr.mxu0 0.0
    %1517 = vmatpush1.msra.mxu0 0.0
    %1518 = vmatprep.subr.mxu0 0.0
    %1519 = vmatpush1.msra.mxu0 0.0
    %1520 = vmatprep.subr.mxu0 0.0
    %1521 = vmatpush1.msra.mxu0 0.0
    %1522 = vmatprep.subr.mxu0 0.0
    %1523 = vmatpush1.msra.mxu0 0.0
    %1524 = vmatprep.subr.mxu0 0.0
    %1525 = vmatpush1.msra.mxu0 0.0
    %1526 = vmatprep.subr.mxu0 0.0
    %1527 = vmatpush1.msra.mxu0 0.0
    %1528 = vmatprep.subr.mxu0 0.0
    %1529 = vmatpush1.msra.mxu0 0.0
    %1530 = vmatprep.subr.mxu0 0.0
    %1531 = vmatpush1.msra.mxu0 0.0
    %1532 = vmatprep.subr.mxu0 0.0
    %1533 = vmatpush1.msra.mxu0 0.0
    %1534 = vmatprep.subr.mxu0 0.0
    %1535 = vmatpush1.msra.mxu0 0.0
    %1536 = vmatprep.subr.mxu0 0.0
    %1537 = vmatpush1.msra.mxu0 0.0
    %1538 = vmatprep.subr.mxu0 0.0
    %1539 = vmatpush1.msra.mxu0 0.0
    %1540 = vmatprep.subr.mxu0 0.0
    %1541 = vmatpush1.msra.mxu0 0.0
    %1542 = vmatprep.subr.mxu0 0.0
    %1543 = vmatpush1.msra.mxu0 0.0
    %1544 = vmatprep.subr.mxu0 0.0
    %1545 = vmatpush1.msra.mxu0 0.0
    %1546 = vmatprep.subr.mxu0 0.0
    %1547 = vmatpush1.msra.mxu0 0.0
    %1548 = vmatprep.subr.mxu0 0.0
    %1549 = vmatpush1.msra.mxu0 0.0
    %1550 = vmatprep.subr.mxu0 0.0
    %1551 = vmatpush1.msra.mxu0 0.0
    %1552 = vmatprep.subr.mxu0 0.0
    %1553 = vmatpush1.msra.mxu0 0.0
    %1554 = vmatprep.mubr.f32.mxu0 0.0
    %1555 = vmatmul.mubr.f32.gmra.mrb[0].mxu0 %v673
    %v1556 = vpop.f32.mrb[0].mxu0
    %v1557 = vadd.f32 0.0, %v1556
    %v1558 = vpop.f32.mrb[0].mxu0
    %1559 = vmatprep.mubr.f32.mxu0 0.0
    %1560 = vmatmul.mubr.f32.gmra.mrb[0].mxu0 %v676
    %v1561 = vpop.f32.mrb[0].mxu0
    %v1562 = vadd.f32 0.0, %v1561
    %v1563 = vpop.f32.mrb[0].mxu0
    %1564 = vmatprep.mubr.f32.mxu0 0.0
    %1565 = vmatmul.mubr.f32.gmra.mrb[0].mxu0 %v679
    %v1566 = vpop.f32.mrb[0].mxu0
    %v1567 = vadd.f32 0.0, %v1566
    %v1568 = vpop.f32.mrb[0].mxu0
    %1569 = vmatprep.mubr.f32.mxu0 0.0
    %1570 = vmatmul.mubr.f32.gmra.mrb[0].mxu0 %v682
    %v1571 = vpop.f32.mrb[0].mxu0
    %v1572 = vadd.f32 0.0, %v1571
    %v1573 = vpop.f32.mrb[0].mxu0
    %1574 = vmatprep.mubr.f32.mxu0 0.0
    %1575 = vmatmul.mubr.f32.gmra.mrb[0].mxu0 %v685
    %v1576 = vpop.f32.mrb[0].mxu0
    %v1577 = vadd.f32 0.0, %v1576
    %v1578 = vpop.f32.mrb[0].mxu0
    %1579 = vmatprep.mubr.f32.mxu0 0.0
    %1580 = vmatmul.mubr.f32.gmra.mrb[0].mxu0 %v688
    %v1581 = vpop.f32.mrb[0].mxu0
    %v1582 = vadd.f32 0.0, %v1581
    %v1583 = vpop.f32.mrb[0].mxu0
    %1584 = vmatprep.mubr.f32.mxu0 0.0
    %1585 = vmatmul.mubr.f32.gmra.mrb[0].mxu0 %v691
    %v1586 = vpop.f32.mrb[0].mxu0
    %v1587 = vadd.f32 0.0, %v1586
    %v1588 = vpop.f32.mrb[0].mxu0
    %1589 = vmatprep.mubr.f32.mxu0 0.0
    %1590 = vmatmul.mubr.f32.gmra.mrb[0].mxu0 %v694
    %v1591 = vpop.f32.mrb[0].mxu0
    %v1592 = vadd.f32 0.0, %v1591
    %v1593 = vpop.f32.mrb[0].mxu0
    %1594 = vmatprep.mubr.f32.mxu0 0.0
    %1595 = vmatmul.mubr.f32.gmra.mrb[0].mxu0 %v697
    %v1596 = vpop.f32.mrb[0].mxu0
    %v1597 = vadd.f32 0.0, %v1596
    %v1598 = vpop.f32.mrb[0].mxu0
    %1599 = vmatprep.mubr.f32.mxu0 0.0
    %1600 = vmatmul.mubr.f32.gmra.mrb[0].mxu0 %v700
    %v1601 = vpop.f32.mrb[0].mxu0
    %v1602 = vadd.f32 0.0, %v1601
    %v1603 = vpop.f32.mrb[0].mxu0
    %1604 = vmatprep.mubr.f32.mxu0 0.0
    %1605 = vmatmul.mubr.f32.gmra.mrb[0].mxu0 %v703
    %v1606 = vpop.f32.mrb[0].mxu0
    %v1607 = vadd.f32 0.0, %v1606
    %v1608 = vpop.f32.mrb[0].mxu0
    %1609 = vmatprep.mubr.f32.mxu0 0.0
    %1610 = vmatmul.mubr.f32.gmra.mrb[0].mxu0 %v706
    %v1611 = vpop.f32.mrb[0].mxu0
    %v1612 = vadd.f32 0.0, %v1611
    %v1613 = vpop.f32.mrb[0].mxu0
    %1614 = vmatprep.mubr.f32.mxu0 0.0
    %1615 = vmatmul.mubr.f32.gmra.mrb[0].mxu0 %v709
    %v1616 = vpop.f32.mrb[0].mxu0
    %v1617 = vadd.f32 0.0, %v1616
    %v1618 = vpop.f32.mrb[0].mxu0
    %1619 = vmatprep.mubr.f32.mxu0 0.0
    %1620 = vmatmul.mubr.f32.gmra.mrb[0].mxu0 %v712
    %v1621 = vpop.f32.mrb[0].mxu0
    %v1622 = vadd.f32 0.0, %v1621
    %v1623 = vpop.f32.mrb[0].mxu0
    %1624 = vmatprep.mubr.f32.mxu0 0.0
    %1625 = vmatmul.mubr.f32.gmra.mrb[0].mxu0 %v715
    %v1626 = vpop.f32.mrb[0].mxu0
    %v1627 = vadd.f32 0.0, %v1626
    %v1628 = vpop.f32.mrb[0].mxu0
    %1629 = vmatprep.mubr.f32.mxu0 0.0
    %1630 = vmatmul.mubr.f32.gmra.mrb[0].mxu0 %v718
    %v1631 = vpop.f32.mrb[0].mxu0
    %v1632 = vadd.f32 0.0, %v1631
    %v1633 = vpop.f32.mrb[0].mxu0
    %1634 = vdwg.mxu0
    %v1635 = vmul.f32 %v1409, %v1557
    %v1636 = vmul.f32 %v1414, %v1562
    %v1637 = vmul.f32 %v1419, %v1567
    %v1638 = vmul.f32 %v1424, %v1572
    %v1639 = vmul.f32 %v1429, %v1577
    %v1640 = vmul.f32 %v1434, %v1582
    %v1641 = vmul.f32 %v1439, %v1587
    %v1642 = vmul.f32 %v1444, %v1592
    %v1643 = vmul.f32 %v1449, %v1597
    %v1644 = vmul.f32 %v1454, %v1602
    %v1645 = vmul.f32 %v1459, %v1607
    %v1646 = vmul.f32 %v1464, %v1612
    %v1647 = vmul.f32 %v1469, %v1617
    %v1648 = vmul.f32 %v1474, %v1622
    %v1649 = vmul.f32 %v1479, %v1627
    %v1650 = vmul.f32 %v1484, %v1632
    %v1652 = vsel %vm523, %v409, 0
    %1654 = vmatprep.subr.mxu0 0.0
    %1655 = vmatpush1.msra.mxu0 %v1652
    %1656 = vmatprep.subr.mxu0 0.0
    %1657 = vmatpush1.msra.mxu0 0.0
    %1658 = vmatprep.subr.mxu0 0.0
    %1659 = vmatpush1.msra.mxu0 0.0
    %1660 = vmatprep.subr.mxu0 0.0
    %1661 = vmatpush1.msra.mxu0 0.0
    %1662 = vmatprep.subr.mxu0 0.0
    %1663 = vmatpush1.msra.mxu0 0.0
    %1664 = vmatprep.subr.mxu0 0.0
    %1665 = vmatpush1.msra.mxu0 0.0
    %1666 = vmatprep.subr.mxu0 0.0
    %1667 = vmatpush1.msra.mxu0 0.0
    %1668 = vmatprep.subr.mxu0 0.0
    %1669 = vmatpush1.msra.mxu0 0.0
    %1670 = vmatprep.subr.mxu0 0.0
    %1671 = vmatpush1.msra.mxu0 0.0
    %1672 = vmatprep.subr.mxu0 0.0
    %1673 = vmatpush1.msra.mxu0 0.0
    %1674 = vmatprep.subr.mxu0 0.0
    %1675 = vmatpush1.msra.mxu0 0.0
    %1676 = vmatprep.subr.mxu0 0.0
    %1677 = vmatpush1.msra.mxu0 0.0
    %1678 = vmatprep.subr.mxu0 0.0
    %1679 = vmatpush1.msra.mxu0 0.0
    %1680 = vmatprep.subr.mxu0 0.0
    %1681 = vmatpush1.msra.mxu0 0.0
    %1682 = vmatprep.subr.mxu0 0.0
    %1683 = vmatpush1.msra.mxu0 0.0
    %1684 = vmatprep.subr.mxu0 0.0
    %1685 = vmatpush1.msra.mxu0 0.0
    %1686 = vmatprep.subr.mxu0 0.0
    %1687 = vmatpush1.msra.mxu0 0.0
    %1688 = vmatprep.subr.mxu0 0.0
    %1689 = vmatpush1.msra.mxu0 0.0
    %1690 = vmatprep.subr.mxu0 0.0
    %1691 = vmatpush1.msra.mxu0 0.0
    %1692 = vmatprep.subr.mxu0 0.0
    %1693 = vmatpush1.msra.mxu0 0.0
    %1694 = vmatprep.subr.mxu0 0.0
    %1695 = vmatpush1.msra.mxu0 0.0
    %1696 = vmatprep.subr.mxu0 0.0
    %1697 = vmatpush1.msra.mxu0 0.0
    %1698 = vmatprep.subr.mxu0 0.0
    %1699 = vmatpush1.msra.mxu0 0.0
    %1700 = vmatprep.subr.mxu0 0.0
    %1701 = vmatpush1.msra.mxu0 0.0
    %1702 = vmatprep.subr.mxu0 0.0
    %1703 = vmatpush1.msra.mxu0 0.0
    %1704 = vmatprep.subr.mxu0 0.0
    %1705 = vmatpush1.msra.mxu0 0.0
    %1706 = vmatprep.subr.mxu0 0.0
    %1707 = vmatpush1.msra.mxu0 0.0
    %1708 = vmatprep.subr.mxu0 0.0
    %1709 = vmatpush1.msra.mxu0 0.0
    %1710 = vmatprep.subr.mxu0 0.0
    %1711 = vmatpush1.msra.mxu0 0.0
    %1712 = vmatprep.subr.mxu0 0.0
    %1713 = vmatpush1.msra.mxu0 0.0
    %1714 = vmatprep.subr.mxu0 0.0
    %1715 = vmatpush1.msra.mxu0 0.0
    %1716 = vmatprep.subr.mxu0 0.0
    %1717 = vmatpush1.msra.mxu0 0.0
    %1718 = vmatprep.mubr.f32.mxu0 0.0
    %1719 = vmatmul.mubr.f32.gmra.mrb[0].mxu0 %v885
    %v1720 = vpop.f32.mrb[0].mxu0
    %v1721 = vadd.f32 0.0, %v1720
    %v1722 = vpop.f32.mrb[0].mxu0
    %1723 = vmatprep.mubr.f32.mxu0 0.0
    %1724 = vmatmul.mubr.f32.gmra.mrb[0].mxu0 %v888
    %v1725 = vpop.f32.mrb[0].mxu0
    %v1726 = vadd.f32 0.0, %v1725
    %v1727 = vpop.f32.mrb[0].mxu0
    %1728 = vmatprep.mubr.f32.mxu0 0.0
    %1729 = vmatmul.mubr.f32.gmra.mrb[0].mxu0 %v891
    %v1730 = vpop.f32.mrb[0].mxu0
    %v1731 = vadd.f32 0.0, %v1730
    %v1732 = vpop.f32.mrb[0].mxu0
    %1733 = vmatprep.mubr.f32.mxu0 0.0
    %1734 = vmatmul.mubr.f32.gmra.mrb[0].mxu0 %v894
    %v1735 = vpop.f32.mrb[0].mxu0
    %v1736 = vadd.f32 0.0, %v1735
    %v1737 = vpop.f32.mrb[0].mxu0
    %1738 = vmatprep.mubr.f32.mxu0 0.0
    %1739 = vmatmul.mubr.f32.gmra.mrb[0].mxu0 %v897
    %v1740 = vpop.f32.mrb[0].mxu0
    %v1741 = vadd.f32 0.0, %v1740
    %v1742 = vpop.f32.mrb[0].mxu0
    %1743 = vmatprep.mubr.f32.mxu0 0.0
    %1744 = vmatmul.mubr.f32.gmra.mrb[0].mxu0 %v900
    %v1745 = vpop.f32.mrb[0].mxu0
    %v1746 = vadd.f32 0.0, %v1745
    %v1747 = vpop.f32.mrb[0].mxu0
    %1748 = vmatprep.mubr.f32.mxu0 0.0
    %1749 = vmatmul.mubr.f32.gmra.mrb[0].mxu0 %v903
    %v1750 = vpop.f32.mrb[0].mxu0
    %v1751 = vadd.f32 0.0, %v1750
    %v1752 = vpop.f32.mrb[0].mxu0
    %1753 = vmatprep.mubr.f32.mxu0 0.0
    %1754 = vmatmul.mubr.f32.gmra.mrb[0].mxu0 %v906
    %v1755 = vpop.f32.mrb[0].mxu0
    %v1756 = vadd.f32 0.0, %v1755
    %v1757 = vpop.f32.mrb[0].mxu0
    %1758 = vmatprep.mubr.f32.mxu0 0.0
    %1759 = vmatmul.mubr.f32.gmra.mrb[0].mxu0 %v909
    %v1760 = vpop.f32.mrb[0].mxu0
    %v1761 = vadd.f32 0.0, %v1760
    %v1762 = vpop.f32.mrb[0].mxu0
    %1763 = vmatprep.mubr.f32.mxu0 0.0
    %1764 = vmatmul.mubr.f32.gmra.mrb[0].mxu0 %v912
    %v1765 = vpop.f32.mrb[0].mxu0
    %v1766 = vadd.f32 0.0, %v1765
    %v1767 = vpop.f32.mrb[0].mxu0
    %1768 = vmatprep.mubr.f32.mxu0 0.0
    %1769 = vmatmul.mubr.f32.gmra.mrb[0].mxu0 %v915
    %v1770 = vpop.f32.mrb[0].mxu0
    %v1771 = vadd.f32 0.0, %v1770
    %v1772 = vpop.f32.mrb[0].mxu0
    %1773 = vmatprep.mubr.f32.mxu0 0.0
    %1774 = vmatmul.mubr.f32.gmra.mrb[0].mxu0 %v918
    %v1775 = vpop.f32.mrb[0].mxu0
    %v1776 = vadd.f32 0.0, %v1775
    %v1777 = vpop.f32.mrb[0].mxu0
    %1778 = vmatprep.mubr.f32.mxu0 0.0
    %1779 = vmatmul.mubr.f32.gmra.mrb[0].mxu0 %v921
    %v1780 = vpop.f32.mrb[0].mxu0
    %v1781 = vadd.f32 0.0, %v1780
    %v1782 = vpop.f32.mrb[0].mxu0
    %1783 = vmatprep.mubr.f32.mxu0 0.0
    %1784 = vmatmul.mubr.f32.gmra.mrb[0].mxu0 %v924
    %v1785 = vpop.f32.mrb[0].mxu0
    %v1786 = vadd.f32 0.0, %v1785
    %v1787 = vpop.f32.mrb[0].mxu0
    %1788 = vmatprep.mubr.f32.mxu0 0.0
    %1789 = vmatmul.mubr.f32.gmra.mrb[0].mxu0 %v927
    %v1790 = vpop.f32.mrb[0].mxu0
    %v1791 = vadd.f32 0.0, %v1790
    %v1792 = vpop.f32.mrb[0].mxu0
    %1793 = vmatprep.mubr.f32.mxu0 0.0
    %1794 = vmatmul.mubr.f32.gmra.mrb[0].mxu0 %v930
    %v1795 = vpop.f32.mrb[0].mxu0
    %v1796 = vadd.f32 0.0, %v1795
    %v1797 = vpop.f32.mrb[0].mxu0
    %1798 = vdwg.mxu0
    %v1799 = vmul.f32 %v1635, %v1721
    %v1800 = vmul.f32 %v1636, %v1726
    %v1801 = vmul.f32 %v1637, %v1731
    %v1802 = vmul.f32 %v1638, %v1736
    %v1803 = vmul.f32 %v1639, %v1741
    %v1804 = vmul.f32 %v1640, %v1746
    %v1805 = vmul.f32 %v1641, %v1751
    %v1806 = vmul.f32 %v1642, %v1756
    %v1807 = vmul.f32 %v1643, %v1761
    %v1808 = vmul.f32 %v1644, %v1766
    %v1809 = vmul.f32 %v1645, %v1771
    %v1810 = vmul.f32 %v1646, %v1776
    %v1811 = vmul.f32 %v1647, %v1781
    %v1812 = vmul.f32 %v1648, %v1786
    %v1813 = vmul.f32 %v1649, %v1791
    %v1814 = vmul.f32 %v1650, %v1796
    %v1815 = vld [vmem:[#allocation2] sm:$0xff]
    %v1816 = vld [vmem:[#allocation2 + $0x8] sm:$0xff]
    %v1817 = vld [vmem:[#allocation2 + $0x10] sm:$0xff]
    %v1818 = vld [vmem:[#allocation2 + $0x18] sm:$0xff]
    %v1819 = vld [vmem:[#allocation2 + $0x20] sm:$0xff]
    %v1820 = vld [vmem:[#allocation2 + $0x28] sm:$0xff]
    %v1821 = vld [vmem:[#allocation2 + $0x30] sm:$0xff]
    %v1822 = vld [vmem:[#allocation2 + $0x38] sm:$0xff]
    %v1823 = vld [vmem:[#allocation2 + $0x40] sm:$0xff]
    %v1824 = vld [vmem:[#allocation2 + $0x48] sm:$0xff]
    %v1825 = vld [vmem:[#allocation2 + $0x50] sm:$0xff]
    %v1826 = vld [vmem:[#allocation2 + $0x58] sm:$0xff]
    %v1827 = vld [vmem:[#allocation2 + $0x60] sm:$0xff]
    %v1828 = vld [vmem:[#allocation2 + $0x68] sm:$0xff]
    %v1829 = vld [vmem:[#allocation2 + $0x70] sm:$0xff]
    %v1830 = vld [vmem:[#allocation2 + $0x78] sm:$0xff]
    %v1832 = vsel %vm1112, %v1799, 0
    %v1835 = vsel %vm1112, %v1800, 0
    %v1838 = vsel %vm1112, %v1801, 0
    %v1841 = vsel %vm1112, %v1802, 0
    %v1844 = vsel %vm1112, %v1803, 0
    %v1847 = vsel %vm1112, %v1804, 0
    %v1850 = vsel %vm1112, %v1805, 0
    %v1853 = vsel %vm1112, %v1806, 0
    %v1856 = vsel %vm1112, %v1807, 0
    %v1859 = vsel %vm1112, %v1808, 0
    %v1862 = vsel %vm1112, %v1809, 0
    %v1865 = vsel %vm1112, %v1810, 0
    %v1868 = vsel %vm1112, %v1811, 0
    %v1871 = vsel %vm1112, %v1812, 0
    %v1874 = vsel %vm1112, %v1813, 0
    %v1877 = vsel %vm1112, %v1814, 0
    %1879 = vmatprep.subr.mxu0 0.0
    %1880 = vmatpush1.msra.mxu0 %v466
    %1881 = vmatprep.subr.mxu0 0.0
    %1882 = vmatpush1.msra.mxu0 %v467
    %1883 = vmatprep.subr.mxu0 0.0
    %1884 = vmatpush1.msra.mxu0 %v468
    %1885 = vmatprep.subr.mxu0 0.0
    %1886 = vmatpush1.msra.mxu0 %v469
    %1887 = vmatprep.subr.mxu0 0.0
    %1888 = vmatpush1.msra.mxu0 %v470
    %1889 = vmatprep.subr.mxu0 0.0
    %1890 = vmatpush1.msra.mxu0 %v471
    %1891 = vmatprep.subr.mxu0 0.0
    %1892 = vmatpush1.msra.mxu0 %v472
    %1893 = vmatprep.subr.mxu0 0.0
    %1894 = vmatpush1.msra.mxu0 %v473
    %1895 = vmatprep.subr.mxu0 0.0
    %1896 = vmatpush1.msra.mxu0 0.0
    %1897 = vmatprep.subr.mxu0 0.0
    %1898 = vmatpush1.msra.mxu0 0.0
    %1899 = vmatprep.subr.mxu0 0.0
    %1900 = vmatpush1.msra.mxu0 0.0
    %1901 = vmatprep.subr.mxu0 0.0
    %1902 = vmatpush1.msra.mxu0 0.0
    %1903 = vmatprep.subr.mxu0 0.0
    %1904 = vmatpush1.msra.mxu0 0.0
    %1905 = vmatprep.subr.mxu0 0.0
    %1906 = vmatpush1.msra.mxu0 0.0
    %1907 = vmatprep.subr.mxu0 0.0
    %1908 = vmatpush1.msra.mxu0 0.0
    %1909 = vmatprep.subr.mxu0 0.0
    %1910 = vmatpush1.msra.mxu0 0.0
    %1911 = vmatprep.subr.mxu0 0.0
    %1912 = vmatpush1.msra.mxu0 0.0
    %1913 = vmatprep.subr.mxu0 0.0
    %1914 = vmatpush1.msra.mxu0 0.0
    %1915 = vmatprep.subr.mxu0 0.0
    %1916 = vmatpush1.msra.mxu0 0.0
    %1917 = vmatprep.subr.mxu0 0.0
    %1918 = vmatpush1.msra.mxu0 0.0
    %1919 = vmatprep.subr.mxu0 0.0
    %1920 = vmatpush1.msra.mxu0 0.0
    %1921 = vmatprep.subr.mxu0 0.0
    %1922 = vmatpush1.msra.mxu0 0.0
    %1923 = vmatprep.subr.mxu0 0.0
    %1924 = vmatpush1.msra.mxu0 0.0
    %1925 = vmatprep.subr.mxu0 0.0
    %1926 = vmatpush1.msra.mxu0 0.0
    %1927 = vmatprep.subr.mxu0 0.0
    %1928 = vmatpush1.msra.mxu0 0.0
    %1929 = vmatprep.subr.mxu0 0.0
    %1930 = vmatpush1.msra.mxu0 0.0
    %1931 = vmatprep.subr.mxu0 0.0
    %1932 = vmatpush1.msra.mxu0 0.0
    %1933 = vmatprep.subr.mxu0 0.0
    %1934 = vmatpush1.msra.mxu0 0.0
    %1935 = vmatprep.subr.mxu0 0.0
    %1936 = vmatpush1.msra.mxu0 0.0
    %1937 = vmatprep.subr.mxu0 0.0
    %1938 = vmatpush1.msra.mxu0 0.0
    %1939 = vmatprep.subr.mxu0 0.0
    %1940 = vmatpush1.msra.mxu0 0.0
    %1941 = vmatprep.subr.mxu0 0.0
    %1942 = vmatpush1.msra.mxu0 0.0
    %1943 = vmatprep.mubr.f32.mxu0 0.0
    %1944 = vmatmul.mubr.f32.gmra.mrb[0].mxu0 %v1832
    %v1945 = vpop.f32.mrb[0].mxu0
    %v1946 = vadd.f32 0.0, %v1945
    %v1947 = vpop.f32.mrb[0].mxu0
    %1948 = vmatprep.mubr.f32.mxu0 0.0
    %1949 = vmatmul.mubr.f32.gmra.mrb[0].mxu0 %v1835
    %v1950 = vpop.f32.mrb[0].mxu0
    %v1951 = vadd.f32 0.0, %v1950
    %v1952 = vpop.f32.mrb[0].mxu0
    %1953 = vmatprep.mubr.f32.mxu0 0.0
    %1954 = vmatmul.mubr.f32.gmra.mrb[0].mxu0 %v1838
    %v1955 = vpop.f32.mrb[0].mxu0
    %v1956 = vadd.f32 0.0, %v1955
    %v1957 = vpop.f32.mrb[0].mxu0
    %1958 = vmatprep.mubr.f32.mxu0 0.0
    %1959 = vmatmul.mubr.f32.gmra.mrb[0].mxu0 %v1841
    %v1960 = vpop.f32.mrb[0].mxu0
    %v1961 = vadd.f32 0.0, %v1960
    %v1962 = vpop.f32.mrb[0].mxu0
    %1963 = vmatprep.mubr.f32.mxu0 0.0
    %1964 = vmatmul.mubr.f32.gmra.mrb[0].mxu0 %v1844
    %v1965 = vpop.f32.mrb[0].mxu0
    %v1966 = vadd.f32 0.0, %v1965
    %v1967 = vpop.f32.mrb[0].mxu0
    %1968 = vmatprep.mubr.f32.mxu0 0.0
    %1969 = vmatmul.mubr.f32.gmra.mrb[0].mxu0 %v1847
    %v1970 = vpop.f32.mrb[0].mxu0
    %v1971 = vadd.f32 0.0, %v1970
    %v1972 = vpop.f32.mrb[0].mxu0
    %1973 = vmatprep.mubr.f32.mxu0 0.0
    %1974 = vmatmul.mubr.f32.gmra.mrb[0].mxu0 %v1850
    %v1975 = vpop.f32.mrb[0].mxu0
    %v1976 = vadd.f32 0.0, %v1975
    %v1977 = vpop.f32.mrb[0].mxu0
    %1978 = vmatprep.mubr.f32.mxu0 0.0
    %1979 = vmatmul.mubr.f32.gmra.mrb[0].mxu0 %v1853
    %v1980 = vpop.f32.mrb[0].mxu0
    %v1981 = vadd.f32 0.0, %v1980
    %v1982 = vpop.f32.mrb[0].mxu0
    %1983 = vmatprep.mubr.f32.mxu0 0.0
    %1984 = vmatmul.mubr.f32.gmra.mrb[0].mxu0 %v1856
    %v1985 = vpop.f32.mrb[0].mxu0
    %v1986 = vadd.f32 0.0, %v1985
    %v1987 = vpop.f32.mrb[0].mxu0
    %1988 = vmatprep.mubr.f32.mxu0 0.0
    %1989 = vmatmul.mubr.f32.gmra.mrb[0].mxu0 %v1859
    %v1990 = vpop.f32.mrb[0].mxu0
    %v1991 = vadd.f32 0.0, %v1990
    %v1992 = vpop.f32.mrb[0].mxu0
    %1993 = vmatprep.mubr.f32.mxu0 0.0
    %1994 = vmatmul.mubr.f32.gmra.mrb[0].mxu0 %v1862
    %v1995 = vpop.f32.mrb[0].mxu0
    %v1996 = vadd.f32 0.0, %v1995
    %v1997 = vpop.f32.mrb[0].mxu0
    %1998 = vmatprep.mubr.f32.mxu0 0.0
    %1999 = vmatmul.mubr.f32.gmra.mrb[0].mxu0 %v1865
    %v2000 = vpop.f32.mrb[0].mxu0
    %v2001 = vadd.f32 0.0, %v2000
    %v2002 = vpop.f32.mrb[0].mxu0
    %2003 = vmatprep.mubr.f32.mxu0 0.0
    %2004 = vmatmul.mubr.f32.gmra.mrb[0].mxu0 %v1868
    %v2005 = vpop.f32.mrb[0].mxu0
    %v2006 = vadd.f32 0.0, %v2005
    %v2007 = vpop.f32.mrb[0].mxu0
    %2008 = vmatprep.mubr.f32.mxu0 0.0
    %2009 = vmatmul.mubr.f32.gmra.mrb[0].mxu0 %v1871
    %v2010 = vpop.f32.mrb[0].mxu0
    %v2011 = vadd.f32 0.0, %v2010
    %v2012 = vpop.f32.mrb[0].mxu0
    %2013 = vmatprep.mubr.f32.mxu0 0.0
    %2014 = vmatmul.mubr.f32.gmra.mrb[0].mxu0 %v1874
    %v2015 = vpop.f32.mrb[0].mxu0
    %v2016 = vadd.f32 0.0, %v2015
    %v2017 = vpop.f32.mrb[0].mxu0
    %2018 = vmatprep.mubr.f32.mxu0 0.0
    %2019 = vmatmul.mubr.f32.gmra.mrb[0].mxu0 %v1877
    %v2020 = vpop.f32.mrb[0].mxu0
    %v2021 = vadd.f32 0.0, %v2020
    %v2022 = vpop.f32.mrb[0].mxu0
    %2023 = vdwg.mxu0
    %2040 = vrot.lane.b32.xlu0 %v1946, 1
    %v2041 = vpop.permute.xlu0 %2040
    %2042 = vrot.lane.b32.xlu0 %v1951, 1
    %v2043 = vpop.permute.xlu0 %2042
    %2044 = vrot.lane.b32.xlu0 %v1956, 1
    %v2045 = vpop.permute.xlu0 %2044
    %2046 = vrot.lane.b32.xlu0 %v1961, 1
    %v2047 = vpop.permute.xlu0 %2046
    %2048 = vrot.lane.b32.xlu0 %v1966, 1
    %v2049 = vpop.permute.xlu0 %2048
    %2050 = vrot.lane.b32.xlu0 %v1971, 1
    %v2051 = vpop.permute.xlu0 %2050
    %2052 = vrot.lane.b32.xlu0 %v1976, 1
    %v2053 = vpop.permute.xlu0 %2052
    %2054 = vrot.lane.b32.xlu0 %v1981, 1
    %v2055 = vpop.permute.xlu0 %2054
    %2056 = vrot.lane.b32.xlu0 %v1986, 1
    %v2057 = vpop.permute.xlu0 %2056
    %2058 = vrot.lane.b32.xlu0 %v1991, 1
    %v2059 = vpop.permute.xlu0 %2058
    %2060 = vrot.lane.b32.xlu0 %v1996, 1
    %v2061 = vpop.permute.xlu0 %2060
    %2062 = vrot.lane.b32.xlu0 %v2001, 1
    %v2063 = vpop.permute.xlu0 %2062
    %2064 = vrot.lane.b32.xlu0 %v2006, 1
    %v2065 = vpop.permute.xlu0 %2064
    %2066 = vrot.lane.b32.xlu0 %v2011, 1
    %v2067 = vpop.permute.xlu0 %2066
    %2068 = vrot.lane.b32.xlu0 %v2016, 1
    %v2069 = vpop.permute.xlu0 %2068
    %2070 = vrot.lane.b32.xlu0 %v2021, 1
    %v2071 = vpop.permute.xlu0 %2070
    %v2088 = vadd.f32 %v1815, %v2041
    %v2089 = vadd.f32 %v1816, %v2043
    %v2090 = vadd.f32 %v1817, %v2045
    %v2091 = vadd.f32 %v1818, %v2047
    %v2092 = vadd.f32 %v1819, %v2049
    %v2093 = vadd.f32 %v1820, %v2051
    %v2094 = vadd.f32 %v1821, %v2053
    %v2095 = vadd.f32 %v1822, %v2055
    %v2096 = vadd.f32 %v1823, %v2057
    %v2097 = vadd.f32 %v1824, %v2059
    %v2098 = vadd.f32 %v1825, %v2061
    %v2099 = vadd.f32 %v1826, %v2063
    %v2100 = vadd.f32 %v1827, %v2065
    %v2101 = vadd.f32 %v1828, %v2067
    %v2102 = vadd.f32 %v1829, %v2069
    %v2103 = vadd.f32 %v1830, %v2071
    %vm2104 = vcmask 15368
    %2105 = vst.msk [vmem:[#allocation2] sm:$0xff] %vm2104, %v2088
    %2106 = vst.msk [vmem:[#allocation2 + $0x8] sm:$0xff] %vm2104, %v2089
    %2107 = vst.msk [vmem:[#allocation2 + $0x10] sm:$0xff] %vm2104, %v2090
    %2108 = vst.msk [vmem:[#allocation2 + $0x18] sm:$0xff] %vm2104, %v2091
    %2109 = vst.msk [vmem:[#allocation2 + $0x20] sm:$0xff] %vm2104, %v2092
    %2110 = vst.msk [vmem:[#allocation2 + $0x28] sm:$0xff] %vm2104, %v2093
    %2111 = vst.msk [vmem:[#allocation2 + $0x30] sm:$0xff] %vm2104, %v2094
    %2112 = vst.msk [vmem:[#allocation2 + $0x38] sm:$0xff] %vm2104, %v2095
    %2113 = vst.msk [vmem:[#allocation2 + $0x40] sm:$0xff] %vm2104, %v2096
    %2114 = vst.msk [vmem:[#allocation2 + $0x48] sm:$0xff] %vm2104, %v2097
    %2115 = vst.msk [vmem:[#allocation2 + $0x50] sm:$0xff] %vm2104, %v2098
    %2116 = vst.msk [vmem:[#allocation2 + $0x58] sm:$0xff] %vm2104, %v2099
    %2117 = vst.msk [vmem:[#allocation2 + $0x60] sm:$0xff] %vm2104, %v2100
    %2118 = vst.msk [vmem:[#allocation2 + $0x68] sm:$0xff] %vm2104, %v2101
    %2119 = vst.msk [vmem:[#allocation2 + $0x70] sm:$0xff] %vm2104, %v2102
    %2120 = vst.msk [vmem:[#allocation2 + $0x78] sm:$0xff] %vm2104, %v2103
    %v2122 = vsel %vm523, %v250, 0
    %2124 = vmatprep.subr.mxu0 0.0
    %2125 = vmatpush1.msra.mxu0 %v2122
    %2126 = vmatprep.subr.mxu0 0.0
    %2127 = vmatpush1.msra.mxu0 0.0
    %2128 = vmatprep.subr.mxu0 0.0
    %2129 = vmatpush1.msra.mxu0 0.0
    %2130 = vmatprep.subr.mxu0 0.0
    %2131 = vmatpush1.msra.mxu0 0.0
    %2132 = vmatprep.subr.mxu0 0.0
    %2133 = vmatpush1.msra.mxu0 0.0
    %2134 = vmatprep.subr.mxu0 0.0
    %2135 = vmatpush1.msra.mxu0 0.0
    %2136 = vmatprep.subr.mxu0 0.0
    %2137 = vmatpush1.msra.mxu0 0.0
    %2138 = vmatprep.subr.mxu0 0.0
    %2139 = vmatpush1.msra.mxu0 0.0
    %2140 = vmatprep.subr.mxu0 0.0
    %2141 = vmatpush1.msra.mxu0 0.0
    %2142 = vmatprep.subr.mxu0 0.0
    %2143 = vmatpush1.msra.mxu0 0.0
    %2144 = vmatprep.subr.mxu0 0.0
    %2145 = vmatpush1.msra.mxu0 0.0
    %2146 = vmatprep.subr.mxu0 0.0
    %2147 = vmatpush1.msra.mxu0 0.0
    %2148 = vmatprep.subr.mxu0 0.0
    %2149 = vmatpush1.msra.mxu0 0.0
    %2150 = vmatprep.subr.mxu0 0.0
    %2151 = vmatpush1.msra.mxu0 0.0
    %2152 = vmatprep.subr.mxu0 0.0
    %2153 = vmatpush1.msra.mxu0 0.0
    %2154 = vmatprep.subr.mxu0 0.0
    %2155 = vmatpush1.msra.mxu0 0.0
    %2156 = vmatprep.subr.mxu0 0.0
    %2157 = vmatpush1.msra.mxu0 0.0
    %2158 = vmatprep.subr.mxu0 0.0
    %2159 = vmatpush1.msra.mxu0 0.0
    %2160 = vmatprep.subr.mxu0 0.0
    %2161 = vmatpush1.msra.mxu0 0.0
    %2162 = vmatprep.subr.mxu0 0.0
    %2163 = vmatpush1.msra.mxu0 0.0
    %2164 = vmatprep.subr.mxu0 0.0
    %2165 = vmatpush1.msra.mxu0 0.0
    %2166 = vmatprep.subr.mxu0 0.0
    %2167 = vmatpush1.msra.mxu0 0.0
    %2168 = vmatprep.subr.mxu0 0.0
    %2169 = vmatpush1.msra.mxu0 0.0
    %2170 = vmatprep.subr.mxu0 0.0
    %2171 = vmatpush1.msra.mxu0 0.0
    %2172 = vmatprep.subr.mxu0 0.0
    %2173 = vmatpush1.msra.mxu0 0.0
    %2174 = vmatprep.subr.mxu0 0.0
    %2175 = vmatpush1.msra.mxu0 0.0
    %2176 = vmatprep.subr.mxu0 0.0
    %2177 = vmatpush1.msra.mxu0 0.0
    %2178 = vmatprep.subr.mxu0 0.0
    %2179 = vmatpush1.msra.mxu0 0.0
    %2180 = vmatprep.subr.mxu0 0.0
    %2181 = vmatpush1.msra.mxu0 0.0
    %2182 = vmatprep.subr.mxu0 0.0
    %2183 = vmatpush1.msra.mxu0 0.0
    %2184 = vmatprep.subr.mxu0 0.0
    %2185 = vmatpush1.msra.mxu0 0.0
    %2186 = vmatprep.subr.mxu0 0.0
    %2187 = vmatpush1.msra.mxu0 0.0
    %2188 = vmatprep.mubr.f32.mxu0 0.0
    %2189 = vmatmul.mubr.f32.gmra.mrb[0].mxu0 %v476
    %v2190 = vpop.f32.mrb[0].mxu0
    %v2191 = vadd.f32 0.0, %v2190
    %v2192 = vpop.f32.mrb[0].mxu0
    %2193 = vmatprep.mubr.f32.mxu0 0.0
    %2194 = vmatmul.mubr.f32.gmra.mrb[0].mxu0 %v479
    %v2195 = vpop.f32.mrb[0].mxu0
    %v2196 = vadd.f32 0.0, %v2195
    %v2197 = vpop.f32.mrb[0].mxu0
    %2198 = vmatprep.mubr.f32.mxu0 0.0
    %2199 = vmatmul.mubr.f32.gmra.mrb[0].mxu0 %v482
    %v2200 = vpop.f32.mrb[0].mxu0
    %v2201 = vadd.f32 0.0, %v2200
    %v2202 = vpop.f32.mrb[0].mxu0
    %2203 = vmatprep.mubr.f32.mxu0 0.0
    %2204 = vmatmul.mubr.f32.gmra.mrb[0].mxu0 %v485
    %v2205 = vpop.f32.mrb[0].mxu0
    %v2206 = vadd.f32 0.0, %v2205
    %v2207 = vpop.f32.mrb[0].mxu0
    %2208 = vmatprep.mubr.f32.mxu0 0.0
    %2209 = vmatmul.mubr.f32.gmra.mrb[0].mxu0 %v488
    %v2210 = vpop.f32.mrb[0].mxu0
    %v2211 = vadd.f32 0.0, %v2210
    %v2212 = vpop.f32.mrb[0].mxu0
    %2213 = vmatprep.mubr.f32.mxu0 0.0
    %2214 = vmatmul.mubr.f32.gmra.mrb[0].mxu0 %v491
    %v2215 = vpop.f32.mrb[0].mxu0
    %v2216 = vadd.f32 0.0, %v2215
    %v2217 = vpop.f32.mrb[0].mxu0
    %2218 = vmatprep.mubr.f32.mxu0 0.0
    %2219 = vmatmul.mubr.f32.gmra.mrb[0].mxu0 %v494
    %v2220 = vpop.f32.mrb[0].mxu0
    %v2221 = vadd.f32 0.0, %v2220
    %v2222 = vpop.f32.mrb[0].mxu0
    %2223 = vmatprep.mubr.f32.mxu0 0.0
    %2224 = vmatmul.mubr.f32.gmra.mrb[0].mxu0 %v497
    %v2225 = vpop.f32.mrb[0].mxu0
    %v2226 = vadd.f32 0.0, %v2225
    %v2227 = vpop.f32.mrb[0].mxu0
    %2228 = vmatprep.mubr.f32.mxu0 0.0
    %2229 = vmatmul.mubr.f32.gmra.mrb[0].mxu0 %v500
    %v2230 = vpop.f32.mrb[0].mxu0
    %v2231 = vadd.f32 0.0, %v2230
    %v2232 = vpop.f32.mrb[0].mxu0
    %2233 = vmatprep.mubr.f32.mxu0 0.0
    %2234 = vmatmul.mubr.f32.gmra.mrb[0].mxu0 %v503
    %v2235 = vpop.f32.mrb[0].mxu0
    %v2236 = vadd.f32 0.0, %v2235
    %v2237 = vpop.f32.mrb[0].mxu0
    %2238 = vmatprep.mubr.f32.mxu0 0.0
    %2239 = vmatmul.mubr.f32.gmra.mrb[0].mxu0 %v506
    %v2240 = vpop.f32.mrb[0].mxu0
    %v2241 = vadd.f32 0.0, %v2240
    %v2242 = vpop.f32.mrb[0].mxu0
    %2243 = vmatprep.mubr.f32.mxu0 0.0
    %2244 = vmatmul.mubr.f32.gmra.mrb[0].mxu0 %v509
    %v2245 = vpop.f32.mrb[0].mxu0
    %v2246 = vadd.f32 0.0, %v2245
    %v2247 = vpop.f32.mrb[0].mxu0
    %2248 = vmatprep.mubr.f32.mxu0 0.0
    %2249 = vmatmul.mubr.f32.gmra.mrb[0].mxu0 %v512
    %v2250 = vpop.f32.mrb[0].mxu0
    %v2251 = vadd.f32 0.0, %v2250
    %v2252 = vpop.f32.mrb[0].mxu0
    %2253 = vmatprep.mubr.f32.mxu0 0.0
    %2254 = vmatmul.mubr.f32.gmra.mrb[0].mxu0 %v515
    %v2255 = vpop.f32.mrb[0].mxu0
    %v2256 = vadd.f32 0.0, %v2255
    %v2257 = vpop.f32.mrb[0].mxu0
    %2258 = vmatprep.mubr.f32.mxu0 0.0
    %2259 = vmatmul.mubr.f32.gmra.mrb[0].mxu0 %v518
    %v2260 = vpop.f32.mrb[0].mxu0
    %v2261 = vadd.f32 0.0, %v2260
    %v2262 = vpop.f32.mrb[0].mxu0
    %2263 = vmatprep.mubr.f32.mxu0 0.0
    %2264 = vmatmul.mubr.f32.gmra.mrb[0].mxu0 %v521
    %v2265 = vpop.f32.mrb[0].mxu0
    %v2266 = vadd.f32 0.0, %v2265
    %v2267 = vpop.f32.mrb[0].mxu0
    %2268 = vdwg.mxu0
    %v2270 = vsel %vm523, %v330, 0
    %2272 = vmatprep.subr.mxu0 0.0
    %2273 = vmatpush1.msra.mxu0 %v2270
    %2274 = vmatprep.subr.mxu0 0.0
    %2275 = vmatpush1.msra.mxu0 0.0
    %2276 = vmatprep.subr.mxu0 0.0
    %2277 = vmatpush1.msra.mxu0 0.0
    %2278 = vmatprep.subr.mxu0 0.0
    %2279 = vmatpush1.msra.mxu0 0.0
    %2280 = vmatprep.subr.mxu0 0.0
    %2281 = vmatpush1.msra.mxu0 0.0
    %2282 = vmatprep.subr.mxu0 0.0
    %2283 = vmatpush1.msra.mxu0 0.0
    %2284 = vmatprep.subr.mxu0 0.0
    %2285 = vmatpush1.msra.mxu0 0.0
    %2286 = vmatprep.subr.mxu0 0.0
    %2287 = vmatpush1.msra.mxu0 0.0
    %2288 = vmatprep.subr.mxu0 0.0
    %2289 = vmatpush1.msra.mxu0 0.0
    %2290 = vmatprep.subr.mxu0 0.0
    %2291 = vmatpush1.msra.mxu0 0.0
    %2292 = vmatprep.subr.mxu0 0.0
    %2293 = vmatpush1.msra.mxu0 0.0
    %2294 = vmatprep.subr.mxu0 0.0
    %2295 = vmatpush1.msra.mxu0 0.0
    %2296 = vmatprep.subr.mxu0 0.0
    %2297 = vmatpush1.msra.mxu0 0.0
    %2298 = vmatprep.subr.mxu0 0.0
    %2299 = vmatpush1.msra.mxu0 0.0
    %2300 = vmatprep.subr.mxu0 0.0
    %2301 = vmatpush1.msra.mxu0 0.0
    %2302 = vmatprep.subr.mxu0 0.0
    %2303 = vmatpush1.msra.mxu0 0.0
    %2304 = vmatprep.subr.mxu0 0.0
    %2305 = vmatpush1.msra.mxu0 0.0
    %2306 = vmatprep.subr.mxu0 0.0
    %2307 = vmatpush1.msra.mxu0 0.0
    %2308 = vmatprep.subr.mxu0 0.0
    %2309 = vmatpush1.msra.mxu0 0.0
    %2310 = vmatprep.subr.mxu0 0.0
    %2311 = vmatpush1.msra.mxu0 0.0
    %2312 = vmatprep.subr.mxu0 0.0
    %2313 = vmatpush1.msra.mxu0 0.0
    %2314 = vmatprep.subr.mxu0 0.0
    %2315 = vmatpush1.msra.mxu0 0.0
    %2316 = vmatprep.subr.mxu0 0.0
    %2317 = vmatpush1.msra.mxu0 0.0
    %2318 = vmatprep.subr.mxu0 0.0
    %2319 = vmatpush1.msra.mxu0 0.0
    %2320 = vmatprep.subr.mxu0 0.0
    %2321 = vmatpush1.msra.mxu0 0.0
    %2322 = vmatprep.subr.mxu0 0.0
    %2323 = vmatpush1.msra.mxu0 0.0
    %2324 = vmatprep.subr.mxu0 0.0
    %2325 = vmatpush1.msra.mxu0 0.0
    %2326 = vmatprep.subr.mxu0 0.0
    %2327 = vmatpush1.msra.mxu0 0.0
    %2328 = vmatprep.subr.mxu0 0.0
    %2329 = vmatpush1.msra.mxu0 0.0
    %2330 = vmatprep.subr.mxu0 0.0
    %2331 = vmatpush1.msra.mxu0 0.0
    %2332 = vmatprep.subr.mxu0 0.0
    %2333 = vmatpush1.msra.mxu0 0.0
    %2334 = vmatprep.subr.mxu0 0.0
    %2335 = vmatpush1.msra.mxu0 0.0
    %2336 = vmatprep.mubr.f32.mxu0 0.0
    %2337 = vmatmul.mubr.f32.gmra.mrb[0].mxu0 %v673
    %v2338 = vpop.f32.mrb[0].mxu0
    %v2339 = vadd.f32 0.0, %v2338
    %v2340 = vpop.f32.mrb[0].mxu0
    %2341 = vmatprep.mubr.f32.mxu0 0.0
    %2342 = vmatmul.mubr.f32.gmra.mrb[0].mxu0 %v676
    %v2343 = vpop.f32.mrb[0].mxu0
    %v2344 = vadd.f32 0.0, %v2343
    %v2345 = vpop.f32.mrb[0].mxu0
    %2346 = vmatprep.mubr.f32.mxu0 0.0
    %2347 = vmatmul.mubr.f32.gmra.mrb[0].mxu0 %v679
    %v2348 = vpop.f32.mrb[0].mxu0
    %v2349 = vadd.f32 0.0, %v2348
    %v2350 = vpop.f32.mrb[0].mxu0
    %2351 = vmatprep.mubr.f32.mxu0 0.0
    %2352 = vmatmul.mubr.f32.gmra.mrb[0].mxu0 %v682
    %v2353 = vpop.f32.mrb[0].mxu0
    %v2354 = vadd.f32 0.0, %v2353
    %v2355 = vpop.f32.mrb[0].mxu0
    %2356 = vmatprep.mubr.f32.mxu0 0.0
    %2357 = vmatmul.mubr.f32.gmra.mrb[0].mxu0 %v685
    %v2358 = vpop.f32.mrb[0].mxu0
    %v2359 = vadd.f32 0.0, %v2358
    %v2360 = vpop.f32.mrb[0].mxu0
    %2361 = vmatprep.mubr.f32.mxu0 0.0
    %2362 = vmatmul.mubr.f32.gmra.mrb[0].mxu0 %v688
    %v2363 = vpop.f32.mrb[0].mxu0
    %v2364 = vadd.f32 0.0, %v2363
    %v2365 = vpop.f32.mrb[0].mxu0
    %2366 = vmatprep.mubr.f32.mxu0 0.0
    %2367 = vmatmul.mubr.f32.gmra.mrb[0].mxu0 %v691
    %v2368 = vpop.f32.mrb[0].mxu0
    %v2369 = vadd.f32 0.0, %v2368
    %v2370 = vpop.f32.mrb[0].mxu0
    %2371 = vmatprep.mubr.f32.mxu0 0.0
    %2372 = vmatmul.mubr.f32.gmra.mrb[0].mxu0 %v694
    %v2373 = vpop.f32.mrb[0].mxu0
    %v2374 = vadd.f32 0.0, %v2373
    %v2375 = vpop.f32.mrb[0].mxu0
    %2376 = vmatprep.mubr.f32.mxu0 0.0
    %2377 = vmatmul.mubr.f32.gmra.mrb[0].mxu0 %v697
    %v2378 = vpop.f32.mrb[0].mxu0
    %v2379 = vadd.f32 0.0, %v2378
    %v2380 = vpop.f32.mrb[0].mxu0
    %2381 = vmatprep.mubr.f32.mxu0 0.0
    %2382 = vmatmul.mubr.f32.gmra.mrb[0].mxu0 %v700
    %v2383 = vpop.f32.mrb[0].mxu0
    %v2384 = vadd.f32 0.0, %v2383
    %v2385 = vpop.f32.mrb[0].mxu0
    %2386 = vmatprep.mubr.f32.mxu0 0.0
    %2387 = vmatmul.mubr.f32.gmra.mrb[0].mxu0 %v703
    %v2388 = vpop.f32.mrb[0].mxu0
    %v2389 = vadd.f32 0.0, %v2388
    %v2390 = vpop.f32.mrb[0].mxu0
    %2391 = vmatprep.mubr.f32.mxu0 0.0
    %2392 = vmatmul.mubr.f32.gmra.mrb[0].mxu0 %v706
    %v2393 = vpop.f32.mrb[0].mxu0
    %v2394 = vadd.f32 0.0, %v2393
    %v2395 = vpop.f32.mrb[0].mxu0
    %2396 = vmatprep.mubr.f32.mxu0 0.0
    %2397 = vmatmul.mubr.f32.gmra.mrb[0].mxu0 %v709
    %v2398 = vpop.f32.mrb[0].mxu0
    %v2399 = vadd.f32 0.0, %v2398
    %v2400 = vpop.f32.mrb[0].mxu0
    %2401 = vmatprep.mubr.f32.mxu0 0.0
    %2402 = vmatmul.mubr.f32.gmra.mrb[0].mxu0 %v712
    %v2403 = vpop.f32.mrb[0].mxu0
    %v2404 = vadd.f32 0.0, %v2403
    %v2405 = vpop.f32.mrb[0].mxu0
    %2406 = vmatprep.mubr.f32.mxu0 0.0
    %2407 = vmatmul.mubr.f32.gmra.mrb[0].mxu0 %v715
    %v2408 = vpop.f32.mrb[0].mxu0
    %v2409 = vadd.f32 0.0, %v2408
    %v2410 = vpop.f32.mrb[0].mxu0
    %2411 = vmatprep.mubr.f32.mxu0 0.0
    %2412 = vmatmul.mubr.f32.gmra.mrb[0].mxu0 %v718
    %v2413 = vpop.f32.mrb[0].mxu0
    %v2414 = vadd.f32 0.0, %v2413
    %v2415 = vpop.f32.mrb[0].mxu0
    %2416 = vdwg.mxu0
    %v2417 = vmul.f32 %v2191, %v2339
    %v2418 = vmul.f32 %v2196, %v2344
    %v2419 = vmul.f32 %v2201, %v2349
    %v2420 = vmul.f32 %v2206, %v2354
    %v2421 = vmul.f32 %v2211, %v2359
    %v2422 = vmul.f32 %v2216, %v2364
    %v2423 = vmul.f32 %v2221, %v2369
    %v2424 = vmul.f32 %v2226, %v2374
    %v2425 = vmul.f32 %v2231, %v2379
    %v2426 = vmul.f32 %v2236, %v2384
    %v2427 = vmul.f32 %v2241, %v2389
    %v2428 = vmul.f32 %v2246, %v2394
    %v2429 = vmul.f32 %v2251, %v2399
    %v2430 = vmul.f32 %v2256, %v2404
    %v2431 = vmul.f32 %v2261, %v2409
    %v2432 = vmul.f32 %v2266, %v2414
    %v2434 = vsel %vm523, %v410, 0
    %2436 = vmatprep.subr.mxu0 0.0
    %2437 = vmatpush1.msra.mxu0 %v2434
    %2438 = vmatprep.subr.mxu0 0.0
    %2439 = vmatpush1.msra.mxu0 0.0
    %2440 = vmatprep.subr.mxu0 0.0
    %2441 = vmatpush1.msra.mxu0 0.0
    %2442 = vmatprep.subr.mxu0 0.0
    %2443 = vmatpush1.msra.mxu0 0.0
    %2444 = vmatprep.subr.mxu0 0.0
    %2445 = vmatpush1.msra.mxu0 0.0
    %2446 = vmatprep.subr.mxu0 0.0
    %2447 = vmatpush1.msra.mxu0 0.0
    %2448 = vmatprep.subr.mxu0 0.0
    %2449 = vmatpush1.msra.mxu0 0.0
    %2450 = vmatprep.subr.mxu0 0.0
    %2451 = vmatpush1.msra.mxu0 0.0
    %2452 = vmatprep.subr.mxu0 0.0
    %2453 = vmatpush1.msra.mxu0 0.0
    %2454 = vmatprep.subr.mxu0 0.0
    %2455 = vmatpush1.msra.mxu0 0.0
    %2456 = vmatprep.subr.mxu0 0.0
    %2457 = vmatpush1.msra.mxu0 0.0
    %2458 = vmatprep.subr.mxu0 0.0
    %2459 = vmatpush1.msra.mxu0 0.0
    %2460 = vmatprep.subr.mxu0 0.0
    %2461 = vmatpush1.msra.mxu0 0.0
    %2462 = vmatprep.subr.mxu0 0.0
    %2463 = vmatpush1.msra.mxu0 0.0
    %2464 = vmatprep.subr.mxu0 0.0
    %2465 = vmatpush1.msra.mxu0 0.0
    %2466 = vmatprep.subr.mxu0 0.0
    %2467 = vmatpush1.msra.mxu0 0.0
    %2468 = vmatprep.subr.mxu0 0.0
    %2469 = vmatpush1.msra.mxu0 0.0
    %2470 = vmatprep.subr.mxu0 0.0
    %2471 = vmatpush1.msra.mxu0 0.0
    %2472 = vmatprep.subr.mxu0 0.0
    %2473 = vmatpush1.msra.mxu0 0.0
    %2474 = vmatprep.subr.mxu0 0.0
    %2475 = vmatpush1.msra.mxu0 0.0
    %2476 = vmatprep.subr.mxu0 0.0
    %2477 = vmatpush1.msra.mxu0 0.0
    %2478 = vmatprep.subr.mxu0 0.0
    %2479 = vmatpush1.msra.mxu0 0.0
    %2480 = vmatprep.subr.mxu0 0.0
    %2481 = vmatpush1.msra.mxu0 0.0
    %2482 = vmatprep.subr.mxu0 0.0
    %2483 = vmatpush1.msra.mxu0 0.0
    %2484 = vmatprep.subr.mxu0 0.0
    %2485 = vmatpush1.msra.mxu0 0.0
    %2486 = vmatprep.subr.mxu0 0.0
    %2487 = vmatpush1.msra.mxu0 0.0
    %2488 = vmatprep.subr.mxu0 0.0
    %2489 = vmatpush1.msra.mxu0 0.0
    %2490 = vmatprep.subr.mxu0 0.0
    %2491 = vmatpush1.msra.mxu0 0.0
    %2492 = vmatprep.subr.mxu0 0.0
    %2493 = vmatpush1.msra.mxu0 0.0
    %2494 = vmatprep.subr.mxu0 0.0
    %2495 = vmatpush1.msra.mxu0 0.0
    %2496 = vmatprep.subr.mxu0 0.0
    %2497 = vmatpush1.msra.mxu0 0.0
    %2498 = vmatprep.subr.mxu0 0.0
    %2499 = vmatpush1.msra.mxu0 0.0
    %2500 = vmatprep.mubr.f32.mxu0 0.0
    %2501 = vmatmul.mubr.f32.gmra.mrb[0].mxu0 %v885
    %v2502 = vpop.f32.mrb[0].mxu0
    %v2503 = vadd.f32 0.0, %v2502
    %v2504 = vpop.f32.mrb[0].mxu0
    %2505 = vmatprep.mubr.f32.mxu0 0.0
    %2506 = vmatmul.mubr.f32.gmra.mrb[0].mxu0 %v888
    %v2507 = vpop.f32.mrb[0].mxu0
    %v2508 = vadd.f32 0.0, %v2507
    %v2509 = vpop.f32.mrb[0].mxu0
    %2510 = vmatprep.mubr.f32.mxu0 0.0
    %2511 = vmatmul.mubr.f32.gmra.mrb[0].mxu0 %v891
    %v2512 = vpop.f32.mrb[0].mxu0
    %v2513 = vadd.f32 0.0, %v2512
    %v2514 = vpop.f32.mrb[0].mxu0
    %2515 = vmatprep.mubr.f32.mxu0 0.0
    %2516 = vmatmul.mubr.f32.gmra.mrb[0].mxu0 %v894
    %v2517 = vpop.f32.mrb[0].mxu0
    %v2518 = vadd.f32 0.0, %v2517
    %v2519 = vpop.f32.mrb[0].mxu0
    %2520 = vmatprep.mubr.f32.mxu0 0.0
    %2521 = vmatmul.mubr.f32.gmra.mrb[0].mxu0 %v897
    %v2522 = vpop.f32.mrb[0].mxu0
    %v2523 = vadd.f32 0.0, %v2522
    %v2524 = vpop.f32.mrb[0].mxu0
    %2525 = vmatprep.mubr.f32.mxu0 0.0
    %2526 = vmatmul.mubr.f32.gmra.mrb[0].mxu0 %v900
    %v2527 = vpop.f32.mrb[0].mxu0
    %v2528 = vadd.f32 0.0, %v2527
    %v2529 = vpop.f32.mrb[0].mxu0
    %2530 = vmatprep.mubr.f32.mxu0 0.0
    %2531 = vmatmul.mubr.f32.gmra.mrb[0].mxu0 %v903
    %v2532 = vpop.f32.mrb[0].mxu0
    %v2533 = vadd.f32 0.0, %v2532
    %v2534 = vpop.f32.mrb[0].mxu0
    %2535 = vmatprep.mubr.f32.mxu0 0.0
    %2536 = vmatmul.mubr.f32.gmra.mrb[0].mxu0 %v906
    %v2537 = vpop.f32.mrb[0].mxu0
    %v2538 = vadd.f32 0.0, %v2537
    %v2539 = vpop.f32.mrb[0].mxu0
    %2540 = vmatprep.mubr.f32.mxu0 0.0
    %2541 = vmatmul.mubr.f32.gmra.mrb[0].mxu0 %v909
    %v2542 = vpop.f32.mrb[0].mxu0
    %v2543 = vadd.f32 0.0, %v2542
    %v2544 = vpop.f32.mrb[0].mxu0
    %2545 = vmatprep.mubr.f32.mxu0 0.0
    %2546 = vmatmul.mubr.f32.gmra.mrb[0].mxu0 %v912
    %v2547 = vpop.f32.mrb[0].mxu0
    %v2548 = vadd.f32 0.0, %v2547
    %v2549 = vpop.f32.mrb[0].mxu0
    %2550 = vmatprep.mubr.f32.mxu0 0.0
    %2551 = vmatmul.mubr.f32.gmra.mrb[0].mxu0 %v915
    %v2552 = vpop.f32.mrb[0].mxu0
    %v2553 = vadd.f32 0.0, %v2552
    %v2554 = vpop.f32.mrb[0].mxu0
    %2555 = vmatprep.mubr.f32.mxu0 0.0
    %2556 = vmatmul.mubr.f32.gmra.mrb[0].mxu0 %v918
    %v2557 = vpop.f32.mrb[0].mxu0
    %v2558 = vadd.f32 0.0, %v2557
    %v2559 = vpop.f32.mrb[0].mxu0
    %2560 = vmatprep.mubr.f32.mxu0 0.0
    %2561 = vmatmul.mubr.f32.gmra.mrb[0].mxu0 %v921
    %v2562 = vpop.f32.mrb[0].mxu0
    %v2563 = vadd.f32 0.0, %v2562
    %v2564 = vpop.f32.mrb[0].mxu0
    %2565 = vmatprep.mubr.f32.mxu0 0.0
    %2566 = vmatmul.mubr.f32.gmra.mrb[0].mxu0 %v924
    %v2567 = vpop.f32.mrb[0].mxu0
    %v2568 = vadd.f32 0.0, %v2567
    %v2569 = vpop.f32.mrb[0].mxu0
    %2570 = vmatprep.mubr.f32.mxu0 0.0
    %2571 = vmatmul.mubr.f32.gmra.mrb[0].mxu0 %v927
    %v2572 = vpop.f32.mrb[0].mxu0
    %v2573 = vadd.f32 0.0, %v2572
    %v2574 = vpop.f32.mrb[0].mxu0
    %2575 = vmatprep.mubr.f32.mxu0 0.0
    %2576 = vmatmul.mubr.f32.gmra.mrb[0].mxu0 %v930
    %v2577 = vpop.f32.mrb[0].mxu0
    %v2578 = vadd.f32 0.0, %v2577
    %v2579 = vpop.f32.mrb[0].mxu0
    %2580 = vdwg.mxu0
    %v2581 = vmul.f32 %v2417, %v2503
    %v2582 = vmul.f32 %v2418, %v2508
    %v2583 = vmul.f32 %v2419, %v2513
    %v2584 = vmul.f32 %v2420, %v2518
    %v2585 = vmul.f32 %v2421, %v2523
    %v2586 = vmul.f32 %v2422, %v2528
    %v2587 = vmul.f32 %v2423, %v2533
    %v2588 = vmul.f32 %v2424, %v2538
    %v2589 = vmul.f32 %v2425, %v2543
    %v2590 = vmul.f32 %v2426, %v2548
    %v2591 = vmul.f32 %v2427, %v2553
    %v2592 = vmul.f32 %v2428, %v2558
    %v2593 = vmul.f32 %v2429, %v2563
    %v2594 = vmul.f32 %v2430, %v2568
    %v2595 = vmul.f32 %v2431, %v2573
    %v2596 = vmul.f32 %v2432, %v2578
    %v2597 = vld [vmem:[#allocation2] sm:$0xff]
    %v2598 = vld [vmem:[#allocation2 + $0x8] sm:$0xff]
    %v2599 = vld [vmem:[#allocation2 + $0x10] sm:$0xff]
    %v2600 = vld [vmem:[#allocation2 + $0x18] sm:$0xff]
    %v2601 = vld [vmem:[#allocation2 + $0x20] sm:$0xff]
    %v2602 = vld [vmem:[#allocation2 + $0x28] sm:$0xff]
    %v2603 = vld [vmem:[#allocation2 + $0x30] sm:$0xff]
    %v2604 = vld [vmem:[#allocation2 + $0x38] sm:$0xff]
    %v2605 = vld [vmem:[#allocation2 + $0x40] sm:$0xff]
    %v2606 = vld [vmem:[#allocation2 + $0x48] sm:$0xff]
    %v2607 = vld [vmem:[#allocation2 + $0x50] sm:$0xff]
    %v2608 = vld [vmem:[#allocation2 + $0x58] sm:$0xff]
    %v2609 = vld [vmem:[#allocation2 + $0x60] sm:$0xff]
    %v2610 = vld [vmem:[#allocation2 + $0x68] sm:$0xff]
    %v2611 = vld [vmem:[#allocation2 + $0x70] sm:$0xff]
    %v2612 = vld [vmem:[#allocation2 + $0x78] sm:$0xff]
    %v2614 = vsel %vm1112, %v2581, 0
    %v2617 = vsel %vm1112, %v2582, 0
    %v2620 = vsel %vm1112, %v2583, 0
    %v2623 = vsel %vm1112, %v2584, 0
    %v2626 = vsel %vm1112, %v2585, 0
    %v2629 = vsel %vm1112, %v2586, 0
    %v2632 = vsel %vm1112, %v2587, 0
    %v2635 = vsel %vm1112, %v2588, 0
    %v2638 = vsel %vm1112, %v2589, 0
    %v2641 = vsel %vm1112, %v2590, 0
    %v2644 = vsel %vm1112, %v2591, 0
    %v2647 = vsel %vm1112, %v2592, 0
    %v2650 = vsel %vm1112, %v2593, 0
    %v2653 = vsel %vm1112, %v2594, 0
    %v2656 = vsel %vm1112, %v2595, 0
    %v2659 = vsel %vm1112, %v2596, 0
    %2661 = vmatprep.subr.mxu0 0.0
    %2662 = vmatpush1.msra.mxu0 %v466
    %2663 = vmatprep.subr.mxu0 0.0
    %2664 = vmatpush1.msra.mxu0 %v467
    %2665 = vmatprep.subr.mxu0 0.0
    %2666 = vmatpush1.msra.mxu0 %v468
    %2667 = vmatprep.subr.mxu0 0.0
    %2668 = vmatpush1.msra.mxu0 %v469
    %2669 = vmatprep.subr.mxu0 0.0
    %2670 = vmatpush1.msra.mxu0 %v470
    %2671 = vmatprep.subr.mxu0 0.0
    %2672 = vmatpush1.msra.mxu0 %v471
    %2673 = vmatprep.subr.mxu0 0.0
    %2674 = vmatpush1.msra.mxu0 %v472
    %2675 = vmatprep.subr.mxu0 0.0
    %2676 = vmatpush1.msra.mxu0 %v473
    %2677 = vmatprep.subr.mxu0 0.0
    %2678 = vmatpush1.msra.mxu0 0.0
    %2679 = vmatprep.subr.mxu0 0.0
    %2680 = vmatpush1.msra.mxu0 0.0
    %2681 = vmatprep.subr.mxu0 0.0
    %2682 = vmatpush1.msra.mxu0 0.0
    %2683 = vmatprep.subr.mxu0 0.0
    %2684 = vmatpush1.msra.mxu0 0.0
    %2685 = vmatprep.subr.mxu0 0.0
    %2686 = vmatpush1.msra.mxu0 0.0
    %2687 = vmatprep.subr.mxu0 0.0
    %2688 = vmatpush1.msra.mxu0 0.0
    %2689 = vmatprep.subr.mxu0 0.0
    %2690 = vmatpush1.msra.mxu0 0.0
    %2691 = vmatprep.subr.mxu0 0.0
    %2692 = vmatpush1.msra.mxu0 0.0
    %2693 = vmatprep.subr.mxu0 0.0
    %2694 = vmatpush1.msra.mxu0 0.0
    %2695 = vmatprep.subr.mxu0 0.0
    %2696 = vmatpush1.msra.mxu0 0.0
    %2697 = vmatprep.subr.mxu0 0.0
    %2698 = vmatpush1.msra.mxu0 0.0
    %2699 = vmatprep.subr.mxu0 0.0
    %2700 = vmatpush1.msra.mxu0 0.0
    %2701 = vmatprep.subr.mxu0 0.0
    %2702 = vmatpush1.msra.mxu0 0.0
    %2703 = vmatprep.subr.mxu0 0.0
    %2704 = vmatpush1.msra.mxu0 0.0
    %2705 = vmatprep.subr.mxu0 0.0
    %2706 = vmatpush1.msra.mxu0 0.0
    %2707 = vmatprep.subr.mxu0 0.0
    %2708 = vmatpush1.msra.mxu0 0.0
    %2709 = vmatprep.subr.mxu0 0.0
    %2710 = vmatpush1.msra.mxu0 0.0
    %2711 = vmatprep.subr.mxu0 0.0
    %2712 = vmatpush1.msra.mxu0 0.0
    %2713 = vmatprep.subr.mxu0 0.0
    %2714 = vmatpush1.msra.mxu0 0.0
    %2715 = vmatprep.subr.mxu0 0.0
    %2716 = vmatpush1.msra.mxu0 0.0
    %2717 = vmatprep.subr.mxu0 0.0
    %2718 = vmatpush1.msra.mxu0 0.0
    %2719 = vmatprep.subr.mxu0 0.0
    %2720 = vmatpush1.msra.mxu0 0.0
    %2721 = vmatprep.subr.mxu0 0.0
    %2722 = vmatpush1.msra.mxu0 0.0
    %2723 = vmatprep.subr.mxu0 0.0
    %2724 = vmatpush1.msra.mxu0 0.0
    %2725 = vmatprep.mubr.f32.mxu0 0.0
    %2726 = vmatmul.mubr.f32.gmra.mrb[0].mxu0 %v2614
    %v2727 = vpop.f32.mrb[0].mxu0
    %v2728 = vadd.f32 0.0, %v2727
    %v2729 = vpop.f32.mrb[0].mxu0
    %2730 = vmatprep.mubr.f32.mxu0 0.0
    %2731 = vmatmul.mubr.f32.gmra.mrb[0].mxu0 %v2617
    %v2732 = vpop.f32.mrb[0].mxu0
    %v2733 = vadd.f32 0.0, %v2732
    %v2734 = vpop.f32.mrb[0].mxu0
    %2735 = vmatprep.mubr.f32.mxu0 0.0
    %2736 = vmatmul.mubr.f32.gmra.mrb[0].mxu0 %v2620
    %v2737 = vpop.f32.mrb[0].mxu0
    %v2738 = vadd.f32 0.0, %v2737
    %v2739 = vpop.f32.mrb[0].mxu0
    %2740 = vmatprep.mubr.f32.mxu0 0.0
    %2741 = vmatmul.mubr.f32.gmra.mrb[0].mxu0 %v2623
    %v2742 = vpop.f32.mrb[0].mxu0
    %v2743 = vadd.f32 0.0, %v2742
    %v2744 = vpop.f32.mrb[0].mxu0
    %2745 = vmatprep.mubr.f32.mxu0 0.0
    %2746 = vmatmul.mubr.f32.gmra.mrb[0].mxu0 %v2626
    %v2747 = vpop.f32.mrb[0].mxu0
    %v2748 = vadd.f32 0.0, %v2747
    %v2749 = vpop.f32.mrb[0].mxu0
    %2750 = vmatprep.mubr.f32.mxu0 0.0
    %2751 = vmatmul.mubr.f32.gmra.mrb[0].mxu0 %v2629
    %v2752 = vpop.f32.mrb[0].mxu0
    %v2753 = vadd.f32 0.0, %v2752
    %v2754 = vpop.f32.mrb[0].mxu0
    %2755 = vmatprep.mubr.f32.mxu0 0.0
    %2756 = vmatmul.mubr.f32.gmra.mrb[0].mxu0 %v2632
    %v2757 = vpop.f32.mrb[0].mxu0
    %v2758 = vadd.f32 0.0, %v2757
    %v2759 = vpop.f32.mrb[0].mxu0
    %2760 = vmatprep.mubr.f32.mxu0 0.0
    %2761 = vmatmul.mubr.f32.gmra.mrb[0].mxu0 %v2635
    %v2762 = vpop.f32.mrb[0].mxu0
    %v2763 = vadd.f32 0.0, %v2762
    %v2764 = vpop.f32.mrb[0].mxu0
    %2765 = vmatprep.mubr.f32.mxu0 0.0
    %2766 = vmatmul.mubr.f32.gmra.mrb[0].mxu0 %v2638
    %v2767 = vpop.f32.mrb[0].mxu0
    %v2768 = vadd.f32 0.0, %v2767
    %v2769 = vpop.f32.mrb[0].mxu0
    %2770 = vmatprep.mubr.f32.mxu0 0.0
    %2771 = vmatmul.mubr.f32.gmra.mrb[0].mxu0 %v2641
    %v2772 = vpop.f32.mrb[0].mxu0
    %v2773 = vadd.f32 0.0, %v2772
    %v2774 = vpop.f32.mrb[0].mxu0
    %2775 = vmatprep.mubr.f32.mxu0 0.0
    %2776 = vmatmul.mubr.f32.gmra.mrb[0].mxu0 %v2644
    %v2777 = vpop.f32.mrb[0].mxu0
    %v2778 = vadd.f32 0.0, %v2777
    %v2779 = vpop.f32.mrb[0].mxu0
    %2780 = vmatprep.mubr.f32.mxu0 0.0
    %2781 = vmatmul.mubr.f32.gmra.mrb[0].mxu0 %v2647
    %v2782 = vpop.f32.mrb[0].mxu0
    %v2783 = vadd.f32 0.0, %v2782
    %v2784 = vpop.f32.mrb[0].mxu0
    %2785 = vmatprep.mubr.f32.mxu0 0.0
    %2786 = vmatmul.mubr.f32.gmra.mrb[0].mxu0 %v2650
    %v2787 = vpop.f32.mrb[0].mxu0
    %v2788 = vadd.f32 0.0, %v2787
    %v2789 = vpop.f32.mrb[0].mxu0
    %2790 = vmatprep.mubr.f32.mxu0 0.0
    %2791 = vmatmul.mubr.f32.gmra.mrb[0].mxu0 %v2653
    %v2792 = vpop.f32.mrb[0].mxu0
    %v2793 = vadd.f32 0.0, %v2792
    %v2794 = vpop.f32.mrb[0].mxu0
    %2795 = vmatprep.mubr.f32.mxu0 0.0
    %2796 = vmatmul.mubr.f32.gmra.mrb[0].mxu0 %v2656
    %v2797 = vpop.f32.mrb[0].mxu0
    %v2798 = vadd.f32 0.0, %v2797
    %v2799 = vpop.f32.mrb[0].mxu0
    %2800 = vmatprep.mubr.f32.mxu0 0.0
    %2801 = vmatmul.mubr.f32.gmra.mrb[0].mxu0 %v2659
    %v2802 = vpop.f32.mrb[0].mxu0
    %v2803 = vadd.f32 0.0, %v2802
    %v2804 = vpop.f32.mrb[0].mxu0
    %2805 = vdwg.mxu0
    %2822 = vrot.lane.b32.xlu0 %v2728, 2
    %v2823 = vpop.permute.xlu0 %2822
    %2824 = vrot.lane.b32.xlu0 %v2733, 2
    %v2825 = vpop.permute.xlu0 %2824
    %2826 = vrot.lane.b32.xlu0 %v2738, 2
    %v2827 = vpop.permute.xlu0 %2826
    %2828 = vrot.lane.b32.xlu0 %v2743, 2
    %v2829 = vpop.permute.xlu0 %2828
    %2830 = vrot.lane.b32.xlu0 %v2748, 2
    %v2831 = vpop.permute.xlu0 %2830
    %2832 = vrot.lane.b32.xlu0 %v2753, 2
    %v2833 = vpop.permute.xlu0 %2832
    %2834 = vrot.lane.b32.xlu0 %v2758, 2
    %v2835 = vpop.permute.xlu0 %2834
    %2836 = vrot.lane.b32.xlu0 %v2763, 2
    %v2837 = vpop.permute.xlu0 %2836
    %2838 = vrot.lane.b32.xlu0 %v2768, 2
    %v2839 = vpop.permute.xlu0 %2838
    %2840 = vrot.lane.b32.xlu0 %v2773, 2
    %v2841 = vpop.permute.xlu0 %2840
    %2842 = vrot.lane.b32.xlu0 %v2778, 2
    %v2843 = vpop.permute.xlu0 %2842
    %2844 = vrot.lane.b32.xlu0 %v2783, 2
    %v2845 = vpop.permute.xlu0 %2844
    %2846 = vrot.lane.b32.xlu0 %v2788, 2
    %v2847 = vpop.permute.xlu0 %2846
    %2848 = vrot.lane.b32.xlu0 %v2793, 2
    %v2849 = vpop.permute.xlu0 %2848
    %2850 = vrot.lane.b32.xlu0 %v2798, 2
    %v2851 = vpop.permute.xlu0 %2850
    %2852 = vrot.lane.b32.xlu0 %v2803, 2
    %v2853 = vpop.permute.xlu0 %2852
    %v2870 = vadd.f32 %v2597, %v2823
    %v2871 = vadd.f32 %v2598, %v2825
    %v2872 = vadd.f32 %v2599, %v2827
    %v2873 = vadd.f32 %v2600, %v2829
    %v2874 = vadd.f32 %v2601, %v2831
    %v2875 = vadd.f32 %v2602, %v2833
    %v2876 = vadd.f32 %v2603, %v2835
    %v2877 = vadd.f32 %v2604, %v2837
    %v2878 = vadd.f32 %v2605, %v2839
    %v2879 = vadd.f32 %v2606, %v2841
    %v2880 = vadd.f32 %v2607, %v2843
    %v2881 = vadd.f32 %v2608, %v2845
    %v2882 = vadd.f32 %v2609, %v2847
    %v2883 = vadd.f32 %v2610, %v2849
    %v2884 = vadd.f32 %v2611, %v2851
    %v2885 = vadd.f32 %v2612, %v2853
    %vm2886 = vcmask 23568
    %2887 = vst.msk [vmem:[#allocation2] sm:$0xff] %vm2886, %v2870
    %2888 = vst.msk [vmem:[#allocation2 + $0x8] sm:$0xff] %vm2886, %v2871
    %2889 = vst.msk [vmem:[#allocation2 + $0x10] sm:$0xff] %vm2886, %v2872
    %2890 = vst.msk [vmem:[#allocation2 + $0x18] sm:$0xff] %vm2886, %v2873
    %2891 = vst.msk [vmem:[#allocation2 + $0x20] sm:$0xff] %vm2886, %v2874
    %2892 = vst.msk [vmem:[#allocation2 + $0x28] sm:$0xff] %vm2886, %v2875
    %2893 = vst.msk [vmem:[#allocation2 + $0x30] sm:$0xff] %vm2886, %v2876
    %2894 = vst.msk [vmem:[#allocation2 + $0x38] sm:$0xff] %vm2886, %v2877
    %2895 = vst.msk [vmem:[#allocation2 + $0x40] sm:$0xff] %vm2886, %v2878
    %2896 = vst.msk [vmem:[#allocation2 + $0x48] sm:$0xff] %vm2886, %v2879
    %2897 = vst.msk [vmem:[#allocation2 + $0x50] sm:$0xff] %vm2886, %v2880
    %2898 = vst.msk [vmem:[#allocation2 + $0x58] sm:$0xff] %vm2886, %v2881
    %2899 = vst.msk [vmem:[#allocation2 + $0x60] sm:$0xff] %vm2886, %v2882
    %2900 = vst.msk [vmem:[#allocation2 + $0x68] sm:$0xff] %vm2886, %v2883
    %2901 = vst.msk [vmem:[#allocation2 + $0x70] sm:$0xff] %vm2886, %v2884
    %2902 = vst.msk [vmem:[#allocation2 + $0x78] sm:$0xff] %vm2886, %v2885
    %v2904 = vsel %vm523, %v251, 0
    %2906 = vmatprep.subr.mxu0 0.0
    %2907 = vmatpush1.msra.mxu0 %v2904
    %2908 = vmatprep.subr.mxu0 0.0
    %2909 = vmatpush1.msra.mxu0 0.0
    %2910 = vmatprep.subr.mxu0 0.0
    %2911 = vmatpush1.msra.mxu0 0.0
    %2912 = vmatprep.subr.mxu0 0.0
    %2913 = vmatpush1.msra.mxu0 0.0
    %2914 = vmatprep.subr.mxu0 0.0
    %2915 = vmatpush1.msra.mxu0 0.0
    %2916 = vmatprep.subr.mxu0 0.0
    %2917 = vmatpush1.msra.mxu0 0.0
    %2918 = vmatprep.subr.mxu0 0.0
    %2919 = vmatpush1.msra.mxu0 0.0
    %2920 = vmatprep.subr.mxu0 0.0
    %2921 = vmatpush1.msra.mxu0 0.0
    %2922 = vmatprep.subr.mxu0 0.0
    %2923 = vmatpush1.msra.mxu0 0.0
    %2924 = vmatprep.subr.mxu0 0.0
    %2925 = vmatpush1.msra.mxu0 0.0
    %2926 = vmatprep.subr.mxu0 0.0
    %2927 = vmatpush1.msra.mxu0 0.0
    %2928 = vmatprep.subr.mxu0 0.0
    %2929 = vmatpush1.msra.mxu0 0.0
    %2930 = vmatprep.subr.mxu0 0.0
    %2931 = vmatpush1.msra.mxu0 0.0
    %2932 = vmatprep.subr.mxu0 0.0
    %2933 = vmatpush1.msra.mxu0 0.0
    %2934 = vmatprep.subr.mxu0 0.0
    %2935 = vmatpush1.msra.mxu0 0.0
    %2936 = vmatprep.subr.mxu0 0.0
    %2937 = vmatpush1.msra.mxu0 0.0
    %2938 = vmatprep.subr.mxu0 0.0
    %2939 = vmatpush1.msra.mxu0 0.0
    %2940 = vmatprep.subr.mxu0 0.0
    %2941 = vmatpush1.msra.mxu0 0.0
    %2942 = vmatprep.subr.mxu0 0.0
    %2943 = vmatpush1.msra.mxu0 0.0
    %2944 = vmatprep.subr.mxu0 0.0
    %2945 = vmatpush1.msra.mxu0 0.0
    %2946 = vmatprep.subr.mxu0 0.0
    %2947 = vmatpush1.msra.mxu0 0.0
    %2948 = vmatprep.subr.mxu0 0.0
    %2949 = vmatpush1.msra.mxu0 0.0
    %2950 = vmatprep.subr.mxu0 0.0
    %2951 = vmatpush1.msra.mxu0 0.0
    %2952 = vmatprep.subr.mxu0 0.0
    %2953 = vmatpush1.msra.mxu0 0.0
    %2954 = vmatprep.subr.mxu0 0.0
    %2955 = vmatpush1.msra.mxu0 0.0
    %2956 = vmatprep.subr.mxu0 0.0
    %2957 = vmatpush1.msra.mxu0 0.0
    %2958 = vmatprep.subr.mxu0 0.0
    %2959 = vmatpush1.msra.mxu0 0.0
    %2960 = vmatprep.subr.mxu0 0.0
    %2961 = vmatpush1.msra.mxu0 0.0
    %2962 = vmatprep.subr.mxu0 0.0
    %2963 = vmatpush1.msra.mxu0 0.0
    %2964 = vmatprep.subr.mxu0 0.0
    %2965 = vmatpush1.msra.mxu0 0.0
    %2966 = vmatprep.subr.mxu0 0.0
    %2967 = vmatpush1.msra.mxu0 0.0
    %2968 = vmatprep.subr.mxu0 0.0
    %2969 = vmatpush1.msra.mxu0 0.0
    %2970 = vmatprep.mubr.f32.mxu0 0.0
    %2971 = vmatmul.mubr.f32.gmra.mrb[0].mxu0 %v476
    %v2972 = vpop.f32.mrb[0].mxu0
    %v2973 = vadd.f32 0.0, %v2972
    %v2974 = vpop.f32.mrb[0].mxu0
    %2975 = vmatprep.mubr.f32.mxu0 0.0
    %2976 = vmatmul.mubr.f32.gmra.mrb[0].mxu0 %v479
    %v2977 = vpop.f32.mrb[0].mxu0
    %v2978 = vadd.f32 0.0, %v2977
    %v2979 = vpop.f32.mrb[0].mxu0
    %2980 = vmatprep.mubr.f32.mxu0 0.0
    %2981 = vmatmul.mubr.f32.gmra.mrb[0].mxu0 %v482
    %v2982 = vpop.f32.mrb[0].mxu0
    %v2983 = vadd.f32 0.0, %v2982
    %v2984 = vpop.f32.mrb[0].mxu0
    %2985 = vmatprep.mubr.f32.mxu0 0.0
    %2986 = vmatmul.mubr.f32.gmra.mrb[0].mxu0 %v485
    %v2987 = vpop.f32.mrb[0].mxu0
    %v2988 = vadd.f32 0.0, %v2987
    %v2989 = vpop.f32.mrb[0].mxu0
    %2990 = vmatprep.mubr.f32.mxu0 0.0
    %2991 = vmatmul.mubr.f32.gmra.mrb[0].mxu0 %v488
    %v2992 = vpop.f32.mrb[0].mxu0
    %v2993 = vadd.f32 0.0, %v2992
    %v2994 = vpop.f32.mrb[0].mxu0
    %2995 = vmatprep.mubr.f32.mxu0 0.0
    %2996 = vmatmul.mubr.f32.gmra.mrb[0].mxu0 %v491
    %v2997 = vpop.f32.mrb[0].mxu0
    %v2998 = vadd.f32 0.0, %v2997
    %v2999 = vpop.f32.mrb[0].mxu0
    %3000 = vmatprep.mubr.f32.mxu0 0.0
    %3001 = vmatmul.mubr.f32.gmra.mrb[0].mxu0 %v494
    %v3002 = vpop.f32.mrb[0].mxu0
    %v3003 = vadd.f32 0.0, %v3002
    %v3004 = vpop.f32.mrb[0].mxu0
    %3005 = vmatprep.mubr.f32.mxu0 0.0
    %3006 = vmatmul.mubr.f32.gmra.mrb[0].mxu0 %v497
    %v3007 = vpop.f32.mrb[0].mxu0
    %v3008 = vadd.f32 0.0, %v3007
    %v3009 = vpop.f32.mrb[0].mxu0
    %3010 = vmatprep.mubr.f32.mxu0 0.0
    %3011 = vmatmul.mubr.f32.gmra.mrb[0].mxu0 %v500
    %v3012 = vpop.f32.mrb[0].mxu0
    %v3013 = vadd.f32 0.0, %v3012
    %v3014 = vpop.f32.mrb[0].mxu0
    %3015 = vmatprep.mubr.f32.mxu0 0.0
    %3016 = vmatmul.mubr.f32.gmra.mrb[0].mxu0 %v503
    %v3017 = vpop.f32.mrb[0].mxu0
    %v3018 = vadd.f32 0.0, %v3017
    %v3019 = vpop.f32.mrb[0].mxu0
    %3020 = vmatprep.mubr.f32.mxu0 0.0
    %3021 = vmatmul.mubr.f32.gmra.mrb[0].mxu0 %v506
    %v3022 = vpop.f32.mrb[0].mxu0
    %v3023 = vadd.f32 0.0, %v3022
    %v3024 = vpop.f32.mrb[0].mxu0
    %3025 = vmatprep.mubr.f32.mxu0 0.0
    %3026 = vmatmul.mubr.f32.gmra.mrb[0].mxu0 %v509
    %v3027 = vpop.f32.mrb[0].mxu0
    %v3028 = vadd.f32 0.0, %v3027
    %v3029 = vpop.f32.mrb[0].mxu0
    %3030 = vmatprep.mubr.f32.mxu0 0.0
    %3031 = vmatmul.mubr.f32.gmra.mrb[0].mxu0 %v512
    %v3032 = vpop.f32.mrb[0].mxu0
    %v3033 = vadd.f32 0.0, %v3032
    %v3034 = vpop.f32.mrb[0].mxu0
    %3035 = vmatprep.mubr.f32.mxu0 0.0
    %3036 = vmatmul.mubr.f32.gmra.mrb[0].mxu0 %v515
    %v3037 = vpop.f32.mrb[0].mxu0
    %v3038 = vadd.f32 0.0, %v3037
    %v3039 = vpop.f32.mrb[0].mxu0
    %3040 = vmatprep.mubr.f32.mxu0 0.0
    %3041 = vmatmul.mubr.f32.gmra.mrb[0].mxu0 %v518
    %v3042 = vpop.f32.mrb[0].mxu0
    %v3043 = vadd.f32 0.0, %v3042
    %v3044 = vpop.f32.mrb[0].mxu0
    %3045 = vmatprep.mubr.f32.mxu0 0.0
    %3046 = vmatmul.mubr.f32.gmra.mrb[0].mxu0 %v521
    %v3047 = vpop.f32.mrb[0].mxu0
    %v3048 = vadd.f32 0.0, %v3047
    %v3049 = vpop.f32.mrb[0].mxu0
    %3050 = vdwg.mxu0
    %v3052 = vsel %vm523, %v331, 0
    %3054 = vmatprep.subr.mxu0 0.0
    %3055 = vmatpush1.msra.mxu0 %v3052
    %3056 = vmatprep.subr.mxu0 0.0
    %3057 = vmatpush1.msra.mxu0 0.0
    %3058 = vmatprep.subr.mxu0 0.0
    %3059 = vmatpush1.msra.mxu0 0.0
    %3060 = vmatprep.subr.mxu0 0.0
    %3061 = vmatpush1.msra.mxu0 0.0
    %3062 = vmatprep.subr.mxu0 0.0
    %3063 = vmatpush1.msra.mxu0 0.0
    %3064 = vmatprep.subr.mxu0 0.0
    %3065 = vmatpush1.msra.mxu0 0.0
    %3066 = vmatprep.subr.mxu0 0.0
    %3067 = vmatpush1.msra.mxu0 0.0
    %3068 = vmatprep.subr.mxu0 0.0
    %3069 = vmatpush1.msra.mxu0 0.0
    %3070 = vmatprep.subr.mxu0 0.0
    %3071 = vmatpush1.msra.mxu0 0.0
    %3072 = vmatprep.subr.mxu0 0.0
    %3073 = vmatpush1.msra.mxu0 0.0
    %3074 = vmatprep.subr.mxu0 0.0
    %3075 = vmatpush1.msra.mxu0 0.0
    %3076 = vmatprep.subr.mxu0 0.0
    %3077 = vmatpush1.msra.mxu0 0.0
    %3078 = vmatprep.subr.mxu0 0.0
    %3079 = vmatpush1.msra.mxu0 0.0
    %3080 = vmatprep.subr.mxu0 0.0
    %3081 = vmatpush1.msra.mxu0 0.0
    %3082 = vmatprep.subr.mxu0 0.0
    %3083 = vmatpush1.msra.mxu0 0.0
    %3084 = vmatprep.subr.mxu0 0.0
    %3085 = vmatpush1.msra.mxu0 0.0
    %3086 = vmatprep.subr.mxu0 0.0
    %3087 = vmatpush1.msra.mxu0 0.0
    %3088 = vmatprep.subr.mxu0 0.0
    %3089 = vmatpush1.msra.mxu0 0.0
    %3090 = vmatprep.subr.mxu0 0.0
    %3091 = vmatpush1.msra.mxu0 0.0
    %3092 = vmatprep.subr.mxu0 0.0
    %3093 = vmatpush1.msra.mxu0 0.0
    %3094 = vmatprep.subr.mxu0 0.0
    %3095 = vmatpush1.msra.mxu0 0.0
    %3096 = vmatprep.subr.mxu0 0.0
    %3097 = vmatpush1.msra.mxu0 0.0
    %3098 = vmatprep.subr.mxu0 0.0
    %3099 = vmatpush1.msra.mxu0 0.0
    %3100 = vmatprep.subr.mxu0 0.0
    %3101 = vmatpush1.msra.mxu0 0.0
    %3102 = vmatprep.subr.mxu0 0.0
    %3103 = vmatpush1.msra.mxu0 0.0
    %3104 = vmatprep.subr.mxu0 0.0
    %3105 = vmatpush1.msra.mxu0 0.0
    %3106 = vmatprep.subr.mxu0 0.0
    %3107 = vmatpush1.msra.mxu0 0.0
    %3108 = vmatprep.subr.mxu0 0.0
    %3109 = vmatpush1.msra.mxu0 0.0
    %3110 = vmatprep.subr.mxu0 0.0
    %3111 = vmatpush1.msra.mxu0 0.0
    %3112 = vmatprep.subr.mxu0 0.0
    %3113 = vmatpush1.msra.mxu0 0.0
    %3114 = vmatprep.subr.mxu0 0.0
    %3115 = vmatpush1.msra.mxu0 0.0
    %3116 = vmatprep.subr.mxu0 0.0
    %3117 = vmatpush1.msra.mxu0 0.0
    %3118 = vmatprep.mubr.f32.mxu0 0.0
    %3119 = vmatmul.mubr.f32.gmra.mrb[0].mxu0 %v673
    %v3120 = vpop.f32.mrb[0].mxu0
    %v3121 = vadd.f32 0.0, %v3120
    %v3122 = vpop.f32.mrb[0].mxu0
    %3123 = vmatprep.mubr.f32.mxu0 0.0
    %3124 = vmatmul.mubr.f32.gmra.mrb[0].mxu0 %v676
    %v3125 = vpop.f32.mrb[0].mxu0
    %v3126 = vadd.f32 0.0, %v3125
    %v3127 = vpop.f32.mrb[0].mxu0
    %3128 = vmatprep.mubr.f32.mxu0 0.0
    %3129 = vmatmul.mubr.f32.gmra.mrb[0].mxu0 %v679
    %v3130 = vpop.f32.mrb[0].mxu0
    %v3131 = vadd.f32 0.0, %v3130
    %v3132 = vpop.f32.mrb[0].mxu0
    %3133 = vmatprep.mubr.f32.mxu0 0.0
    %3134 = vmatmul.mubr.f32.gmra.mrb[0].mxu0 %v682
    %v3135 = vpop.f32.mrb[0].mxu0
    %v3136 = vadd.f32 0.0, %v3135
    %v3137 = vpop.f32.mrb[0].mxu0
    %3138 = vmatprep.mubr.f32.mxu0 0.0
    %3139 = vmatmul.mubr.f32.gmra.mrb[0].mxu0 %v685
    %v3140 = vpop.f32.mrb[0].mxu0
    %v3141 = vadd.f32 0.0, %v3140
    %v3142 = vpop.f32.mrb[0].mxu0
    %3143 = vmatprep.mubr.f32.mxu0 0.0
    %3144 = vmatmul.mubr.f32.gmra.mrb[0].mxu0 %v688
    %v3145 = vpop.f32.mrb[0].mxu0
    %v3146 = vadd.f32 0.0, %v3145
    %v3147 = vpop.f32.mrb[0].mxu0
    %3148 = vmatprep.mubr.f32.mxu0 0.0
    %3149 = vmatmul.mubr.f32.gmra.mrb[0].mxu0 %v691
    %v3150 = vpop.f32.mrb[0].mxu0
    %v3151 = vadd.f32 0.0, %v3150
    %v3152 = vpop.f32.mrb[0].mxu0
    %3153 = vmatprep.mubr.f32.mxu0 0.0
    %3154 = vmatmul.mubr.f32.gmra.mrb[0].mxu0 %v694
    %v3155 = vpop.f32.mrb[0].mxu0
    %v3156 = vadd.f32 0.0, %v3155
    %v3157 = vpop.f32.mrb[0].mxu0
    %3158 = vmatprep.mubr.f32.mxu0 0.0
    %3159 = vmatmul.mubr.f32.gmra.mrb[0].mxu0 %v697
    %v3160 = vpop.f32.mrb[0].mxu0
    %v3161 = vadd.f32 0.0, %v3160
    %v3162 = vpop.f32.mrb[0].mxu0
    %3163 = vmatprep.mubr.f32.mxu0 0.0
    %3164 = vmatmul.mubr.f32.gmra.mrb[0].mxu0 %v700
    %v3165 = vpop.f32.mrb[0].mxu0
    %v3166 = vadd.f32 0.0, %v3165
    %v3167 = vpop.f32.mrb[0].mxu0
    %3168 = vmatprep.mubr.f32.mxu0 0.0
    %3169 = vmatmul.mubr.f32.gmra.mrb[0].mxu0 %v703
    %v3170 = vpop.f32.mrb[0].mxu0
    %v3171 = vadd.f32 0.0, %v3170
    %v3172 = vpop.f32.mrb[0].mxu0
    %3173 = vmatprep.mubr.f32.mxu0 0.0
    %3174 = vmatmul.mubr.f32.gmra.mrb[0].mxu0 %v706
    %v3175 = vpop.f32.mrb[0].mxu0
    %v3176 = vadd.f32 0.0, %v3175
    %v3177 = vpop.f32.mrb[0].mxu0
    %3178 = vmatprep.mubr.f32.mxu0 0.0
    %3179 = vmatmul.mubr.f32.gmra.mrb[0].mxu0 %v709
    %v3180 = vpop.f32.mrb[0].mxu0
    %v3181 = vadd.f32 0.0, %v3180
    %v3182 = vpop.f32.mrb[0].mxu0
    %3183 = vmatprep.mubr.f32.mxu0 0.0
    %3184 = vmatmul.mubr.f32.gmra.mrb[0].mxu0 %v712
    %v3185 = vpop.f32.mrb[0].mxu0
    %v3186 = vadd.f32 0.0, %v3185
    %v3187 = vpop.f32.mrb[0].mxu0
    %3188 = vmatprep.mubr.f32.mxu0 0.0
    %3189 = vmatmul.mubr.f32.gmra.mrb[0].mxu0 %v715
    %v3190 = vpop.f32.mrb[0].mxu0
    %v3191 = vadd.f32 0.0, %v3190
    %v3192 = vpop.f32.mrb[0].mxu0
    %3193 = vmatprep.mubr.f32.mxu0 0.0
    %3194 = vmatmul.mubr.f32.gmra.mrb[0].mxu0 %v718
    %v3195 = vpop.f32.mrb[0].mxu0
    %v3196 = vadd.f32 0.0, %v3195
    %v3197 = vpop.f32.mrb[0].mxu0
    %3198 = vdwg.mxu0
    %v3199 = vmul.f32 %v2973, %v3121
    %v3200 = vmul.f32 %v2978, %v3126
    %v3201 = vmul.f32 %v2983, %v3131
    %v3202 = vmul.f32 %v2988, %v3136
    %v3203 = vmul.f32 %v2993, %v3141
    %v3204 = vmul.f32 %v2998, %v3146
    %v3205 = vmul.f32 %v3003, %v3151
    %v3206 = vmul.f32 %v3008, %v3156
    %v3207 = vmul.f32 %v3013, %v3161
    %v3208 = vmul.f32 %v3018, %v3166
    %v3209 = vmul.f32 %v3023, %v3171
    %v3210 = vmul.f32 %v3028, %v3176
    %v3211 = vmul.f32 %v3033, %v3181
    %v3212 = vmul.f32 %v3038, %v3186
    %v3213 = vmul.f32 %v3043, %v3191
    %v3214 = vmul.f32 %v3048, %v3196
    %v3216 = vsel %vm523, %v411, 0
    %3218 = vmatprep.subr.mxu0 0.0
    %3219 = vmatpush1.msra.mxu0 %v3216
    %3220 = vmatprep.subr.mxu0 0.0
    %3221 = vmatpush1.msra.mxu0 0.0
    %3222 = vmatprep.subr.mxu0 0.0
    %3223 = vmatpush1.msra.mxu0 0.0
    %3224 = vmatprep.subr.mxu0 0.0
    %3225 = vmatpush1.msra.mxu0 0.0
    %3226 = vmatprep.subr.mxu0 0.0
    %3227 = vmatpush1.msra.mxu0 0.0
    %3228 = vmatprep.subr.mxu0 0.0
    %3229 = vmatpush1.msra.mxu0 0.0
    %3230 = vmatprep.subr.mxu0 0.0
    %3231 = vmatpush1.msra.mxu0 0.0
    %3232 = vmatprep.subr.mxu0 0.0
    %3233 = vmatpush1.msra.mxu0 0.0
    %3234 = vmatprep.subr.mxu0 0.0
    %3235 = vmatpush1.msra.mxu0 0.0
    %3236 = vmatprep.subr.mxu0 0.0
    %3237 = vmatpush1.msra.mxu0 0.0
    %3238 = vmatprep.subr.mxu0 0.0
    %3239 = vmatpush1.msra.mxu0 0.0
    %3240 = vmatprep.subr.mxu0 0.0
    %3241 = vmatpush1.msra.mxu0 0.0
    %3242 = vmatprep.subr.mxu0 0.0
    %3243 = vmatpush1.msra.mxu0 0.0
    %3244 = vmatprep.subr.mxu0 0.0
    %3245 = vmatpush1.msra.mxu0 0.0
    %3246 = vmatprep.subr.mxu0 0.0
    %3247 = vmatpush1.msra.mxu0 0.0
    %3248 = vmatprep.subr.mxu0 0.0
    %3249 = vmatpush1.msra.mxu0 0.0
    %3250 = vmatprep.subr.mxu0 0.0
    %3251 = vmatpush1.msra.mxu0 0.0
    %3252 = vmatprep.subr.mxu0 0.0
    %3253 = vmatpush1.msra.mxu0 0.0
    %3254 = vmatprep.subr.mxu0 0.0
    %3255 = vmatpush1.msra.mxu0 0.0
    %3256 = vmatprep.subr.mxu0 0.0
    %3257 = vmatpush1.msra.mxu0 0.0
    %3258 = vmatprep.subr.mxu0 0.0
    %3259 = vmatpush1.msra.mxu0 0.0
    %3260 = vmatprep.subr.mxu0 0.0
    %3261 = vmatpush1.msra.mxu0 0.0
    %3262 = vmatprep.subr.mxu0 0.0
    %3263 = vmatpush1.msra.mxu0 0.0
    %3264 = vmatprep.subr.mxu0 0.0
    %3265 = vmatpush1.msra.mxu0 0.0
    %3266 = vmatprep.subr.mxu0 0.0
    %3267 = vmatpush1.msra.mxu0 0.0
    %3268 = vmatprep.subr.mxu0 0.0
    %3269 = vmatpush1.msra.mxu0 0.0
    %3270 = vmatprep.subr.mxu0 0.0
    %3271 = vmatpush1.msra.mxu0 0.0
    %3272 = vmatprep.subr.mxu0 0.0
    %3273 = vmatpush1.msra.mxu0 0.0
    %3274 = vmatprep.subr.mxu0 0.0
    %3275 = vmatpush1.msra.mxu0 0.0
    %3276 = vmatprep.subr.mxu0 0.0
    %3277 = vmatpush1.msra.mxu0 0.0
    %3278 = vmatprep.subr.mxu0 0.0
    %3279 = vmatpush1.msra.mxu0 0.0
    %3280 = vmatprep.subr.mxu0 0.0
    %3281 = vmatpush1.msra.mxu0 0.0
    %3282 = vmatprep.mubr.f32.mxu0 0.0
    %3283 = vmatmul.mubr.f32.gmra.mrb[0].mxu0 %v885
    %v3284 = vpop.f32.mrb[0].mxu0
    %v3285 = vadd.f32 0.0, %v3284
    %v3286 = vpop.f32.mrb[0].mxu0
    %3287 = vmatprep.mubr.f32.mxu0 0.0
    %3288 = vmatmul.mubr.f32.gmra.mrb[0].mxu0 %v888
    %v3289 = vpop.f32.mrb[0].mxu0
    %v3290 = vadd.f32 0.0, %v3289
    %v3291 = vpop.f32.mrb[0].mxu0
    %3292 = vmatprep.mubr.f32.mxu0 0.0
    %3293 = vmatmul.mubr.f32.gmra.mrb[0].mxu0 %v891
    %v3294 = vpop.f32.mrb[0].mxu0
    %v3295 = vadd.f32 0.0, %v3294
    %v3296 = vpop.f32.mrb[0].mxu0
    %3297 = vmatprep.mubr.f32.mxu0 0.0
    %3298 = vmatmul.mubr.f32.gmra.mrb[0].mxu0 %v894
    %v3299 = vpop.f32.mrb[0].mxu0
    %v3300 = vadd.f32 0.0, %v3299
    %v3301 = vpop.f32.mrb[0].mxu0
    %3302 = vmatprep.mubr.f32.mxu0 0.0
    %3303 = vmatmul.mubr.f32.gmra.mrb[0].mxu0 %v897
    %v3304 = vpop.f32.mrb[0].mxu0
    %v3305 = vadd.f32 0.0, %v3304
    %v3306 = vpop.f32.mrb[0].mxu0
    %3307 = vmatprep.mubr.f32.mxu0 0.0
    %3308 = vmatmul.mubr.f32.gmra.mrb[0].mxu0 %v900
    %v3309 = vpop.f32.mrb[0].mxu0
    %v3310 = vadd.f32 0.0, %v3309
    %v3311 = vpop.f32.mrb[0].mxu0
    %3312 = vmatprep.mubr.f32.mxu0 0.0
    %3313 = vmatmul.mubr.f32.gmra.mrb[0].mxu0 %v903
    %v3314 = vpop.f32.mrb[0].mxu0
    %v3315 = vadd.f32 0.0, %v3314
    %v3316 = vpop.f32.mrb[0].mxu0
    %3317 = vmatprep.mubr.f32.mxu0 0.0
    %3318 = vmatmul.mubr.f32.gmra.mrb[0].mxu0 %v906
    %v3319 = vpop.f32.mrb[0].mxu0
    %v3320 = vadd.f32 0.0, %v3319
    %v3321 = vpop.f32.mrb[0].mxu0
    %3322 = vmatprep.mubr.f32.mxu0 0.0
    %3323 = vmatmul.mubr.f32.gmra.mrb[0].mxu0 %v909
    %v3324 = vpop.f32.mrb[0].mxu0
    %v3325 = vadd.f32 0.0, %v3324
    %v3326 = vpop.f32.mrb[0].mxu0
    %3327 = vmatprep.mubr.f32.mxu0 0.0
    %3328 = vmatmul.mubr.f32.gmra.mrb[0].mxu0 %v912
    %v3329 = vpop.f32.mrb[0].mxu0
    %v3330 = vadd.f32 0.0, %v3329
    %v3331 = vpop.f32.mrb[0].mxu0
    %3332 = vmatprep.mubr.f32.mxu0 0.0
    %3333 = vmatmul.mubr.f32.gmra.mrb[0].mxu0 %v915
    %v3334 = vpop.f32.mrb[0].mxu0
    %v3335 = vadd.f32 0.0, %v3334
    %v3336 = vpop.f32.mrb[0].mxu0
    %3337 = vmatprep.mubr.f32.mxu0 0.0
    %3338 = vmatmul.mubr.f32.gmra.mrb[0].mxu0 %v918
    %v3339 = vpop.f32.mrb[0].mxu0
    %v3340 = vadd.f32 0.0, %v3339
    %v3341 = vpop.f32.mrb[0].mxu0
    %3342 = vmatprep.mubr.f32.mxu0 0.0
    %3343 = vmatmul.mubr.f32.gmra.mrb[0].mxu0 %v921
    %v3344 = vpop.f32.mrb[0].mxu0
    %v3345 = vadd.f32 0.0, %v3344
    %v3346 = vpop.f32.mrb[0].mxu0
    %3347 = vmatprep.mubr.f32.mxu0 0.0
    %3348 = vmatmul.mubr.f32.gmra.mrb[0].mxu0 %v924
    %v3349 = vpop.f32.mrb[0].mxu0
    %v3350 = vadd.f32 0.0, %v3349
    %v3351 = vpop.f32.mrb[0].mxu0
    %3352 = vmatprep.mubr.f32.mxu0 0.0
    %3353 = vmatmul.mubr.f32.gmra.mrb[0].mxu0 %v927
    %v3354 = vpop.f32.mrb[0].mxu0
    %v3355 = vadd.f32 0.0, %v3354
    %v3356 = vpop.f32.mrb[0].mxu0
    %3357 = vmatprep.mubr.f32.mxu0 0.0
    %3358 = vmatmul.mubr.f32.gmra.mrb[0].mxu0 %v930
    %v3359 = vpop.f32.mrb[0].mxu0
    %v3360 = vadd.f32 0.0, %v3359
    %v3361 = vpop.f32.mrb[0].mxu0
    %3362 = vdwg.mxu0
    %v3363 = vmul.f32 %v3199, %v3285
    %v3364 = vmul.f32 %v3200, %v3290
    %v3365 = vmul.f32 %v3201, %v3295
    %v3366 = vmul.f32 %v3202, %v3300
    %v3367 = vmul.f32 %v3203, %v3305
    %v3368 = vmul.f32 %v3204, %v3310
    %v3369 = vmul.f32 %v3205, %v3315
    %v3370 = vmul.f32 %v3206, %v3320
    %v3371 = vmul.f32 %v3207, %v3325
    %v3372 = vmul.f32 %v3208, %v3330
    %v3373 = vmul.f32 %v3209, %v3335
    %v3374 = vmul.f32 %v3210, %v3340
    %v3375 = vmul.f32 %v3211, %v3345
    %v3376 = vmul.f32 %v3212, %v3350
    %v3377 = vmul.f32 %v3213, %v3355
    %v3378 = vmul.f32 %v3214, %v3360
    %v3379 = vld [vmem:[#allocation2] sm:$0xff]
    %v3380 = vld [vmem:[#allocation2 + $0x8] sm:$0xff]
    %v3381 = vld [vmem:[#allocation2 + $0x10] sm:$0xff]
    %v3382 = vld [vmem:[#allocation2 + $0x18] sm:$0xff]
    %v3383 = vld [vmem:[#allocation2 + $0x20] sm:$0xff]
    %v3384 = vld [vmem:[#allocation2 + $0x28] sm:$0xff]
    %v3385 = vld [vmem:[#allocation2 + $0x30] sm:$0xff]
    %v3386 = vld [vmem:[#allocation2 + $0x38] sm:$0xff]
    %v3387 = vld [vmem:[#allocation2 + $0x40] sm:$0xff]
    %v3388 = vld [vmem:[#allocation2 + $0x48] sm:$0xff]
    %v3389 = vld [vmem:[#allocation2 + $0x50] sm:$0xff]
    %v3390 = vld [vmem:[#allocation2 + $0x58] sm:$0xff]
    %v3391 = vld [vmem:[#allocation2 + $0x60] sm:$0xff]
    %v3392 = vld [vmem:[#allocation2 + $0x68] sm:$0xff]
    %v3393 = vld [vmem:[#allocation2 + $0x70] sm:$0xff]
    %v3394 = vld [vmem:[#allocation2 + $0x78] sm:$0xff]
    %v3396 = vsel %vm1112, %v3363, 0
    %v3399 = vsel %vm1112, %v3364, 0
    %v3402 = vsel %vm1112, %v3365, 0
    %v3405 = vsel %vm1112, %v3366, 0
    %v3408 = vsel %vm1112, %v3367, 0
    %v3411 = vsel %vm1112, %v3368, 0
    %v3414 = vsel %vm1112, %v3369, 0
    %v3417 = vsel %vm1112, %v3370, 0
    %v3420 = vsel %vm1112, %v3371, 0
    %v3423 = vsel %vm1112, %v3372, 0
    %v3426 = vsel %vm1112, %v3373, 0
    %v3429 = vsel %vm1112, %v3374, 0
    %v3432 = vsel %vm1112, %v3375, 0
    %v3435 = vsel %vm1112, %v3376, 0
    %v3438 = vsel %vm1112, %v3377, 0
    %v3441 = vsel %vm1112, %v3378, 0
    %3443 = vmatprep.subr.mxu0 0.0
    %3444 = vmatpush1.msra.mxu0 %v466
    %3445 = vmatprep.subr.mxu0 0.0
    %3446 = vmatpush1.msra.mxu0 %v467
    %3447 = vmatprep.subr.mxu0 0.0
    %3448 = vmatpush1.msra.mxu0 %v468
    %3449 = vmatprep.subr.mxu0 0.0
    %3450 = vmatpush1.msra.mxu0 %v469
    %3451 = vmatprep.subr.mxu0 0.0
    %3452 = vmatpush1.msra.mxu0 %v470
    %3453 = vmatprep.subr.mxu0 0.0
    %3454 = vmatpush1.msra.mxu0 %v471
    %3455 = vmatprep.subr.mxu0 0.0
    %3456 = vmatpush1.msra.mxu0 %v472
    %3457 = vmatprep.subr.mxu0 0.0
    %3458 = vmatpush1.msra.mxu0 %v473
    %3459 = vmatprep.subr.mxu0 0.0
    %3460 = vmatpush1.msra.mxu0 0.0
    %3461 = vmatprep.subr.mxu0 0.0
    %3462 = vmatpush1.msra.mxu0 0.0
    %3463 = vmatprep.subr.mxu0 0.0
    %3464 = vmatpush1.msra.mxu0 0.0
    %3465 = vmatprep.subr.mxu0 0.0
    %3466 = vmatpush1.msra.mxu0 0.0
    %3467 = vmatprep.subr.mxu0 0.0
    %3468 = vmatpush1.msra.mxu0 0.0
    %3469 = vmatprep.subr.mxu0 0.0
    %3470 = vmatpush1.msra.mxu0 0.0
    %3471 = vmatprep.subr.mxu0 0.0
    %3472 = vmatpush1.msra.mxu0 0.0
    %3473 = vmatprep.subr.mxu0 0.0
    %3474 = vmatpush1.msra.mxu0 0.0
    %3475 = vmatprep.subr.mxu0 0.0
    %3476 = vmatpush1.msra.mxu0 0.0
    %3477 = vmatprep.subr.mxu0 0.0
    %3478 = vmatpush1.msra.mxu0 0.0
    %3479 = vmatprep.subr.mxu0 0.0
    %3480 = vmatpush1.msra.mxu0 0.0
    %3481 = vmatprep.subr.mxu0 0.0
    %3482 = vmatpush1.msra.mxu0 0.0
    %3483 = vmatprep.subr.mxu0 0.0
    %3484 = vmatpush1.msra.mxu0 0.0
    %3485 = vmatprep.subr.mxu0 0.0
    %3486 = vmatpush1.msra.mxu0 0.0
    %3487 = vmatprep.subr.mxu0 0.0
    %3488 = vmatpush1.msra.mxu0 0.0
    %3489 = vmatprep.subr.mxu0 0.0
    %3490 = vmatpush1.msra.mxu0 0.0
    %3491 = vmatprep.subr.mxu0 0.0
    %3492 = vmatpush1.msra.mxu0 0.0
    %3493 = vmatprep.subr.mxu0 0.0
    %3494 = vmatpush1.msra.mxu0 0.0
    %3495 = vmatprep.subr.mxu0 0.0
    %3496 = vmatpush1.msra.mxu0 0.0
    %3497 = vmatprep.subr.mxu0 0.0
    %3498 = vmatpush1.msra.mxu0 0.0
    %3499 = vmatprep.subr.mxu0 0.0
    %3500 = vmatpush1.msra.mxu0 0.0
    %3501 = vmatprep.subr.mxu0 0.0
    %3502 = vmatpush1.msra.mxu0 0.0
    %3503 = vmatprep.subr.mxu0 0.0
    %3504 = vmatpush1.msra.mxu0 0.0
    %3505 = vmatprep.subr.mxu0 0.0
    %3506 = vmatpush1.msra.mxu0 0.0
    %3507 = vmatprep.mubr.f32.mxu0 0.0
    %3508 = vmatmul.mubr.f32.gmra.mrb[0].mxu0 %v3396
    %v3509 = vpop.f32.mrb[0].mxu0
    %v3510 = vadd.f32 0.0, %v3509
    %v3511 = vpop.f32.mrb[0].mxu0
    %3512 = vmatprep.mubr.f32.mxu0 0.0
    %3513 = vmatmul.mubr.f32.gmra.mrb[0].mxu0 %v3399
    %v3514 = vpop.f32.mrb[0].mxu0
    %v3515 = vadd.f32 0.0, %v3514
    %v3516 = vpop.f32.mrb[0].mxu0
    %3517 = vmatprep.mubr.f32.mxu0 0.0
    %3518 = vmatmul.mubr.f32.gmra.mrb[0].mxu0 %v3402
    %v3519 = vpop.f32.mrb[0].mxu0
    %v3520 = vadd.f32 0.0, %v3519
    %v3521 = vpop.f32.mrb[0].mxu0
    %3522 = vmatprep.mubr.f32.mxu0 0.0
    %3523 = vmatmul.mubr.f32.gmra.mrb[0].mxu0 %v3405
    %v3524 = vpop.f32.mrb[0].mxu0
    %v3525 = vadd.f32 0.0, %v3524
    %v3526 = vpop.f32.mrb[0].mxu0
    %3527 = vmatprep.mubr.f32.mxu0 0.0
    %3528 = vmatmul.mubr.f32.gmra.mrb[0].mxu0 %v3408
    %v3529 = vpop.f32.mrb[0].mxu0
    %v3530 = vadd.f32 0.0, %v3529
    %v3531 = vpop.f32.mrb[0].mxu0
    %3532 = vmatprep.mubr.f32.mxu0 0.0
    %3533 = vmatmul.mubr.f32.gmra.mrb[0].mxu0 %v3411
    %v3534 = vpop.f32.mrb[0].mxu0
    %v3535 = vadd.f32 0.0, %v3534
    %v3536 = vpop.f32.mrb[0].mxu0
    %3537 = vmatprep.mubr.f32.mxu0 0.0
    %3538 = vmatmul.mubr.f32.gmra.mrb[0].mxu0 %v3414
    %v3539 = vpop.f32.mrb[0].mxu0
    %v3540 = vadd.f32 0.0, %v3539
    %v3541 = vpop.f32.mrb[0].mxu0
    %3542 = vmatprep.mubr.f32.mxu0 0.0
    %3543 = vmatmul.mubr.f32.gmra.mrb[0].mxu0 %v3417
    %v3544 = vpop.f32.mrb[0].mxu0
    %v3545 = vadd.f32 0.0, %v3544
    %v3546 = vpop.f32.mrb[0].mxu0
    %3547 = vmatprep.mubr.f32.mxu0 0.0
    %3548 = vmatmul.mubr.f32.gmra.mrb[0].mxu0 %v3420
    %v3549 = vpop.f32.mrb[0].mxu0
    %v3550 = vadd.f32 0.0, %v3549
    %v3551 = vpop.f32.mrb[0].mxu0
    %3552 = vmatprep.mubr.f32.mxu0 0.0
    %3553 = vmatmul.mubr.f32.gmra.mrb[0].mxu0 %v3423
    %v3554 = vpop.f32.mrb[0].mxu0
    %v3555 = vadd.f32 0.0, %v3554
    %v3556 = vpop.f32.mrb[0].mxu0
    %3557 = vmatprep.mubr.f32.mxu0 0.0
    %3558 = vmatmul.mubr.f32.gmra.mrb[0].mxu0 %v3426
    %v3559 = vpop.f32.mrb[0].mxu0
    %v3560 = vadd.f32 0.0, %v3559
    %v3561 = vpop.f32.mrb[0].mxu0
    %3562 = vmatprep.mubr.f32.mxu0 0.0
    %3563 = vmatmul.mubr.f32.gmra.mrb[0].mxu0 %v3429
    %v3564 = vpop.f32.mrb[0].mxu0
    %v3565 = vadd.f32 0.0, %v3564
    %v3566 = vpop.f32.mrb[0].mxu0
    %3567 = vmatprep.mubr.f32.mxu0 0.0
    %3568 = vmatmul.mubr.f32.gmra.mrb[0].mxu0 %v3432
    %v3569 = vpop.f32.mrb[0].mxu0
    %v3570 = vadd.f32 0.0, %v3569
    %v3571 = vpop.f32.mrb[0].mxu0
    %3572 = vmatprep.mubr.f32.mxu0 0.0
    %3573 = vmatmul.mubr.f32.gmra.mrb[0].mxu0 %v3435
    %v3574 = vpop.f32.mrb[0].mxu0
    %v3575 = vadd.f32 0.0, %v3574
    %v3576 = vpop.f32.mrb[0].mxu0
    %3577 = vmatprep.mubr.f32.mxu0 0.0
    %3578 = vmatmul.mubr.f32.gmra.mrb[0].mxu0 %v3438
    %v3579 = vpop.f32.mrb[0].mxu0
    %v3580 = vadd.f32 0.0, %v3579
    %v3581 = vpop.f32.mrb[0].mxu0
    %3582 = vmatprep.mubr.f32.mxu0 0.0
    %3583 = vmatmul.mubr.f32.gmra.mrb[0].mxu0 %v3441
    %v3584 = vpop.f32.mrb[0].mxu0
    %v3585 = vadd.f32 0.0, %v3584
    %v3586 = vpop.f32.mrb[0].mxu0
    %3587 = vdwg.mxu0
    %3604 = vrot.lane.b32.xlu0 %v3510, 3
    %v3605 = vpop.permute.xlu0 %3604
    %3606 = vrot.lane.b32.xlu0 %v3515, 3
    %v3607 = vpop.permute.xlu0 %3606
    %3608 = vrot.lane.b32.xlu0 %v3520, 3
    %v3609 = vpop.permute.xlu0 %3608
    %3610 = vrot.lane.b32.xlu0 %v3525, 3
    %v3611 = vpop.permute.xlu0 %3610
    %3612 = vrot.lane.b32.xlu0 %v3530, 3
    %v3613 = vpop.permute.xlu0 %3612
    %3614 = vrot.lane.b32.xlu0 %v3535, 3
    %v3615 = vpop.permute.xlu0 %3614
    %3616 = vrot.lane.b32.xlu0 %v3540, 3
    %v3617 = vpop.permute.xlu0 %3616
    %3618 = vrot.lane.b32.xlu0 %v3545, 3
    %v3619 = vpop.permute.xlu0 %3618
    %3620 = vrot.lane.b32.xlu0 %v3550, 3
    %v3621 = vpop.permute.xlu0 %3620
    %3622 = vrot.lane.b32.xlu0 %v3555, 3
    %v3623 = vpop.permute.xlu0 %3622
    %3624 = vrot.lane.b32.xlu0 %v3560, 3
    %v3625 = vpop.permute.xlu0 %3624
    %3626 = vrot.lane.b32.xlu0 %v3565, 3
    %v3627 = vpop.permute.xlu0 %3626
    %3628 = vrot.lane.b32.xlu0 %v3570, 3
    %v3629 = vpop.permute.xlu0 %3628
    %3630 = vrot.lane.b32.xlu0 %v3575, 3
    %v3631 = vpop.permute.xlu0 %3630
    %3632 = vrot.lane.b32.xlu0 %v3580, 3
    %v3633 = vpop.permute.xlu0 %3632
    %3634 = vrot.lane.b32.xlu0 %v3585, 3
    %v3635 = vpop.permute.xlu0 %3634
    %v3652 = vadd.f32 %v3379, %v3605
    %v3653 = vadd.f32 %v3380, %v3607
    %v3654 = vadd.f32 %v3381, %v3609
    %v3655 = vadd.f32 %v3382, %v3611
    %v3656 = vadd.f32 %v3383, %v3613
    %v3657 = vadd.f32 %v3384, %v3615
    %v3658 = vadd.f32 %v3385, %v3617
    %v3659 = vadd.f32 %v3386, %v3619
    %v3660 = vadd.f32 %v3387, %v3621
    %v3661 = vadd.f32 %v3388, %v3623
    %v3662 = vadd.f32 %v3389, %v3625
    %v3663 = vadd.f32 %v3390, %v3627
    %v3664 = vadd.f32 %v3391, %v3629
    %v3665 = vadd.f32 %v3392, %v3631
    %v3666 = vadd.f32 %v3393, %v3633
    %v3667 = vadd.f32 %v3394, %v3635
    %vm3668 = vcmask 31768
    %3669 = vst.msk [vmem:[#allocation2] sm:$0xff] %vm3668, %v3652
    %3670 = vst.msk [vmem:[#allocation2 + $0x8] sm:$0xff] %vm3668, %v3653
    %3671 = vst.msk [vmem:[#allocation2 + $0x10] sm:$0xff] %vm3668, %v3654
    %3672 = vst.msk [vmem:[#allocation2 + $0x18] sm:$0xff] %vm3668, %v3655
    %3673 = vst.msk [vmem:[#allocation2 + $0x20] sm:$0xff] %vm3668, %v3656
    %3674 = vst.msk [vmem:[#allocation2 + $0x28] sm:$0xff] %vm3668, %v3657
    %3675 = vst.msk [vmem:[#allocation2 + $0x30] sm:$0xff] %vm3668, %v3658
    %3676 = vst.msk [vmem:[#allocation2 + $0x38] sm:$0xff] %vm3668, %v3659
    %3677 = vst.msk [vmem:[#allocation2 + $0x40] sm:$0xff] %vm3668, %v3660
    %3678 = vst.msk [vmem:[#allocation2 + $0x48] sm:$0xff] %vm3668, %v3661
    %3679 = vst.msk [vmem:[#allocation2 + $0x50] sm:$0xff] %vm3668, %v3662
    %3680 = vst.msk [vmem:[#allocation2 + $0x58] sm:$0xff] %vm3668, %v3663
    %3681 = vst.msk [vmem:[#allocation2 + $0x60] sm:$0xff] %vm3668, %v3664
    %3682 = vst.msk [vmem:[#allocation2 + $0x68] sm:$0xff] %vm3668, %v3665
    %3683 = vst.msk [vmem:[#allocation2 + $0x70] sm:$0xff] %vm3668, %v3666
    %3684 = vst.msk [vmem:[#allocation2 + $0x78] sm:$0xff] %vm3668, %v3667
    %v3686 = vsel %vm523, %v252, 0
    %3688 = vmatprep.subr.mxu0 0.0
    %3689 = vmatpush1.msra.mxu0 %v3686
    %3690 = vmatprep.subr.mxu0 0.0
    %3691 = vmatpush1.msra.mxu0 0.0
    %3692 = vmatprep.subr.mxu0 0.0
    %3693 = vmatpush1.msra.mxu0 0.0
    %3694 = vmatprep.subr.mxu0 0.0
    %3695 = vmatpush1.msra.mxu0 0.0
    %3696 = vmatprep.subr.mxu0 0.0
    %3697 = vmatpush1.msra.mxu0 0.0
    %3698 = vmatprep.subr.mxu0 0.0
    %3699 = vmatpush1.msra.mxu0 0.0
    %3700 = vmatprep.subr.mxu0 0.0
    %3701 = vmatpush1.msra.mxu0 0.0
    %3702 = vmatprep.subr.mxu0 0.0
    %3703 = vmatpush1.msra.mxu0 0.0
    %3704 = vmatprep.subr.mxu0 0.0
    %3705 = vmatpush1.msra.mxu0 0.0
    %3706 = vmatprep.subr.mxu0 0.0
    %3707 = vmatpush1.msra.mxu0 0.0
    %3708 = vmatprep.subr.mxu0 0.0
    %3709 = vmatpush1.msra.mxu0 0.0
    %3710 = vmatprep.subr.mxu0 0.0
    %3711 = vmatpush1.msra.mxu0 0.0
    %3712 = vmatprep.subr.mxu0 0.0
    %3713 = vmatpush1.msra.mxu0 0.0
    %3714 = vmatprep.subr.mxu0 0.0
    %3715 = vmatpush1.msra.mxu0 0.0
    %3716 = vmatprep.subr.mxu0 0.0
    %3717 = vmatpush1.msra.mxu0 0.0
    %3718 = vmatprep.subr.mxu0 0.0
    %3719 = vmatpush1.msra.mxu0 0.0
    %3720 = vmatprep.subr.mxu0 0.0
    %3721 = vmatpush1.msra.mxu0 0.0
    %3722 = vmatprep.subr.mxu0 0.0
    %3723 = vmatpush1.msra.mxu0 0.0
    %3724 = vmatprep.subr.mxu0 0.0
    %3725 = vmatpush1.msra.mxu0 0.0
    %3726 = vmatprep.subr.mxu0 0.0
    %3727 = vmatpush1.msra.mxu0 0.0
    %3728 = vmatprep.subr.mxu0 0.0
    %3729 = vmatpush1.msra.mxu0 0.0
    %3730 = vmatprep.subr.mxu0 0.0
    %3731 = vmatpush1.msra.mxu0 0.0
    %3732 = vmatprep.subr.mxu0 0.0
    %3733 = vmatpush1.msra.mxu0 0.0
    %3734 = vmatprep.subr.mxu0 0.0
    %3735 = vmatpush1.msra.mxu0 0.0
    %3736 = vmatprep.subr.mxu0 0.0
    %3737 = vmatpush1.msra.mxu0 0.0
    %3738 = vmatprep.subr.mxu0 0.0
    %3739 = vmatpush1.msra.mxu0 0.0
    %3740 = vmatprep.subr.mxu0 0.0
    %3741 = vmatpush1.msra.mxu0 0.0
    %3742 = vmatprep.subr.mxu0 0.0
    %3743 = vmatpush1.msra.mxu0 0.0
    %3744 = vmatprep.subr.mxu0 0.0
    %3745 = vmatpush1.msra.mxu0 0.0
    %3746 = vmatprep.subr.mxu0 0.0
    %3747 = vmatpush1.msra.mxu0 0.0
    %3748 = vmatprep.subr.mxu0 0.0
    %3749 = vmatpush1.msra.mxu0 0.0
    %3750 = vmatprep.subr.mxu0 0.0
    %3751 = vmatpush1.msra.mxu0 0.0
    %3752 = vmatprep.mubr.f32.mxu0 0.0
    %3753 = vmatmul.mubr.f32.gmra.mrb[0].mxu0 %v476
    %v3754 = vpop.f32.mrb[0].mxu0
    %v3755 = vadd.f32 0.0, %v3754
    %v3756 = vpop.f32.mrb[0].mxu0
    %3757 = vmatprep.mubr.f32.mxu0 0.0
    %3758 = vmatmul.mubr.f32.gmra.mrb[0].mxu0 %v479
    %v3759 = vpop.f32.mrb[0].mxu0
    %v3760 = vadd.f32 0.0, %v3759
    %v3761 = vpop.f32.mrb[0].mxu0
    %3762 = vmatprep.mubr.f32.mxu0 0.0
    %3763 = vmatmul.mubr.f32.gmra.mrb[0].mxu0 %v482
    %v3764 = vpop.f32.mrb[0].mxu0
    %v3765 = vadd.f32 0.0, %v3764
    %v3766 = vpop.f32.mrb[0].mxu0
    %3767 = vmatprep.mubr.f32.mxu0 0.0
    %3768 = vmatmul.mubr.f32.gmra.mrb[0].mxu0 %v485
    %v3769 = vpop.f32.mrb[0].mxu0
    %v3770 = vadd.f32 0.0, %v3769
    %v3771 = vpop.f32.mrb[0].mxu0
    %3772 = vmatprep.mubr.f32.mxu0 0.0
    %3773 = vmatmul.mubr.f32.gmra.mrb[0].mxu0 %v488
    %v3774 = vpop.f32.mrb[0].mxu0
    %v3775 = vadd.f32 0.0, %v3774
    %v3776 = vpop.f32.mrb[0].mxu0
    %3777 = vmatprep.mubr.f32.mxu0 0.0
    %3778 = vmatmul.mubr.f32.gmra.mrb[0].mxu0 %v491
    %v3779 = vpop.f32.mrb[0].mxu0
    %v3780 = vadd.f32 0.0, %v3779
    %v3781 = vpop.f32.mrb[0].mxu0
    %3782 = vmatprep.mubr.f32.mxu0 0.0
    %3783 = vmatmul.mubr.f32.gmra.mrb[0].mxu0 %v494
    %v3784 = vpop.f32.mrb[0].mxu0
    %v3785 = vadd.f32 0.0, %v3784
    %v3786 = vpop.f32.mrb[0].mxu0
    %3787 = vmatprep.mubr.f32.mxu0 0.0
    %3788 = vmatmul.mubr.f32.gmra.mrb[0].mxu0 %v497
    %v3789 = vpop.f32.mrb[0].mxu0
    %v3790 = vadd.f32 0.0, %v3789
    %v3791 = vpop.f32.mrb[0].mxu0
    %3792 = vmatprep.mubr.f32.mxu0 0.0
    %3793 = vmatmul.mubr.f32.gmra.mrb[0].mxu0 %v500
    %v3794 = vpop.f32.mrb[0].mxu0
    %v3795 = vadd.f32 0.0, %v3794
    %v3796 = vpop.f32.mrb[0].mxu0
    %3797 = vmatprep.mubr.f32.mxu0 0.0
    %3798 = vmatmul.mubr.f32.gmra.mrb[0].mxu0 %v503
    %v3799 = vpop.f32.mrb[0].mxu0
    %v3800 = vadd.f32 0.0, %v3799
    %v3801 = vpop.f32.mrb[0].mxu0
    %3802 = vmatprep.mubr.f32.mxu0 0.0
    %3803 = vmatmul.mubr.f32.gmra.mrb[0].mxu0 %v506
    %v3804 = vpop.f32.mrb[0].mxu0
    %v3805 = vadd.f32 0.0, %v3804
    %v3806 = vpop.f32.mrb[0].mxu0
    %3807 = vmatprep.mubr.f32.mxu0 0.0
    %3808 = vmatmul.mubr.f32.gmra.mrb[0].mxu0 %v509
    %v3809 = vpop.f32.mrb[0].mxu0
    %v3810 = vadd.f32 0.0, %v3809
    %v3811 = vpop.f32.mrb[0].mxu0
    %3812 = vmatprep.mubr.f32.mxu0 0.0
    %3813 = vmatmul.mubr.f32.gmra.mrb[0].mxu0 %v512
    %v3814 = vpop.f32.mrb[0].mxu0
    %v3815 = vadd.f32 0.0, %v3814
    %v3816 = vpop.f32.mrb[0].mxu0
    %3817 = vmatprep.mubr.f32.mxu0 0.0
    %3818 = vmatmul.mubr.f32.gmra.mrb[0].mxu0 %v515
    %v3819 = vpop.f32.mrb[0].mxu0
    %v3820 = vadd.f32 0.0, %v3819
    %v3821 = vpop.f32.mrb[0].mxu0
    %3822 = vmatprep.mubr.f32.mxu0 0.0
    %3823 = vmatmul.mubr.f32.gmra.mrb[0].mxu0 %v518
    %v3824 = vpop.f32.mrb[0].mxu0
    %v3825 = vadd.f32 0.0, %v3824
    %v3826 = vpop.f32.mrb[0].mxu0
    %3827 = vmatprep.mubr.f32.mxu0 0.0
    %3828 = vmatmul.mubr.f32.gmra.mrb[0].mxu0 %v521
    %v3829 = vpop.f32.mrb[0].mxu0
    %v3830 = vadd.f32 0.0, %v3829
    %v3831 = vpop.f32.mrb[0].mxu0
    %3832 = vdwg.mxu0
    %v3834 = vsel %vm523, %v332, 0
    %3836 = vmatprep.subr.mxu0 0.0
    %3837 = vmatpush1.msra.mxu0 %v3834
    %3838 = vmatprep.subr.mxu0 0.0
    %3839 = vmatpush1.msra.mxu0 0.0
    %3840 = vmatprep.subr.mxu0 0.0
    %3841 = vmatpush1.msra.mxu0 0.0
    %3842 = vmatprep.subr.mxu0 0.0
    %3843 = vmatpush1.msra.mxu0 0.0
    %3844 = vmatprep.subr.mxu0 0.0
    %3845 = vmatpush1.msra.mxu0 0.0
    %3846 = vmatprep.subr.mxu0 0.0
    %3847 = vmatpush1.msra.mxu0 0.0
    %3848 = vmatprep.subr.mxu0 0.0
    %3849 = vmatpush1.msra.mxu0 0.0
    %3850 = vmatprep.subr.mxu0 0.0
    %3851 = vmatpush1.msra.mxu0 0.0
    %3852 = vmatprep.subr.mxu0 0.0
    %3853 = vmatpush1.msra.mxu0 0.0
    %3854 = vmatprep.subr.mxu0 0.0
    %3855 = vmatpush1.msra.mxu0 0.0
    %3856 = vmatprep.subr.mxu0 0.0
    %3857 = vmatpush1.msra.mxu0 0.0
    %3858 = vmatprep.subr.mxu0 0.0
    %3859 = vmatpush1.msra.mxu0 0.0
    %3860 = vmatprep.subr.mxu0 0.0
    %3861 = vmatpush1.msra.mxu0 0.0
    %3862 = vmatprep.subr.mxu0 0.0
    %3863 = vmatpush1.msra.mxu0 0.0
    %3864 = vmatprep.subr.mxu0 0.0
    %3865 = vmatpush1.msra.mxu0 0.0
    %3866 = vmatprep.subr.mxu0 0.0
    %3867 = vmatpush1.msra.mxu0 0.0
    %3868 = vmatprep.subr.mxu0 0.0
    %3869 = vmatpush1.msra.mxu0 0.0
    %3870 = vmatprep.subr.mxu0 0.0
    %3871 = vmatpush1.msra.mxu0 0.0
    %3872 = vmatprep.subr.mxu0 0.0
    %3873 = vmatpush1.msra.mxu0 0.0
    %3874 = vmatprep.subr.mxu0 0.0
    %3875 = vmatpush1.msra.mxu0 0.0
    %3876 = vmatprep.subr.mxu0 0.0
    %3877 = vmatpush1.msra.mxu0 0.0
    %3878 = vmatprep.subr.mxu0 0.0
    %3879 = vmatpush1.msra.mxu0 0.0
    %3880 = vmatprep.subr.mxu0 0.0
    %3881 = vmatpush1.msra.mxu0 0.0
    %3882 = vmatprep.subr.mxu0 0.0
    %3883 = vmatpush1.msra.mxu0 0.0
    %3884 = vmatprep.subr.mxu0 0.0
    %3885 = vmatpush1.msra.mxu0 0.0
    %3886 = vmatprep.subr.mxu0 0.0
    %3887 = vmatpush1.msra.mxu0 0.0
    %3888 = vmatprep.subr.mxu0 0.0
    %3889 = vmatpush1.msra.mxu0 0.0
    %3890 = vmatprep.subr.mxu0 0.0
    %3891 = vmatpush1.msra.mxu0 0.0
    %3892 = vmatprep.subr.mxu0 0.0
    %3893 = vmatpush1.msra.mxu0 0.0
    %3894 = vmatprep.subr.mxu0 0.0
    %3895 = vmatpush1.msra.mxu0 0.0
    %3896 = vmatprep.subr.mxu0 0.0
    %3897 = vmatpush1.msra.mxu0 0.0
    %3898 = vmatprep.subr.mxu0 0.0
    %3899 = vmatpush1.msra.mxu0 0.0
    %3900 = vmatprep.mubr.f32.mxu0 0.0
    %3901 = vmatmul.mubr.f32.gmra.mrb[0].mxu0 %v673
    %v3902 = vpop.f32.mrb[0].mxu0
    %v3903 = vadd.f32 0.0, %v3902
    %v3904 = vpop.f32.mrb[0].mxu0
    %3905 = vmatprep.mubr.f32.mxu0 0.0
    %3906 = vmatmul.mubr.f32.gmra.mrb[0].mxu0 %v676
    %v3907 = vpop.f32.mrb[0].mxu0
    %v3908 = vadd.f32 0.0, %v3907
    %v3909 = vpop.f32.mrb[0].mxu0
    %3910 = vmatprep.mubr.f32.mxu0 0.0
    %3911 = vmatmul.mubr.f32.gmra.mrb[0].mxu0 %v679
    %v3912 = vpop.f32.mrb[0].mxu0
    %v3913 = vadd.f32 0.0, %v3912
    %v3914 = vpop.f32.mrb[0].mxu0
    %3915 = vmatprep.mubr.f32.mxu0 0.0
    %3916 = vmatmul.mubr.f32.gmra.mrb[0].mxu0 %v682
    %v3917 = vpop.f32.mrb[0].mxu0
    %v3918 = vadd.f32 0.0, %v3917
    %v3919 = vpop.f32.mrb[0].mxu0
    %3920 = vmatprep.mubr.f32.mxu0 0.0
    %3921 = vmatmul.mubr.f32.gmra.mrb[0].mxu0 %v685
    %v3922 = vpop.f32.mrb[0].mxu0
    %v3923 = vadd.f32 0.0, %v3922
    %v3924 = vpop.f32.mrb[0].mxu0
    %3925 = vmatprep.mubr.f32.mxu0 0.0
    %3926 = vmatmul.mubr.f32.gmra.mrb[0].mxu0 %v688
    %v3927 = vpop.f32.mrb[0].mxu0
    %v3928 = vadd.f32 0.0, %v3927
    %v3929 = vpop.f32.mrb[0].mxu0
    %3930 = vmatprep.mubr.f32.mxu0 0.0
    %3931 = vmatmul.mubr.f32.gmra.mrb[0].mxu0 %v691
    %v3932 = vpop.f32.mrb[0].mxu0
    %v3933 = vadd.f32 0.0, %v3932
    %v3934 = vpop.f32.mrb[0].mxu0
    %3935 = vmatprep.mubr.f32.mxu0 0.0
    %3936 = vmatmul.mubr.f32.gmra.mrb[0].mxu0 %v694
    %v3937 = vpop.f32.mrb[0].mxu0
    %v3938 = vadd.f32 0.0, %v3937
    %v3939 = vpop.f32.mrb[0].mxu0
    %3940 = vmatprep.mubr.f32.mxu0 0.0
    %3941 = vmatmul.mubr.f32.gmra.mrb[0].mxu0 %v697
    %v3942 = vpop.f32.mrb[0].mxu0
    %v3943 = vadd.f32 0.0, %v3942
    %v3944 = vpop.f32.mrb[0].mxu0
    %3945 = vmatprep.mubr.f32.mxu0 0.0
    %3946 = vmatmul.mubr.f32.gmra.mrb[0].mxu0 %v700
    %v3947 = vpop.f32.mrb[0].mxu0
    %v3948 = vadd.f32 0.0, %v3947
    %v3949 = vpop.f32.mrb[0].mxu0
    %3950 = vmatprep.mubr.f32.mxu0 0.0
    %3951 = vmatmul.mubr.f32.gmra.mrb[0].mxu0 %v703
    %v3952 = vpop.f32.mrb[0].mxu0
    %v3953 = vadd.f32 0.0, %v3952
    %v3954 = vpop.f32.mrb[0].mxu0
    %3955 = vmatprep.mubr.f32.mxu0 0.0
    %3956 = vmatmul.mubr.f32.gmra.mrb[0].mxu0 %v706
    %v3957 = vpop.f32.mrb[0].mxu0
    %v3958 = vadd.f32 0.0, %v3957
    %v3959 = vpop.f32.mrb[0].mxu0
    %3960 = vmatprep.mubr.f32.mxu0 0.0
    %3961 = vmatmul.mubr.f32.gmra.mrb[0].mxu0 %v709
    %v3962 = vpop.f32.mrb[0].mxu0
    %v3963 = vadd.f32 0.0, %v3962
    %v3964 = vpop.f32.mrb[0].mxu0
    %3965 = vmatprep.mubr.f32.mxu0 0.0
    %3966 = vmatmul.mubr.f32.gmra.mrb[0].mxu0 %v712
    %v3967 = vpop.f32.mrb[0].mxu0
    %v3968 = vadd.f32 0.0, %v3967
    %v3969 = vpop.f32.mrb[0].mxu0
    %3970 = vmatprep.mubr.f32.mxu0 0.0
    %3971 = vmatmul.mubr.f32.gmra.mrb[0].mxu0 %v715
    %v3972 = vpop.f32.mrb[0].mxu0
    %v3973 = vadd.f32 0.0, %v3972
    %v3974 = vpop.f32.mrb[0].mxu0
    %3975 = vmatprep.mubr.f32.mxu0 0.0
    %3976 = vmatmul.mubr.f32.gmra.mrb[0].mxu0 %v718
    %v3977 = vpop.f32.mrb[0].mxu0
    %v3978 = vadd.f32 0.0, %v3977
    %v3979 = vpop.f32.mrb[0].mxu0
    %3980 = vdwg.mxu0
    %v3981 = vmul.f32 %v3755, %v3903
    %v3982 = vmul.f32 %v3760, %v3908
    %v3983 = vmul.f32 %v3765, %v3913
    %v3984 = vmul.f32 %v3770, %v3918
    %v3985 = vmul.f32 %v3775, %v3923
    %v3986 = vmul.f32 %v3780, %v3928
    %v3987 = vmul.f32 %v3785, %v3933
    %v3988 = vmul.f32 %v3790, %v3938
    %v3989 = vmul.f32 %v3795, %v3943
    %v3990 = vmul.f32 %v3800, %v3948
    %v3991 = vmul.f32 %v3805, %v3953
    %v3992 = vmul.f32 %v3810, %v3958
    %v3993 = vmul.f32 %v3815, %v3963
    %v3994 = vmul.f32 %v3820, %v3968
    %v3995 = vmul.f32 %v3825, %v3973
    %v3996 = vmul.f32 %v3830, %v3978
    %v3998 = vsel %vm523, %v412, 0
    %4000 = vmatprep.subr.mxu0 0.0
    %4001 = vmatpush1.msra.mxu0 %v3998
    %4002 = vmatprep.subr.mxu0 0.0
    %4003 = vmatpush1.msra.mxu0 0.0
    %4004 = vmatprep.subr.mxu0 0.0
    %4005 = vmatpush1.msra.mxu0 0.0
    %4006 = vmatprep.subr.mxu0 0.0
    %4007 = vmatpush1.msra.mxu0 0.0
    %4008 = vmatprep.subr.mxu0 0.0
    %4009 = vmatpush1.msra.mxu0 0.0
    %4010 = vmatprep.subr.mxu0 0.0
    %4011 = vmatpush1.msra.mxu0 0.0
    %4012 = vmatprep.subr.mxu0 0.0
    %4013 = vmatpush1.msra.mxu0 0.0
    %4014 = vmatprep.subr.mxu0 0.0
    %4015 = vmatpush1.msra.mxu0 0.0
    %4016 = vmatprep.subr.mxu0 0.0
    %4017 = vmatpush1.msra.mxu0 0.0
    %4018 = vmatprep.subr.mxu0 0.0
    %4019 = vmatpush1.msra.mxu0 0.0
    %4020 = vmatprep.subr.mxu0 0.0
    %4021 = vmatpush1.msra.mxu0 0.0
    %4022 = vmatprep.subr.mxu0 0.0
    %4023 = vmatpush1.msra.mxu0 0.0
    %4024 = vmatprep.subr.mxu0 0.0
    %4025 = vmatpush1.msra.mxu0 0.0
    %4026 = vmatprep.subr.mxu0 0.0
    %4027 = vmatpush1.msra.mxu0 0.0
    %4028 = vmatprep.subr.mxu0 0.0
    %4029 = vmatpush1.msra.mxu0 0.0
    %4030 = vmatprep.subr.mxu0 0.0
    %4031 = vmatpush1.msra.mxu0 0.0
    %4032 = vmatprep.subr.mxu0 0.0
    %4033 = vmatpush1.msra.mxu0 0.0
    %4034 = vmatprep.subr.mxu0 0.0
    %4035 = vmatpush1.msra.mxu0 0.0
    %4036 = vmatprep.subr.mxu0 0.0
    %4037 = vmatpush1.msra.mxu0 0.0
    %4038 = vmatprep.subr.mxu0 0.0
    %4039 = vmatpush1.msra.mxu0 0.0
    %4040 = vmatprep.subr.mxu0 0.0
    %4041 = vmatpush1.msra.mxu0 0.0
    %4042 = vmatprep.subr.mxu0 0.0
    %4043 = vmatpush1.msra.mxu0 0.0
    %4044 = vmatprep.subr.mxu0 0.0
    %4045 = vmatpush1.msra.mxu0 0.0
    %4046 = vmatprep.subr.mxu0 0.0
    %4047 = vmatpush1.msra.mxu0 0.0
    %4048 = vmatprep.subr.mxu0 0.0
    %4049 = vmatpush1.msra.mxu0 0.0
    %4050 = vmatprep.subr.mxu0 0.0
    %4051 = vmatpush1.msra.mxu0 0.0
    %4052 = vmatprep.subr.mxu0 0.0
    %4053 = vmatpush1.msra.mxu0 0.0
    %4054 = vmatprep.subr.mxu0 0.0
    %4055 = vmatpush1.msra.mxu0 0.0
    %4056 = vmatprep.subr.mxu0 0.0
    %4057 = vmatpush1.msra.mxu0 0.0
    %4058 = vmatprep.subr.mxu0 0.0
    %4059 = vmatpush1.msra.mxu0 0.0
    %4060 = vmatprep.subr.mxu0 0.0
    %4061 = vmatpush1.msra.mxu0 0.0
    %4062 = vmatprep.subr.mxu0 0.0
    %4063 = vmatpush1.msra.mxu0 0.0
    %4064 = vmatprep.mubr.f32.mxu0 0.0
    %4065 = vmatmul.mubr.f32.gmra.mrb[0].mxu0 %v885
    %v4066 = vpop.f32.mrb[0].mxu0
    %v4067 = vadd.f32 0.0, %v4066
    %v4068 = vpop.f32.mrb[0].mxu0
    %4069 = vmatprep.mubr.f32.mxu0 0.0
    %4070 = vmatmul.mubr.f32.gmra.mrb[0].mxu0 %v888
    %v4071 = vpop.f32.mrb[0].mxu0
    %v4072 = vadd.f32 0.0, %v4071
    %v4073 = vpop.f32.mrb[0].mxu0
    %4074 = vmatprep.mubr.f32.mxu0 0.0
    %4075 = vmatmul.mubr.f32.gmra.mrb[0].mxu0 %v891
    %v4076 = vpop.f32.mrb[0].mxu0
    %v4077 = vadd.f32 0.0, %v4076
    %v4078 = vpop.f32.mrb[0].mxu0
    %4079 = vmatprep.mubr.f32.mxu0 0.0
    %4080 = vmatmul.mubr.f32.gmra.mrb[0].mxu0 %v894
    %v4081 = vpop.f32.mrb[0].mxu0
    %v4082 = vadd.f32 0.0, %v4081
    %v4083 = vpop.f32.mrb[0].mxu0
    %4084 = vmatprep.mubr.f32.mxu0 0.0
    %4085 = vmatmul.mubr.f32.gmra.mrb[0].mxu0 %v897
    %v4086 = vpop.f32.mrb[0].mxu0
    %v4087 = vadd.f32 0.0, %v4086
    %v4088 = vpop.f32.mrb[0].mxu0
    %4089 = vmatprep.mubr.f32.mxu0 0.0
    %4090 = vmatmul.mubr.f32.gmra.mrb[0].mxu0 %v900
    %v4091 = vpop.f32.mrb[0].mxu0
    %v4092 = vadd.f32 0.0, %v4091
    %v4093 = vpop.f32.mrb[0].mxu0
    %4094 = vmatprep.mubr.f32.mxu0 0.0
    %4095 = vmatmul.mubr.f32.gmra.mrb[0].mxu0 %v903
    %v4096 = vpop.f32.mrb[0].mxu0
    %v4097 = vadd.f32 0.0, %v4096
    %v4098 = vpop.f32.mrb[0].mxu0
    %4099 = vmatprep.mubr.f32.mxu0 0.0
    %4100 = vmatmul.mubr.f32.gmra.mrb[0].mxu0 %v906
    %v4101 = vpop.f32.mrb[0].mxu0
    %v4102 = vadd.f32 0.0, %v4101
    %v4103 = vpop.f32.mrb[0].mxu0
    %4104 = vmatprep.mubr.f32.mxu0 0.0
    %4105 = vmatmul.mubr.f32.gmra.mrb[0].mxu0 %v909
    %v4106 = vpop.f32.mrb[0].mxu0
    %v4107 = vadd.f32 0.0, %v4106
    %v4108 = vpop.f32.mrb[0].mxu0
    %4109 = vmatprep.mubr.f32.mxu0 0.0
    %4110 = vmatmul.mubr.f32.gmra.mrb[0].mxu0 %v912
    %v4111 = vpop.f32.mrb[0].mxu0
    %v4112 = vadd.f32 0.0, %v4111
    %v4113 = vpop.f32.mrb[0].mxu0
    %4114 = vmatprep.mubr.f32.mxu0 0.0
    %4115 = vmatmul.mubr.f32.gmra.mrb[0].mxu0 %v915
    %v4116 = vpop.f32.mrb[0].mxu0
    %v4117 = vadd.f32 0.0, %v4116
    %v4118 = vpop.f32.mrb[0].mxu0
    %4119 = vmatprep.mubr.f32.mxu0 0.0
    %4120 = vmatmul.mubr.f32.gmra.mrb[0].mxu0 %v918
    %v4121 = vpop.f32.mrb[0].mxu0
    %v4122 = vadd.f32 0.0, %v4121
    %v4123 = vpop.f32.mrb[0].mxu0
    %4124 = vmatprep.mubr.f32.mxu0 0.0
    %4125 = vmatmul.mubr.f32.gmra.mrb[0].mxu0 %v921
    %v4126 = vpop.f32.mrb[0].mxu0
    %v4127 = vadd.f32 0.0, %v4126
    %v4128 = vpop.f32.mrb[0].mxu0
    %4129 = vmatprep.mubr.f32.mxu0 0.0
    %4130 = vmatmul.mubr.f32.gmra.mrb[0].mxu0 %v924
    %v4131 = vpop.f32.mrb[0].mxu0
    %v4132 = vadd.f32 0.0, %v4131
    %v4133 = vpop.f32.mrb[0].mxu0
    %4134 = vmatprep.mubr.f32.mxu0 0.0
    %4135 = vmatmul.mubr.f32.gmra.mrb[0].mxu0 %v927
    %v4136 = vpop.f32.mrb[0].mxu0
    %v4137 = vadd.f32 0.0, %v4136
    %v4138 = vpop.f32.mrb[0].mxu0
    %4139 = vmatprep.mubr.f32.mxu0 0.0
    %4140 = vmatmul.mubr.f32.gmra.mrb[0].mxu0 %v930
    %v4141 = vpop.f32.mrb[0].mxu0
    %v4142 = vadd.f32 0.0, %v4141
    %v4143 = vpop.f32.mrb[0].mxu0
    %4144 = vdwg.mxu0
    %v4145 = vmul.f32 %v3981, %v4067
    %v4146 = vmul.f32 %v3982, %v4072
    %v4147 = vmul.f32 %v3983, %v4077
    %v4148 = vmul.f32 %v3984, %v4082
    %v4149 = vmul.f32 %v3985, %v4087
    %v4150 = vmul.f32 %v3986, %v4092
    %v4151 = vmul.f32 %v3987, %v4097
    %v4152 = vmul.f32 %v3988, %v4102
    %v4153 = vmul.f32 %v3989, %v4107
    %v4154 = vmul.f32 %v3990, %v4112
    %v4155 = vmul.f32 %v3991, %v4117
    %v4156 = vmul.f32 %v3992, %v4122
    %v4157 = vmul.f32 %v3993, %v4127
    %v4158 = vmul.f32 %v3994, %v4132
    %v4159 = vmul.f32 %v3995, %v4137
    %v4160 = vmul.f32 %v3996, %v4142
    %v4161 = vld [vmem:[#allocation2] sm:$0xff]
    %v4162 = vld [vmem:[#allocation2 + $0x8] sm:$0xff]
    %v4163 = vld [vmem:[#allocation2 + $0x10] sm:$0xff]
    %v4164 = vld [vmem:[#allocation2 + $0x18] sm:$0xff]
    %v4165 = vld [vmem:[#allocation2 + $0x20] sm:$0xff]
    %v4166 = vld [vmem:[#allocation2 + $0x28] sm:$0xff]
    %v4167 = vld [vmem:[#allocation2 + $0x30] sm:$0xff]
    %v4168 = vld [vmem:[#allocation2 + $0x38] sm:$0xff]
    %v4169 = vld [vmem:[#allocation2 + $0x40] sm:$0xff]
    %v4170 = vld [vmem:[#allocation2 + $0x48] sm:$0xff]
    %v4171 = vld [vmem:[#allocation2 + $0x50] sm:$0xff]
    %v4172 = vld [vmem:[#allocation2 + $0x58] sm:$0xff]
    %v4173 = vld [vmem:[#allocation2 + $0x60] sm:$0xff]
    %v4174 = vld [vmem:[#allocation2 + $0x68] sm:$0xff]
    %v4175 = vld [vmem:[#allocation2 + $0x70] sm:$0xff]
    %v4176 = vld [vmem:[#allocation2 + $0x78] sm:$0xff]
    %v4178 = vsel %vm1112, %v4145, 0
    %v4181 = vsel %vm1112, %v4146, 0
    %v4184 = vsel %vm1112, %v4147, 0
    %v4187 = vsel %vm1112, %v4148, 0
    %v4190 = vsel %vm1112, %v4149, 0
    %v4193 = vsel %vm1112, %v4150, 0
    %v4196 = vsel %vm1112, %v4151, 0
    %v4199 = vsel %vm1112, %v4152, 0
    %v4202 = vsel %vm1112, %v4153, 0
    %v4205 = vsel %vm1112, %v4154, 0
    %v4208 = vsel %vm1112, %v4155, 0
    %v4211 = vsel %vm1112, %v4156, 0
    %v4214 = vsel %vm1112, %v4157, 0
    %v4217 = vsel %vm1112, %v4158, 0
    %v4220 = vsel %vm1112, %v4159, 0
    %v4223 = vsel %vm1112, %v4160, 0
    %4225 = vmatprep.subr.mxu0 0.0
    %4226 = vmatpush1.msra.mxu0 %v466
    %4227 = vmatprep.subr.mxu0 0.0
    %4228 = vmatpush1.msra.mxu0 %v467
    %4229 = vmatprep.subr.mxu0 0.0
    %4230 = vmatpush1.msra.mxu0 %v468
    %4231 = vmatprep.subr.mxu0 0.0
    %4232 = vmatpush1.msra.mxu0 %v469
    %4233 = vmatprep.subr.mxu0 0.0
    %4234 = vmatpush1.msra.mxu0 %v470
    %4235 = vmatprep.subr.mxu0 0.0
    %4236 = vmatpush1.msra.mxu0 %v471
    %4237 = vmatprep.subr.mxu0 0.0
    %4238 = vmatpush1.msra.mxu0 %v472
    %4239 = vmatprep.subr.mxu0 0.0
    %4240 = vmatpush1.msra.mxu0 %v473
    %4241 = vmatprep.subr.mxu0 0.0
    %4242 = vmatpush1.msra.mxu0 0.0
    %4243 = vmatprep.subr.mxu0 0.0
    %4244 = vmatpush1.msra.mxu0 0.0
    %4245 = vmatprep.subr.mxu0 0.0
    %4246 = vmatpush1.msra.mxu0 0.0
    %4247 = vmatprep.subr.mxu0 0.0
    %4248 = vmatpush1.msra.mxu0 0.0
    %4249 = vmatprep.subr.mxu0 0.0
    %4250 = vmatpush1.msra.mxu0 0.0
    %4251 = vmatprep.subr.mxu0 0.0
    %4252 = vmatpush1.msra.mxu0 0.0
    %4253 = vmatprep.subr.mxu0 0.0
    %4254 = vmatpush1.msra.mxu0 0.0
    %4255 = vmatprep.subr.mxu0 0.0
    %4256 = vmatpush1.msra.mxu0 0.0
    %4257 = vmatprep.subr.mxu0 0.0
    %4258 = vmatpush1.msra.mxu0 0.0
    %4259 = vmatprep.subr.mxu0 0.0
    %4260 = vmatpush1.msra.mxu0 0.0
    %4261 = vmatprep.subr.mxu0 0.0
    %4262 = vmatpush1.msra.mxu0 0.0
    %4263 = vmatprep.subr.mxu0 0.0
    %4264 = vmatpush1.msra.mxu0 0.0
    %4265 = vmatprep.subr.mxu0 0.0
    %4266 = vmatpush1.msra.mxu0 0.0
    %4267 = vmatprep.subr.mxu0 0.0
    %4268 = vmatpush1.msra.mxu0 0.0
    %4269 = vmatprep.subr.mxu0 0.0
    %4270 = vmatpush1.msra.mxu0 0.0
    %4271 = vmatprep.subr.mxu0 0.0
    %4272 = vmatpush1.msra.mxu0 0.0
    %4273 = vmatprep.subr.mxu0 0.0
    %4274 = vmatpush1.msra.mxu0 0.0
    %4275 = vmatprep.subr.mxu0 0.0
    %4276 = vmatpush1.msra.mxu0 0.0
    %4277 = vmatprep.subr.mxu0 0.0
    %4278 = vmatpush1.msra.mxu0 0.0
    %4279 = vmatprep.subr.mxu0 0.0
    %4280 = vmatpush1.msra.mxu0 0.0
    %4281 = vmatprep.subr.mxu0 0.0
    %4282 = vmatpush1.msra.mxu0 0.0
    %4283 = vmatprep.subr.mxu0 0.0
    %4284 = vmatpush1.msra.mxu0 0.0
    %4285 = vmatprep.subr.mxu0 0.0
    %4286 = vmatpush1.msra.mxu0 0.0
    %4287 = vmatprep.subr.mxu0 0.0
    %4288 = vmatpush1.msra.mxu0 0.0
    %4289 = vmatprep.mubr.f32.mxu0 0.0
    %4290 = vmatmul.mubr.f32.gmra.mrb[0].mxu0 %v4178
    %v4291 = vpop.f32.mrb[0].mxu0
    %v4292 = vadd.f32 0.0, %v4291
    %v4293 = vpop.f32.mrb[0].mxu0
    %4294 = vmatprep.mubr.f32.mxu0 0.0
    %4295 = vmatmul.mubr.f32.gmra.mrb[0].mxu0 %v4181
    %v4296 = vpop.f32.mrb[0].mxu0
    %v4297 = vadd.f32 0.0, %v4296
    %v4298 = vpop.f32.mrb[0].mxu0
    %4299 = vmatprep.mubr.f32.mxu0 0.0
    %4300 = vmatmul.mubr.f32.gmra.mrb[0].mxu0 %v4184
    %v4301 = vpop.f32.mrb[0].mxu0
    %v4302 = vadd.f32 0.0, %v4301
    %v4303 = vpop.f32.mrb[0].mxu0
    %4304 = vmatprep.mubr.f32.mxu0 0.0
    %4305 = vmatmul.mubr.f32.gmra.mrb[0].mxu0 %v4187
    %v4306 = vpop.f32.mrb[0].mxu0
    %v4307 = vadd.f32 0.0, %v4306
    %v4308 = vpop.f32.mrb[0].mxu0
    %4309 = vmatprep.mubr.f32.mxu0 0.0
    %4310 = vmatmul.mubr.f32.gmra.mrb[0].mxu0 %v4190
    %v4311 = vpop.f32.mrb[0].mxu0
    %v4312 = vadd.f32 0.0, %v4311
    %v4313 = vpop.f32.mrb[0].mxu0
    %4314 = vmatprep.mubr.f32.mxu0 0.0
    %4315 = vmatmul.mubr.f32.gmra.mrb[0].mxu0 %v4193
    %v4316 = vpop.f32.mrb[0].mxu0
    %v4317 = vadd.f32 0.0, %v4316
    %v4318 = vpop.f32.mrb[0].mxu0
    %4319 = vmatprep.mubr.f32.mxu0 0.0
    %4320 = vmatmul.mubr.f32.gmra.mrb[0].mxu0 %v4196
    %v4321 = vpop.f32.mrb[0].mxu0
    %v4322 = vadd.f32 0.0, %v4321
    %v4323 = vpop.f32.mrb[0].mxu0
    %4324 = vmatprep.mubr.f32.mxu0 0.0
    %4325 = vmatmul.mubr.f32.gmra.mrb[0].mxu0 %v4199
    %v4326 = vpop.f32.mrb[0].mxu0
    %v4327 = vadd.f32 0.0, %v4326
    %v4328 = vpop.f32.mrb[0].mxu0
    %4329 = vmatprep.mubr.f32.mxu0 0.0
    %4330 = vmatmul.mubr.f32.gmra.mrb[0].mxu0 %v4202
    %v4331 = vpop.f32.mrb[0].mxu0
    %v4332 = vadd.f32 0.0, %v4331
    %v4333 = vpop.f32.mrb[0].mxu0
    %4334 = vmatprep.mubr.f32.mxu0 0.0
    %4335 = vmatmul.mubr.f32.gmra.mrb[0].mxu0 %v4205
    %v4336 = vpop.f32.mrb[0].mxu0
    %v4337 = vadd.f32 0.0, %v4336
    %v4338 = vpop.f32.mrb[0].mxu0
    %4339 = vmatprep.mubr.f32.mxu0 0.0
    %4340 = vmatmul.mubr.f32.gmra.mrb[0].mxu0 %v4208
    %v4341 = vpop.f32.mrb[0].mxu0
    %v4342 = vadd.f32 0.0, %v4341
    %v4343 = vpop.f32.mrb[0].mxu0
    %4344 = vmatprep.mubr.f32.mxu0 0.0
    %4345 = vmatmul.mubr.f32.gmra.mrb[0].mxu0 %v4211
    %v4346 = vpop.f32.mrb[0].mxu0
    %v4347 = vadd.f32 0.0, %v4346
    %v4348 = vpop.f32.mrb[0].mxu0
    %4349 = vmatprep.mubr.f32.mxu0 0.0
    %4350 = vmatmul.mubr.f32.gmra.mrb[0].mxu0 %v4214
    %v4351 = vpop.f32.mrb[0].mxu0
    %v4352 = vadd.f32 0.0, %v4351
    %v4353 = vpop.f32.mrb[0].mxu0
    %4354 = vmatprep.mubr.f32.mxu0 0.0
    %4355 = vmatmul.mubr.f32.gmra.mrb[0].mxu0 %v4217
    %v4356 = vpop.f32.mrb[0].mxu0
    %v4357 = vadd.f32 0.0, %v4356
    %v4358 = vpop.f32.mrb[0].mxu0
    %4359 = vmatprep.mubr.f32.mxu0 0.0
    %4360 = vmatmul.mubr.f32.gmra.mrb[0].mxu0 %v4220
    %v4361 = vpop.f32.mrb[0].mxu0
    %v4362 = vadd.f32 0.0, %v4361
    %v4363 = vpop.f32.mrb[0].mxu0
    %4364 = vmatprep.mubr.f32.mxu0 0.0
    %4365 = vmatmul.mubr.f32.gmra.mrb[0].mxu0 %v4223
    %v4366 = vpop.f32.mrb[0].mxu0
    %v4367 = vadd.f32 0.0, %v4366
    %v4368 = vpop.f32.mrb[0].mxu0
    %4369 = vdwg.mxu0
    %4386 = vrot.lane.b32.xlu0 %v4292, 4
    %v4387 = vpop.permute.xlu0 %4386
    %4388 = vrot.lane.b32.xlu0 %v4297, 4
    %v4389 = vpop.permute.xlu0 %4388
    %4390 = vrot.lane.b32.xlu0 %v4302, 4
    %v4391 = vpop.permute.xlu0 %4390
    %4392 = vrot.lane.b32.xlu0 %v4307, 4
    %v4393 = vpop.permute.xlu0 %4392
    %4394 = vrot.lane.b32.xlu0 %v4312, 4
    %v4395 = vpop.permute.xlu0 %4394
    %4396 = vrot.lane.b32.xlu0 %v4317, 4
    %v4397 = vpop.permute.xlu0 %4396
    %4398 = vrot.lane.b32.xlu0 %v4322, 4
    %v4399 = vpop.permute.xlu0 %4398
    %4400 = vrot.lane.b32.xlu0 %v4327, 4
    %v4401 = vpop.permute.xlu0 %4400
    %4402 = vrot.lane.b32.xlu0 %v4332, 4
    %v4403 = vpop.permute.xlu0 %4402
    %4404 = vrot.lane.b32.xlu0 %v4337, 4
    %v4405 = vpop.permute.xlu0 %4404
    %4406 = vrot.lane.b32.xlu0 %v4342, 4
    %v4407 = vpop.permute.xlu0 %4406
    %4408 = vrot.lane.b32.xlu0 %v4347, 4
    %v4409 = vpop.permute.xlu0 %4408
    %4410 = vrot.lane.b32.xlu0 %v4352, 4
    %v4411 = vpop.permute.xlu0 %4410
    %4412 = vrot.lane.b32.xlu0 %v4357, 4
    %v4413 = vpop.permute.xlu0 %4412
    %4414 = vrot.lane.b32.xlu0 %v4362, 4
    %v4415 = vpop.permute.xlu0 %4414
    %4416 = vrot.lane.b32.xlu0 %v4367, 4
    %v4417 = vpop.permute.xlu0 %4416
    %v4434 = vadd.f32 %v4161, %v4387
    %v4435 = vadd.f32 %v4162, %v4389
    %v4436 = vadd.f32 %v4163, %v4391
    %v4437 = vadd.f32 %v4164, %v4393
    %v4438 = vadd.f32 %v4165, %v4395
    %v4439 = vadd.f32 %v4166, %v4397
    %v4440 = vadd.f32 %v4167, %v4399
    %v4441 = vadd.f32 %v4168, %v4401
    %v4442 = vadd.f32 %v4169, %v4403
    %v4443 = vadd.f32 %v4170, %v4405
    %v4444 = vadd.f32 %v4171, %v4407
    %v4445 = vadd.f32 %v4172, %v4409
    %v4446 = vadd.f32 %v4173, %v4411
    %v4447 = vadd.f32 %v4174, %v4413
    %v4448 = vadd.f32 %v4175, %v4415
    %v4449 = vadd.f32 %v4176, %v4417
    %vm4450 = vcmask 39968
    %4451 = vst.msk [vmem:[#allocation2] sm:$0xff] %vm4450, %v4434
    %4452 = vst.msk [vmem:[#allocation2 + $0x8] sm:$0xff] %vm4450, %v4435
    %4453 = vst.msk [vmem:[#allocation2 + $0x10] sm:$0xff] %vm4450, %v4436
    %4454 = vst.msk [vmem:[#allocation2 + $0x18] sm:$0xff] %vm4450, %v4437
    %4455 = vst.msk [vmem:[#allocation2 + $0x20] sm:$0xff] %vm4450, %v4438
    %4456 = vst.msk [vmem:[#allocation2 + $0x28] sm:$0xff] %vm4450, %v4439
    %4457 = vst.msk [vmem:[#allocation2 + $0x30] sm:$0xff] %vm4450, %v4440
    %4458 = vst.msk [vmem:[#allocation2 + $0x38] sm:$0xff] %vm4450, %v4441
    %4459 = vst.msk [vmem:[#allocation2 + $0x40] sm:$0xff] %vm4450, %v4442
    %4460 = vst.msk [vmem:[#allocation2 + $0x48] sm:$0xff] %vm4450, %v4443
    %4461 = vst.msk [vmem:[#allocation2 + $0x50] sm:$0xff] %vm4450, %v4444
    %4462 = vst.msk [vmem:[#allocation2 + $0x58] sm:$0xff] %vm4450, %v4445
    %4463 = vst.msk [vmem:[#allocation2 + $0x60] sm:$0xff] %vm4450, %v4446
    %4464 = vst.msk [vmem:[#allocation2 + $0x68] sm:$0xff] %vm4450, %v4447
    %4465 = vst.msk [vmem:[#allocation2 + $0x70] sm:$0xff] %vm4450, %v4448
    %4466 = vst.msk [vmem:[#allocation2 + $0x78] sm:$0xff] %vm4450, %v4449
    %v4468 = vsel %vm523, %v253, 0
    %4470 = vmatprep.subr.mxu0 0.0
    %4471 = vmatpush1.msra.mxu0 %v4468
    %4472 = vmatprep.subr.mxu0 0.0
    %4473 = vmatpush1.msra.mxu0 0.0
    %4474 = vmatprep.subr.mxu0 0.0
    %4475 = vmatpush1.msra.mxu0 0.0
    %4476 = vmatprep.subr.mxu0 0.0
    %4477 = vmatpush1.msra.mxu0 0.0
    %4478 = vmatprep.subr.mxu0 0.0
    %4479 = vmatpush1.msra.mxu0 0.0
    %4480 = vmatprep.subr.mxu0 0.0
    %4481 = vmatpush1.msra.mxu0 0.0
    %4482 = vmatprep.subr.mxu0 0.0
    %4483 = vmatpush1.msra.mxu0 0.0
    %4484 = vmatprep.subr.mxu0 0.0
    %4485 = vmatpush1.msra.mxu0 0.0
    %4486 = vmatprep.subr.mxu0 0.0
    %4487 = vmatpush1.msra.mxu0 0.0
    %4488 = vmatprep.subr.mxu0 0.0
    %4489 = vmatpush1.msra.mxu0 0.0
    %4490 = vmatprep.subr.mxu0 0.0
    %4491 = vmatpush1.msra.mxu0 0.0
    %4492 = vmatprep.subr.mxu0 0.0
    %4493 = vmatpush1.msra.mxu0 0.0
    %4494 = vmatprep.subr.mxu0 0.0
    %4495 = vmatpush1.msra.mxu0 0.0
    %4496 = vmatprep.subr.mxu0 0.0
    %4497 = vmatpush1.msra.mxu0 0.0
    %4498 = vmatprep.subr.mxu0 0.0
    %4499 = vmatpush1.msra.mxu0 0.0
    %4500 = vmatprep.subr.mxu0 0.0
    %4501 = vmatpush1.msra.mxu0 0.0
    %4502 = vmatprep.subr.mxu0 0.0
    %4503 = vmatpush1.msra.mxu0 0.0
    %4504 = vmatprep.subr.mxu0 0.0
    %4505 = vmatpush1.msra.mxu0 0.0
    %4506 = vmatprep.subr.mxu0 0.0
    %4507 = vmatpush1.msra.mxu0 0.0
    %4508 = vmatprep.subr.mxu0 0.0
    %4509 = vmatpush1.msra.mxu0 0.0
    %4510 = vmatprep.subr.mxu0 0.0
    %4511 = vmatpush1.msra.mxu0 0.0
    %4512 = vmatprep.subr.mxu0 0.0
    %4513 = vmatpush1.msra.mxu0 0.0
    %4514 = vmatprep.subr.mxu0 0.0
    %4515 = vmatpush1.msra.mxu0 0.0
    %4516 = vmatprep.subr.mxu0 0.0
    %4517 = vmatpush1.msra.mxu0 0.0
    %4518 = vmatprep.subr.mxu0 0.0
    %4519 = vmatpush1.msra.mxu0 0.0
    %4520 = vmatprep.subr.mxu0 0.0
    %4521 = vmatpush1.msra.mxu0 0.0
    %4522 = vmatprep.subr.mxu0 0.0
    %4523 = vmatpush1.msra.mxu0 0.0
    %4524 = vmatprep.subr.mxu0 0.0
    %4525 = vmatpush1.msra.mxu0 0.0
    %4526 = vmatprep.subr.mxu0 0.0
    %4527 = vmatpush1.msra.mxu0 0.0
    %4528 = vmatprep.subr.mxu0 0.0
    %4529 = vmatpush1.msra.mxu0 0.0
    %4530 = vmatprep.subr.mxu0 0.0
    %4531 = vmatpush1.msra.mxu0 0.0
    %4532 = vmatprep.subr.mxu0 0.0
    %4533 = vmatpush1.msra.mxu0 0.0
    %4534 = vmatprep.mubr.f32.mxu0 0.0
    %4535 = vmatmul.mubr.f32.gmra.mrb[0].mxu0 %v476
    %v4536 = vpop.f32.mrb[0].mxu0
    %v4537 = vadd.f32 0.0, %v4536
    %v4538 = vpop.f32.mrb[0].mxu0
    %4539 = vmatprep.mubr.f32.mxu0 0.0
    %4540 = vmatmul.mubr.f32.gmra.mrb[0].mxu0 %v479
    %v4541 = vpop.f32.mrb[0].mxu0
    %v4542 = vadd.f32 0.0, %v4541
    %v4543 = vpop.f32.mrb[0].mxu0
    %4544 = vmatprep.mubr.f32.mxu0 0.0
    %4545 = vmatmul.mubr.f32.gmra.mrb[0].mxu0 %v482
    %v4546 = vpop.f32.mrb[0].mxu0
    %v4547 = vadd.f32 0.0, %v4546
    %v4548 = vpop.f32.mrb[0].mxu0
    %4549 = vmatprep.mubr.f32.mxu0 0.0
    %4550 = vmatmul.mubr.f32.gmra.mrb[0].mxu0 %v485
    %v4551 = vpop.f32.mrb[0].mxu0
    %v4552 = vadd.f32 0.0, %v4551
    %v4553 = vpop.f32.mrb[0].mxu0
    %4554 = vmatprep.mubr.f32.mxu0 0.0
    %4555 = vmatmul.mubr.f32.gmra.mrb[0].mxu0 %v488
    %v4556 = vpop.f32.mrb[0].mxu0
    %v4557 = vadd.f32 0.0, %v4556
    %v4558 = vpop.f32.mrb[0].mxu0
    %4559 = vmatprep.mubr.f32.mxu0 0.0
    %4560 = vmatmul.mubr.f32.gmra.mrb[0].mxu0 %v491
    %v4561 = vpop.f32.mrb[0].mxu0
    %v4562 = vadd.f32 0.0, %v4561
    %v4563 = vpop.f32.mrb[0].mxu0
    %4564 = vmatprep.mubr.f32.mxu0 0.0
    %4565 = vmatmul.mubr.f32.gmra.mrb[0].mxu0 %v494
    %v4566 = vpop.f32.mrb[0].mxu0
    %v4567 = vadd.f32 0.0, %v4566
    %v4568 = vpop.f32.mrb[0].mxu0
    %4569 = vmatprep.mubr.f32.mxu0 0.0
    %4570 = vmatmul.mubr.f32.gmra.mrb[0].mxu0 %v497
    %v4571 = vpop.f32.mrb[0].mxu0
    %v4572 = vadd.f32 0.0, %v4571
    %v4573 = vpop.f32.mrb[0].mxu0
    %4574 = vmatprep.mubr.f32.mxu0 0.0
    %4575 = vmatmul.mubr.f32.gmra.mrb[0].mxu0 %v500
    %v4576 = vpop.f32.mrb[0].mxu0
    %v4577 = vadd.f32 0.0, %v4576
    %v4578 = vpop.f32.mrb[0].mxu0
    %4579 = vmatprep.mubr.f32.mxu0 0.0
    %4580 = vmatmul.mubr.f32.gmra.mrb[0].mxu0 %v503
    %v4581 = vpop.f32.mrb[0].mxu0
    %v4582 = vadd.f32 0.0, %v4581
    %v4583 = vpop.f32.mrb[0].mxu0
    %4584 = vmatprep.mubr.f32.mxu0 0.0
    %4585 = vmatmul.mubr.f32.gmra.mrb[0].mxu0 %v506
    %v4586 = vpop.f32.mrb[0].mxu0
    %v4587 = vadd.f32 0.0, %v4586
    %v4588 = vpop.f32.mrb[0].mxu0
    %4589 = vmatprep.mubr.f32.mxu0 0.0
    %4590 = vmatmul.mubr.f32.gmra.mrb[0].mxu0 %v509
    %v4591 = vpop.f32.mrb[0].mxu0
    %v4592 = vadd.f32 0.0, %v4591
    %v4593 = vpop.f32.mrb[0].mxu0
    %4594 = vmatprep.mubr.f32.mxu0 0.0
    %4595 = vmatmul.mubr.f32.gmra.mrb[0].mxu0 %v512
    %v4596 = vpop.f32.mrb[0].mxu0
    %v4597 = vadd.f32 0.0, %v4596
    %v4598 = vpop.f32.mrb[0].mxu0
    %4599 = vmatprep.mubr.f32.mxu0 0.0
    %4600 = vmatmul.mubr.f32.gmra.mrb[0].mxu0 %v515
    %v4601 = vpop.f32.mrb[0].mxu0
    %v4602 = vadd.f32 0.0, %v4601
    %v4603 = vpop.f32.mrb[0].mxu0
    %4604 = vmatprep.mubr.f32.mxu0 0.0
    %4605 = vmatmul.mubr.f32.gmra.mrb[0].mxu0 %v518
    %v4606 = vpop.f32.mrb[0].mxu0
    %v4607 = vadd.f32 0.0, %v4606
    %v4608 = vpop.f32.mrb[0].mxu0
    %4609 = vmatprep.mubr.f32.mxu0 0.0
    %4610 = vmatmul.mubr.f32.gmra.mrb[0].mxu0 %v521
    %v4611 = vpop.f32.mrb[0].mxu0
    %v4612 = vadd.f32 0.0, %v4611
    %v4613 = vpop.f32.mrb[0].mxu0
    %4614 = vdwg.mxu0
    %v4616 = vsel %vm523, %v333, 0
    %4618 = vmatprep.subr.mxu0 0.0
    %4619 = vmatpush1.msra.mxu0 %v4616
    %4620 = vmatprep.subr.mxu0 0.0
    %4621 = vmatpush1.msra.mxu0 0.0
    %4622 = vmatprep.subr.mxu0 0.0
    %4623 = vmatpush1.msra.mxu0 0.0
    %4624 = vmatprep.subr.mxu0 0.0
    %4625 = vmatpush1.msra.mxu0 0.0
    %4626 = vmatprep.subr.mxu0 0.0
    %4627 = vmatpush1.msra.mxu0 0.0
    %4628 = vmatprep.subr.mxu0 0.0
    %4629 = vmatpush1.msra.mxu0 0.0
    %4630 = vmatprep.subr.mxu0 0.0
    %4631 = vmatpush1.msra.mxu0 0.0
    %4632 = vmatprep.subr.mxu0 0.0
    %4633 = vmatpush1.msra.mxu0 0.0
    %4634 = vmatprep.subr.mxu0 0.0
    %4635 = vmatpush1.msra.mxu0 0.0
    %4636 = vmatprep.subr.mxu0 0.0
    %4637 = vmatpush1.msra.mxu0 0.0
    %4638 = vmatprep.subr.mxu0 0.0
    %4639 = vmatpush1.msra.mxu0 0.0
    %4640 = vmatprep.subr.mxu0 0.0
    %4641 = vmatpush1.msra.mxu0 0.0
    %4642 = vmatprep.subr.mxu0 0.0
    %4643 = vmatpush1.msra.mxu0 0.0
    %4644 = vmatprep.subr.mxu0 0.0
    %4645 = vmatpush1.msra.mxu0 0.0
    %4646 = vmatprep.subr.mxu0 0.0
    %4647 = vmatpush1.msra.mxu0 0.0
    %4648 = vmatprep.subr.mxu0 0.0
    %4649 = vmatpush1.msra.mxu0 0.0
    %4650 = vmatprep.subr.mxu0 0.0
    %4651 = vmatpush1.msra.mxu0 0.0
    %4652 = vmatprep.subr.mxu0 0.0
    %4653 = vmatpush1.msra.mxu0 0.0
    %4654 = vmatprep.subr.mxu0 0.0
    %4655 = vmatpush1.msra.mxu0 0.0
    %4656 = vmatprep.subr.mxu0 0.0
    %4657 = vmatpush1.msra.mxu0 0.0
    %4658 = vmatprep.subr.mxu0 0.0
    %4659 = vmatpush1.msra.mxu0 0.0
    %4660 = vmatprep.subr.mxu0 0.0
    %4661 = vmatpush1.msra.mxu0 0.0
    %4662 = vmatprep.subr.mxu0 0.0
    %4663 = vmatpush1.msra.mxu0 0.0
    %4664 = vmatprep.subr.mxu0 0.0
    %4665 = vmatpush1.msra.mxu0 0.0
    %4666 = vmatprep.subr.mxu0 0.0
    %4667 = vmatpush1.msra.mxu0 0.0
    %4668 = vmatprep.subr.mxu0 0.0
    %4669 = vmatpush1.msra.mxu0 0.0
    %4670 = vmatprep.subr.mxu0 0.0
    %4671 = vmatpush1.msra.mxu0 0.0
    %4672 = vmatprep.subr.mxu0 0.0
    %4673 = vmatpush1.msra.mxu0 0.0
    %4674 = vmatprep.subr.mxu0 0.0
    %4675 = vmatpush1.msra.mxu0 0.0
    %4676 = vmatprep.subr.mxu0 0.0
    %4677 = vmatpush1.msra.mxu0 0.0
    %4678 = vmatprep.subr.mxu0 0.0
    %4679 = vmatpush1.msra.mxu0 0.0
    %4680 = vmatprep.subr.mxu0 0.0
    %4681 = vmatpush1.msra.mxu0 0.0
    %4682 = vmatprep.mubr.f32.mxu0 0.0
    %4683 = vmatmul.mubr.f32.gmra.mrb[0].mxu0 %v673
    %v4684 = vpop.f32.mrb[0].mxu0
    %v4685 = vadd.f32 0.0, %v4684
    %v4686 = vpop.f32.mrb[0].mxu0
    %4687 = vmatprep.mubr.f32.mxu0 0.0
    %4688 = vmatmul.mubr.f32.gmra.mrb[0].mxu0 %v676
    %v4689 = vpop.f32.mrb[0].mxu0
    %v4690 = vadd.f32 0.0, %v4689
    %v4691 = vpop.f32.mrb[0].mxu0
    %4692 = vmatprep.mubr.f32.mxu0 0.0
    %4693 = vmatmul.mubr.f32.gmra.mrb[0].mxu0 %v679
    %v4694 = vpop.f32.mrb[0].mxu0
    %v4695 = vadd.f32 0.0, %v4694
    %v4696 = vpop.f32.mrb[0].mxu0
    %4697 = vmatprep.mubr.f32.mxu0 0.0
    %4698 = vmatmul.mubr.f32.gmra.mrb[0].mxu0 %v682
    %v4699 = vpop.f32.mrb[0].mxu0
    %v4700 = vadd.f32 0.0, %v4699
    %v4701 = vpop.f32.mrb[0].mxu0
    %4702 = vmatprep.mubr.f32.mxu0 0.0
    %4703 = vmatmul.mubr.f32.gmra.mrb[0].mxu0 %v685
    %v4704 = vpop.f32.mrb[0].mxu0
    %v4705 = vadd.f32 0.0, %v4704
    %v4706 = vpop.f32.mrb[0].mxu0
    %4707 = vmatprep.mubr.f32.mxu0 0.0
    %4708 = vmatmul.mubr.f32.gmra.mrb[0].mxu0 %v688
    %v4709 = vpop.f32.mrb[0].mxu0
    %v4710 = vadd.f32 0.0, %v4709
    %v4711 = vpop.f32.mrb[0].mxu0
    %4712 = vmatprep.mubr.f32.mxu0 0.0
    %4713 = vmatmul.mubr.f32.gmra.mrb[0].mxu0 %v691
    %v4714 = vpop.f32.mrb[0].mxu0
    %v4715 = vadd.f32 0.0, %v4714
    %v4716 = vpop.f32.mrb[0].mxu0
    %4717 = vmatprep.mubr.f32.mxu0 0.0
    %4718 = vmatmul.mubr.f32.gmra.mrb[0].mxu0 %v694
    %v4719 = vpop.f32.mrb[0].mxu0
    %v4720 = vadd.f32 0.0, %v4719
    %v4721 = vpop.f32.mrb[0].mxu0
    %4722 = vmatprep.mubr.f32.mxu0 0.0
    %4723 = vmatmul.mubr.f32.gmra.mrb[0].mxu0 %v697
    %v4724 = vpop.f32.mrb[0].mxu0
    %v4725 = vadd.f32 0.0, %v4724
    %v4726 = vpop.f32.mrb[0].mxu0
    %4727 = vmatprep.mubr.f32.mxu0 0.0
    %4728 = vmatmul.mubr.f32.gmra.mrb[0].mxu0 %v700
    %v4729 = vpop.f32.mrb[0].mxu0
    %v4730 = vadd.f32 0.0, %v4729
    %v4731 = vpop.f32.mrb[0].mxu0
    %4732 = vmatprep.mubr.f32.mxu0 0.0
    %4733 = vmatmul.mubr.f32.gmra.mrb[0].mxu0 %v703
    %v4734 = vpop.f32.mrb[0].mxu0
    %v4735 = vadd.f32 0.0, %v4734
    %v4736 = vpop.f32.mrb[0].mxu0
    %4737 = vmatprep.mubr.f32.mxu0 0.0
    %4738 = vmatmul.mubr.f32.gmra.mrb[0].mxu0 %v706
    %v4739 = vpop.f32.mrb[0].mxu0
    %v4740 = vadd.f32 0.0, %v4739
    %v4741 = vpop.f32.mrb[0].mxu0
    %4742 = vmatprep.mubr.f32.mxu0 0.0
    %4743 = vmatmul.mubr.f32.gmra.mrb[0].mxu0 %v709
    %v4744 = vpop.f32.mrb[0].mxu0
    %v4745 = vadd.f32 0.0, %v4744
    %v4746 = vpop.f32.mrb[0].mxu0
    %4747 = vmatprep.mubr.f32.mxu0 0.0
    %4748 = vmatmul.mubr.f32.gmra.mrb[0].mxu0 %v712
    %v4749 = vpop.f32.mrb[0].mxu0
    %v4750 = vadd.f32 0.0, %v4749
    %v4751 = vpop.f32.mrb[0].mxu0
    %4752 = vmatprep.mubr.f32.mxu0 0.0
    %4753 = vmatmul.mubr.f32.gmra.mrb[0].mxu0 %v715
    %v4754 = vpop.f32.mrb[0].mxu0
    %v4755 = vadd.f32 0.0, %v4754
    %v4756 = vpop.f32.mrb[0].mxu0
    %4757 = vmatprep.mubr.f32.mxu0 0.0
    %4758 = vmatmul.mubr.f32.gmra.mrb[0].mxu0 %v718
    %v4759 = vpop.f32.mrb[0].mxu0
    %v4760 = vadd.f32 0.0, %v4759
    %v4761 = vpop.f32.mrb[0].mxu0
    %4762 = vdwg.mxu0
    %v4763 = vmul.f32 %v4537, %v4685
    %v4764 = vmul.f32 %v4542, %v4690
    %v4765 = vmul.f32 %v4547, %v4695
    %v4766 = vmul.f32 %v4552, %v4700
    %v4767 = vmul.f32 %v4557, %v4705
    %v4768 = vmul.f32 %v4562, %v4710
    %v4769 = vmul.f32 %v4567, %v4715
    %v4770 = vmul.f32 %v4572, %v4720
    %v4771 = vmul.f32 %v4577, %v4725
    %v4772 = vmul.f32 %v4582, %v4730
    %v4773 = vmul.f32 %v4587, %v4735
    %v4774 = vmul.f32 %v4592, %v4740
    %v4775 = vmul.f32 %v4597, %v4745
    %v4776 = vmul.f32 %v4602, %v4750
    %v4777 = vmul.f32 %v4607, %v4755
    %v4778 = vmul.f32 %v4612, %v4760
    %v4780 = vsel %vm523, %v413, 0
    %4782 = vmatprep.subr.mxu0 0.0
    %4783 = vmatpush1.msra.mxu0 %v4780
    %4784 = vmatprep.subr.mxu0 0.0
    %4785 = vmatpush1.msra.mxu0 0.0
    %4786 = vmatprep.subr.mxu0 0.0
    %4787 = vmatpush1.msra.mxu0 0.0
    %4788 = vmatprep.subr.mxu0 0.0
    %4789 = vmatpush1.msra.mxu0 0.0
    %4790 = vmatprep.subr.mxu0 0.0
    %4791 = vmatpush1.msra.mxu0 0.0
    %4792 = vmatprep.subr.mxu0 0.0
    %4793 = vmatpush1.msra.mxu0 0.0
    %4794 = vmatprep.subr.mxu0 0.0
    %4795 = vmatpush1.msra.mxu0 0.0
    %4796 = vmatprep.subr.mxu0 0.0
    %4797 = vmatpush1.msra.mxu0 0.0
    %4798 = vmatprep.subr.mxu0 0.0
    %4799 = vmatpush1.msra.mxu0 0.0
    %4800 = vmatprep.subr.mxu0 0.0
    %4801 = vmatpush1.msra.mxu0 0.0
    %4802 = vmatprep.subr.mxu0 0.0
    %4803 = vmatpush1.msra.mxu0 0.0
    %4804 = vmatprep.subr.mxu0 0.0
    %4805 = vmatpush1.msra.mxu0 0.0
    %4806 = vmatprep.subr.mxu0 0.0
    %4807 = vmatpush1.msra.mxu0 0.0
    %4808 = vmatprep.subr.mxu0 0.0
    %4809 = vmatpush1.msra.mxu0 0.0
    %4810 = vmatprep.subr.mxu0 0.0
    %4811 = vmatpush1.msra.mxu0 0.0
    %4812 = vmatprep.subr.mxu0 0.0
    %4813 = vmatpush1.msra.mxu0 0.0
    %4814 = vmatprep.subr.mxu0 0.0
    %4815 = vmatpush1.msra.mxu0 0.0
    %4816 = vmatprep.subr.mxu0 0.0
    %4817 = vmatpush1.msra.mxu0 0.0
    %4818 = vmatprep.subr.mxu0 0.0
    %4819 = vmatpush1.msra.mxu0 0.0
    %4820 = vmatprep.subr.mxu0 0.0
    %4821 = vmatpush1.msra.mxu0 0.0
    %4822 = vmatprep.subr.mxu0 0.0
    %4823 = vmatpush1.msra.mxu0 0.0
    %4824 = vmatprep.subr.mxu0 0.0
    %4825 = vmatpush1.msra.mxu0 0.0
    %4826 = vmatprep.subr.mxu0 0.0
    %4827 = vmatpush1.msra.mxu0 0.0
    %4828 = vmatprep.subr.mxu0 0.0
    %4829 = vmatpush1.msra.mxu0 0.0
    %4830 = vmatprep.subr.mxu0 0.0
    %4831 = vmatpush1.msra.mxu0 0.0
    %4832 = vmatprep.subr.mxu0 0.0
    %4833 = vmatpush1.msra.mxu0 0.0
    %4834 = vmatprep.subr.mxu0 0.0
    %4835 = vmatpush1.msra.mxu0 0.0
    %4836 = vmatprep.subr.mxu0 0.0
    %4837 = vmatpush1.msra.mxu0 0.0
    %4838 = vmatprep.subr.mxu0 0.0
    %4839 = vmatpush1.msra.mxu0 0.0
    %4840 = vmatprep.subr.mxu0 0.0
    %4841 = vmatpush1.msra.mxu0 0.0
    %4842 = vmatprep.subr.mxu0 0.0
    %4843 = vmatpush1.msra.mxu0 0.0
    %4844 = vmatprep.subr.mxu0 0.0
    %4845 = vmatpush1.msra.mxu0 0.0
    %4846 = vmatprep.mubr.f32.mxu0 0.0
    %4847 = vmatmul.mubr.f32.gmra.mrb[0].mxu0 %v885
    %v4848 = vpop.f32.mrb[0].mxu0
    %v4849 = vadd.f32 0.0, %v4848
    %v4850 = vpop.f32.mrb[0].mxu0
    %4851 = vmatprep.mubr.f32.mxu0 0.0
    %4852 = vmatmul.mubr.f32.gmra.mrb[0].mxu0 %v888
    %v4853 = vpop.f32.mrb[0].mxu0
    %v4854 = vadd.f32 0.0, %v4853
    %v4855 = vpop.f32.mrb[0].mxu0
    %4856 = vmatprep.mubr.f32.mxu0 0.0
    %4857 = vmatmul.mubr.f32.gmra.mrb[0].mxu0 %v891
    %v4858 = vpop.f32.mrb[0].mxu0
    %v4859 = vadd.f32 0.0, %v4858
    %v4860 = vpop.f32.mrb[0].mxu0
    %4861 = vmatprep.mubr.f32.mxu0 0.0
    %4862 = vmatmul.mubr.f32.gmra.mrb[0].mxu0 %v894
    %v4863 = vpop.f32.mrb[0].mxu0
    %v4864 = vadd.f32 0.0, %v4863
    %v4865 = vpop.f32.mrb[0].mxu0
    %4866 = vmatprep.mubr.f32.mxu0 0.0
    %4867 = vmatmul.mubr.f32.gmra.mrb[0].mxu0 %v897
    %v4868 = vpop.f32.mrb[0].mxu0
    %v4869 = vadd.f32 0.0, %v4868
    %v4870 = vpop.f32.mrb[0].mxu0
    %4871 = vmatprep.mubr.f32.mxu0 0.0
    %4872 = vmatmul.mubr.f32.gmra.mrb[0].mxu0 %v900
    %v4873 = vpop.f32.mrb[0].mxu0
    %v4874 = vadd.f32 0.0, %v4873
    %v4875 = vpop.f32.mrb[0].mxu0
    %4876 = vmatprep.mubr.f32.mxu0 0.0
    %4877 = vmatmul.mubr.f32.gmra.mrb[0].mxu0 %v903
    %v4878 = vpop.f32.mrb[0].mxu0
    %v4879 = vadd.f32 0.0, %v4878
    %v4880 = vpop.f32.mrb[0].mxu0
    %4881 = vmatprep.mubr.f32.mxu0 0.0
    %4882 = vmatmul.mubr.f32.gmra.mrb[0].mxu0 %v906
    %v4883 = vpop.f32.mrb[0].mxu0
    %v4884 = vadd.f32 0.0, %v4883
    %v4885 = vpop.f32.mrb[0].mxu0
    %4886 = vmatprep.mubr.f32.mxu0 0.0
    %4887 = vmatmul.mubr.f32.gmra.mrb[0].mxu0 %v909
    %v4888 = vpop.f32.mrb[0].mxu0
    %v4889 = vadd.f32 0.0, %v4888
    %v4890 = vpop.f32.mrb[0].mxu0
    %4891 = vmatprep.mubr.f32.mxu0 0.0
    %4892 = vmatmul.mubr.f32.gmra.mrb[0].mxu0 %v912
    %v4893 = vpop.f32.mrb[0].mxu0
    %v4894 = vadd.f32 0.0, %v4893
    %v4895 = vpop.f32.mrb[0].mxu0
    %4896 = vmatprep.mubr.f32.mxu0 0.0
    %4897 = vmatmul.mubr.f32.gmra.mrb[0].mxu0 %v915
    %v4898 = vpop.f32.mrb[0].mxu0
    %v4899 = vadd.f32 0.0, %v4898
    %v4900 = vpop.f32.mrb[0].mxu0
    %4901 = vmatprep.mubr.f32.mxu0 0.0
    %4902 = vmatmul.mubr.f32.gmra.mrb[0].mxu0 %v918
    %v4903 = vpop.f32.mrb[0].mxu0
    %v4904 = vadd.f32 0.0, %v4903
    %v4905 = vpop.f32.mrb[0].mxu0
    %4906 = vmatprep.mubr.f32.mxu0 0.0
    %4907 = vmatmul.mubr.f32.gmra.mrb[0].mxu0 %v921
    %v4908 = vpop.f32.mrb[0].mxu0
    %v4909 = vadd.f32 0.0, %v4908
    %v4910 = vpop.f32.mrb[0].mxu0
    %4911 = vmatprep.mubr.f32.mxu0 0.0
    %4912 = vmatmul.mubr.f32.gmra.mrb[0].mxu0 %v924
    %v4913 = vpop.f32.mrb[0].mxu0
    %v4914 = vadd.f32 0.0, %v4913
    %v4915 = vpop.f32.mrb[0].mxu0
    %4916 = vmatprep.mubr.f32.mxu0 0.0
    %4917 = vmatmul.mubr.f32.gmra.mrb[0].mxu0 %v927
    %v4918 = vpop.f32.mrb[0].mxu0
    %v4919 = vadd.f32 0.0, %v4918
    %v4920 = vpop.f32.mrb[0].mxu0
    %4921 = vmatprep.mubr.f32.mxu0 0.0
    %4922 = vmatmul.mubr.f32.gmra.mrb[0].mxu0 %v930
    %v4923 = vpop.f32.mrb[0].mxu0
    %v4924 = vadd.f32 0.0, %v4923
    %v4925 = vpop.f32.mrb[0].mxu0
    %4926 = vdwg.mxu0
    %v4927 = vmul.f32 %v4763, %v4849
    %v4928 = vmul.f32 %v4764, %v4854
    %v4929 = vmul.f32 %v4765, %v4859
    %v4930 = vmul.f32 %v4766, %v4864
    %v4931 = vmul.f32 %v4767, %v4869
    %v4932 = vmul.f32 %v4768, %v4874
    %v4933 = vmul.f32 %v4769, %v4879
    %v4934 = vmul.f32 %v4770, %v4884
    %v4935 = vmul.f32 %v4771, %v4889
    %v4936 = vmul.f32 %v4772, %v4894
    %v4937 = vmul.f32 %v4773, %v4899
    %v4938 = vmul.f32 %v4774, %v4904
    %v4939 = vmul.f32 %v4775, %v4909
    %v4940 = vmul.f32 %v4776, %v4914
    %v4941 = vmul.f32 %v4777, %v4919
    %v4942 = vmul.f32 %v4778, %v4924
    %v4943 = vld [vmem:[#allocation2] sm:$0xff]
    %v4944 = vld [vmem:[#allocation2 + $0x8] sm:$0xff]
    %v4945 = vld [vmem:[#allocation2 + $0x10] sm:$0xff]
    %v4946 = vld [vmem:[#allocation2 + $0x18] sm:$0xff]
    %v4947 = vld [vmem:[#allocation2 + $0x20] sm:$0xff]
    %v4948 = vld [vmem:[#allocation2 + $0x28] sm:$0xff]
    %v4949 = vld [vmem:[#allocation2 + $0x30] sm:$0xff]
    %v4950 = vld [vmem:[#allocation2 + $0x38] sm:$0xff]
    %v4951 = vld [vmem:[#allocation2 + $0x40] sm:$0xff]
    %v4952 = vld [vmem:[#allocation2 + $0x48] sm:$0xff]
    %v4953 = vld [vmem:[#allocation2 + $0x50] sm:$0xff]
    %v4954 = vld [vmem:[#allocation2 + $0x58] sm:$0xff]
    %v4955 = vld [vmem:[#allocation2 + $0x60] sm:$0xff]
    %v4956 = vld [vmem:[#allocation2 + $0x68] sm:$0xff]
    %v4957 = vld [vmem:[#allocation2 + $0x70] sm:$0xff]
    %v4958 = vld [vmem:[#allocation2 + $0x78] sm:$0xff]
    %v4960 = vsel %vm1112, %v4927, 0
    %v4963 = vsel %vm1112, %v4928, 0
    %v4966 = vsel %vm1112, %v4929, 0
    %v4969 = vsel %vm1112, %v4930, 0
    %v4972 = vsel %vm1112, %v4931, 0
    %v4975 = vsel %vm1112, %v4932, 0
    %v4978 = vsel %vm1112, %v4933, 0
    %v4981 = vsel %vm1112, %v4934, 0
    %v4984 = vsel %vm1112, %v4935, 0
    %v4987 = vsel %vm1112, %v4936, 0
    %v4990 = vsel %vm1112, %v4937, 0
    %v4993 = vsel %vm1112, %v4938, 0
    %v4996 = vsel %vm1112, %v4939, 0
    %v4999 = vsel %vm1112, %v4940, 0
    %v5002 = vsel %vm1112, %v4941, 0
    %v5005 = vsel %vm1112, %v4942, 0
    %5007 = vmatprep.subr.mxu0 0.0
    %5008 = vmatpush1.msra.mxu0 %v466
    %5009 = vmatprep.subr.mxu0 0.0
    %5010 = vmatpush1.msra.mxu0 %v467
    %5011 = vmatprep.subr.mxu0 0.0
    %5012 = vmatpush1.msra.mxu0 %v468
    %5013 = vmatprep.subr.mxu0 0.0
    %5014 = vmatpush1.msra.mxu0 %v469
    %5015 = vmatprep.subr.mxu0 0.0
    %5016 = vmatpush1.msra.mxu0 %v470
    %5017 = vmatprep.subr.mxu0 0.0
    %5018 = vmatpush1.msra.mxu0 %v471
    %5019 = vmatprep.subr.mxu0 0.0
    %5020 = vmatpush1.msra.mxu0 %v472
    %5021 = vmatprep.subr.mxu0 0.0
    %5022 = vmatpush1.msra.mxu0 %v473
    %5023 = vmatprep.subr.mxu0 0.0
    %5024 = vmatpush1.msra.mxu0 0.0
    %5025 = vmatprep.subr.mxu0 0.0
    %5026 = vmatpush1.msra.mxu0 0.0
    %5027 = vmatprep.subr.mxu0 0.0
    %5028 = vmatpush1.msra.mxu0 0.0
    %5029 = vmatprep.subr.mxu0 0.0
    %5030 = vmatpush1.msra.mxu0 0.0
    %5031 = vmatprep.subr.mxu0 0.0
    %5032 = vmatpush1.msra.mxu0 0.0
    %5033 = vmatprep.subr.mxu0 0.0
    %5034 = vmatpush1.msra.mxu0 0.0
    %5035 = vmatprep.subr.mxu0 0.0
    %5036 = vmatpush1.msra.mxu0 0.0
    %5037 = vmatprep.subr.mxu0 0.0
    %5038 = vmatpush1.msra.mxu0 0.0
    %5039 = vmatprep.subr.mxu0 0.0
    %5040 = vmatpush1.msra.mxu0 0.0
    %5041 = vmatprep.subr.mxu0 0.0
    %5042 = vmatpush1.msra.mxu0 0.0
    %5043 = vmatprep.subr.mxu0 0.0
    %5044 = vmatpush1.msra.mxu0 0.0
    %5045 = vmatprep.subr.mxu0 0.0
    %5046 = vmatpush1.msra.mxu0 0.0
    %5047 = vmatprep.subr.mxu0 0.0
    %5048 = vmatpush1.msra.mxu0 0.0
    %5049 = vmatprep.subr.mxu0 0.0
    %5050 = vmatpush1.msra.mxu0 0.0
    %5051 = vmatprep.subr.mxu0 0.0
    %5052 = vmatpush1.msra.mxu0 0.0
    %5053 = vmatprep.subr.mxu0 0.0
    %5054 = vmatpush1.msra.mxu0 0.0
    %5055 = vmatprep.subr.mxu0 0.0
    %5056 = vmatpush1.msra.mxu0 0.0
    %5057 = vmatprep.subr.mxu0 0.0
    %5058 = vmatpush1.msra.mxu0 0.0
    %5059 = vmatprep.subr.mxu0 0.0
    %5060 = vmatpush1.msra.mxu0 0.0
    %5061 = vmatprep.subr.mxu0 0.0
    %5062 = vmatpush1.msra.mxu0 0.0
    %5063 = vmatprep.subr.mxu0 0.0
    %5064 = vmatpush1.msra.mxu0 0.0
    %5065 = vmatprep.subr.mxu0 0.0
    %5066 = vmatpush1.msra.mxu0 0.0
    %5067 = vmatprep.subr.mxu0 0.0
    %5068 = vmatpush1.msra.mxu0 0.0
    %5069 = vmatprep.subr.mxu0 0.0
    %5070 = vmatpush1.msra.mxu0 0.0
    %5071 = vmatprep.mubr.f32.mxu0 0.0
    %5072 = vmatmul.mubr.f32.gmra.mrb[0].mxu0 %v4960
    %v5073 = vpop.f32.mrb[0].mxu0
    %v5074 = vadd.f32 0.0, %v5073
    %v5075 = vpop.f32.mrb[0].mxu0
    %5076 = vmatprep.mubr.f32.mxu0 0.0
    %5077 = vmatmul.mubr.f32.gmra.mrb[0].mxu0 %v4963
    %v5078 = vpop.f32.mrb[0].mxu0
    %v5079 = vadd.f32 0.0, %v5078
    %v5080 = vpop.f32.mrb[0].mxu0
    %5081 = vmatprep.mubr.f32.mxu0 0.0
    %5082 = vmatmul.mubr.f32.gmra.mrb[0].mxu0 %v4966
    %v5083 = vpop.f32.mrb[0].mxu0
    %v5084 = vadd.f32 0.0, %v5083
    %v5085 = vpop.f32.mrb[0].mxu0
    %5086 = vmatprep.mubr.f32.mxu0 0.0
    %5087 = vmatmul.mubr.f32.gmra.mrb[0].mxu0 %v4969
    %v5088 = vpop.f32.mrb[0].mxu0
    %v5089 = vadd.f32 0.0, %v5088
    %v5090 = vpop.f32.mrb[0].mxu0
    %5091 = vmatprep.mubr.f32.mxu0 0.0
    %5092 = vmatmul.mubr.f32.gmra.mrb[0].mxu0 %v4972
    %v5093 = vpop.f32.mrb[0].mxu0
    %v5094 = vadd.f32 0.0, %v5093
    %v5095 = vpop.f32.mrb[0].mxu0
    %5096 = vmatprep.mubr.f32.mxu0 0.0
    %5097 = vmatmul.mubr.f32.gmra.mrb[0].mxu0 %v4975
    %v5098 = vpop.f32.mrb[0].mxu0
    %v5099 = vadd.f32 0.0, %v5098
    %v5100 = vpop.f32.mrb[0].mxu0
    %5101 = vmatprep.mubr.f32.mxu0 0.0
    %5102 = vmatmul.mubr.f32.gmra.mrb[0].mxu0 %v4978
    %v5103 = vpop.f32.mrb[0].mxu0
    %v5104 = vadd.f32 0.0, %v5103
    %v5105 = vpop.f32.mrb[0].mxu0
    %5106 = vmatprep.mubr.f32.mxu0 0.0
    %5107 = vmatmul.mubr.f32.gmra.mrb[0].mxu0 %v4981
    %v5108 = vpop.f32.mrb[0].mxu0
    %v5109 = vadd.f32 0.0, %v5108
    %v5110 = vpop.f32.mrb[0].mxu0
    %5111 = vmatprep.mubr.f32.mxu0 0.0
    %5112 = vmatmul.mubr.f32.gmra.mrb[0].mxu0 %v4984
    %v5113 = vpop.f32.mrb[0].mxu0
    %v5114 = vadd.f32 0.0, %v5113
    %v5115 = vpop.f32.mrb[0].mxu0
    %5116 = vmatprep.mubr.f32.mxu0 0.0
    %5117 = vmatmul.mubr.f32.gmra.mrb[0].mxu0 %v4987
    %v5118 = vpop.f32.mrb[0].mxu0
    %v5119 = vadd.f32 0.0, %v5118
    %v5120 = vpop.f32.mrb[0].mxu0
    %5121 = vmatprep.mubr.f32.mxu0 0.0
    %5122 = vmatmul.mubr.f32.gmra.mrb[0].mxu0 %v4990
    %v5123 = vpop.f32.mrb[0].mxu0
    %v5124 = vadd.f32 0.0, %v5123
    %v5125 = vpop.f32.mrb[0].mxu0
    %5126 = vmatprep.mubr.f32.mxu0 0.0
    %5127 = vmatmul.mubr.f32.gmra.mrb[0].mxu0 %v4993
    %v5128 = vpop.f32.mrb[0].mxu0
    %v5129 = vadd.f32 0.0, %v5128
    %v5130 = vpop.f32.mrb[0].mxu0
    %5131 = vmatprep.mubr.f32.mxu0 0.0
    %5132 = vmatmul.mubr.f32.gmra.mrb[0].mxu0 %v4996
    %v5133 = vpop.f32.mrb[0].mxu0
    %v5134 = vadd.f32 0.0, %v5133
    %v5135 = vpop.f32.mrb[0].mxu0
    %5136 = vmatprep.mubr.f32.mxu0 0.0
    %5137 = vmatmul.mubr.f32.gmra.mrb[0].mxu0 %v4999
    %v5138 = vpop.f32.mrb[0].mxu0
    %v5139 = vadd.f32 0.0, %v5138
    %v5140 = vpop.f32.mrb[0].mxu0
    %5141 = vmatprep.mubr.f32.mxu0 0.0
    %5142 = vmatmul.mubr.f32.gmra.mrb[0].mxu0 %v5002
    %v5143 = vpop.f32.mrb[0].mxu0
    %v5144 = vadd.f32 0.0, %v5143
    %v5145 = vpop.f32.mrb[0].mxu0
    %5146 = vmatprep.mubr.f32.mxu0 0.0
    %5147 = vmatmul.mubr.f32.gmra.mrb[0].mxu0 %v5005
    %v5148 = vpop.f32.mrb[0].mxu0
    %v5149 = vadd.f32 0.0, %v5148
    %v5150 = vpop.f32.mrb[0].mxu0
    %5151 = vdwg.mxu0
    %5168 = vrot.lane.b32.xlu0 %v5074, 5
    %v5169 = vpop.permute.xlu0 %5168
    %5170 = vrot.lane.b32.xlu0 %v5079, 5
    %v5171 = vpop.permute.xlu0 %5170
    %5172 = vrot.lane.b32.xlu0 %v5084, 5
    %v5173 = vpop.permute.xlu0 %5172
    %5174 = vrot.lane.b32.xlu0 %v5089, 5
    %v5175 = vpop.permute.xlu0 %5174
    %5176 = vrot.lane.b32.xlu0 %v5094, 5
    %v5177 = vpop.permute.xlu0 %5176
    %5178 = vrot.lane.b32.xlu0 %v5099, 5
    %v5179 = vpop.permute.xlu0 %5178
    %5180 = vrot.lane.b32.xlu0 %v5104, 5
    %v5181 = vpop.permute.xlu0 %5180
    %5182 = vrot.lane.b32.xlu0 %v5109, 5
    %v5183 = vpop.permute.xlu0 %5182
    %5184 = vrot.lane.b32.xlu0 %v5114, 5
    %v5185 = vpop.permute.xlu0 %5184
    %5186 = vrot.lane.b32.xlu0 %v5119, 5
    %v5187 = vpop.permute.xlu0 %5186
    %5188 = vrot.lane.b32.xlu0 %v5124, 5
    %v5189 = vpop.permute.xlu0 %5188
    %5190 = vrot.lane.b32.xlu0 %v5129, 5
    %v5191 = vpop.permute.xlu0 %5190
    %5192 = vrot.lane.b32.xlu0 %v5134, 5
    %v5193 = vpop.permute.xlu0 %5192
    %5194 = vrot.lane.b32.xlu0 %v5139, 5
    %v5195 = vpop.permute.xlu0 %5194
    %5196 = vrot.lane.b32.xlu0 %v5144, 5
    %v5197 = vpop.permute.xlu0 %5196
    %5198 = vrot.lane.b32.xlu0 %v5149, 5
    %v5199 = vpop.permute.xlu0 %5198
    %v5216 = vadd.f32 %v4943, %v5169
    %v5217 = vadd.f32 %v4944, %v5171
    %v5218 = vadd.f32 %v4945, %v5173
    %v5219 = vadd.f32 %v4946, %v5175
    %v5220 = vadd.f32 %v4947, %v5177
    %v5221 = vadd.f32 %v4948, %v5179
    %v5222 = vadd.f32 %v4949, %v5181
    %v5223 = vadd.f32 %v4950, %v5183
    %v5224 = vadd.f32 %v4951, %v5185
    %v5225 = vadd.f32 %v4952, %v5187
    %v5226 = vadd.f32 %v4953, %v5189
    %v5227 = vadd.f32 %v4954, %v5191
    %v5228 = vadd.f32 %v4955, %v5193
    %v5229 = vadd.f32 %v4956, %v5195
    %v5230 = vadd.f32 %v4957, %v5197
    %v5231 = vadd.f32 %v4958, %v5199
    %vm5232 = vcmask 48168
    %5233 = vst.msk [vmem:[#allocation2] sm:$0xff] %vm5232, %v5216
    %5234 = vst.msk [vmem:[#allocation2 + $0x8] sm:$0xff] %vm5232, %v5217
    %5235 = vst.msk [vmem:[#allocation2 + $0x10] sm:$0xff] %vm5232, %v5218
    %5236 = vst.msk [vmem:[#allocation2 + $0x18] sm:$0xff] %vm5232, %v5219
    %5237 = vst.msk [vmem:[#allocation2 + $0x20] sm:$0xff] %vm5232, %v5220
    %5238 = vst.msk [vmem:[#allocation2 + $0x28] sm:$0xff] %vm5232, %v5221
    %5239 = vst.msk [vmem:[#allocation2 + $0x30] sm:$0xff] %vm5232, %v5222
    %5240 = vst.msk [vmem:[#allocation2 + $0x38] sm:$0xff] %vm5232, %v5223
    %5241 = vst.msk [vmem:[#allocation2 + $0x40] sm:$0xff] %vm5232, %v5224
    %5242 = vst.msk [vmem:[#allocation2 + $0x48] sm:$0xff] %vm5232, %v5225
    %5243 = vst.msk [vmem:[#allocation2 + $0x50] sm:$0xff] %vm5232, %v5226
    %5244 = vst.msk [vmem:[#allocation2 + $0x58] sm:$0xff] %vm5232, %v5227
    %5245 = vst.msk [vmem:[#allocation2 + $0x60] sm:$0xff] %vm5232, %v5228
    %5246 = vst.msk [vmem:[#allocation2 + $0x68] sm:$0xff] %vm5232, %v5229
    %5247 = vst.msk [vmem:[#allocation2 + $0x70] sm:$0xff] %vm5232, %v5230
    %5248 = vst.msk [vmem:[#allocation2 + $0x78] sm:$0xff] %vm5232, %v5231
    %v5250 = vsel %vm523, %v254, 0
    %5252 = vmatprep.subr.mxu0 0.0
    %5253 = vmatpush1.msra.mxu0 %v5250
    %5254 = vmatprep.subr.mxu0 0.0
    %5255 = vmatpush1.msra.mxu0 0.0
    %5256 = vmatprep.subr.mxu0 0.0
    %5257 = vmatpush1.msra.mxu0 0.0
    %5258 = vmatprep.subr.mxu0 0.0
    %5259 = vmatpush1.msra.mxu0 0.0
    %5260 = vmatprep.subr.mxu0 0.0
    %5261 = vmatpush1.msra.mxu0 0.0
    %5262 = vmatprep.subr.mxu0 0.0
    %5263 = vmatpush1.msra.mxu0 0.0
    %5264 = vmatprep.subr.mxu0 0.0
    %5265 = vmatpush1.msra.mxu0 0.0
    %5266 = vmatprep.subr.mxu0 0.0
    %5267 = vmatpush1.msra.mxu0 0.0
    %5268 = vmatprep.subr.mxu0 0.0
    %5269 = vmatpush1.msra.mxu0 0.0
    %5270 = vmatprep.subr.mxu0 0.0
    %5271 = vmatpush1.msra.mxu0 0.0
    %5272 = vmatprep.subr.mxu0 0.0
    %5273 = vmatpush1.msra.mxu0 0.0
    %5274 = vmatprep.subr.mxu0 0.0
    %5275 = vmatpush1.msra.mxu0 0.0
    %5276 = vmatprep.subr.mxu0 0.0
    %5277 = vmatpush1.msra.mxu0 0.0
    %5278 = vmatprep.subr.mxu0 0.0
    %5279 = vmatpush1.msra.mxu0 0.0
    %5280 = vmatprep.subr.mxu0 0.0
    %5281 = vmatpush1.msra.mxu0 0.0
    %5282 = vmatprep.subr.mxu0 0.0
    %5283 = vmatpush1.msra.mxu0 0.0
    %5284 = vmatprep.subr.mxu0 0.0
    %5285 = vmatpush1.msra.mxu0 0.0
    %5286 = vmatprep.subr.mxu0 0.0
    %5287 = vmatpush1.msra.mxu0 0.0
    %5288 = vmatprep.subr.mxu0 0.0
    %5289 = vmatpush1.msra.mxu0 0.0
    %5290 = vmatprep.subr.mxu0 0.0
    %5291 = vmatpush1.msra.mxu0 0.0
    %5292 = vmatprep.subr.mxu0 0.0
    %5293 = vmatpush1.msra.mxu0 0.0
    %5294 = vmatprep.subr.mxu0 0.0
    %5295 = vmatpush1.msra.mxu0 0.0
    %5296 = vmatprep.subr.mxu0 0.0
    %5297 = vmatpush1.msra.mxu0 0.0
    %5298 = vmatprep.subr.mxu0 0.0
    %5299 = vmatpush1.msra.mxu0 0.0
    %5300 = vmatprep.subr.mxu0 0.0
    %5301 = vmatpush1.msra.mxu0 0.0
    %5302 = vmatprep.subr.mxu0 0.0
    %5303 = vmatpush1.msra.mxu0 0.0
    %5304 = vmatprep.subr.mxu0 0.0
    %5305 = vmatpush1.msra.mxu0 0.0
    %5306 = vmatprep.subr.mxu0 0.0
    %5307 = vmatpush1.msra.mxu0 0.0
    %5308 = vmatprep.subr.mxu0 0.0
    %5309 = vmatpush1.msra.mxu0 0.0
    %5310 = vmatprep.subr.mxu0 0.0
    %5311 = vmatpush1.msra.mxu0 0.0
    %5312 = vmatprep.subr.mxu0 0.0
    %5313 = vmatpush1.msra.mxu0 0.0
    %5314 = vmatprep.subr.mxu0 0.0
    %5315 = vmatpush1.msra.mxu0 0.0
    %5316 = vmatprep.mubr.f32.mxu0 0.0
    %5317 = vmatmul.mubr.f32.gmra.mrb[0].mxu0 %v476
    %v5318 = vpop.f32.mrb[0].mxu0
    %v5319 = vadd.f32 0.0, %v5318
    %v5320 = vpop.f32.mrb[0].mxu0
    %5321 = vmatprep.mubr.f32.mxu0 0.0
    %5322 = vmatmul.mubr.f32.gmra.mrb[0].mxu0 %v479
    %v5323 = vpop.f32.mrb[0].mxu0
    %v5324 = vadd.f32 0.0, %v5323
    %v5325 = vpop.f32.mrb[0].mxu0
    %5326 = vmatprep.mubr.f32.mxu0 0.0
    %5327 = vmatmul.mubr.f32.gmra.mrb[0].mxu0 %v482
    %v5328 = vpop.f32.mrb[0].mxu0
    %v5329 = vadd.f32 0.0, %v5328
    %v5330 = vpop.f32.mrb[0].mxu0
    %5331 = vmatprep.mubr.f32.mxu0 0.0
    %5332 = vmatmul.mubr.f32.gmra.mrb[0].mxu0 %v485
    %v5333 = vpop.f32.mrb[0].mxu0
    %v5334 = vadd.f32 0.0, %v5333
    %v5335 = vpop.f32.mrb[0].mxu0
    %5336 = vmatprep.mubr.f32.mxu0 0.0
    %5337 = vmatmul.mubr.f32.gmra.mrb[0].mxu0 %v488
    %v5338 = vpop.f32.mrb[0].mxu0
    %v5339 = vadd.f32 0.0, %v5338
    %v5340 = vpop.f32.mrb[0].mxu0
    %5341 = vmatprep.mubr.f32.mxu0 0.0
    %5342 = vmatmul.mubr.f32.gmra.mrb[0].mxu0 %v491
    %v5343 = vpop.f32.mrb[0].mxu0
    %v5344 = vadd.f32 0.0, %v5343
    %v5345 = vpop.f32.mrb[0].mxu0
    %5346 = vmatprep.mubr.f32.mxu0 0.0
    %5347 = vmatmul.mubr.f32.gmra.mrb[0].mxu0 %v494
    %v5348 = vpop.f32.mrb[0].mxu0
    %v5349 = vadd.f32 0.0, %v5348
    %v5350 = vpop.f32.mrb[0].mxu0
    %5351 = vmatprep.mubr.f32.mxu0 0.0
    %5352 = vmatmul.mubr.f32.gmra.mrb[0].mxu0 %v497
    %v5353 = vpop.f32.mrb[0].mxu0
    %v5354 = vadd.f32 0.0, %v5353
    %v5355 = vpop.f32.mrb[0].mxu0
    %5356 = vmatprep.mubr.f32.mxu0 0.0
    %5357 = vmatmul.mubr.f32.gmra.mrb[0].mxu0 %v500
    %v5358 = vpop.f32.mrb[0].mxu0
    %v5359 = vadd.f32 0.0, %v5358
    %v5360 = vpop.f32.mrb[0].mxu0
    %5361 = vmatprep.mubr.f32.mxu0 0.0
    %5362 = vmatmul.mubr.f32.gmra.mrb[0].mxu0 %v503
    %v5363 = vpop.f32.mrb[0].mxu0
    %v5364 = vadd.f32 0.0, %v5363
    %v5365 = vpop.f32.mrb[0].mxu0
    %5366 = vmatprep.mubr.f32.mxu0 0.0
    %5367 = vmatmul.mubr.f32.gmra.mrb[0].mxu0 %v506
    %v5368 = vpop.f32.mrb[0].mxu0
    %v5369 = vadd.f32 0.0, %v5368
    %v5370 = vpop.f32.mrb[0].mxu0
    %5371 = vmatprep.mubr.f32.mxu0 0.0
    %5372 = vmatmul.mubr.f32.gmra.mrb[0].mxu0 %v509
    %v5373 = vpop.f32.mrb[0].mxu0
    %v5374 = vadd.f32 0.0, %v5373
    %v5375 = vpop.f32.mrb[0].mxu0
    %5376 = vmatprep.mubr.f32.mxu0 0.0
    %5377 = vmatmul.mubr.f32.gmra.mrb[0].mxu0 %v512
    %v5378 = vpop.f32.mrb[0].mxu0
    %v5379 = vadd.f32 0.0, %v5378
    %v5380 = vpop.f32.mrb[0].mxu0
    %5381 = vmatprep.mubr.f32.mxu0 0.0
    %5382 = vmatmul.mubr.f32.gmra.mrb[0].mxu0 %v515
    %v5383 = vpop.f32.mrb[0].mxu0
    %v5384 = vadd.f32 0.0, %v5383
    %v5385 = vpop.f32.mrb[0].mxu0
    %5386 = vmatprep.mubr.f32.mxu0 0.0
    %5387 = vmatmul.mubr.f32.gmra.mrb[0].mxu0 %v518
    %v5388 = vpop.f32.mrb[0].mxu0
    %v5389 = vadd.f32 0.0, %v5388
    %v5390 = vpop.f32.mrb[0].mxu0
    %5391 = vmatprep.mubr.f32.mxu0 0.0
    %5392 = vmatmul.mubr.f32.gmra.mrb[0].mxu0 %v521
    %v5393 = vpop.f32.mrb[0].mxu0
    %v5394 = vadd.f32 0.0, %v5393
    %v5395 = vpop.f32.mrb[0].mxu0
    %5396 = vdwg.mxu0
    %v5398 = vsel %vm523, %v334, 0
    %5400 = vmatprep.subr.mxu0 0.0
    %5401 = vmatpush1.msra.mxu0 %v5398
    %5402 = vmatprep.subr.mxu0 0.0
    %5403 = vmatpush1.msra.mxu0 0.0
    %5404 = vmatprep.subr.mxu0 0.0
    %5405 = vmatpush1.msra.mxu0 0.0
    %5406 = vmatprep.subr.mxu0 0.0
    %5407 = vmatpush1.msra.mxu0 0.0
    %5408 = vmatprep.subr.mxu0 0.0
    %5409 = vmatpush1.msra.mxu0 0.0
    %5410 = vmatprep.subr.mxu0 0.0
    %5411 = vmatpush1.msra.mxu0 0.0
    %5412 = vmatprep.subr.mxu0 0.0
    %5413 = vmatpush1.msra.mxu0 0.0
    %5414 = vmatprep.subr.mxu0 0.0
    %5415 = vmatpush1.msra.mxu0 0.0
    %5416 = vmatprep.subr.mxu0 0.0
    %5417 = vmatpush1.msra.mxu0 0.0
    %5418 = vmatprep.subr.mxu0 0.0
    %5419 = vmatpush1.msra.mxu0 0.0
    %5420 = vmatprep.subr.mxu0 0.0
    %5421 = vmatpush1.msra.mxu0 0.0
    %5422 = vmatprep.subr.mxu0 0.0
    %5423 = vmatpush1.msra.mxu0 0.0
    %5424 = vmatprep.subr.mxu0 0.0
    %5425 = vmatpush1.msra.mxu0 0.0
    %5426 = vmatprep.subr.mxu0 0.0
    %5427 = vmatpush1.msra.mxu0 0.0
    %5428 = vmatprep.subr.mxu0 0.0
    %5429 = vmatpush1.msra.mxu0 0.0
    %5430 = vmatprep.subr.mxu0 0.0
    %5431 = vmatpush1.msra.mxu0 0.0
    %5432 = vmatprep.subr.mxu0 0.0
    %5433 = vmatpush1.msra.mxu0 0.0
    %5434 = vmatprep.subr.mxu0 0.0
    %5435 = vmatpush1.msra.mxu0 0.0
    %5436 = vmatprep.subr.mxu0 0.0
    %5437 = vmatpush1.msra.mxu0 0.0
    %5438 = vmatprep.subr.mxu0 0.0
    %5439 = vmatpush1.msra.mxu0 0.0
    %5440 = vmatprep.subr.mxu0 0.0
    %5441 = vmatpush1.msra.mxu0 0.0
    %5442 = vmatprep.subr.mxu0 0.0
    %5443 = vmatpush1.msra.mxu0 0.0
    %5444 = vmatprep.subr.mxu0 0.0
    %5445 = vmatpush1.msra.mxu0 0.0
    %5446 = vmatprep.subr.mxu0 0.0
    %5447 = vmatpush1.msra.mxu0 0.0
    %5448 = vmatprep.subr.mxu0 0.0
    %5449 = vmatpush1.msra.mxu0 0.0
    %5450 = vmatprep.subr.mxu0 0.0
    %5451 = vmatpush1.msra.mxu0 0.0
    %5452 = vmatprep.subr.mxu0 0.0
    %5453 = vmatpush1.msra.mxu0 0.0
    %5454 = vmatprep.subr.mxu0 0.0
    %5455 = vmatpush1.msra.mxu0 0.0
    %5456 = vmatprep.subr.mxu0 0.0
    %5457 = vmatpush1.msra.mxu0 0.0
    %5458 = vmatprep.subr.mxu0 0.0
    %5459 = vmatpush1.msra.mxu0 0.0
    %5460 = vmatprep.subr.mxu0 0.0
    %5461 = vmatpush1.msra.mxu0 0.0
    %5462 = vmatprep.subr.mxu0 0.0
    %5463 = vmatpush1.msra.mxu0 0.0
    %5464 = vmatprep.mubr.f32.mxu0 0.0
    %5465 = vmatmul.mubr.f32.gmra.mrb[0].mxu0 %v673
    %v5466 = vpop.f32.mrb[0].mxu0
    %v5467 = vadd.f32 0.0, %v5466
    %v5468 = vpop.f32.mrb[0].mxu0
    %5469 = vmatprep.mubr.f32.mxu0 0.0
    %5470 = vmatmul.mubr.f32.gmra.mrb[0].mxu0 %v676
    %v5471 = vpop.f32.mrb[0].mxu0
    %v5472 = vadd.f32 0.0, %v5471
    %v5473 = vpop.f32.mrb[0].mxu0
    %5474 = vmatprep.mubr.f32.mxu0 0.0
    %5475 = vmatmul.mubr.f32.gmra.mrb[0].mxu0 %v679
    %v5476 = vpop.f32.mrb[0].mxu0
    %v5477 = vadd.f32 0.0, %v5476
    %v5478 = vpop.f32.mrb[0].mxu0
    %5479 = vmatprep.mubr.f32.mxu0 0.0
    %5480 = vmatmul.mubr.f32.gmra.mrb[0].mxu0 %v682
    %v5481 = vpop.f32.mrb[0].mxu0
    %v5482 = vadd.f32 0.0, %v5481
    %v5483 = vpop.f32.mrb[0].mxu0
    %5484 = vmatprep.mubr.f32.mxu0 0.0
    %5485 = vmatmul.mubr.f32.gmra.mrb[0].mxu0 %v685
    %v5486 = vpop.f32.mrb[0].mxu0
    %v5487 = vadd.f32 0.0, %v5486
    %v5488 = vpop.f32.mrb[0].mxu0
    %5489 = vmatprep.mubr.f32.mxu0 0.0
    %5490 = vmatmul.mubr.f32.gmra.mrb[0].mxu0 %v688
    %v5491 = vpop.f32.mrb[0].mxu0
    %v5492 = vadd.f32 0.0, %v5491
    %v5493 = vpop.f32.mrb[0].mxu0
    %5494 = vmatprep.mubr.f32.mxu0 0.0
    %5495 = vmatmul.mubr.f32.gmra.mrb[0].mxu0 %v691
    %v5496 = vpop.f32.mrb[0].mxu0
    %v5497 = vadd.f32 0.0, %v5496
    %v5498 = vpop.f32.mrb[0].mxu0
    %5499 = vmatprep.mubr.f32.mxu0 0.0
    %5500 = vmatmul.mubr.f32.gmra.mrb[0].mxu0 %v694
    %v5501 = vpop.f32.mrb[0].mxu0
    %v5502 = vadd.f32 0.0, %v5501
    %v5503 = vpop.f32.mrb[0].mxu0
    %5504 = vmatprep.mubr.f32.mxu0 0.0
    %5505 = vmatmul.mubr.f32.gmra.mrb[0].mxu0 %v697
    %v5506 = vpop.f32.mrb[0].mxu0
    %v5507 = vadd.f32 0.0, %v5506
    %v5508 = vpop.f32.mrb[0].mxu0
    %5509 = vmatprep.mubr.f32.mxu0 0.0
    %5510 = vmatmul.mubr.f32.gmra.mrb[0].mxu0 %v700
    %v5511 = vpop.f32.mrb[0].mxu0
    %v5512 = vadd.f32 0.0, %v5511
    %v5513 = vpop.f32.mrb[0].mxu0
    %5514 = vmatprep.mubr.f32.mxu0 0.0
    %5515 = vmatmul.mubr.f32.gmra.mrb[0].mxu0 %v703
    %v5516 = vpop.f32.mrb[0].mxu0
    %v5517 = vadd.f32 0.0, %v5516
    %v5518 = vpop.f32.mrb[0].mxu0
    %5519 = vmatprep.mubr.f32.mxu0 0.0
    %5520 = vmatmul.mubr.f32.gmra.mrb[0].mxu0 %v706
    %v5521 = vpop.f32.mrb[0].mxu0
    %v5522 = vadd.f32 0.0, %v5521
    %v5523 = vpop.f32.mrb[0].mxu0
    %5524 = vmatprep.mubr.f32.mxu0 0.0
    %5525 = vmatmul.mubr.f32.gmra.mrb[0].mxu0 %v709
    %v5526 = vpop.f32.mrb[0].mxu0
    %v5527 = vadd.f32 0.0, %v5526
    %v5528 = vpop.f32.mrb[0].mxu0
    %5529 = vmatprep.mubr.f32.mxu0 0.0
    %5530 = vmatmul.mubr.f32.gmra.mrb[0].mxu0 %v712
    %v5531 = vpop.f32.mrb[0].mxu0
    %v5532 = vadd.f32 0.0, %v5531
    %v5533 = vpop.f32.mrb[0].mxu0
    %5534 = vmatprep.mubr.f32.mxu0 0.0
    %5535 = vmatmul.mubr.f32.gmra.mrb[0].mxu0 %v715
    %v5536 = vpop.f32.mrb[0].mxu0
    %v5537 = vadd.f32 0.0, %v5536
    %v5538 = vpop.f32.mrb[0].mxu0
    %5539 = vmatprep.mubr.f32.mxu0 0.0
    %5540 = vmatmul.mubr.f32.gmra.mrb[0].mxu0 %v718
    %v5541 = vpop.f32.mrb[0].mxu0
    %v5542 = vadd.f32 0.0, %v5541
    %v5543 = vpop.f32.mrb[0].mxu0
    %5544 = vdwg.mxu0
    %v5545 = vmul.f32 %v5319, %v5467
    %v5546 = vmul.f32 %v5324, %v5472
    %v5547 = vmul.f32 %v5329, %v5477
    %v5548 = vmul.f32 %v5334, %v5482
    %v5549 = vmul.f32 %v5339, %v5487
    %v5550 = vmul.f32 %v5344, %v5492
    %v5551 = vmul.f32 %v5349, %v5497
    %v5552 = vmul.f32 %v5354, %v5502
    %v5553 = vmul.f32 %v5359, %v5507
    %v5554 = vmul.f32 %v5364, %v5512
    %v5555 = vmul.f32 %v5369, %v5517
    %v5556 = vmul.f32 %v5374, %v5522
    %v5557 = vmul.f32 %v5379, %v5527
    %v5558 = vmul.f32 %v5384, %v5532
    %v5559 = vmul.f32 %v5389, %v5537
    %v5560 = vmul.f32 %v5394, %v5542
    %v5562 = vsel %vm523, %v414, 0
    %5564 = vmatprep.subr.mxu0 0.0
    %5565 = vmatpush1.msra.mxu0 %v5562
    %5566 = vmatprep.subr.mxu0 0.0
    %5567 = vmatpush1.msra.mxu0 0.0
    %5568 = vmatprep.subr.mxu0 0.0
    %5569 = vmatpush1.msra.mxu0 0.0
    %5570 = vmatprep.subr.mxu0 0.0
    %5571 = vmatpush1.msra.mxu0 0.0
    %5572 = vmatprep.subr.mxu0 0.0
    %5573 = vmatpush1.msra.mxu0 0.0
    %5574 = vmatprep.subr.mxu0 0.0
    %5575 = vmatpush1.msra.mxu0 0.0
    %5576 = vmatprep.subr.mxu0 0.0
    %5577 = vmatpush1.msra.mxu0 0.0
    %5578 = vmatprep.subr.mxu0 0.0
    %5579 = vmatpush1.msra.mxu0 0.0
    %5580 = vmatprep.subr.mxu0 0.0
    %5581 = vmatpush1.msra.mxu0 0.0
    %5582 = vmatprep.subr.mxu0 0.0
    %5583 = vmatpush1.msra.mxu0 0.0
    %5584 = vmatprep.subr.mxu0 0.0
    %5585 = vmatpush1.msra.mxu0 0.0
    %5586 = vmatprep.subr.mxu0 0.0
    %5587 = vmatpush1.msra.mxu0 0.0
    %5588 = vmatprep.subr.mxu0 0.0
    %5589 = vmatpush1.msra.mxu0 0.0
    %5590 = vmatprep.subr.mxu0 0.0
    %5591 = vmatpush1.msra.mxu0 0.0
    %5592 = vmatprep.subr.mxu0 0.0
    %5593 = vmatpush1.msra.mxu0 0.0
    %5594 = vmatprep.subr.mxu0 0.0
    %5595 = vmatpush1.msra.mxu0 0.0
    %5596 = vmatprep.subr.mxu0 0.0
    %5597 = vmatpush1.msra.mxu0 0.0
    %5598 = vmatprep.subr.mxu0 0.0
    %5599 = vmatpush1.msra.mxu0 0.0
    %5600 = vmatprep.subr.mxu0 0.0
    %5601 = vmatpush1.msra.mxu0 0.0
    %5602 = vmatprep.subr.mxu0 0.0
    %5603 = vmatpush1.msra.mxu0 0.0
    %5604 = vmatprep.subr.mxu0 0.0
    %5605 = vmatpush1.msra.mxu0 0.0
    %5606 = vmatprep.subr.mxu0 0.0
    %5607 = vmatpush1.msra.mxu0 0.0
    %5608 = vmatprep.subr.mxu0 0.0
    %5609 = vmatpush1.msra.mxu0 0.0
    %5610 = vmatprep.subr.mxu0 0.0
    %5611 = vmatpush1.msra.mxu0 0.0
    %5612 = vmatprep.subr.mxu0 0.0
    %5613 = vmatpush1.msra.mxu0 0.0
    %5614 = vmatprep.subr.mxu0 0.0
    %5615 = vmatpush1.msra.mxu0 0.0
    %5616 = vmatprep.subr.mxu0 0.0
    %5617 = vmatpush1.msra.mxu0 0.0
    %5618 = vmatprep.subr.mxu0 0.0
    %5619 = vmatpush1.msra.mxu0 0.0
    %5620 = vmatprep.subr.mxu0 0.0
    %5621 = vmatpush1.msra.mxu0 0.0
    %5622 = vmatprep.subr.mxu0 0.0
    %5623 = vmatpush1.msra.mxu0 0.0
    %5624 = vmatprep.subr.mxu0 0.0
    %5625 = vmatpush1.msra.mxu0 0.0
    %5626 = vmatprep.subr.mxu0 0.0
    %5627 = vmatpush1.msra.mxu0 0.0
    %5628 = vmatprep.mubr.f32.mxu0 0.0
    %5629 = vmatmul.mubr.f32.gmra.mrb[0].mxu0 %v885
    %v5630 = vpop.f32.mrb[0].mxu0
    %v5631 = vadd.f32 0.0, %v5630
    %v5632 = vpop.f32.mrb[0].mxu0
    %5633 = vmatprep.mubr.f32.mxu0 0.0
    %5634 = vmatmul.mubr.f32.gmra.mrb[0].mxu0 %v888
    %v5635 = vpop.f32.mrb[0].mxu0
    %v5636 = vadd.f32 0.0, %v5635
    %v5637 = vpop.f32.mrb[0].mxu0
    %5638 = vmatprep.mubr.f32.mxu0 0.0
    %5639 = vmatmul.mubr.f32.gmra.mrb[0].mxu0 %v891
    %v5640 = vpop.f32.mrb[0].mxu0
    %v5641 = vadd.f32 0.0, %v5640
    %v5642 = vpop.f32.mrb[0].mxu0
    %5643 = vmatprep.mubr.f32.mxu0 0.0
    %5644 = vmatmul.mubr.f32.gmra.mrb[0].mxu0 %v894
    %v5645 = vpop.f32.mrb[0].mxu0
    %v5646 = vadd.f32 0.0, %v5645
    %v5647 = vpop.f32.mrb[0].mxu0
    %5648 = vmatprep.mubr.f32.mxu0 0.0
    %5649 = vmatmul.mubr.f32.gmra.mrb[0].mxu0 %v897
    %v5650 = vpop.f32.mrb[0].mxu0
    %v5651 = vadd.f32 0.0, %v5650
    %v5652 = vpop.f32.mrb[0].mxu0
    %5653 = vmatprep.mubr.f32.mxu0 0.0
    %5654 = vmatmul.mubr.f32.gmra.mrb[0].mxu0 %v900
    %v5655 = vpop.f32.mrb[0].mxu0
    %v5656 = vadd.f32 0.0, %v5655
    %v5657 = vpop.f32.mrb[0].mxu0
    %5658 = vmatprep.mubr.f32.mxu0 0.0
    %5659 = vmatmul.mubr.f32.gmra.mrb[0].mxu0 %v903
    %v5660 = vpop.f32.mrb[0].mxu0
    %v5661 = vadd.f32 0.0, %v5660
    %v5662 = vpop.f32.mrb[0].mxu0
    %5663 = vmatprep.mubr.f32.mxu0 0.0
    %5664 = vmatmul.mubr.f32.gmra.mrb[0].mxu0 %v906
    %v5665 = vpop.f32.mrb[0].mxu0
    %v5666 = vadd.f32 0.0, %v5665
    %v5667 = vpop.f32.mrb[0].mxu0
    %5668 = vmatprep.mubr.f32.mxu0 0.0
    %5669 = vmatmul.mubr.f32.gmra.mrb[0].mxu0 %v909
    %v5670 = vpop.f32.mrb[0].mxu0
    %v5671 = vadd.f32 0.0, %v5670
    %v5672 = vpop.f32.mrb[0].mxu0
    %5673 = vmatprep.mubr.f32.mxu0 0.0
    %5674 = vmatmul.mubr.f32.gmra.mrb[0].mxu0 %v912
    %v5675 = vpop.f32.mrb[0].mxu0
    %v5676 = vadd.f32 0.0, %v5675
    %v5677 = vpop.f32.mrb[0].mxu0
    %5678 = vmatprep.mubr.f32.mxu0 0.0
    %5679 = vmatmul.mubr.f32.gmra.mrb[0].mxu0 %v915
    %v5680 = vpop.f32.mrb[0].mxu0
    %v5681 = vadd.f32 0.0, %v5680
    %v5682 = vpop.f32.mrb[0].mxu0
    %5683 = vmatprep.mubr.f32.mxu0 0.0
    %5684 = vmatmul.mubr.f32.gmra.mrb[0].mxu0 %v918
    %v5685 = vpop.f32.mrb[0].mxu0
    %v5686 = vadd.f32 0.0, %v5685
    %v5687 = vpop.f32.mrb[0].mxu0
    %5688 = vmatprep.mubr.f32.mxu0 0.0
    %5689 = vmatmul.mubr.f32.gmra.mrb[0].mxu0 %v921
    %v5690 = vpop.f32.mrb[0].mxu0
    %v5691 = vadd.f32 0.0, %v5690
    %v5692 = vpop.f32.mrb[0].mxu0
    %5693 = vmatprep.mubr.f32.mxu0 0.0
    %5694 = vmatmul.mubr.f32.gmra.mrb[0].mxu0 %v924
    %v5695 = vpop.f32.mrb[0].mxu0
    %v5696 = vadd.f32 0.0, %v5695
    %v5697 = vpop.f32.mrb[0].mxu0
    %5698 = vmatprep.mubr.f32.mxu0 0.0
    %5699 = vmatmul.mubr.f32.gmra.mrb[0].mxu0 %v927
    %v5700 = vpop.f32.mrb[0].mxu0
    %v5701 = vadd.f32 0.0, %v5700
    %v5702 = vpop.f32.mrb[0].mxu0
    %5703 = vmatprep.mubr.f32.mxu0 0.0
    %5704 = vmatmul.mubr.f32.gmra.mrb[0].mxu0 %v930
    %v5705 = vpop.f32.mrb[0].mxu0
    %v5706 = vadd.f32 0.0, %v5705
    %v5707 = vpop.f32.mrb[0].mxu0
    %5708 = vdwg.mxu0
    %v5709 = vmul.f32 %v5545, %v5631
    %v5710 = vmul.f32 %v5546, %v5636
    %v5711 = vmul.f32 %v5547, %v5641
    %v5712 = vmul.f32 %v5548, %v5646
    %v5713 = vmul.f32 %v5549, %v5651
    %v5714 = vmul.f32 %v5550, %v5656
    %v5715 = vmul.f32 %v5551, %v5661
    %v5716 = vmul.f32 %v5552, %v5666
    %v5717 = vmul.f32 %v5553, %v5671
    %v5718 = vmul.f32 %v5554, %v5676
    %v5719 = vmul.f32 %v5555, %v5681
    %v5720 = vmul.f32 %v5556, %v5686
    %v5721 = vmul.f32 %v5557, %v5691
    %v5722 = vmul.f32 %v5558, %v5696
    %v5723 = vmul.f32 %v5559, %v5701
    %v5724 = vmul.f32 %v5560, %v5706
    %v5725 = vld [vmem:[#allocation2] sm:$0xff]
    %v5726 = vld [vmem:[#allocation2 + $0x8] sm:$0xff]
    %v5727 = vld [vmem:[#allocation2 + $0x10] sm:$0xff]
    %v5728 = vld [vmem:[#allocation2 + $0x18] sm:$0xff]
    %v5729 = vld [vmem:[#allocation2 + $0x20] sm:$0xff]
    %v5730 = vld [vmem:[#allocation2 + $0x28] sm:$0xff]
    %v5731 = vld [vmem:[#allocation2 + $0x30] sm:$0xff]
    %v5732 = vld [vmem:[#allocation2 + $0x38] sm:$0xff]
    %v5733 = vld [vmem:[#allocation2 + $0x40] sm:$0xff]
    %v5734 = vld [vmem:[#allocation2 + $0x48] sm:$0xff]
    %v5735 = vld [vmem:[#allocation2 + $0x50] sm:$0xff]
    %v5736 = vld [vmem:[#allocation2 + $0x58] sm:$0xff]
    %v5737 = vld [vmem:[#allocation2 + $0x60] sm:$0xff]
    %v5738 = vld [vmem:[#allocation2 + $0x68] sm:$0xff]
    %v5739 = vld [vmem:[#allocation2 + $0x70] sm:$0xff]
    %v5740 = vld [vmem:[#allocation2 + $0x78] sm:$0xff]
    %v5742 = vsel %vm1112, %v5709, 0
    %v5745 = vsel %vm1112, %v5710, 0
    %v5748 = vsel %vm1112, %v5711, 0
    %v5751 = vsel %vm1112, %v5712, 0
    %v5754 = vsel %vm1112, %v5713, 0
    %v5757 = vsel %vm1112, %v5714, 0
    %v5760 = vsel %vm1112, %v5715, 0
    %v5763 = vsel %vm1112, %v5716, 0
    %v5766 = vsel %vm1112, %v5717, 0
    %v5769 = vsel %vm1112, %v5718, 0
    %v5772 = vsel %vm1112, %v5719, 0
    %v5775 = vsel %vm1112, %v5720, 0
    %v5778 = vsel %vm1112, %v5721, 0
    %v5781 = vsel %vm1112, %v5722, 0
    %v5784 = vsel %vm1112, %v5723, 0
    %v5787 = vsel %vm1112, %v5724, 0
    %5789 = vmatprep.subr.mxu0 0.0
    %5790 = vmatpush1.msra.mxu0 %v466
    %5791 = vmatprep.subr.mxu0 0.0
    %5792 = vmatpush1.msra.mxu0 %v467
    %5793 = vmatprep.subr.mxu0 0.0
    %5794 = vmatpush1.msra.mxu0 %v468
    %5795 = vmatprep.subr.mxu0 0.0
    %5796 = vmatpush1.msra.mxu0 %v469
    %5797 = vmatprep.subr.mxu0 0.0
    %5798 = vmatpush1.msra.mxu0 %v470
    %5799 = vmatprep.subr.mxu0 0.0
    %5800 = vmatpush1.msra.mxu0 %v471
    %5801 = vmatprep.subr.mxu0 0.0
    %5802 = vmatpush1.msra.mxu0 %v472
    %5803 = vmatprep.subr.mxu0 0.0
    %5804 = vmatpush1.msra.mxu0 %v473
    %5805 = vmatprep.subr.mxu0 0.0
    %5806 = vmatpush1.msra.mxu0 0.0
    %5807 = vmatprep.subr.mxu0 0.0
    %5808 = vmatpush1.msra.mxu0 0.0
    %5809 = vmatprep.subr.mxu0 0.0
    %5810 = vmatpush1.msra.mxu0 0.0
    %5811 = vmatprep.subr.mxu0 0.0
    %5812 = vmatpush1.msra.mxu0 0.0
    %5813 = vmatprep.subr.mxu0 0.0
    %5814 = vmatpush1.msra.mxu0 0.0
    %5815 = vmatprep.subr.mxu0 0.0
    %5816 = vmatpush1.msra.mxu0 0.0
    %5817 = vmatprep.subr.mxu0 0.0
    %5818 = vmatpush1.msra.mxu0 0.0
    %5819 = vmatprep.subr.mxu0 0.0
    %5820 = vmatpush1.msra.mxu0 0.0
    %5821 = vmatprep.subr.mxu0 0.0
    %5822 = vmatpush1.msra.mxu0 0.0
    %5823 = vmatprep.subr.mxu0 0.0
    %5824 = vmatpush1.msra.mxu0 0.0
    %5825 = vmatprep.subr.mxu0 0.0
    %5826 = vmatpush1.msra.mxu0 0.0
    %5827 = vmatprep.subr.mxu0 0.0
    %5828 = vmatpush1.msra.mxu0 0.0
    %5829 = vmatprep.subr.mxu0 0.0
    %5830 = vmatpush1.msra.mxu0 0.0
    %5831 = vmatprep.subr.mxu0 0.0
    %5832 = vmatpush1.msra.mxu0 0.0
    %5833 = vmatprep.subr.mxu0 0.0
    %5834 = vmatpush1.msra.mxu0 0.0
    %5835 = vmatprep.subr.mxu0 0.0
    %5836 = vmatpush1.msra.mxu0 0.0
    %5837 = vmatprep.subr.mxu0 0.0
    %5838 = vmatpush1.msra.mxu0 0.0
    %5839 = vmatprep.subr.mxu0 0.0
    %5840 = vmatpush1.msra.mxu0 0.0
    %5841 = vmatprep.subr.mxu0 0.0
    %5842 = vmatpush1.msra.mxu0 0.0
    %5843 = vmatprep.subr.mxu0 0.0
    %5844 = vmatpush1.msra.mxu0 0.0
    %5845 = vmatprep.subr.mxu0 0.0
    %5846 = vmatpush1.msra.mxu0 0.0
    %5847 = vmatprep.subr.mxu0 0.0
    %5848 = vmatpush1.msra.mxu0 0.0
    %5849 = vmatprep.subr.mxu0 0.0
    %5850 = vmatpush1.msra.mxu0 0.0
    %5851 = vmatprep.subr.mxu0 0.0
    %5852 = vmatpush1.msra.mxu0 0.0
    %5853 = vmatprep.mubr.f32.mxu0 0.0
    %5854 = vmatmul.mubr.f32.gmra.mrb[0].mxu0 %v5742
    %v5855 = vpop.f32.mrb[0].mxu0
    %v5856 = vadd.f32 0.0, %v5855
    %v5857 = vpop.f32.mrb[0].mxu0
    %5858 = vmatprep.mubr.f32.mxu0 0.0
    %5859 = vmatmul.mubr.f32.gmra.mrb[0].mxu0 %v5745
    %v5860 = vpop.f32.mrb[0].mxu0
    %v5861 = vadd.f32 0.0, %v5860
    %v5862 = vpop.f32.mrb[0].mxu0
    %5863 = vmatprep.mubr.f32.mxu0 0.0
    %5864 = vmatmul.mubr.f32.gmra.mrb[0].mxu0 %v5748
    %v5865 = vpop.f32.mrb[0].mxu0
    %v5866 = vadd.f32 0.0, %v5865
    %v5867 = vpop.f32.mrb[0].mxu0
    %5868 = vmatprep.mubr.f32.mxu0 0.0
    %5869 = vmatmul.mubr.f32.gmra.mrb[0].mxu0 %v5751
    %v5870 = vpop.f32.mrb[0].mxu0
    %v5871 = vadd.f32 0.0, %v5870
    %v5872 = vpop.f32.mrb[0].mxu0
    %5873 = vmatprep.mubr.f32.mxu0 0.0
    %5874 = vmatmul.mubr.f32.gmra.mrb[0].mxu0 %v5754
    %v5875 = vpop.f32.mrb[0].mxu0
    %v5876 = vadd.f32 0.0, %v5875
    %v5877 = vpop.f32.mrb[0].mxu0
    %5878 = vmatprep.mubr.f32.mxu0 0.0
    %5879 = vmatmul.mubr.f32.gmra.mrb[0].mxu0 %v5757
    %v5880 = vpop.f32.mrb[0].mxu0
    %v5881 = vadd.f32 0.0, %v5880
    %v5882 = vpop.f32.mrb[0].mxu0
    %5883 = vmatprep.mubr.f32.mxu0 0.0
    %5884 = vmatmul.mubr.f32.gmra.mrb[0].mxu0 %v5760
    %v5885 = vpop.f32.mrb[0].mxu0
    %v5886 = vadd.f32 0.0, %v5885
    %v5887 = vpop.f32.mrb[0].mxu0
    %5888 = vmatprep.mubr.f32.mxu0 0.0
    %5889 = vmatmul.mubr.f32.gmra.mrb[0].mxu0 %v5763
    %v5890 = vpop.f32.mrb[0].mxu0
    %v5891 = vadd.f32 0.0, %v5890
    %v5892 = vpop.f32.mrb[0].mxu0
    %5893 = vmatprep.mubr.f32.mxu0 0.0
    %5894 = vmatmul.mubr.f32.gmra.mrb[0].mxu0 %v5766
    %v5895 = vpop.f32.mrb[0].mxu0
    %v5896 = vadd.f32 0.0, %v5895
    %v5897 = vpop.f32.mrb[0].mxu0
    %5898 = vmatprep.mubr.f32.mxu0 0.0
    %5899 = vmatmul.mubr.f32.gmra.mrb[0].mxu0 %v5769
    %v5900 = vpop.f32.mrb[0].mxu0
    %v5901 = vadd.f32 0.0, %v5900
    %v5902 = vpop.f32.mrb[0].mxu0
    %5903 = vmatprep.mubr.f32.mxu0 0.0
    %5904 = vmatmul.mubr.f32.gmra.mrb[0].mxu0 %v5772
    %v5905 = vpop.f32.mrb[0].mxu0
    %v5906 = vadd.f32 0.0, %v5905
    %v5907 = vpop.f32.mrb[0].mxu0
    %5908 = vmatprep.mubr.f32.mxu0 0.0
    %5909 = vmatmul.mubr.f32.gmra.mrb[0].mxu0 %v5775
    %v5910 = vpop.f32.mrb[0].mxu0
    %v5911 = vadd.f32 0.0, %v5910
    %v5912 = vpop.f32.mrb[0].mxu0
    %5913 = vmatprep.mubr.f32.mxu0 0.0
    %5914 = vmatmul.mubr.f32.gmra.mrb[0].mxu0 %v5778
    %v5915 = vpop.f32.mrb[0].mxu0
    %v5916 = vadd.f32 0.0, %v5915
    %v5917 = vpop.f32.mrb[0].mxu0
    %5918 = vmatprep.mubr.f32.mxu0 0.0
    %5919 = vmatmul.mubr.f32.gmra.mrb[0].mxu0 %v5781
    %v5920 = vpop.f32.mrb[0].mxu0
    %v5921 = vadd.f32 0.0, %v5920
    %v5922 = vpop.f32.mrb[0].mxu0
    %5923 = vmatprep.mubr.f32.mxu0 0.0
    %5924 = vmatmul.mubr.f32.gmra.mrb[0].mxu0 %v5784
    %v5925 = vpop.f32.mrb[0].mxu0
    %v5926 = vadd.f32 0.0, %v5925
    %v5927 = vpop.f32.mrb[0].mxu0
    %5928 = vmatprep.mubr.f32.mxu0 0.0
    %5929 = vmatmul.mubr.f32.gmra.mrb[0].mxu0 %v5787
    %v5930 = vpop.f32.mrb[0].mxu0
    %v5931 = vadd.f32 0.0, %v5930
    %v5932 = vpop.f32.mrb[0].mxu0
    %5933 = vdwg.mxu0
    %5950 = vrot.lane.b32.xlu0 %v5856, 6
    %v5951 = vpop.permute.xlu0 %5950
    %5952 = vrot.lane.b32.xlu0 %v5861, 6
    %v5953 = vpop.permute.xlu0 %5952
    %5954 = vrot.lane.b32.xlu0 %v5866, 6
    %v5955 = vpop.permute.xlu0 %5954
    %5956 = vrot.lane.b32.xlu0 %v5871, 6
    %v5957 = vpop.permute.xlu0 %5956
    %5958 = vrot.lane.b32.xlu0 %v5876, 6
    %v5959 = vpop.permute.xlu0 %5958
    %5960 = vrot.lane.b32.xlu0 %v5881, 6
    %v5961 = vpop.permute.xlu0 %5960
    %5962 = vrot.lane.b32.xlu0 %v5886, 6
    %v5963 = vpop.permute.xlu0 %5962
    %5964 = vrot.lane.b32.xlu0 %v5891, 6
    %v5965 = vpop.permute.xlu0 %5964
    %5966 = vrot.lane.b32.xlu0 %v5896, 6
    %v5967 = vpop.permute.xlu0 %5966
    %5968 = vrot.lane.b32.xlu0 %v5901, 6
    %v5969 = vpop.permute.xlu0 %5968
    %5970 = vrot.lane.b32.xlu0 %v5906, 6
    %v5971 = vpop.permute.xlu0 %5970
    %5972 = vrot.lane.b32.xlu0 %v5911, 6
    %v5973 = vpop.permute.xlu0 %5972
    %5974 = vrot.lane.b32.xlu0 %v5916, 6
    %v5975 = vpop.permute.xlu0 %5974
    %5976 = vrot.lane.b32.xlu0 %v5921, 6
    %v5977 = vpop.permute.xlu0 %5976
    %5978 = vrot.lane.b32.xlu0 %v5926, 6
    %v5979 = vpop.permute.xlu0 %5978
    %5980 = vrot.lane.b32.xlu0 %v5931, 6
    %v5981 = vpop.permute.xlu0 %5980
    %v5998 = vadd.f32 %v5725, %v5951
    %v5999 = vadd.f32 %v5726, %v5953
    %v6000 = vadd.f32 %v5727, %v5955
    %v6001 = vadd.f32 %v5728, %v5957
    %v6002 = vadd.f32 %v5729, %v5959
    %v6003 = vadd.f32 %v5730, %v5961
    %v6004 = vadd.f32 %v5731, %v5963
    %v6005 = vadd.f32 %v5732, %v5965
    %v6006 = vadd.f32 %v5733, %v5967
    %v6007 = vadd.f32 %v5734, %v5969
    %v6008 = vadd.f32 %v5735, %v5971
    %v6009 = vadd.f32 %v5736, %v5973
    %v6010 = vadd.f32 %v5737, %v5975
    %v6011 = vadd.f32 %v5738, %v5977
    %v6012 = vadd.f32 %v5739, %v5979
    %v6013 = vadd.f32 %v5740, %v5981
    %vm6014 = vcmask 56368
    %6015 = vst.msk [vmem:[#allocation2] sm:$0xff] %vm6014, %v5998
    %6016 = vst.msk [vmem:[#allocation2 + $0x8] sm:$0xff] %vm6014, %v5999
    %6017 = vst.msk [vmem:[#allocation2 + $0x10] sm:$0xff] %vm6014, %v6000
    %6018 = vst.msk [vmem:[#allocation2 + $0x18] sm:$0xff] %vm6014, %v6001
    %6019 = vst.msk [vmem:[#allocation2 + $0x20] sm:$0xff] %vm6014, %v6002
    %6020 = vst.msk [vmem:[#allocation2 + $0x28] sm:$0xff] %vm6014, %v6003
    %6021 = vst.msk [vmem:[#allocation2 + $0x30] sm:$0xff] %vm6014, %v6004
    %6022 = vst.msk [vmem:[#allocation2 + $0x38] sm:$0xff] %vm6014, %v6005
    %6023 = vst.msk [vmem:[#allocation2 + $0x40] sm:$0xff] %vm6014, %v6006
    %6024 = vst.msk [vmem:[#allocation2 + $0x48] sm:$0xff] %vm6014, %v6007
    %6025 = vst.msk [vmem:[#allocation2 + $0x50] sm:$0xff] %vm6014, %v6008
    %6026 = vst.msk [vmem:[#allocation2 + $0x58] sm:$0xff] %vm6014, %v6009
    %6027 = vst.msk [vmem:[#allocation2 + $0x60] sm:$0xff] %vm6014, %v6010
    %6028 = vst.msk [vmem:[#allocation2 + $0x68] sm:$0xff] %vm6014, %v6011
    %6029 = vst.msk [vmem:[#allocation2 + $0x70] sm:$0xff] %vm6014, %v6012
    %6030 = vst.msk [vmem:[#allocation2 + $0x78] sm:$0xff] %vm6014, %v6013
    %v6032 = vsel %vm523, %v255, 0
    %6034 = vmatprep.subr.mxu0 0.0
    %6035 = vmatpush1.msra.mxu0 %v6032
    %6036 = vmatprep.subr.mxu0 0.0
    %6037 = vmatpush1.msra.mxu0 0.0
    %6038 = vmatprep.subr.mxu0 0.0
    %6039 = vmatpush1.msra.mxu0 0.0
    %6040 = vmatprep.subr.mxu0 0.0
    %6041 = vmatpush1.msra.mxu0 0.0
    %6042 = vmatprep.subr.mxu0 0.0
    %6043 = vmatpush1.msra.mxu0 0.0
    %6044 = vmatprep.subr.mxu0 0.0
    %6045 = vmatpush1.msra.mxu0 0.0
    %6046 = vmatprep.subr.mxu0 0.0
    %6047 = vmatpush1.msra.mxu0 0.0
    %6048 = vmatprep.subr.mxu0 0.0
    %6049 = vmatpush1.msra.mxu0 0.0
    %6050 = vmatprep.subr.mxu0 0.0
    %6051 = vmatpush1.msra.mxu0 0.0
    %6052 = vmatprep.subr.mxu0 0.0
    %6053 = vmatpush1.msra.mxu0 0.0
    %6054 = vmatprep.subr.mxu0 0.0
    %6055 = vmatpush1.msra.mxu0 0.0
    %6056 = vmatprep.subr.mxu0 0.0
    %6057 = vmatpush1.msra.mxu0 0.0
    %6058 = vmatprep.subr.mxu0 0.0
    %6059 = vmatpush1.msra.mxu0 0.0
    %6060 = vmatprep.subr.mxu0 0.0
    %6061 = vmatpush1.msra.mxu0 0.0
    %6062 = vmatprep.subr.mxu0 0.0
    %6063 = vmatpush1.msra.mxu0 0.0
    %6064 = vmatprep.subr.mxu0 0.0
    %6065 = vmatpush1.msra.mxu0 0.0
    %6066 = vmatprep.subr.mxu0 0.0
    %6067 = vmatpush1.msra.mxu0 0.0
    %6068 = vmatprep.subr.mxu0 0.0
    %6069 = vmatpush1.msra.mxu0 0.0
    %6070 = vmatprep.subr.mxu0 0.0
    %6071 = vmatpush1.msra.mxu0 0.0
    %6072 = vmatprep.subr.mxu0 0.0
    %6073 = vmatpush1.msra.mxu0 0.0
    %6074 = vmatprep.subr.mxu0 0.0
    %6075 = vmatpush1.msra.mxu0 0.0
    %6076 = vmatprep.subr.mxu0 0.0
    %6077 = vmatpush1.msra.mxu0 0.0
    %6078 = vmatprep.subr.mxu0 0.0
    %6079 = vmatpush1.msra.mxu0 0.0
    %6080 = vmatprep.subr.mxu0 0.0
    %6081 = vmatpush1.msra.mxu0 0.0
    %6082 = vmatprep.subr.mxu0 0.0
    %6083 = vmatpush1.msra.mxu0 0.0
    %6084 = vmatprep.subr.mxu0 0.0
    %6085 = vmatpush1.msra.mxu0 0.0
    %6086 = vmatprep.subr.mxu0 0.0
    %6087 = vmatpush1.msra.mxu0 0.0
    %6088 = vmatprep.subr.mxu0 0.0
    %6089 = vmatpush1.msra.mxu0 0.0
    %6090 = vmatprep.subr.mxu0 0.0
    %6091 = vmatpush1.msra.mxu0 0.0
    %6092 = vmatprep.subr.mxu0 0.0
    %6093 = vmatpush1.msra.mxu0 0.0
    %6094 = vmatprep.subr.mxu0 0.0
    %6095 = vmatpush1.msra.mxu0 0.0
    %6096 = vmatprep.subr.mxu0 0.0
    %6097 = vmatpush1.msra.mxu0 0.0
    %6098 = vmatprep.mubr.f32.mxu0 0.0
    %6099 = vmatmul.mubr.f32.gmra.mrb[0].mxu0 %v476
    %v6100 = vpop.f32.mrb[0].mxu0
    %v6101 = vadd.f32 0.0, %v6100
    %v6102 = vpop.f32.mrb[0].mxu0
    %6103 = vmatprep.mubr.f32.mxu0 0.0
    %6104 = vmatmul.mubr.f32.gmra.mrb[0].mxu0 %v479
    %v6105 = vpop.f32.mrb[0].mxu0
    %v6106 = vadd.f32 0.0, %v6105
    %v6107 = vpop.f32.mrb[0].mxu0
    %6108 = vmatprep.mubr.f32.mxu0 0.0
    %6109 = vmatmul.mubr.f32.gmra.mrb[0].mxu0 %v482
    %v6110 = vpop.f32.mrb[0].mxu0
    %v6111 = vadd.f32 0.0, %v6110
    %v6112 = vpop.f32.mrb[0].mxu0
    %6113 = vmatprep.mubr.f32.mxu0 0.0
    %6114 = vmatmul.mubr.f32.gmra.mrb[0].mxu0 %v485
    %v6115 = vpop.f32.mrb[0].mxu0
    %v6116 = vadd.f32 0.0, %v6115
    %v6117 = vpop.f32.mrb[0].mxu0
    %6118 = vmatprep.mubr.f32.mxu0 0.0
    %6119 = vmatmul.mubr.f32.gmra.mrb[0].mxu0 %v488
    %v6120 = vpop.f32.mrb[0].mxu0
    %v6121 = vadd.f32 0.0, %v6120
    %v6122 = vpop.f32.mrb[0].mxu0
    %6123 = vmatprep.mubr.f32.mxu0 0.0
    %6124 = vmatmul.mubr.f32.gmra.mrb[0].mxu0 %v491
    %v6125 = vpop.f32.mrb[0].mxu0
    %v6126 = vadd.f32 0.0, %v6125
    %v6127 = vpop.f32.mrb[0].mxu0
    %6128 = vmatprep.mubr.f32.mxu0 0.0
    %6129 = vmatmul.mubr.f32.gmra.mrb[0].mxu0 %v494
    %v6130 = vpop.f32.mrb[0].mxu0
    %v6131 = vadd.f32 0.0, %v6130
    %v6132 = vpop.f32.mrb[0].mxu0
    %6133 = vmatprep.mubr.f32.mxu0 0.0
    %6134 = vmatmul.mubr.f32.gmra.mrb[0].mxu0 %v497
    %v6135 = vpop.f32.mrb[0].mxu0
    %v6136 = vadd.f32 0.0, %v6135
    %v6137 = vpop.f32.mrb[0].mxu0
    %6138 = vmatprep.mubr.f32.mxu0 0.0
    %6139 = vmatmul.mubr.f32.gmra.mrb[0].mxu0 %v500
    %v6140 = vpop.f32.mrb[0].mxu0
    %v6141 = vadd.f32 0.0, %v6140
    %v6142 = vpop.f32.mrb[0].mxu0
    %6143 = vmatprep.mubr.f32.mxu0 0.0
    %6144 = vmatmul.mubr.f32.gmra.mrb[0].mxu0 %v503
    %v6145 = vpop.f32.mrb[0].mxu0
    %v6146 = vadd.f32 0.0, %v6145
    %v6147 = vpop.f32.mrb[0].mxu0
    %6148 = vmatprep.mubr.f32.mxu0 0.0
    %6149 = vmatmul.mubr.f32.gmra.mrb[0].mxu0 %v506
    %v6150 = vpop.f32.mrb[0].mxu0
    %v6151 = vadd.f32 0.0, %v6150
    %v6152 = vpop.f32.mrb[0].mxu0
    %6153 = vmatprep.mubr.f32.mxu0 0.0
    %6154 = vmatmul.mubr.f32.gmra.mrb[0].mxu0 %v509
    %v6155 = vpop.f32.mrb[0].mxu0
    %v6156 = vadd.f32 0.0, %v6155
    %v6157 = vpop.f32.mrb[0].mxu0
    %6158 = vmatprep.mubr.f32.mxu0 0.0
    %6159 = vmatmul.mubr.f32.gmra.mrb[0].mxu0 %v512
    %v6160 = vpop.f32.mrb[0].mxu0
    %v6161 = vadd.f32 0.0, %v6160
    %v6162 = vpop.f32.mrb[0].mxu0
    %6163 = vmatprep.mubr.f32.mxu0 0.0
    %6164 = vmatmul.mubr.f32.gmra.mrb[0].mxu0 %v515
    %v6165 = vpop.f32.mrb[0].mxu0
    %v6166 = vadd.f32 0.0, %v6165
    %v6167 = vpop.f32.mrb[0].mxu0
    %6168 = vmatprep.mubr.f32.mxu0 0.0
    %6169 = vmatmul.mubr.f32.gmra.mrb[0].mxu0 %v518
    %v6170 = vpop.f32.mrb[0].mxu0
    %v6171 = vadd.f32 0.0, %v6170
    %v6172 = vpop.f32.mrb[0].mxu0
    %6173 = vmatprep.mubr.f32.mxu0 0.0
    %6174 = vmatmul.mubr.f32.gmra.mrb[0].mxu0 %v521
    %v6175 = vpop.f32.mrb[0].mxu0
    %v6176 = vadd.f32 0.0, %v6175
    %v6177 = vpop.f32.mrb[0].mxu0
    %6178 = vdwg.mxu0
    %v6180 = vsel %vm523, %v335, 0
    %6182 = vmatprep.subr.mxu0 0.0
    %6183 = vmatpush1.msra.mxu0 %v6180
    %6184 = vmatprep.subr.mxu0 0.0
    %6185 = vmatpush1.msra.mxu0 0.0
    %6186 = vmatprep.subr.mxu0 0.0
    %6187 = vmatpush1.msra.mxu0 0.0
    %6188 = vmatprep.subr.mxu0 0.0
    %6189 = vmatpush1.msra.mxu0 0.0
    %6190 = vmatprep.subr.mxu0 0.0
    %6191 = vmatpush1.msra.mxu0 0.0
    %6192 = vmatprep.subr.mxu0 0.0
    %6193 = vmatpush1.msra.mxu0 0.0
    %6194 = vmatprep.subr.mxu0 0.0
    %6195 = vmatpush1.msra.mxu0 0.0
    %6196 = vmatprep.subr.mxu0 0.0
    %6197 = vmatpush1.msra.mxu0 0.0
    %6198 = vmatprep.subr.mxu0 0.0
    %6199 = vmatpush1.msra.mxu0 0.0
    %6200 = vmatprep.subr.mxu0 0.0
    %6201 = vmatpush1.msra.mxu0 0.0
    %6202 = vmatprep.subr.mxu0 0.0
    %6203 = vmatpush1.msra.mxu0 0.0
    %6204 = vmatprep.subr.mxu0 0.0
    %6205 = vmatpush1.msra.mxu0 0.0
    %6206 = vmatprep.subr.mxu0 0.0
    %6207 = vmatpush1.msra.mxu0 0.0
    %6208 = vmatprep.subr.mxu0 0.0
    %6209 = vmatpush1.msra.mxu0 0.0
    %6210 = vmatprep.subr.mxu0 0.0
    %6211 = vmatpush1.msra.mxu0 0.0
    %6212 = vmatprep.subr.mxu0 0.0
    %6213 = vmatpush1.msra.mxu0 0.0
    %6214 = vmatprep.subr.mxu0 0.0
    %6215 = vmatpush1.msra.mxu0 0.0
    %6216 = vmatprep.subr.mxu0 0.0
    %6217 = vmatpush1.msra.mxu0 0.0
    %6218 = vmatprep.subr.mxu0 0.0
    %6219 = vmatpush1.msra.mxu0 0.0
    %6220 = vmatprep.subr.mxu0 0.0
    %6221 = vmatpush1.msra.mxu0 0.0
    %6222 = vmatprep.subr.mxu0 0.0
    %6223 = vmatpush1.msra.mxu0 0.0
    %6224 = vmatprep.subr.mxu0 0.0
    %6225 = vmatpush1.msra.mxu0 0.0
    %6226 = vmatprep.subr.mxu0 0.0
    %6227 = vmatpush1.msra.mxu0 0.0
    %6228 = vmatprep.subr.mxu0 0.0
    %6229 = vmatpush1.msra.mxu0 0.0
    %6230 = vmatprep.subr.mxu0 0.0
    %6231 = vmatpush1.msra.mxu0 0.0
    %6232 = vmatprep.subr.mxu0 0.0
    %6233 = vmatpush1.msra.mxu0 0.0
    %6234 = vmatprep.subr.mxu0 0.0
    %6235 = vmatpush1.msra.mxu0 0.0
    %6236 = vmatprep.subr.mxu0 0.0
    %6237 = vmatpush1.msra.mxu0 0.0
    %6238 = vmatprep.subr.mxu0 0.0
    %6239 = vmatpush1.msra.mxu0 0.0
    %6240 = vmatprep.subr.mxu0 0.0
    %6241 = vmatpush1.msra.mxu0 0.0
    %6242 = vmatprep.subr.mxu0 0.0
    %6243 = vmatpush1.msra.mxu0 0.0
    %6244 = vmatprep.subr.mxu0 0.0
    %6245 = vmatpush1.msra.mxu0 0.0
    %6246 = vmatprep.mubr.f32.mxu0 0.0
    %6247 = vmatmul.mubr.f32.gmra.mrb[0].mxu0 %v673
    %v6248 = vpop.f32.mrb[0].mxu0
    %v6249 = vadd.f32 0.0, %v6248
    %v6250 = vpop.f32.mrb[0].mxu0
    %6251 = vmatprep.mubr.f32.mxu0 0.0
    %6252 = vmatmul.mubr.f32.gmra.mrb[0].mxu0 %v676
    %v6253 = vpop.f32.mrb[0].mxu0
    %v6254 = vadd.f32 0.0, %v6253
    %v6255 = vpop.f32.mrb[0].mxu0
    %6256 = vmatprep.mubr.f32.mxu0 0.0
    %6257 = vmatmul.mubr.f32.gmra.mrb[0].mxu0 %v679
    %v6258 = vpop.f32.mrb[0].mxu0
    %v6259 = vadd.f32 0.0, %v6258
    %v6260 = vpop.f32.mrb[0].mxu0
    %6261 = vmatprep.mubr.f32.mxu0 0.0
    %6262 = vmatmul.mubr.f32.gmra.mrb[0].mxu0 %v682
    %v6263 = vpop.f32.mrb[0].mxu0
    %v6264 = vadd.f32 0.0, %v6263
    %v6265 = vpop.f32.mrb[0].mxu0
    %6266 = vmatprep.mubr.f32.mxu0 0.0
    %6267 = vmatmul.mubr.f32.gmra.mrb[0].mxu0 %v685
    %v6268 = vpop.f32.mrb[0].mxu0
    %v6269 = vadd.f32 0.0, %v6268
    %v6270 = vpop.f32.mrb[0].mxu0
    %6271 = vmatprep.mubr.f32.mxu0 0.0
    %6272 = vmatmul.mubr.f32.gmra.mrb[0].mxu0 %v688
    %v6273 = vpop.f32.mrb[0].mxu0
    %v6274 = vadd.f32 0.0, %v6273
    %v6275 = vpop.f32.mrb[0].mxu0
    %6276 = vmatprep.mubr.f32.mxu0 0.0
    %6277 = vmatmul.mubr.f32.gmra.mrb[0].mxu0 %v691
    %v6278 = vpop.f32.mrb[0].mxu0
    %v6279 = vadd.f32 0.0, %v6278
    %v6280 = vpop.f32.mrb[0].mxu0
    %6281 = vmatprep.mubr.f32.mxu0 0.0
    %6282 = vmatmul.mubr.f32.gmra.mrb[0].mxu0 %v694
    %v6283 = vpop.f32.mrb[0].mxu0
    %v6284 = vadd.f32 0.0, %v6283
    %v6285 = vpop.f32.mrb[0].mxu0
    %6286 = vmatprep.mubr.f32.mxu0 0.0
    %6287 = vmatmul.mubr.f32.gmra.mrb[0].mxu0 %v697
    %v6288 = vpop.f32.mrb[0].mxu0
    %v6289 = vadd.f32 0.0, %v6288
    %v6290 = vpop.f32.mrb[0].mxu0
    %6291 = vmatprep.mubr.f32.mxu0 0.0
    %6292 = vmatmul.mubr.f32.gmra.mrb[0].mxu0 %v700
    %v6293 = vpop.f32.mrb[0].mxu0
    %v6294 = vadd.f32 0.0, %v6293
    %v6295 = vpop.f32.mrb[0].mxu0
    %6296 = vmatprep.mubr.f32.mxu0 0.0
    %6297 = vmatmul.mubr.f32.gmra.mrb[0].mxu0 %v703
    %v6298 = vpop.f32.mrb[0].mxu0
    %v6299 = vadd.f32 0.0, %v6298
    %v6300 = vpop.f32.mrb[0].mxu0
    %6301 = vmatprep.mubr.f32.mxu0 0.0
    %6302 = vmatmul.mubr.f32.gmra.mrb[0].mxu0 %v706
    %v6303 = vpop.f32.mrb[0].mxu0
    %v6304 = vadd.f32 0.0, %v6303
    %v6305 = vpop.f32.mrb[0].mxu0
    %6306 = vmatprep.mubr.f32.mxu0 0.0
    %6307 = vmatmul.mubr.f32.gmra.mrb[0].mxu0 %v709
    %v6308 = vpop.f32.mrb[0].mxu0
    %v6309 = vadd.f32 0.0, %v6308
    %v6310 = vpop.f32.mrb[0].mxu0
    %6311 = vmatprep.mubr.f32.mxu0 0.0
    %6312 = vmatmul.mubr.f32.gmra.mrb[0].mxu0 %v712
    %v6313 = vpop.f32.mrb[0].mxu0
    %v6314 = vadd.f32 0.0, %v6313
    %v6315 = vpop.f32.mrb[0].mxu0
    %6316 = vmatprep.mubr.f32.mxu0 0.0
    %6317 = vmatmul.mubr.f32.gmra.mrb[0].mxu0 %v715
    %v6318 = vpop.f32.mrb[0].mxu0
    %v6319 = vadd.f32 0.0, %v6318
    %v6320 = vpop.f32.mrb[0].mxu0
    %6321 = vmatprep.mubr.f32.mxu0 0.0
    %6322 = vmatmul.mubr.f32.gmra.mrb[0].mxu0 %v718
    %v6323 = vpop.f32.mrb[0].mxu0
    %v6324 = vadd.f32 0.0, %v6323
    %v6325 = vpop.f32.mrb[0].mxu0
    %6326 = vdwg.mxu0
    %v6327 = vmul.f32 %v6101, %v6249
    %v6328 = vmul.f32 %v6106, %v6254
    %v6329 = vmul.f32 %v6111, %v6259
    %v6330 = vmul.f32 %v6116, %v6264
    %v6331 = vmul.f32 %v6121, %v6269
    %v6332 = vmul.f32 %v6126, %v6274
    %v6333 = vmul.f32 %v6131, %v6279
    %v6334 = vmul.f32 %v6136, %v6284
    %v6335 = vmul.f32 %v6141, %v6289
    %v6336 = vmul.f32 %v6146, %v6294
    %v6337 = vmul.f32 %v6151, %v6299
    %v6338 = vmul.f32 %v6156, %v6304
    %v6339 = vmul.f32 %v6161, %v6309
    %v6340 = vmul.f32 %v6166, %v6314
    %v6341 = vmul.f32 %v6171, %v6319
    %v6342 = vmul.f32 %v6176, %v6324
    %v6344 = vsel %vm523, %v415, 0
    %6346 = vmatprep.subr.mxu0 0.0
    %6347 = vmatpush1.msra.mxu0 %v6344
    %6348 = vmatprep.subr.mxu0 0.0
    %6349 = vmatpush1.msra.mxu0 0.0
    %6350 = vmatprep.subr.mxu0 0.0
    %6351 = vmatpush1.msra.mxu0 0.0
    %6352 = vmatprep.subr.mxu0 0.0
    %6353 = vmatpush1.msra.mxu0 0.0
    %6354 = vmatprep.subr.mxu0 0.0
    %6355 = vmatpush1.msra.mxu0 0.0
    %6356 = vmatprep.subr.mxu0 0.0
    %6357 = vmatpush1.msra.mxu0 0.0
    %6358 = vmatprep.subr.mxu0 0.0
    %6359 = vmatpush1.msra.mxu0 0.0
    %6360 = vmatprep.subr.mxu0 0.0
    %6361 = vmatpush1.msra.mxu0 0.0
    %6362 = vmatprep.subr.mxu0 0.0
    %6363 = vmatpush1.msra.mxu0 0.0
    %6364 = vmatprep.subr.mxu0 0.0
    %6365 = vmatpush1.msra.mxu0 0.0
    %6366 = vmatprep.subr.mxu0 0.0
    %6367 = vmatpush1.msra.mxu0 0.0
    %6368 = vmatprep.subr.mxu0 0.0
    %6369 = vmatpush1.msra.mxu0 0.0
    %6370 = vmatprep.subr.mxu0 0.0
    %6371 = vmatpush1.msra.mxu0 0.0
    %6372 = vmatprep.subr.mxu0 0.0
    %6373 = vmatpush1.msra.mxu0 0.0
    %6374 = vmatprep.subr.mxu0 0.0
    %6375 = vmatpush1.msra.mxu0 0.0
    %6376 = vmatprep.subr.mxu0 0.0
    %6377 = vmatpush1.msra.mxu0 0.0
    %6378 = vmatprep.subr.mxu0 0.0
    %6379 = vmatpush1.msra.mxu0 0.0
    %6380 = vmatprep.subr.mxu0 0.0
    %6381 = vmatpush1.msra.mxu0 0.0
    %6382 = vmatprep.subr.mxu0 0.0
    %6383 = vmatpush1.msra.mxu0 0.0
    %6384 = vmatprep.subr.mxu0 0.0
    %6385 = vmatpush1.msra.mxu0 0.0
    %6386 = vmatprep.subr.mxu0 0.0
    %6387 = vmatpush1.msra.mxu0 0.0
    %6388 = vmatprep.subr.mxu0 0.0
    %6389 = vmatpush1.msra.mxu0 0.0
    %6390 = vmatprep.subr.mxu0 0.0
    %6391 = vmatpush1.msra.mxu0 0.0
    %6392 = vmatprep.subr.mxu0 0.0
    %6393 = vmatpush1.msra.mxu0 0.0
    %6394 = vmatprep.subr.mxu0 0.0
    %6395 = vmatpush1.msra.mxu0 0.0
    %6396 = vmatprep.subr.mxu0 0.0
    %6397 = vmatpush1.msra.mxu0 0.0
    %6398 = vmatprep.subr.mxu0 0.0
    %6399 = vmatpush1.msra.mxu0 0.0
    %6400 = vmatprep.subr.mxu0 0.0
    %6401 = vmatpush1.msra.mxu0 0.0
    %6402 = vmatprep.subr.mxu0 0.0
    %6403 = vmatpush1.msra.mxu0 0.0
    %6404 = vmatprep.subr.mxu0 0.0
    %6405 = vmatpush1.msra.mxu0 0.0
    %6406 = vmatprep.subr.mxu0 0.0
    %6407 = vmatpush1.msra.mxu0 0.0
    %6408 = vmatprep.subr.mxu0 0.0
    %6409 = vmatpush1.msra.mxu0 0.0
    %6410 = vmatprep.mubr.f32.mxu0 0.0
    %6411 = vmatmul.mubr.f32.gmra.mrb[0].mxu0 %v885
    %v6412 = vpop.f32.mrb[0].mxu0
    %v6413 = vadd.f32 0.0, %v6412
    %v6414 = vpop.f32.mrb[0].mxu0
    %6415 = vmatprep.mubr.f32.mxu0 0.0
    %6416 = vmatmul.mubr.f32.gmra.mrb[0].mxu0 %v888
    %v6417 = vpop.f32.mrb[0].mxu0
    %v6418 = vadd.f32 0.0, %v6417
    %v6419 = vpop.f32.mrb[0].mxu0
    %6420 = vmatprep.mubr.f32.mxu0 0.0
    %6421 = vmatmul.mubr.f32.gmra.mrb[0].mxu0 %v891
    %v6422 = vpop.f32.mrb[0].mxu0
    %v6423 = vadd.f32 0.0, %v6422
    %v6424 = vpop.f32.mrb[0].mxu0
    %6425 = vmatprep.mubr.f32.mxu0 0.0
    %6426 = vmatmul.mubr.f32.gmra.mrb[0].mxu0 %v894
    %v6427 = vpop.f32.mrb[0].mxu0
    %v6428 = vadd.f32 0.0, %v6427
    %v6429 = vpop.f32.mrb[0].mxu0
    %6430 = vmatprep.mubr.f32.mxu0 0.0
    %6431 = vmatmul.mubr.f32.gmra.mrb[0].mxu0 %v897
    %v6432 = vpop.f32.mrb[0].mxu0
    %v6433 = vadd.f32 0.0, %v6432
    %v6434 = vpop.f32.mrb[0].mxu0
    %6435 = vmatprep.mubr.f32.mxu0 0.0
    %6436 = vmatmul.mubr.f32.gmra.mrb[0].mxu0 %v900
    %v6437 = vpop.f32.mrb[0].mxu0
    %v6438 = vadd.f32 0.0, %v6437
    %v6439 = vpop.f32.mrb[0].mxu0
    %6440 = vmatprep.mubr.f32.mxu0 0.0
    %6441 = vmatmul.mubr.f32.gmra.mrb[0].mxu0 %v903
    %v6442 = vpop.f32.mrb[0].mxu0
    %v6443 = vadd.f32 0.0, %v6442
    %v6444 = vpop.f32.mrb[0].mxu0
    %6445 = vmatprep.mubr.f32.mxu0 0.0
    %6446 = vmatmul.mubr.f32.gmra.mrb[0].mxu0 %v906
    %v6447 = vpop.f32.mrb[0].mxu0
    %v6448 = vadd.f32 0.0, %v6447
    %v6449 = vpop.f32.mrb[0].mxu0
    %6450 = vmatprep.mubr.f32.mxu0 0.0
    %6451 = vmatmul.mubr.f32.gmra.mrb[0].mxu0 %v909
    %v6452 = vpop.f32.mrb[0].mxu0
    %v6453 = vadd.f32 0.0, %v6452
    %v6454 = vpop.f32.mrb[0].mxu0
    %6455 = vmatprep.mubr.f32.mxu0 0.0
    %6456 = vmatmul.mubr.f32.gmra.mrb[0].mxu0 %v912
    %v6457 = vpop.f32.mrb[0].mxu0
    %v6458 = vadd.f32 0.0, %v6457
    %v6459 = vpop.f32.mrb[0].mxu0
    %6460 = vmatprep.mubr.f32.mxu0 0.0
    %6461 = vmatmul.mubr.f32.gmra.mrb[0].mxu0 %v915
    %v6462 = vpop.f32.mrb[0].mxu0
    %v6463 = vadd.f32 0.0, %v6462
    %v6464 = vpop.f32.mrb[0].mxu0
    %6465 = vmatprep.mubr.f32.mxu0 0.0
    %6466 = vmatmul.mubr.f32.gmra.mrb[0].mxu0 %v918
    %v6467 = vpop.f32.mrb[0].mxu0
    %v6468 = vadd.f32 0.0, %v6467
    %v6469 = vpop.f32.mrb[0].mxu0
    %6470 = vmatprep.mubr.f32.mxu0 0.0
    %6471 = vmatmul.mubr.f32.gmra.mrb[0].mxu0 %v921
    %v6472 = vpop.f32.mrb[0].mxu0
    %v6473 = vadd.f32 0.0, %v6472
    %v6474 = vpop.f32.mrb[0].mxu0
    %6475 = vmatprep.mubr.f32.mxu0 0.0
    %6476 = vmatmul.mubr.f32.gmra.mrb[0].mxu0 %v924
    %v6477 = vpop.f32.mrb[0].mxu0
    %v6478 = vadd.f32 0.0, %v6477
    %v6479 = vpop.f32.mrb[0].mxu0
    %6480 = vmatprep.mubr.f32.mxu0 0.0
    %6481 = vmatmul.mubr.f32.gmra.mrb[0].mxu0 %v927
    %v6482 = vpop.f32.mrb[0].mxu0
    %v6483 = vadd.f32 0.0, %v6482
    %v6484 = vpop.f32.mrb[0].mxu0
    %6485 = vmatprep.mubr.f32.mxu0 0.0
    %6486 = vmatmul.mubr.f32.gmra.mrb[0].mxu0 %v930
    %v6487 = vpop.f32.mrb[0].mxu0
    %v6488 = vadd.f32 0.0, %v6487
    %v6489 = vpop.f32.mrb[0].mxu0
    %6490 = vdwg.mxu0
    %v6491 = vmul.f32 %v6327, %v6413
    %v6492 = vmul.f32 %v6328, %v6418
    %v6493 = vmul.f32 %v6329, %v6423
    %v6494 = vmul.f32 %v6330, %v6428
    %v6495 = vmul.f32 %v6331, %v6433
    %v6496 = vmul.f32 %v6332, %v6438
    %v6497 = vmul.f32 %v6333, %v6443
    %v6498 = vmul.f32 %v6334, %v6448
    %v6499 = vmul.f32 %v6335, %v6453
    %v6500 = vmul.f32 %v6336, %v6458
    %v6501 = vmul.f32 %v6337, %v6463
    %v6502 = vmul.f32 %v6338, %v6468
    %v6503 = vmul.f32 %v6339, %v6473
    %v6504 = vmul.f32 %v6340, %v6478
    %v6505 = vmul.f32 %v6341, %v6483
    %v6506 = vmul.f32 %v6342, %v6488
    %v6507 = vld [vmem:[#allocation2] sm:$0xff]
    %v6508 = vld [vmem:[#allocation2 + $0x8] sm:$0xff]
    %v6509 = vld [vmem:[#allocation2 + $0x10] sm:$0xff]
    %v6510 = vld [vmem:[#allocation2 + $0x18] sm:$0xff]
    %v6511 = vld [vmem:[#allocation2 + $0x20] sm:$0xff]
    %v6512 = vld [vmem:[#allocation2 + $0x28] sm:$0xff]
    %v6513 = vld [vmem:[#allocation2 + $0x30] sm:$0xff]
    %v6514 = vld [vmem:[#allocation2 + $0x38] sm:$0xff]
    %v6515 = vld [vmem:[#allocation2 + $0x40] sm:$0xff]
    %v6516 = vld [vmem:[#allocation2 + $0x48] sm:$0xff]
    %v6517 = vld [vmem:[#allocation2 + $0x50] sm:$0xff]
    %v6518 = vld [vmem:[#allocation2 + $0x58] sm:$0xff]
    %v6519 = vld [vmem:[#allocation2 + $0x60] sm:$0xff]
    %v6520 = vld [vmem:[#allocation2 + $0x68] sm:$0xff]
    %v6521 = vld [vmem:[#allocation2 + $0x70] sm:$0xff]
    %v6522 = vld [vmem:[#allocation2 + $0x78] sm:$0xff]
    %v6524 = vsel %vm1112, %v6491, 0
    %v6527 = vsel %vm1112, %v6492, 0
    %v6530 = vsel %vm1112, %v6493, 0
    %v6533 = vsel %vm1112, %v6494, 0
    %v6536 = vsel %vm1112, %v6495, 0
    %v6539 = vsel %vm1112, %v6496, 0
    %v6542 = vsel %vm1112, %v6497, 0
    %v6545 = vsel %vm1112, %v6498, 0
    %v6548 = vsel %vm1112, %v6499, 0
    %v6551 = vsel %vm1112, %v6500, 0
    %v6554 = vsel %vm1112, %v6501, 0
    %v6557 = vsel %vm1112, %v6502, 0
    %v6560 = vsel %vm1112, %v6503, 0
    %v6563 = vsel %vm1112, %v6504, 0
    %v6566 = vsel %vm1112, %v6505, 0
    %v6569 = vsel %vm1112, %v6506, 0
    %6571 = vmatprep.subr.mxu0 0.0
    %6572 = vmatpush1.msra.mxu0 %v466
    %6573 = vmatprep.subr.mxu0 0.0
    %6574 = vmatpush1.msra.mxu0 %v467
    %6575 = vmatprep.subr.mxu0 0.0
    %6576 = vmatpush1.msra.mxu0 %v468
    %6577 = vmatprep.subr.mxu0 0.0
    %6578 = vmatpush1.msra.mxu0 %v469
    %6579 = vmatprep.subr.mxu0 0.0
    %6580 = vmatpush1.msra.mxu0 %v470
    %6581 = vmatprep.subr.mxu0 0.0
    %6582 = vmatpush1.msra.mxu0 %v471
    %6583 = vmatprep.subr.mxu0 0.0
    %6584 = vmatpush1.msra.mxu0 %v472
    %6585 = vmatprep.subr.mxu0 0.0
    %6586 = vmatpush1.msra.mxu0 %v473
    %6587 = vmatprep.subr.mxu0 0.0
    %6588 = vmatpush1.msra.mxu0 0.0
    %6589 = vmatprep.subr.mxu0 0.0
    %6590 = vmatpush1.msra.mxu0 0.0
    %6591 = vmatprep.subr.mxu0 0.0
    %6592 = vmatpush1.msra.mxu0 0.0
    %6593 = vmatprep.subr.mxu0 0.0
    %6594 = vmatpush1.msra.mxu0 0.0
    %6595 = vmatprep.subr.mxu0 0.0
    %6596 = vmatpush1.msra.mxu0 0.0
    %6597 = vmatprep.subr.mxu0 0.0
    %6598 = vmatpush1.msra.mxu0 0.0
    %6599 = vmatprep.subr.mxu0 0.0
    %6600 = vmatpush1.msra.mxu0 0.0
    %6601 = vmatprep.subr.mxu0 0.0
    %6602 = vmatpush1.msra.mxu0 0.0
    %6603 = vmatprep.subr.mxu0 0.0
    %6604 = vmatpush1.msra.mxu0 0.0
    %6605 = vmatprep.subr.mxu0 0.0
    %6606 = vmatpush1.msra.mxu0 0.0
    %6607 = vmatprep.subr.mxu0 0.0
    %6608 = vmatpush1.msra.mxu0 0.0
    %6609 = vmatprep.subr.mxu0 0.0
    %6610 = vmatpush1.msra.mxu0 0.0
    %6611 = vmatprep.subr.mxu0 0.0
    %6612 = vmatpush1.msra.mxu0 0.0
    %6613 = vmatprep.subr.mxu0 0.0
    %6614 = vmatpush1.msra.mxu0 0.0
    %6615 = vmatprep.subr.mxu0 0.0
    %6616 = vmatpush1.msra.mxu0 0.0
    %6617 = vmatprep.subr.mxu0 0.0
    %6618 = vmatpush1.msra.mxu0 0.0
    %6619 = vmatprep.subr.mxu0 0.0
    %6620 = vmatpush1.msra.mxu0 0.0
    %6621 = vmatprep.subr.mxu0 0.0
    %6622 = vmatpush1.msra.mxu0 0.0
    %6623 = vmatprep.subr.mxu0 0.0
    %6624 = vmatpush1.msra.mxu0 0.0
    %6625 = vmatprep.subr.mxu0 0.0
    %6626 = vmatpush1.msra.mxu0 0.0
    %6627 = vmatprep.subr.mxu0 0.0
    %6628 = vmatpush1.msra.mxu0 0.0
    %6629 = vmatprep.subr.mxu0 0.0
    %6630 = vmatpush1.msra.mxu0 0.0
    %6631 = vmatprep.subr.mxu0 0.0
    %6632 = vmatpush1.msra.mxu0 0.0
    %6633 = vmatprep.subr.mxu0 0.0
    %6634 = vmatpush1.msra.mxu0 0.0
    %6635 = vmatprep.mubr.f32.mxu0 0.0
    %6636 = vmatmul.mubr.f32.gmra.mrb[0].mxu0 %v6524
    %v6637 = vpop.f32.mrb[0].mxu0
    %v6638 = vadd.f32 0.0, %v6637
    %v6639 = vpop.f32.mrb[0].mxu0
    %6640 = vmatprep.mubr.f32.mxu0 0.0
    %6641 = vmatmul.mubr.f32.gmra.mrb[0].mxu0 %v6527
    %v6642 = vpop.f32.mrb[0].mxu0
    %v6643 = vadd.f32 0.0, %v6642
    %v6644 = vpop.f32.mrb[0].mxu0
    %6645 = vmatprep.mubr.f32.mxu0 0.0
    %6646 = vmatmul.mubr.f32.gmra.mrb[0].mxu0 %v6530
    %v6647 = vpop.f32.mrb[0].mxu0
    %v6648 = vadd.f32 0.0, %v6647
    %v6649 = vpop.f32.mrb[0].mxu0
    %6650 = vmatprep.mubr.f32.mxu0 0.0
    %6651 = vmatmul.mubr.f32.gmra.mrb[0].mxu0 %v6533
    %v6652 = vpop.f32.mrb[0].mxu0
    %v6653 = vadd.f32 0.0, %v6652
    %v6654 = vpop.f32.mrb[0].mxu0
    %6655 = vmatprep.mubr.f32.mxu0 0.0
    %6656 = vmatmul.mubr.f32.gmra.mrb[0].mxu0 %v6536
    %v6657 = vpop.f32.mrb[0].mxu0
    %v6658 = vadd.f32 0.0, %v6657
    %v6659 = vpop.f32.mrb[0].mxu0
    %6660 = vmatprep.mubr.f32.mxu0 0.0
    %6661 = vmatmul.mubr.f32.gmra.mrb[0].mxu0 %v6539
    %v6662 = vpop.f32.mrb[0].mxu0
    %v6663 = vadd.f32 0.0, %v6662
    %v6664 = vpop.f32.mrb[0].mxu0
    %6665 = vmatprep.mubr.f32.mxu0 0.0
    %6666 = vmatmul.mubr.f32.gmra.mrb[0].mxu0 %v6542
    %v6667 = vpop.f32.mrb[0].mxu0
    %v6668 = vadd.f32 0.0, %v6667
    %v6669 = vpop.f32.mrb[0].mxu0
    %6670 = vmatprep.mubr.f32.mxu0 0.0
    %6671 = vmatmul.mubr.f32.gmra.mrb[0].mxu0 %v6545
    %v6672 = vpop.f32.mrb[0].mxu0
    %v6673 = vadd.f32 0.0, %v6672
    %v6674 = vpop.f32.mrb[0].mxu0
    %6675 = vmatprep.mubr.f32.mxu0 0.0
    %6676 = vmatmul.mubr.f32.gmra.mrb[0].mxu0 %v6548
    %v6677 = vpop.f32.mrb[0].mxu0
    %v6678 = vadd.f32 0.0, %v6677
    %v6679 = vpop.f32.mrb[0].mxu0
    %6680 = vmatprep.mubr.f32.mxu0 0.0
    %6681 = vmatmul.mubr.f32.gmra.mrb[0].mxu0 %v6551
    %v6682 = vpop.f32.mrb[0].mxu0
    %v6683 = vadd.f32 0.0, %v6682
    %v6684 = vpop.f32.mrb[0].mxu0
    %6685 = vmatprep.mubr.f32.mxu0 0.0
    %6686 = vmatmul.mubr.f32.gmra.mrb[0].mxu0 %v6554
    %v6687 = vpop.f32.mrb[0].mxu0
    %v6688 = vadd.f32 0.0, %v6687
    %v6689 = vpop.f32.mrb[0].mxu0
    %6690 = vmatprep.mubr.f32.mxu0 0.0
    %6691 = vmatmul.mubr.f32.gmra.mrb[0].mxu0 %v6557
    %v6692 = vpop.f32.mrb[0].mxu0
    %v6693 = vadd.f32 0.0, %v6692
    %v6694 = vpop.f32.mrb[0].mxu0
    %6695 = vmatprep.mubr.f32.mxu0 0.0
    %6696 = vmatmul.mubr.f32.gmra.mrb[0].mxu0 %v6560
    %v6697 = vpop.f32.mrb[0].mxu0
    %v6698 = vadd.f32 0.0, %v6697
    %v6699 = vpop.f32.mrb[0].mxu0
    %6700 = vmatprep.mubr.f32.mxu0 0.0
    %6701 = vmatmul.mubr.f32.gmra.mrb[0].mxu0 %v6563
    %v6702 = vpop.f32.mrb[0].mxu0
    %v6703 = vadd.f32 0.0, %v6702
    %v6704 = vpop.f32.mrb[0].mxu0
    %6705 = vmatprep.mubr.f32.mxu0 0.0
    %6706 = vmatmul.mubr.f32.gmra.mrb[0].mxu0 %v6566
    %v6707 = vpop.f32.mrb[0].mxu0
    %v6708 = vadd.f32 0.0, %v6707
    %v6709 = vpop.f32.mrb[0].mxu0
    %6710 = vmatprep.mubr.f32.mxu0 0.0
    %6711 = vmatmul.mubr.f32.gmra.mrb[0].mxu0 %v6569
    %v6712 = vpop.f32.mrb[0].mxu0
    %v6713 = vadd.f32 0.0, %v6712
    %v6714 = vpop.f32.mrb[0].mxu0
    %6715 = vdwg.mxu0
    %6732 = vrot.lane.b32.xlu0 %v6638, 7
    %v6733 = vpop.permute.xlu0 %6732
    %6734 = vrot.lane.b32.xlu0 %v6643, 7
    %v6735 = vpop.permute.xlu0 %6734
    %6736 = vrot.lane.b32.xlu0 %v6648, 7
    %v6737 = vpop.permute.xlu0 %6736
    %6738 = vrot.lane.b32.xlu0 %v6653, 7
    %v6739 = vpop.permute.xlu0 %6738
    %6740 = vrot.lane.b32.xlu0 %v6658, 7
    %v6741 = vpop.permute.xlu0 %6740
    %6742 = vrot.lane.b32.xlu0 %v6663, 7
    %v6743 = vpop.permute.xlu0 %6742
    %6744 = vrot.lane.b32.xlu0 %v6668, 7
    %v6745 = vpop.permute.xlu0 %6744
    %6746 = vrot.lane.b32.xlu0 %v6673, 7
    %v6747 = vpop.permute.xlu0 %6746
    %6748 = vrot.lane.b32.xlu0 %v6678, 7
    %v6749 = vpop.permute.xlu0 %6748
    %6750 = vrot.lane.b32.xlu0 %v6683, 7
    %v6751 = vpop.permute.xlu0 %6750
    %6752 = vrot.lane.b32.xlu0 %v6688, 7
    %v6753 = vpop.permute.xlu0 %6752
    %6754 = vrot.lane.b32.xlu0 %v6693, 7
    %v6755 = vpop.permute.xlu0 %6754
    %6756 = vrot.lane.b32.xlu0 %v6698, 7
    %v6757 = vpop.permute.xlu0 %6756
    %6758 = vrot.lane.b32.xlu0 %v6703, 7
    %v6759 = vpop.permute.xlu0 %6758
    %6760 = vrot.lane.b32.xlu0 %v6708, 7
    %v6761 = vpop.permute.xlu0 %6760
    %6762 = vrot.lane.b32.xlu0 %v6713, 7
    %v6763 = vpop.permute.xlu0 %6762
    %v6780 = vadd.f32 %v6507, %v6733
    %v6781 = vadd.f32 %v6508, %v6735
    %v6782 = vadd.f32 %v6509, %v6737
    %v6783 = vadd.f32 %v6510, %v6739
    %v6784 = vadd.f32 %v6511, %v6741
    %v6785 = vadd.f32 %v6512, %v6743
    %v6786 = vadd.f32 %v6513, %v6745
    %v6787 = vadd.f32 %v6514, %v6747
    %v6788 = vadd.f32 %v6515, %v6749
    %v6789 = vadd.f32 %v6516, %v6751
    %v6790 = vadd.f32 %v6517, %v6753
    %v6791 = vadd.f32 %v6518, %v6755
    %v6792 = vadd.f32 %v6519, %v6757
    %v6793 = vadd.f32 %v6520, %v6759
    %v6794 = vadd.f32 %v6521, %v6761
    %v6795 = vadd.f32 %v6522, %v6763
    %vm6796 = vcmask 64568
    %6797 = vst.msk [vmem:[#allocation2] sm:$0xff] %vm6796, %v6780
    %6798 = vst.msk [vmem:[#allocation2 + $0x8] sm:$0xff] %vm6796, %v6781
    %6799 = vst.msk [vmem:[#allocation2 + $0x10] sm:$0xff] %vm6796, %v6782
    %6800 = vst.msk [vmem:[#allocation2 + $0x18] sm:$0xff] %vm6796, %v6783
    %6801 = vst.msk [vmem:[#allocation2 + $0x20] sm:$0xff] %vm6796, %v6784
    %6802 = vst.msk [vmem:[#allocation2 + $0x28] sm:$0xff] %vm6796, %v6785
    %6803 = vst.msk [vmem:[#allocation2 + $0x30] sm:$0xff] %vm6796, %v6786
    %6804 = vst.msk [vmem:[#allocation2 + $0x38] sm:$0xff] %vm6796, %v6787
    %6805 = vst.msk [vmem:[#allocation2 + $0x40] sm:$0xff] %vm6796, %v6788
    %6806 = vst.msk [vmem:[#allocation2 + $0x48] sm:$0xff] %vm6796, %v6789
    %6807 = vst.msk [vmem:[#allocation2 + $0x50] sm:$0xff] %vm6796, %v6790
    %6808 = vst.msk [vmem:[#allocation2 + $0x58] sm:$0xff] %vm6796, %v6791
    %6809 = vst.msk [vmem:[#allocation2 + $0x60] sm:$0xff] %vm6796, %v6792
    %6810 = vst.msk [vmem:[#allocation2 + $0x68] sm:$0xff] %vm6796, %v6793
    %6811 = vst.msk [vmem:[#allocation2 + $0x70] sm:$0xff] %vm6796, %v6794
    %6812 = vst.msk [vmem:[#allocation2 + $0x78] sm:$0xff] %vm6796, %v6795
    // Predicated region
    $region50: #{tpu_custom_call.1} parent=1 // pred_check
      %p6813 = pneg %p39
    $region51: #{tpu_custom_call.1} parent=1 // pred_check_branch
      %6815 = sbr.rel (%p6813) target = $region53
    $region52: #{tpu_custom_call.1} parent=1 // pred_region
      %v6816 = vld [vmem:[#allocation2] sm:$0xff]
      %v6817 = vld [vmem:[#allocation2 + $0x8] sm:$0xff]
      %v6818 = vld [vmem:[#allocation2 + $0x10] sm:$0xff]
      %v6819 = vld [vmem:[#allocation2 + $0x18] sm:$0xff]
      %v6820 = vld [vmem:[#allocation2 + $0x20] sm:$0xff]
      %v6821 = vld [vmem:[#allocation2 + $0x28] sm:$0xff]
      %v6822 = vld [vmem:[#allocation2 + $0x30] sm:$0xff]
      %v6823 = vld [vmem:[#allocation2 + $0x38] sm:$0xff]
      %v6824 = vld [vmem:[#allocation2 + $0x40] sm:$0xff]
      %v6825 = vld [vmem:[#allocation2 + $0x48] sm:$0xff]
      %v6826 = vld [vmem:[#allocation2 + $0x50] sm:$0xff]
      %v6827 = vld [vmem:[#allocation2 + $0x58] sm:$0xff]
      %v6828 = vld [vmem:[#allocation2 + $0x60] sm:$0xff]
      %v6829 = vld [vmem:[#allocation2 + $0x68] sm:$0xff]
      %v6830 = vld [vmem:[#allocation2 + $0x70] sm:$0xff]
      %v6831 = vld [vmem:[#allocation2 + $0x78] sm:$0xff]
      %v6832 = vld [vmem:[%s3] sm:$0xff]
      %v6833 = vld [vmem:[%s3 + $0x8] sm:$0xff]
      %v6834 = vld [vmem:[%s3 + $0x10] sm:$0xff]
      %v6835 = vld [vmem:[%s3 + $0x18] sm:$0xff]
      %v6836 = vld [vmem:[%s3 + $0x20] sm:$0xff]
      %v6837 = vld [vmem:[%s3 + $0x28] sm:$0xff]
      %v6838 = vld [vmem:[%s3 + $0x30] sm:$0xff]
      %v6839 = vld [vmem:[%s3 + $0x38] sm:$0xff]
      %v6840 = vld [vmem:[%s3 + $0x40] sm:$0xff]
      %v6841 = vld [vmem:[%s3 + $0x48] sm:$0xff]
      %v6842 = vld [vmem:[%s3 + $0x50] sm:$0xff]
      %v6843 = vld [vmem:[%s3 + $0x58] sm:$0xff]
      %v6844 = vld [vmem:[%s3 + $0x60] sm:$0xff]
      %v6845 = vld [vmem:[%s3 + $0x68] sm:$0xff]
      %v6846 = vld [vmem:[%s3 + $0x70] sm:$0xff]
      %v6847 = vld [vmem:[%s3 + $0x78] sm:$0xff]
      %v6848 = vld [vmem:[%s4] sm:$0xff]
      %v6849 = vld [vmem:[%s4 + $0x8] sm:$0xff]
      %v6850 = vld [vmem:[%s4 + $0x10] sm:$0xff]
      %v6851 = vld [vmem:[%s4 + $0x18] sm:$0xff]
      %v6852 = vld [vmem:[%s4 + $0x20] sm:$0xff]
      %v6853 = vld [vmem:[%s4 + $0x28] sm:$0xff]
      %v6854 = vld [vmem:[%s4 + $0x30] sm:$0xff]
      %v6855 = vld [vmem:[%s4 + $0x38] sm:$0xff]
      %v6856 = vld [vmem:[%s4 + $0x40] sm:$0xff]
      %v6857 = vld [vmem:[%s4 + $0x48] sm:$0xff]
      %v6858 = vld [vmem:[%s4 + $0x50] sm:$0xff]
      %v6859 = vld [vmem:[%s4 + $0x58] sm:$0xff]
      %v6860 = vld [vmem:[%s4 + $0x60] sm:$0xff]
      %v6861 = vld [vmem:[%s4 + $0x68] sm:$0xff]
      %v6862 = vld [vmem:[%s4 + $0x70] sm:$0xff]
      %v6863 = vld [vmem:[%s4 + $0x78] sm:$0xff]
      %6865 = vset.pattern.permute.xlu0 0
      %6866 = vperm.xlu0 %6865, %v6848
      %v6867 = vpop.permute.xlu0 %6866
      %6870 = vset.pattern.permute.xlu0 0
      %6871 = vperm.xlu0 %6870, %v6849
      %v6872 = vpop.permute.xlu0 %6871
      %6875 = vset.pattern.permute.xlu0 0
      %6876 = vperm.xlu0 %6875, %v6850
      %v6877 = vpop.permute.xlu0 %6876
      %6880 = vset.pattern.permute.xlu0 0
      %6881 = vperm.xlu0 %6880, %v6851
      %v6882 = vpop.permute.xlu0 %6881
      %6885 = vset.pattern.permute.xlu0 0
      %6886 = vperm.xlu0 %6885, %v6852
      %v6887 = vpop.permute.xlu0 %6886
      %6890 = vset.pattern.permute.xlu0 0
      %6891 = vperm.xlu0 %6890, %v6853
      %v6892 = vpop.permute.xlu0 %6891
      %6895 = vset.pattern.permute.xlu0 0
      %6896 = vperm.xlu0 %6895, %v6854
      %v6897 = vpop.permute.xlu0 %6896
      %6900 = vset.pattern.permute.xlu0 0
      %6901 = vperm.xlu0 %6900, %v6855
      %v6902 = vpop.permute.xlu0 %6901
      %6905 = vset.pattern.permute.xlu0 0
      %6906 = vperm.xlu0 %6905, %v6856
      %v6907 = vpop.permute.xlu0 %6906
      %6910 = vset.pattern.permute.xlu0 0
      %6911 = vperm.xlu0 %6910, %v6857
      %v6912 = vpop.permute.xlu0 %6911
      %6915 = vset.pattern.permute.xlu0 0
      %6916 = vperm.xlu0 %6915, %v6858
      %v6917 = vpop.permute.xlu0 %6916
      %6920 = vset.pattern.permute.xlu0 0
      %6921 = vperm.xlu0 %6920, %v6859
      %v6922 = vpop.permute.xlu0 %6921
      %6925 = vset.pattern.permute.xlu0 0
      %6926 = vperm.xlu0 %6925, %v6860
      %v6927 = vpop.permute.xlu0 %6926
      %6930 = vset.pattern.permute.xlu0 0
      %6931 = vperm.xlu0 %6930, %v6861
      %v6932 = vpop.permute.xlu0 %6931
      %6935 = vset.pattern.permute.xlu0 0
      %6936 = vperm.xlu0 %6935, %v6862
      %v6937 = vpop.permute.xlu0 %6936
      %6940 = vset.pattern.permute.xlu0 0
      %6941 = vperm.xlu0 %6940, %v6863
      %v6942 = vpop.permute.xlu0 %6941
      %6944 = vmatprep.subr.mxu0 0.0
      %6945 = vmatpush1.msra.mxu0 %v6816
      %6946 = vmatprep.subr.mxu0 0.0
      %6947 = vmatpush1.msra.mxu0 %v6817
      %6948 = vmatprep.subr.mxu0 0.0
      %6949 = vmatpush1.msra.mxu0 %v6818
      %6950 = vmatprep.subr.mxu0 0.0
      %6951 = vmatpush1.msra.mxu0 %v6819
      %6952 = vmatprep.subr.mxu0 0.0
      %6953 = vmatpush1.msra.mxu0 %v6820
      %6954 = vmatprep.subr.mxu0 0.0
      %6955 = vmatpush1.msra.mxu0 %v6821
      %6956 = vmatprep.subr.mxu0 0.0
      %6957 = vmatpush1.msra.mxu0 %v6822
      %6958 = vmatprep.subr.mxu0 0.0
      %6959 = vmatpush1.msra.mxu0 %v6823
      %6960 = vmatprep.subr.mxu0 0.0
      %6961 = vmatpush1.msra.mxu0 %v6824
      %6962 = vmatprep.subr.mxu0 0.0
      %6963 = vmatpush1.msra.mxu0 %v6825
      %6964 = vmatprep.subr.mxu0 0.0
      %6965 = vmatpush1.msra.mxu0 %v6826
      %6966 = vmatprep.subr.mxu0 0.0
      %6967 = vmatpush1.msra.mxu0 %v6827
      %6968 = vmatprep.subr.mxu0 0.0
      %6969 = vmatpush1.msra.mxu0 %v6828
      %6970 = vmatprep.subr.mxu0 0.0
      %6971 = vmatpush1.msra.mxu0 %v6829
      %6972 = vmatprep.subr.mxu0 0.0
      %6973 = vmatpush1.msra.mxu0 %v6830
      %6974 = vmatprep.subr.mxu0 0.0
      %6975 = vmatpush1.msra.mxu0 %v6831
      %6976 = vmatprep.subr.mxu0 0.0
      %6977 = vmatpush1.msra.mxu0 0.0
      %6978 = vmatprep.subr.mxu0 0.0
      %6979 = vmatpush1.msra.mxu0 0.0
      %6980 = vmatprep.subr.mxu0 0.0
      %6981 = vmatpush1.msra.mxu0 0.0
      %6982 = vmatprep.subr.mxu0 0.0
      %6983 = vmatpush1.msra.mxu0 0.0
      %6984 = vmatprep.subr.mxu0 0.0
      %6985 = vmatpush1.msra.mxu0 0.0
      %6986 = vmatprep.subr.mxu0 0.0
      %6987 = vmatpush1.msra.mxu0 0.0
      %6988 = vmatprep.subr.mxu0 0.0
      %6989 = vmatpush1.msra.mxu0 0.0
      %6990 = vmatprep.subr.mxu0 0.0
      %6991 = vmatpush1.msra.mxu0 0.0
      %6992 = vmatprep.subr.mxu0 0.0
      %6993 = vmatpush1.msra.mxu0 0.0
      %6994 = vmatprep.subr.mxu0 0.0
      %6995 = vmatpush1.msra.mxu0 0.0
      %6996 = vmatprep.subr.mxu0 0.0
      %6997 = vmatpush1.msra.mxu0 0.0
      %6998 = vmatprep.subr.mxu0 0.0
      %6999 = vmatpush1.msra.mxu0 0.0
      %7000 = vmatprep.subr.mxu0 0.0
      %7001 = vmatpush1.msra.mxu0 0.0
      %7002 = vmatprep.subr.mxu0 0.0
      %7003 = vmatpush1.msra.mxu0 0.0
      %7004 = vmatprep.subr.mxu0 0.0
      %7005 = vmatpush1.msra.mxu0 0.0
      %7006 = vmatprep.subr.mxu0 0.0
      %7007 = vmatpush1.msra.mxu0 0.0
      %7008 = vmatprep.mubr.f32.mxu0 0.0
      %7009 = vmatmul.mubr.f32.gmra.mrb[0].mxu0 %v6832
      %v7010 = vpop.f32.mrb[0].mxu0
      %v7011 = vadd.f32 %v6867, %v7010
      %v7012 = vpop.f32.mrb[0].mxu0
      %7013 = vmatprep.mubr.f32.mxu0 0.0
      %7014 = vmatmul.mubr.f32.gmra.mrb[0].mxu0 %v6833
      %v7015 = vpop.f32.mrb[0].mxu0
      %v7016 = vadd.f32 %v6872, %v7015
      %v7017 = vpop.f32.mrb[0].mxu0
      %7018 = vmatprep.mubr.f32.mxu0 0.0
      %7019 = vmatmul.mubr.f32.gmra.mrb[0].mxu0 %v6834
      %v7020 = vpop.f32.mrb[0].mxu0
      %v7021 = vadd.f32 %v6877, %v7020
      %v7022 = vpop.f32.mrb[0].mxu0
      %7023 = vmatprep.mubr.f32.mxu0 0.0
      %7024 = vmatmul.mubr.f32.gmra.mrb[0].mxu0 %v6835
      %v7025 = vpop.f32.mrb[0].mxu0
      %v7026 = vadd.f32 %v6882, %v7025
      %v7027 = vpop.f32.mrb[0].mxu0
      %7028 = vmatprep.mubr.f32.mxu0 0.0
      %7029 = vmatmul.mubr.f32.gmra.mrb[0].mxu0 %v6836
      %v7030 = vpop.f32.mrb[0].mxu0
      %v7031 = vadd.f32 %v6887, %v7030
      %v7032 = vpop.f32.mrb[0].mxu0
      %7033 = vmatprep.mubr.f32.mxu0 0.0
      %7034 = vmatmul.mubr.f32.gmra.mrb[0].mxu0 %v6837
      %v7035 = vpop.f32.mrb[0].mxu0
      %v7036 = vadd.f32 %v6892, %v7035
      %v7037 = vpop.f32.mrb[0].mxu0
      %7038 = vmatprep.mubr.f32.mxu0 0.0
      %7039 = vmatmul.mubr.f32.gmra.mrb[0].mxu0 %v6838
      %v7040 = vpop.f32.mrb[0].mxu0
      %v7041 = vadd.f32 %v6897, %v7040
      %v7042 = vpop.f32.mrb[0].mxu0
      %7043 = vmatprep.mubr.f32.mxu0 0.0
      %7044 = vmatmul.mubr.f32.gmra.mrb[0].mxu0 %v6839
      %v7045 = vpop.f32.mrb[0].mxu0
      %v7046 = vadd.f32 %v6902, %v7045
      %v7047 = vpop.f32.mrb[0].mxu0
      %7048 = vmatprep.mubr.f32.mxu0 0.0
      %7049 = vmatmul.mubr.f32.gmra.mrb[0].mxu0 %v6840
      %v7050 = vpop.f32.mrb[0].mxu0
      %v7051 = vadd.f32 %v6907, %v7050
      %v7052 = vpop.f32.mrb[0].mxu0
      %7053 = vmatprep.mubr.f32.mxu0 0.0
      %7054 = vmatmul.mubr.f32.gmra.mrb[0].mxu0 %v6841
      %v7055 = vpop.f32.mrb[0].mxu0
      %v7056 = vadd.f32 %v6912, %v7055
      %v7057 = vpop.f32.mrb[0].mxu0
      %7058 = vmatprep.mubr.f32.mxu0 0.0
      %7059 = vmatmul.mubr.f32.gmra.mrb[0].mxu0 %v6842
      %v7060 = vpop.f32.mrb[0].mxu0
      %v7061 = vadd.f32 %v6917, %v7060
      %v7062 = vpop.f32.mrb[0].mxu0
      %7063 = vmatprep.mubr.f32.mxu0 0.0
      %7064 = vmatmul.mubr.f32.gmra.mrb[0].mxu0 %v6843
      %v7065 = vpop.f32.mrb[0].mxu0
      %v7066 = vadd.f32 %v6922, %v7065
      %v7067 = vpop.f32.mrb[0].mxu0
      %7068 = vmatprep.mubr.f32.mxu0 0.0
      %7069 = vmatmul.mubr.f32.gmra.mrb[0].mxu0 %v6844
      %v7070 = vpop.f32.mrb[0].mxu0
      %v7071 = vadd.f32 %v6927, %v7070
      %v7072 = vpop.f32.mrb[0].mxu0
      %7073 = vmatprep.mubr.f32.mxu0 0.0
      %7074 = vmatmul.mubr.f32.gmra.mrb[0].mxu0 %v6845
      %v7075 = vpop.f32.mrb[0].mxu0
      %v7076 = vadd.f32 %v6932, %v7075
      %v7077 = vpop.f32.mrb[0].mxu0
      %7078 = vmatprep.mubr.f32.mxu0 0.0
      %7079 = vmatmul.mubr.f32.gmra.mrb[0].mxu0 %v6846
      %v7080 = vpop.f32.mrb[0].mxu0
      %v7081 = vadd.f32 %v6937, %v7080
      %v7082 = vpop.f32.mrb[0].mxu0
      %7083 = vmatprep.mubr.f32.mxu0 0.0
      %7084 = vmatmul.mubr.f32.gmra.mrb[0].mxu0 %v6847
      %v7085 = vpop.f32.mrb[0].mxu0
      %v7086 = vadd.f32 %v6942, %v7085
      %v7087 = vpop.f32.mrb[0].mxu0
      %7088 = vdwg.mxu0
      %v7089 = vmax.f32 %v7011, 0.0
      %v7090 = vmax.f32 %v7016, 0.0
      %v7091 = vmax.f32 %v7021, 0.0
      %v7092 = vmax.f32 %v7026, 0.0
      %v7093 = vmax.f32 %v7031, 0.0
      %v7094 = vmax.f32 %v7036, 0.0
      %v7095 = vmax.f32 %v7041, 0.0
      %v7096 = vmax.f32 %v7046, 0.0
      %v7097 = vmax.f32 %v7051, 0.0
      %v7098 = vmax.f32 %v7056, 0.0
      %v7099 = vmax.f32 %v7061, 0.0
      %v7100 = vmax.f32 %v7066, 0.0
      %v7101 = vmax.f32 %v7071, 0.0
      %v7102 = vmax.f32 %v7076, 0.0
      %v7103 = vmax.f32 %v7081, 0.0
      %v7104 = vmax.f32 %v7086, 0.0
      %v7105 = vld [vmem:[%s5] sm:$0xff]
      %v7106 = vld [vmem:[%s5 + $0x8] sm:$0xff]
      %v7107 = vld [vmem:[%s5 + $0x10] sm:$0xff]
      %v7108 = vld [vmem:[%s5 + $0x18] sm:$0xff]
      %v7109 = vld [vmem:[%s5 + $0x20] sm:$0xff]
      %v7110 = vld [vmem:[%s5 + $0x28] sm:$0xff]
      %v7111 = vld [vmem:[%s5 + $0x30] sm:$0xff]
      %v7112 = vld [vmem:[%s5 + $0x38] sm:$0xff]
      %v7113 = vld [vmem:[%s5 + $0x40] sm:$0xff]
      %v7114 = vld [vmem:[%s5 + $0x48] sm:$0xff]
      %v7115 = vld [vmem:[%s5 + $0x50] sm:$0xff]
      %v7116 = vld [vmem:[%s5 + $0x58] sm:$0xff]
      %v7117 = vld [vmem:[%s5 + $0x60] sm:$0xff]
      %v7118 = vld [vmem:[%s5 + $0x68] sm:$0xff]
      %v7119 = vld [vmem:[%s5 + $0x70] sm:$0xff]
      %v7120 = vld [vmem:[%s5 + $0x78] sm:$0xff]
      %v7121 = vld [vmem:[%s6] sm:$0xff]
      %v7122 = vld [vmem:[%s6 + $0x8] sm:$0xff]
      %v7123 = vld [vmem:[%s6 + $0x10] sm:$0xff]
      %v7124 = vld [vmem:[%s6 + $0x18] sm:$0xff]
      %v7125 = vld [vmem:[%s6 + $0x20] sm:$0xff]
      %v7126 = vld [vmem:[%s6 + $0x28] sm:$0xff]
      %v7127 = vld [vmem:[%s6 + $0x30] sm:$0xff]
      %v7128 = vld [vmem:[%s6 + $0x38] sm:$0xff]
      %v7129 = vld [vmem:[%s6 + $0x40] sm:$0xff]
      %v7130 = vld [vmem:[%s6 + $0x48] sm:$0xff]
      %v7131 = vld [vmem:[%s6 + $0x50] sm:$0xff]
      %v7132 = vld [vmem:[%s6 + $0x58] sm:$0xff]
      %v7133 = vld [vmem:[%s6 + $0x60] sm:$0xff]
      %v7134 = vld [vmem:[%s6 + $0x68] sm:$0xff]
      %v7135 = vld [vmem:[%s6 + $0x70] sm:$0xff]
      %v7136 = vld [vmem:[%s6 + $0x78] sm:$0xff]
      %7138 = vset.pattern.permute.xlu0 0
      %7139 = vperm.xlu0 %7138, %v7121
      %v7140 = vpop.permute.xlu0 %7139
      %7143 = vset.pattern.permute.xlu0 0
      %7144 = vperm.xlu0 %7143, %v7122
      %v7145 = vpop.permute.xlu0 %7144
      %7148 = vset.pattern.permute.xlu0 0
      %7149 = vperm.xlu0 %7148, %v7123
      %v7150 = vpop.permute.xlu0 %7149
      %7153 = vset.pattern.permute.xlu0 0
      %7154 = vperm.xlu0 %7153, %v7124
      %v7155 = vpop.permute.xlu0 %7154
      %7158 = vset.pattern.permute.xlu0 0
      %7159 = vperm.xlu0 %7158, %v7125
      %v7160 = vpop.permute.xlu0 %7159
      %7163 = vset.pattern.permute.xlu0 0
      %7164 = vperm.xlu0 %7163, %v7126
      %v7165 = vpop.permute.xlu0 %7164
      %7168 = vset.pattern.permute.xlu0 0
      %7169 = vperm.xlu0 %7168, %v7127
      %v7170 = vpop.permute.xlu0 %7169
      %7173 = vset.pattern.permute.xlu0 0
      %7174 = vperm.xlu0 %7173, %v7128
      %v7175 = vpop.permute.xlu0 %7174
      %7178 = vset.pattern.permute.xlu0 0
      %7179 = vperm.xlu0 %7178, %v7129
      %v7180 = vpop.permute.xlu0 %7179
      %7183 = vset.pattern.permute.xlu0 0
      %7184 = vperm.xlu0 %7183, %v7130
      %v7185 = vpop.permute.xlu0 %7184
      %7188 = vset.pattern.permute.xlu0 0
      %7189 = vperm.xlu0 %7188, %v7131
      %v7190 = vpop.permute.xlu0 %7189
      %7193 = vset.pattern.permute.xlu0 0
      %7194 = vperm.xlu0 %7193, %v7132
      %v7195 = vpop.permute.xlu0 %7194
      %7198 = vset.pattern.permute.xlu0 0
      %7199 = vperm.xlu0 %7198, %v7133
      %v7200 = vpop.permute.xlu0 %7199
      %7203 = vset.pattern.permute.xlu0 0
      %7204 = vperm.xlu0 %7203, %v7134
      %v7205 = vpop.permute.xlu0 %7204
      %7208 = vset.pattern.permute.xlu0 0
      %7209 = vperm.xlu0 %7208, %v7135
      %v7210 = vpop.permute.xlu0 %7209
      %7213 = vset.pattern.permute.xlu0 0
      %7214 = vperm.xlu0 %7213, %v7136
      %v7215 = vpop.permute.xlu0 %7214
      %7217 = vmatprep.subr.mxu0 0.0
      %7218 = vmatpush1.msra.mxu0 %v7089
      %7219 = vmatprep.subr.mxu0 0.0
      %7220 = vmatpush1.msra.mxu0 %v7090
      %7221 = vmatprep.subr.mxu0 0.0
      %7222 = vmatpush1.msra.mxu0 %v7091
      %7223 = vmatprep.subr.mxu0 0.0
      %7224 = vmatpush1.msra.mxu0 %v7092
      %7225 = vmatprep.subr.mxu0 0.0
      %7226 = vmatpush1.msra.mxu0 %v7093
      %7227 = vmatprep.subr.mxu0 0.0
      %7228 = vmatpush1.msra.mxu0 %v7094
      %7229 = vmatprep.subr.mxu0 0.0
      %7230 = vmatpush1.msra.mxu0 %v7095
      %7231 = vmatprep.subr.mxu0 0.0
      %7232 = vmatpush1.msra.mxu0 %v7096
      %7233 = vmatprep.subr.mxu0 0.0
      %7234 = vmatpush1.msra.mxu0 %v7097
      %7235 = vmatprep.subr.mxu0 0.0
      %7236 = vmatpush1.msra.mxu0 %v7098
      %7237 = vmatprep.subr.mxu0 0.0
      %7238 = vmatpush1.msra.mxu0 %v7099
      %7239 = vmatprep.subr.mxu0 0.0
      %7240 = vmatpush1.msra.mxu0 %v7100
      %7241 = vmatprep.subr.mxu0 0.0
      %7242 = vmatpush1.msra.mxu0 %v7101
      %7243 = vmatprep.subr.mxu0 0.0
      %7244 = vmatpush1.msra.mxu0 %v7102
      %7245 = vmatprep.subr.mxu0 0.0
      %7246 = vmatpush1.msra.mxu0 %v7103
      %7247 = vmatprep.subr.mxu0 0.0
      %7248 = vmatpush1.msra.mxu0 %v7104
      %7249 = vmatprep.subr.mxu0 0.0
      %7250 = vmatpush1.msra.mxu0 0.0
      %7251 = vmatprep.subr.mxu0 0.0
      %7252 = vmatpush1.msra.mxu0 0.0
      %7253 = vmatprep.subr.mxu0 0.0
      %7254 = vmatpush1.msra.mxu0 0.0
      %7255 = vmatprep.subr.mxu0 0.0
      %7256 = vmatpush1.msra.mxu0 0.0
      %7257 = vmatprep.subr.mxu0 0.0
      %7258 = vmatpush1.msra.mxu0 0.0
      %7259 = vmatprep.subr.mxu0 0.0
      %7260 = vmatpush1.msra.mxu0 0.0
      %7261 = vmatprep.subr.mxu0 0.0
      %7262 = vmatpush1.msra.mxu0 0.0
      %7263 = vmatprep.subr.mxu0 0.0
      %7264 = vmatpush1.msra.mxu0 0.0
      %7265 = vmatprep.subr.mxu0 0.0
      %7266 = vmatpush1.msra.mxu0 0.0
      %7267 = vmatprep.subr.mxu0 0.0
      %7268 = vmatpush1.msra.mxu0 0.0
      %7269 = vmatprep.subr.mxu0 0.0
      %7270 = vmatpush1.msra.mxu0 0.0
      %7271 = vmatprep.subr.mxu0 0.0
      %7272 = vmatpush1.msra.mxu0 0.0
      %7273 = vmatprep.subr.mxu0 0.0
      %7274 = vmatpush1.msra.mxu0 0.0
      %7275 = vmatprep.subr.mxu0 0.0
      %7276 = vmatpush1.msra.mxu0 0.0
      %7277 = vmatprep.subr.mxu0 0.0
      %7278 = vmatpush1.msra.mxu0 0.0
      %7279 = vmatprep.subr.mxu0 0.0
      %7280 = vmatpush1.msra.mxu0 0.0
      %7281 = vmatprep.mubr.f32.mxu0 0.0
      %7282 = vmatmul.mubr.f32.gmra.mrb[0].mxu0 %v7105
      %v7283 = vpop.f32.mrb[0].mxu0
      %v7284 = vadd.f32 %v7140, %v7283
      %v7285 = vpop.f32.mrb[0].mxu0
      %7286 = vmatprep.mubr.f32.mxu0 0.0
      %7287 = vmatmul.mubr.f32.gmra.mrb[0].mxu0 %v7106
      %v7288 = vpop.f32.mrb[0].mxu0
      %v7289 = vadd.f32 %v7145, %v7288
      %v7290 = vpop.f32.mrb[0].mxu0
      %7291 = vmatprep.mubr.f32.mxu0 0.0
      %7292 = vmatmul.mubr.f32.gmra.mrb[0].mxu0 %v7107
      %v7293 = vpop.f32.mrb[0].mxu0
      %v7294 = vadd.f32 %v7150, %v7293
      %v7295 = vpop.f32.mrb[0].mxu0
      %7296 = vmatprep.mubr.f32.mxu0 0.0
      %7297 = vmatmul.mubr.f32.gmra.mrb[0].mxu0 %v7108
      %v7298 = vpop.f32.mrb[0].mxu0
      %v7299 = vadd.f32 %v7155, %v7298
      %v7300 = vpop.f32.mrb[0].mxu0
      %7301 = vmatprep.mubr.f32.mxu0 0.0
      %7302 = vmatmul.mubr.f32.gmra.mrb[0].mxu0 %v7109
      %v7303 = vpop.f32.mrb[0].mxu0
      %v7304 = vadd.f32 %v7160, %v7303
      %v7305 = vpop.f32.mrb[0].mxu0
      %7306 = vmatprep.mubr.f32.mxu0 0.0
      %7307 = vmatmul.mubr.f32.gmra.mrb[0].mxu0 %v7110
      %v7308 = vpop.f32.mrb[0].mxu0
      %v7309 = vadd.f32 %v7165, %v7308
      %v7310 = vpop.f32.mrb[0].mxu0
      %7311 = vmatprep.mubr.f32.mxu0 0.0
      %7312 = vmatmul.mubr.f32.gmra.mrb[0].mxu0 %v7111
      %v7313 = vpop.f32.mrb[0].mxu0
      %v7314 = vadd.f32 %v7170, %v7313
      %v7315 = vpop.f32.mrb[0].mxu0
      %7316 = vmatprep.mubr.f32.mxu0 0.0
      %7317 = vmatmul.mubr.f32.gmra.mrb[0].mxu0 %v7112
      %v7318 = vpop.f32.mrb[0].mxu0
      %v7319 = vadd.f32 %v7175, %v7318
      %v7320 = vpop.f32.mrb[0].mxu0
      %7321 = vmatprep.mubr.f32.mxu0 0.0
      %7322 = vmatmul.mubr.f32.gmra.mrb[0].mxu0 %v7113
      %v7323 = vpop.f32.mrb[0].mxu0
      %v7324 = vadd.f32 %v7180, %v7323
      %v7325 = vpop.f32.mrb[0].mxu0
      %7326 = vmatprep.mubr.f32.mxu0 0.0
      %7327 = vmatmul.mubr.f32.gmra.mrb[0].mxu0 %v7114
      %v7328 = vpop.f32.mrb[0].mxu0
      %v7329 = vadd.f32 %v7185, %v7328
      %v7330 = vpop.f32.mrb[0].mxu0
      %7331 = vmatprep.mubr.f32.mxu0 0.0
      %7332 = vmatmul.mubr.f32.gmra.mrb[0].mxu0 %v7115
      %v7333 = vpop.f32.mrb[0].mxu0
      %v7334 = vadd.f32 %v7190, %v7333
      %v7335 = vpop.f32.mrb[0].mxu0
      %7336 = vmatprep.mubr.f32.mxu0 0.0
      %7337 = vmatmul.mubr.f32.gmra.mrb[0].mxu0 %v7116
      %v7338 = vpop.f32.mrb[0].mxu0
      %v7339 = vadd.f32 %v7195, %v7338
      %v7340 = vpop.f32.mrb[0].mxu0
      %7341 = vmatprep.mubr.f32.mxu0 0.0
      %7342 = vmatmul.mubr.f32.gmra.mrb[0].mxu0 %v7117
      %v7343 = vpop.f32.mrb[0].mxu0
      %v7344 = vadd.f32 %v7200, %v7343
      %v7345 = vpop.f32.mrb[0].mxu0
      %7346 = vmatprep.mubr.f32.mxu0 0.0
      %7347 = vmatmul.mubr.f32.gmra.mrb[0].mxu0 %v7118
      %v7348 = vpop.f32.mrb[0].mxu0
      %v7349 = vadd.f32 %v7205, %v7348
      %v7350 = vpop.f32.mrb[0].mxu0
      %7351 = vmatprep.mubr.f32.mxu0 0.0
      %7352 = vmatmul.mubr.f32.gmra.mrb[0].mxu0 %v7119
      %v7353 = vpop.f32.mrb[0].mxu0
      %v7354 = vadd.f32 %v7210, %v7353
      %v7355 = vpop.f32.mrb[0].mxu0
      %7356 = vmatprep.mubr.f32.mxu0 0.0
      %7357 = vmatmul.mubr.f32.gmra.mrb[0].mxu0 %v7120
      %v7358 = vpop.f32.mrb[0].mxu0
      %v7359 = vadd.f32 %v7215, %v7358
      %v7360 = vpop.f32.mrb[0].mxu0
      %7361 = vdwg.mxu0
      %v7362 = vmax.f32 %v7284, 0.0
      %v7363 = vmax.f32 %v7289, 0.0
      %v7364 = vmax.f32 %v7294, 0.0
      %v7365 = vmax.f32 %v7299, 0.0
      %v7366 = vmax.f32 %v7304, 0.0
      %v7367 = vmax.f32 %v7309, 0.0
      %v7368 = vmax.f32 %v7314, 0.0
      %v7369 = vmax.f32 %v7319, 0.0
      %v7370 = vmax.f32 %v7324, 0.0
      %v7371 = vmax.f32 %v7329, 0.0
      %v7372 = vmax.f32 %v7334, 0.0
      %v7373 = vmax.f32 %v7339, 0.0
      %v7374 = vmax.f32 %v7344, 0.0
      %v7375 = vmax.f32 %v7349, 0.0
      %v7376 = vmax.f32 %v7354, 0.0
      %v7377 = vmax.f32 %v7359, 0.0
      %v7378 = vld [vmem:[%s7] sm:$0xff]
      %v7379 = vld [vmem:[%s7 + $0x8] sm:$0xff]
      %v7380 = vld [vmem:[%s7 + $0x10] sm:$0xff]
      %v7381 = vld [vmem:[%s7 + $0x18] sm:$0xff]
      %v7382 = vld [vmem:[%s7 + $0x20] sm:$0xff]
      %v7383 = vld [vmem:[%s7 + $0x28] sm:$0xff]
      %v7384 = vld [vmem:[%s7 + $0x30] sm:$0xff]
      %v7385 = vld [vmem:[%s7 + $0x38] sm:$0xff]
      %v7386 = vld [vmem:[%s7 + $0x40] sm:$0xff]
      %v7387 = vld [vmem:[%s7 + $0x48] sm:$0xff]
      %v7388 = vld [vmem:[%s7 + $0x50] sm:$0xff]
      %v7389 = vld [vmem:[%s7 + $0x58] sm:$0xff]
      %v7390 = vld [vmem:[%s7 + $0x60] sm:$0xff]
      %v7391 = vld [vmem:[%s7 + $0x68] sm:$0xff]
      %v7392 = vld [vmem:[%s7 + $0x70] sm:$0xff]
      %v7393 = vld [vmem:[%s7 + $0x78] sm:$0xff]
      %v7394 = vld [vmem:[%s8] sm:$0xff]
      %v7395 = vld [vmem:[%s8 + $0x8] sm:$0xff]
      %v7396 = vld [vmem:[%s8 + $0x10] sm:$0xff]
      %v7397 = vld [vmem:[%s8 + $0x18] sm:$0xff]
      %v7398 = vld [vmem:[%s8 + $0x20] sm:$0xff]
      %v7399 = vld [vmem:[%s8 + $0x28] sm:$0xff]
      %v7400 = vld [vmem:[%s8 + $0x30] sm:$0xff]
      %v7401 = vld [vmem:[%s8 + $0x38] sm:$0xff]
      %v7402 = vld [vmem:[%s8 + $0x40] sm:$0xff]
      %v7403 = vld [vmem:[%s8 + $0x48] sm:$0xff]
      %v7404 = vld [vmem:[%s8 + $0x50] sm:$0xff]
      %v7405 = vld [vmem:[%s8 + $0x58] sm:$0xff]
      %v7406 = vld [vmem:[%s8 + $0x60] sm:$0xff]
      %v7407 = vld [vmem:[%s8 + $0x68] sm:$0xff]
      %v7408 = vld [vmem:[%s8 + $0x70] sm:$0xff]
      %v7409 = vld [vmem:[%s8 + $0x78] sm:$0xff]
      %7411 = vset.pattern.permute.xlu0 0
      %7412 = vperm.xlu0 %7411, %v7394
      %v7413 = vpop.permute.xlu0 %7412
      %7416 = vset.pattern.permute.xlu0 0
      %7417 = vperm.xlu0 %7416, %v7395
      %v7418 = vpop.permute.xlu0 %7417
      %7421 = vset.pattern.permute.xlu0 0
      %7422 = vperm.xlu0 %7421, %v7396
      %v7423 = vpop.permute.xlu0 %7422
      %7426 = vset.pattern.permute.xlu0 0
      %7427 = vperm.xlu0 %7426, %v7397
      %v7428 = vpop.permute.xlu0 %7427
      %7431 = vset.pattern.permute.xlu0 0
      %7432 = vperm.xlu0 %7431, %v7398
      %v7433 = vpop.permute.xlu0 %7432
      %7436 = vset.pattern.permute.xlu0 0
      %7437 = vperm.xlu0 %7436, %v7399
      %v7438 = vpop.permute.xlu0 %7437
      %7441 = vset.pattern.permute.xlu0 0
      %7442 = vperm.xlu0 %7441, %v7400
      %v7443 = vpop.permute.xlu0 %7442
      %7446 = vset.pattern.permute.xlu0 0
      %7447 = vperm.xlu0 %7446, %v7401
      %v7448 = vpop.permute.xlu0 %7447
      %7451 = vset.pattern.permute.xlu0 0
      %7452 = vperm.xlu0 %7451, %v7402
      %v7453 = vpop.permute.xlu0 %7452
      %7456 = vset.pattern.permute.xlu0 0
      %7457 = vperm.xlu0 %7456, %v7403
      %v7458 = vpop.permute.xlu0 %7457
      %7461 = vset.pattern.permute.xlu0 0
      %7462 = vperm.xlu0 %7461, %v7404
      %v7463 = vpop.permute.xlu0 %7462
      %7466 = vset.pattern.permute.xlu0 0
      %7467 = vperm.xlu0 %7466, %v7405
      %v7468 = vpop.permute.xlu0 %7467
      %7471 = vset.pattern.permute.xlu0 0
      %7472 = vperm.xlu0 %7471, %v7406
      %v7473 = vpop.permute.xlu0 %7472
      %7476 = vset.pattern.permute.xlu0 0
      %7477 = vperm.xlu0 %7476, %v7407
      %v7478 = vpop.permute.xlu0 %7477
      %7481 = vset.pattern.permute.xlu0 0
      %7482 = vperm.xlu0 %7481, %v7408
      %v7483 = vpop.permute.xlu0 %7482
      %7486 = vset.pattern.permute.xlu0 0
      %7487 = vperm.xlu0 %7486, %v7409
      %v7488 = vpop.permute.xlu0 %7487
      %7490 = vmatprep.subr.mxu0 0.0
      %7491 = vmatpush1.msra.mxu0 %v7362
      %7492 = vmatprep.subr.mxu0 0.0
      %7493 = vmatpush1.msra.mxu0 %v7363
      %7494 = vmatprep.subr.mxu0 0.0
      %7495 = vmatpush1.msra.mxu0 %v7364
      %7496 = vmatprep.subr.mxu0 0.0
      %7497 = vmatpush1.msra.mxu0 %v7365
      %7498 = vmatprep.subr.mxu0 0.0
      %7499 = vmatpush1.msra.mxu0 %v7366
      %7500 = vmatprep.subr.mxu0 0.0
      %7501 = vmatpush1.msra.mxu0 %v7367
      %7502 = vmatprep.subr.mxu0 0.0
      %7503 = vmatpush1.msra.mxu0 %v7368
      %7504 = vmatprep.subr.mxu0 0.0
      %7505 = vmatpush1.msra.mxu0 %v7369
      %7506 = vmatprep.subr.mxu0 0.0
      %7507 = vmatpush1.msra.mxu0 %v7370
      %7508 = vmatprep.subr.mxu0 0.0
      %7509 = vmatpush1.msra.mxu0 %v7371
      %7510 = vmatprep.subr.mxu0 0.0
      %7511 = vmatpush1.msra.mxu0 %v7372
      %7512 = vmatprep.subr.mxu0 0.0
      %7513 = vmatpush1.msra.mxu0 %v7373
      %7514 = vmatprep.subr.mxu0 0.0
      %7515 = vmatpush1.msra.mxu0 %v7374
      %7516 = vmatprep.subr.mxu0 0.0
      %7517 = vmatpush1.msra.mxu0 %v7375
      %7518 = vmatprep.subr.mxu0 0.0
      %7519 = vmatpush1.msra.mxu0 %v7376
      %7520 = vmatprep.subr.mxu0 0.0
      %7521 = vmatpush1.msra.mxu0 %v7377
      %7522 = vmatprep.subr.mxu0 0.0
      %7523 = vmatpush1.msra.mxu0 0.0
      %7524 = vmatprep.subr.mxu0 0.0
      %7525 = vmatpush1.msra.mxu0 0.0
      %7526 = vmatprep.subr.mxu0 0.0
      %7527 = vmatpush1.msra.mxu0 0.0
      %7528 = vmatprep.subr.mxu0 0.0
      %7529 = vmatpush1.msra.mxu0 0.0
      %7530 = vmatprep.subr.mxu0 0.0
      %7531 = vmatpush1.msra.mxu0 0.0
      %7532 = vmatprep.subr.mxu0 0.0
      %7533 = vmatpush1.msra.mxu0 0.0
      %7534 = vmatprep.subr.mxu0 0.0
      %7535 = vmatpush1.msra.mxu0 0.0
      %7536 = vmatprep.subr.mxu0 0.0
      %7537 = vmatpush1.msra.mxu0 0.0
      %7538 = vmatprep.subr.mxu0 0.0
      %7539 = vmatpush1.msra.mxu0 0.0
      %7540 = vmatprep.subr.mxu0 0.0
      %7541 = vmatpush1.msra.mxu0 0.0
      %7542 = vmatprep.subr.mxu0 0.0
      %7543 = vmatpush1.msra.mxu0 0.0
      %7544 = vmatprep.subr.mxu0 0.0
      %7545 = vmatpush1.msra.mxu0 0.0
      %7546 = vmatprep.subr.mxu0 0.0
      %7547 = vmatpush1.msra.mxu0 0.0
      %7548 = vmatprep.subr.mxu0 0.0
      %7549 = vmatpush1.msra.mxu0 0.0
      %7550 = vmatprep.subr.mxu0 0.0
      %7551 = vmatpush1.msra.mxu0 0.0
      %7552 = vmatprep.subr.mxu0 0.0
      %7553 = vmatpush1.msra.mxu0 0.0
      %7554 = vmatprep.mubr.f32.mxu0 0.0
      %7555 = vmatmul.mubr.f32.gmra.mrb[0].mxu0 %v7378
      %v7556 = vpop.f32.mrb[0].mxu0
      %v7557 = vadd.f32 %v7413, %v7556
      %v7558 = vpop.f32.mrb[0].mxu0
      %7559 = vmatprep.mubr.f32.mxu0 0.0
      %7560 = vmatmul.mubr.f32.gmra.mrb[0].mxu0 %v7379
      %v7561 = vpop.f32.mrb[0].mxu0
      %v7562 = vadd.f32 %v7418, %v7561
      %v7563 = vpop.f32.mrb[0].mxu0
      %7564 = vmatprep.mubr.f32.mxu0 0.0
      %7565 = vmatmul.mubr.f32.gmra.mrb[0].mxu0 %v7380
      %v7566 = vpop.f32.mrb[0].mxu0
      %v7567 = vadd.f32 %v7423, %v7566
      %v7568 = vpop.f32.mrb[0].mxu0
      %7569 = vmatprep.mubr.f32.mxu0 0.0
      %7570 = vmatmul.mubr.f32.gmra.mrb[0].mxu0 %v7381
      %v7571 = vpop.f32.mrb[0].mxu0
      %v7572 = vadd.f32 %v7428, %v7571
      %v7573 = vpop.f32.mrb[0].mxu0
      %7574 = vmatprep.mubr.f32.mxu0 0.0
      %7575 = vmatmul.mubr.f32.gmra.mrb[0].mxu0 %v7382
      %v7576 = vpop.f32.mrb[0].mxu0
      %v7577 = vadd.f32 %v7433, %v7576
      %v7578 = vpop.f32.mrb[0].mxu0
      %7579 = vmatprep.mubr.f32.mxu0 0.0
      %7580 = vmatmul.mubr.f32.gmra.mrb[0].mxu0 %v7383
      %v7581 = vpop.f32.mrb[0].mxu0
      %v7582 = vadd.f32 %v7438, %v7581
      %v7583 = vpop.f32.mrb[0].mxu0
      %7584 = vmatprep.mubr.f32.mxu0 0.0
      %7585 = vmatmul.mubr.f32.gmra.mrb[0].mxu0 %v7384
      %v7586 = vpop.f32.mrb[0].mxu0
      %v7587 = vadd.f32 %v7443, %v7586
      %v7588 = vpop.f32.mrb[0].mxu0
      %7589 = vmatprep.mubr.f32.mxu0 0.0
      %7590 = vmatmul.mubr.f32.gmra.mrb[0].mxu0 %v7385
      %v7591 = vpop.f32.mrb[0].mxu0
      %v7592 = vadd.f32 %v7448, %v7591
      %v7593 = vpop.f32.mrb[0].mxu0
      %7594 = vmatprep.mubr.f32.mxu0 0.0
      %7595 = vmatmul.mubr.f32.gmra.mrb[0].mxu0 %v7386
      %v7596 = vpop.f32.mrb[0].mxu0
      %v7597 = vadd.f32 %v7453, %v7596
      %v7598 = vpop.f32.mrb[0].mxu0
      %7599 = vmatprep.mubr.f32.mxu0 0.0
      %7600 = vmatmul.mubr.f32.gmra.mrb[0].mxu0 %v7387
      %v7601 = vpop.f32.mrb[0].mxu0
      %v7602 = vadd.f32 %v7458, %v7601
      %v7603 = vpop.f32.mrb[0].mxu0
      %7604 = vmatprep.mubr.f32.mxu0 0.0
      %7605 = vmatmul.mubr.f32.gmra.mrb[0].mxu0 %v7388
      %v7606 = vpop.f32.mrb[0].mxu0
      %v7607 = vadd.f32 %v7463, %v7606
      %v7608 = vpop.f32.mrb[0].mxu0
      %7609 = vmatprep.mubr.f32.mxu0 0.0
      %7610 = vmatmul.mubr.f32.gmra.mrb[0].mxu0 %v7389
      %v7611 = vpop.f32.mrb[0].mxu0
      %v7612 = vadd.f32 %v7468, %v7611
      %v7613 = vpop.f32.mrb[0].mxu0
      %7614 = vmatprep.mubr.f32.mxu0 0.0
      %7615 = vmatmul.mubr.f32.gmra.mrb[0].mxu0 %v7390
      %v7616 = vpop.f32.mrb[0].mxu0
      %v7617 = vadd.f32 %v7473, %v7616
      %v7618 = vpop.f32.mrb[0].mxu0
      %7619 = vmatprep.mubr.f32.mxu0 0.0
      %7620 = vmatmul.mubr.f32.gmra.mrb[0].mxu0 %v7391
      %v7621 = vpop.f32.mrb[0].mxu0
      %v7622 = vadd.f32 %v7478, %v7621
      %v7623 = vpop.f32.mrb[0].mxu0
      %7624 = vmatprep.mubr.f32.mxu0 0.0
      %7625 = vmatmul.mubr.f32.gmra.mrb[0].mxu0 %v7392
      %v7626 = vpop.f32.mrb[0].mxu0
      %v7627 = vadd.f32 %v7483, %v7626
      %v7628 = vpop.f32.mrb[0].mxu0
      %7629 = vmatprep.mubr.f32.mxu0 0.0
      %7630 = vmatmul.mubr.f32.gmra.mrb[0].mxu0 %v7393
      %v7631 = vpop.f32.mrb[0].mxu0
      %v7632 = vadd.f32 %v7488, %v7631
      %v7633 = vpop.f32.mrb[0].mxu0
      %7634 = vdwg.mxu0
      %v7635 = vmax.f32 %v7557, 0.0
      %v7636 = vmax.f32 %v7562, 0.0
      %v7637 = vmax.f32 %v7567, 0.0
      %v7638 = vmax.f32 %v7572, 0.0
      %v7639 = vmax.f32 %v7577, 0.0
      %v7640 = vmax.f32 %v7582, 0.0
      %v7641 = vmax.f32 %v7587, 0.0
      %v7642 = vmax.f32 %v7592, 0.0
      %v7643 = vmax.f32 %v7597, 0.0
      %v7644 = vmax.f32 %v7602, 0.0
      %v7645 = vmax.f32 %v7607, 0.0
      %v7646 = vmax.f32 %v7612, 0.0
      %v7647 = vmax.f32 %v7617, 0.0
      %v7648 = vmax.f32 %v7622, 0.0
      %v7649 = vmax.f32 %v7627, 0.0
      %v7650 = vmax.f32 %v7632, 0.0
      %v7651 = vld [vmem:[%s9] sm:$0xff]
      %v7652 = vld [vmem:[%s9 + $0x8] sm:$0xff]
      %v7653 = vld [vmem:[%s9 + $0x10] sm:$0xff]
      %v7654 = vld [vmem:[%s9 + $0x18] sm:$0xff]
      %v7655 = vld [vmem:[%s9 + $0x20] sm:$0xff]
      %v7656 = vld [vmem:[%s9 + $0x28] sm:$0xff]
      %v7657 = vld [vmem:[%s9 + $0x30] sm:$0xff]
      %v7658 = vld [vmem:[%s9 + $0x38] sm:$0xff]
      %v7659 = vld [vmem:[%s9 + $0x40] sm:$0xff]
      %v7660 = vld [vmem:[%s9 + $0x48] sm:$0xff]
      %v7661 = vld [vmem:[%s9 + $0x50] sm:$0xff]
      %v7662 = vld [vmem:[%s9 + $0x58] sm:$0xff]
      %v7663 = vld [vmem:[%s9 + $0x60] sm:$0xff]
      %v7664 = vld [vmem:[%s9 + $0x68] sm:$0xff]
      %v7665 = vld [vmem:[%s9 + $0x70] sm:$0xff]
      %v7666 = vld [vmem:[%s9 + $0x78] sm:$0xff]
      %v7667 = vld [vmem:[%s10] sm:$0xff]
      %v7668 = vld [vmem:[%s10 + $0x8] sm:$0xff]
      %v7669 = vld [vmem:[%s10 + $0x10] sm:$0xff]
      %v7670 = vld [vmem:[%s10 + $0x18] sm:$0xff]
      %v7671 = vld [vmem:[%s10 + $0x20] sm:$0xff]
      %v7672 = vld [vmem:[%s10 + $0x28] sm:$0xff]
      %v7673 = vld [vmem:[%s10 + $0x30] sm:$0xff]
      %v7674 = vld [vmem:[%s10 + $0x38] sm:$0xff]
      %v7675 = vld [vmem:[%s10 + $0x40] sm:$0xff]
      %v7676 = vld [vmem:[%s10 + $0x48] sm:$0xff]
      %v7677 = vld [vmem:[%s10 + $0x50] sm:$0xff]
      %v7678 = vld [vmem:[%s10 + $0x58] sm:$0xff]
      %v7679 = vld [vmem:[%s10 + $0x60] sm:$0xff]
      %v7680 = vld [vmem:[%s10 + $0x68] sm:$0xff]
      %v7681 = vld [vmem:[%s10 + $0x70] sm:$0xff]
      %v7682 = vld [vmem:[%s10 + $0x78] sm:$0xff]
      %7684 = vset.pattern.permute.xlu0 0
      %7685 = vperm.xlu0 %7684, %v7667
      %v7686 = vpop.permute.xlu0 %7685
      %7689 = vset.pattern.permute.xlu0 0
      %7690 = vperm.xlu0 %7689, %v7668
      %v7691 = vpop.permute.xlu0 %7690
      %7694 = vset.pattern.permute.xlu0 0
      %7695 = vperm.xlu0 %7694, %v7669
      %v7696 = vpop.permute.xlu0 %7695
      %7699 = vset.pattern.permute.xlu0 0
      %7700 = vperm.xlu0 %7699, %v7670
      %v7701 = vpop.permute.xlu0 %7700
      %7704 = vset.pattern.permute.xlu0 0
      %7705 = vperm.xlu0 %7704, %v7671
      %v7706 = vpop.permute.xlu0 %7705
      %7709 = vset.pattern.permute.xlu0 0
      %7710 = vperm.xlu0 %7709, %v7672
      %v7711 = vpop.permute.xlu0 %7710
      %7714 = vset.pattern.permute.xlu0 0
      %7715 = vperm.xlu0 %7714, %v7673
      %v7716 = vpop.permute.xlu0 %7715
      %7719 = vset.pattern.permute.xlu0 0
      %7720 = vperm.xlu0 %7719, %v7674
      %v7721 = vpop.permute.xlu0 %7720
      %7724 = vset.pattern.permute.xlu0 0
      %7725 = vperm.xlu0 %7724, %v7675
      %v7726 = vpop.permute.xlu0 %7725
      %7729 = vset.pattern.permute.xlu0 0
      %7730 = vperm.xlu0 %7729, %v7676
      %v7731 = vpop.permute.xlu0 %7730
      %7734 = vset.pattern.permute.xlu0 0
      %7735 = vperm.xlu0 %7734, %v7677
      %v7736 = vpop.permute.xlu0 %7735
      %7739 = vset.pattern.permute.xlu0 0
      %7740 = vperm.xlu0 %7739, %v7678
      %v7741 = vpop.permute.xlu0 %7740
      %7744 = vset.pattern.permute.xlu0 0
      %7745 = vperm.xlu0 %7744, %v7679
      %v7746 = vpop.permute.xlu0 %7745
      %7749 = vset.pattern.permute.xlu0 0
      %7750 = vperm.xlu0 %7749, %v7680
      %v7751 = vpop.permute.xlu0 %7750
      %7754 = vset.pattern.permute.xlu0 0
      %7755 = vperm.xlu0 %7754, %v7681
      %v7756 = vpop.permute.xlu0 %7755
      %7759 = vset.pattern.permute.xlu0 0
      %7760 = vperm.xlu0 %7759, %v7682
      %v7761 = vpop.permute.xlu0 %7760
      %7763 = vmatprep.subr.mxu0 0.0
      %7764 = vmatpush1.msra.mxu0 %v7635
      %7765 = vmatprep.subr.mxu0 0.0
      %7766 = vmatpush1.msra.mxu0 %v7636
      %7767 = vmatprep.subr.mxu0 0.0
      %7768 = vmatpush1.msra.mxu0 %v7637
      %7769 = vmatprep.subr.mxu0 0.0
      %7770 = vmatpush1.msra.mxu0 %v7638
      %7771 = vmatprep.subr.mxu0 0.0
      %7772 = vmatpush1.msra.mxu0 %v7639
      %7773 = vmatprep.subr.mxu0 0.0
      %7774 = vmatpush1.msra.mxu0 %v7640
      %7775 = vmatprep.subr.mxu0 0.0
      %7776 = vmatpush1.msra.mxu0 %v7641
      %7777 = vmatprep.subr.mxu0 0.0
      %7778 = vmatpush1.msra.mxu0 %v7642
      %7779 = vmatprep.subr.mxu0 0.0
      %7780 = vmatpush1.msra.mxu0 %v7643
      %7781 = vmatprep.subr.mxu0 0.0
      %7782 = vmatpush1.msra.mxu0 %v7644
      %7783 = vmatprep.subr.mxu0 0.0
      %7784 = vmatpush1.msra.mxu0 %v7645
      %7785 = vmatprep.subr.mxu0 0.0
      %7786 = vmatpush1.msra.mxu0 %v7646
      %7787 = vmatprep.subr.mxu0 0.0
      %7788 = vmatpush1.msra.mxu0 %v7647
      %7789 = vmatprep.subr.mxu0 0.0
      %7790 = vmatpush1.msra.mxu0 %v7648
      %7791 = vmatprep.subr.mxu0 0.0
      %7792 = vmatpush1.msra.mxu0 %v7649
      %7793 = vmatprep.subr.mxu0 0.0
      %7794 = vmatpush1.msra.mxu0 %v7650
      %7795 = vmatprep.subr.mxu0 0.0
      %7796 = vmatpush1.msra.mxu0 0.0
      %7797 = vmatprep.subr.mxu0 0.0
      %7798 = vmatpush1.msra.mxu0 0.0
      %7799 = vmatprep.subr.mxu0 0.0
      %7800 = vmatpush1.msra.mxu0 0.0
      %7801 = vmatprep.subr.mxu0 0.0
      %7802 = vmatpush1.msra.mxu0 0.0
      %7803 = vmatprep.subr.mxu0 0.0
      %7804 = vmatpush1.msra.mxu0 0.0
      %7805 = vmatprep.subr.mxu0 0.0
      %7806 = vmatpush1.msra.mxu0 0.0
      %7807 = vmatprep.subr.mxu0 0.0
      %7808 = vmatpush1.msra.mxu0 0.0
      %7809 = vmatprep.subr.mxu0 0.0
      %7810 = vmatpush1.msra.mxu0 0.0
      %7811 = vmatprep.subr.mxu0 0.0
      %7812 = vmatpush1.msra.mxu0 0.0
      %7813 = vmatprep.subr.mxu0 0.0
      %7814 = vmatpush1.msra.mxu0 0.0
      %7815 = vmatprep.subr.mxu0 0.0
      %7816 = vmatpush1.msra.mxu0 0.0
      %7817 = vmatprep.subr.mxu0 0.0
      %7818 = vmatpush1.msra.mxu0 0.0
      %7819 = vmatprep.subr.mxu0 0.0
      %7820 = vmatpush1.msra.mxu0 0.0
      %7821 = vmatprep.subr.mxu0 0.0
      %7822 = vmatpush1.msra.mxu0 0.0
      %7823 = vmatprep.subr.mxu0 0.0
      %7824 = vmatpush1.msra.mxu0 0.0
      %7825 = vmatprep.subr.mxu0 0.0
      %7826 = vmatpush1.msra.mxu0 0.0
      %7827 = vmatprep.mubr.f32.mxu0 0.0
      %7828 = vmatmul.mubr.f32.gmra.mrb[0].mxu0 %v7651
      %v7829 = vpop.f32.mrb[0].mxu0
      %v7830 = vadd.f32 %v7686, %v7829
      %v7831 = vpop.f32.mrb[0].mxu0
      %7832 = vmatprep.mubr.f32.mxu0 0.0
      %7833 = vmatmul.mubr.f32.gmra.mrb[0].mxu0 %v7652
      %v7834 = vpop.f32.mrb[0].mxu0
      %v7835 = vadd.f32 %v7691, %v7834
      %v7836 = vpop.f32.mrb[0].mxu0
      %7837 = vmatprep.mubr.f32.mxu0 0.0
      %7838 = vmatmul.mubr.f32.gmra.mrb[0].mxu0 %v7653
      %v7839 = vpop.f32.mrb[0].mxu0
      %v7840 = vadd.f32 %v7696, %v7839
      %v7841 = vpop.f32.mrb[0].mxu0
      %7842 = vmatprep.mubr.f32.mxu0 0.0
      %7843 = vmatmul.mubr.f32.gmra.mrb[0].mxu0 %v7654
      %v7844 = vpop.f32.mrb[0].mxu0
      %v7845 = vadd.f32 %v7701, %v7844
      %v7846 = vpop.f32.mrb[0].mxu0
      %7847 = vmatprep.mubr.f32.mxu0 0.0
      %7848 = vmatmul.mubr.f32.gmra.mrb[0].mxu0 %v7655
      %v7849 = vpop.f32.mrb[0].mxu0
      %v7850 = vadd.f32 %v7706, %v7849
      %v7851 = vpop.f32.mrb[0].mxu0
      %7852 = vmatprep.mubr.f32.mxu0 0.0
      %7853 = vmatmul.mubr.f32.gmra.mrb[0].mxu0 %v7656
      %v7854 = vpop.f32.mrb[0].mxu0
      %v7855 = vadd.f32 %v7711, %v7854
      %v7856 = vpop.f32.mrb[0].mxu0
      %7857 = vmatprep.mubr.f32.mxu0 0.0
      %7858 = vmatmul.mubr.f32.gmra.mrb[0].mxu0 %v7657
      %v7859 = vpop.f32.mrb[0].mxu0
      %v7860 = vadd.f32 %v7716, %v7859
      %v7861 = vpop.f32.mrb[0].mxu0
      %7862 = vmatprep.mubr.f32.mxu0 0.0
      %7863 = vmatmul.mubr.f32.gmra.mrb[0].mxu0 %v7658
      %v7864 = vpop.f32.mrb[0].mxu0
      %v7865 = vadd.f32 %v7721, %v7864
      %v7866 = vpop.f32.mrb[0].mxu0
      %7867 = vmatprep.mubr.f32.mxu0 0.0
      %7868 = vmatmul.mubr.f32.gmra.mrb[0].mxu0 %v7659
      %v7869 = vpop.f32.mrb[0].mxu0
      %v7870 = vadd.f32 %v7726, %v7869
      %v7871 = vpop.f32.mrb[0].mxu0
      %7872 = vmatprep.mubr.f32.mxu0 0.0
      %7873 = vmatmul.mubr.f32.gmra.mrb[0].mxu0 %v7660
      %v7874 = vpop.f32.mrb[0].mxu0
      %v7875 = vadd.f32 %v7731, %v7874
      %v7876 = vpop.f32.mrb[0].mxu0
      %7877 = vmatprep.mubr.f32.mxu0 0.0
      %7878 = vmatmul.mubr.f32.gmra.mrb[0].mxu0 %v7661
      %v7879 = vpop.f32.mrb[0].mxu0
      %v7880 = vadd.f32 %v7736, %v7879
      %v7881 = vpop.f32.mrb[0].mxu0
      %7882 = vmatprep.mubr.f32.mxu0 0.0
      %7883 = vmatmul.mubr.f32.gmra.mrb[0].mxu0 %v7662
      %v7884 = vpop.f32.mrb[0].mxu0
      %v7885 = vadd.f32 %v7741, %v7884
      %v7886 = vpop.f32.mrb[0].mxu0
      %7887 = vmatprep.mubr.f32.mxu0 0.0
      %7888 = vmatmul.mubr.f32.gmra.mrb[0].mxu0 %v7663
      %v7889 = vpop.f32.mrb[0].mxu0
      %v7890 = vadd.f32 %v7746, %v7889
      %v7891 = vpop.f32.mrb[0].mxu0
      %7892 = vmatprep.mubr.f32.mxu0 0.0
      %7893 = vmatmul.mubr.f32.gmra.mrb[0].mxu0 %v7664
      %v7894 = vpop.f32.mrb[0].mxu0
      %v7895 = vadd.f32 %v7751, %v7894
      %v7896 = vpop.f32.mrb[0].mxu0
      %7897 = vmatprep.mubr.f32.mxu0 0.0
      %7898 = vmatmul.mubr.f32.gmra.mrb[0].mxu0 %v7665
      %v7899 = vpop.f32.mrb[0].mxu0
      %v7900 = vadd.f32 %v7756, %v7899
      %v7901 = vpop.f32.mrb[0].mxu0
      %7902 = vmatprep.mubr.f32.mxu0 0.0
      %7903 = vmatmul.mubr.f32.gmra.mrb[0].mxu0 %v7666
      %v7904 = vpop.f32.mrb[0].mxu0
      %v7905 = vadd.f32 %v7761, %v7904
      %v7906 = vpop.f32.mrb[0].mxu0
      %7907 = vdwg.mxu0
      %7908 = vxpose.xlu0.b32.start [1/16] %v7830, 128
      %7909 = vxpose.xlu0.b32.cont [2/16] %v7835, 128
      %7910 = vxpose.xlu0.b32.cont [3/16] %v7840, 128
      %7911 = vxpose.xlu0.b32.cont [4/16] %v7845, 128
      %7912 = vxpose.xlu0.b32.cont [5/16] %v7850, 128
      %7913 = vxpose.xlu0.b32.cont [6/16] %v7855, 128
      %7914 = vxpose.xlu0.b32.cont [7/16] %v7860, 128
      %7915 = vxpose.xlu0.b32.cont [8/16] %v7865, 128
      %7916 = vxpose.xlu0.b32.cont [9/16] %v7870, 128
      %7917 = vxpose.xlu0.b32.cont [10/16] %v7875, 128
      %7918 = vxpose.xlu0.b32.cont [11/16] %v7880, 128
      %7919 = vxpose.xlu0.b32.cont [12/16] %v7885, 128
      %7920 = vxpose.xlu0.b32.cont [13/16] %v7890, 128
      %7921 = vxpose.xlu0.b32.cont [14/16] %v7895, 128
      %7922 = vxpose.xlu0.b32.cont [15/16] %v7900, 128
      %7923 = vxpose.xlu0.b32.end [16/16] %v7905, 128
      %v7924 = vpop.trf.xlu0
      %v7925 = vpop.trf.xlu0
      %v7926 = vpop.trf.xlu0
      %v7927 = vpop.trf.xlu0
      %v7928 = vpop.trf.xlu0
      %v7929 = vpop.trf.xlu0
      %v7930 = vpop.trf.xlu0
      %v7931 = vpop.trf.xlu0
      %v7932 = vpop.trf.xlu0
      %v7933 = vpop.trf.xlu0
      %v7934 = vpop.trf.xlu0
      %v7935 = vpop.trf.xlu0
      %v7936 = vpop.trf.xlu0
      %v7937 = vpop.trf.xlu0
      %v7938 = vpop.trf.xlu0
      %v7939 = vpop.trf.xlu0
      %7940 = vst [vmem:[#allocation3] sm:$0xff] %v7924
    $region53: #{tpu_custom_call.1} parent=1 // pred_fallthru
      _
    // Predicated region
    $region54: #{tpu_custom_call.1} parent=1 // pred_check
      _
    $region55: #{tpu_custom_call.1} parent=1 // pred_check_branch
      %7942 = sbr.rel (0) target = $region57
    $region56: #{tpu_custom_call.1} parent=1 // pred_region
      %s7944 = ssub.s32 128, 128
      %7945 = vsyncadd [#allocation4], %s7944
      %s7947 = sshll.u32 [#allocation3], 4
      %s7948 = int_to_ptr.vmem [resolvable:$true] %s7947
      %7950 = dma.vmem_to_hbm [thread:$0]  %s7948, 128, %s11, [#allocation4]
    $region57: #{tpu_custom_call.1} parent=1 // pred_fallthru
      _
    // Predicated region
    $region58: #{tpu_custom_call.1} parent=1 // pred_check
      _
    $region59: #{tpu_custom_call.1} parent=1 // pred_check_branch
      %7952 = sbr.rel (0) target = $region61
    $region60: #{tpu_custom_call.1} parent=1 // pred_region
      %7953 = dma.done [#allocation4], 128
    $region61: #{tpu_custom_call.1} parent=1 // pred_fallthru
      _
    %7954 = vsyncpa [#allocation4], 1

</llo_original>
